<compile_context>
chip_gen: v6e
topology: v6e:2x2x1
jax: 0.10.0
libtpu: 0.0.40
codegen_flags: <defaults>
</compile_context>

<pallas_src>
import functools

import jax
import jax.numpy as jnp
from jax.experimental import pallas as pl
from jax.experimental.pallas import tpu as pltpu

TIME_STEPS = 100
RECURRENT_MAX = 2.0 ** (1.0 / TIME_STEPS)
IRNN_CLASSES = 2


def _round_up(x, m):
    return -(-x // m) * m


def _pad_cols(a, n):
    return a if a.shape[1] == n else jnp.pad(a, ((0, 0), (0, n - a.shape[1])))


def _pad_rows(a, n):
    return a if a.shape[0] == n else jnp.pad(a, ((0, n - a.shape[0]), (0, 0)))


def _choose_time_block(t_len, batch, target_rows=512, max_unroll=32):
    """Largest divisor of T such that tt*batch stays near target_rows and the
    in-kernel unroll stays bounded."""
    cap = max(1, min(t_len, max_unroll, target_rows // max(batch, 1)))
    best = 1
    for cand in range(1, cap + 1):
        if t_len % cand == 0:
            best = cand
    return best


def _vmem_bytes_estimate(tb, chunk_dims, hidden, x_bytes, y_bytes, w_bytes):
    d_total = sum(chunk_dims)
    xbuf = 2 * 2 * tb * d_total * x_bytes      # fwd+bwd inputs, double-buffered
    ybuf = 2 * 2 * tb * hidden * y_bytes       # fwd+bwd outputs, double-buffered
    wres = 2 * d_total * hidden * w_bytes      # resident weights
    pre = 2 * tb * hidden * 4                  # traced pre_f / pre_b temps
    misc = 32 * hidden * 4 + 4 * tb * 4        # h scratch, stats, b/u, slack
    return xbuf + ybuf + wres + pre + misc


# ----------------------------------------------------------------------------
# Fused bidirectional IndRNN layer kernel (factory over #input chunks).
# ----------------------------------------------------------------------------
def _make_bidir_kernel(n_chunks, tt, batch_valid):
    """Ref layout (inputs, outputs, scratch):
      x_f[k]   (1, TT*B, d_k)   block g           (forward direction)
      x_b[k]   (1, TT*B, d_k)   block NB-1-g      (backward direction)
      w_f[k], w_b[k]  (d_k, H)  constant index -> resident in VMEM
      b_f, b_b, u_f, u_b  (1, H)
      y_f      (1, TT*B, H)     block g
      y_b      (1, TT*B, H)     block NB-1-g
      stats    (4, H)           [sum_f; sum_b; sumsq_f; sumsq_b], constant
                                index -> resident accumulator output
      hf_sc, hb_sc (B, H) VMEM  hidden state carried across grid steps
    """
    n_in = 4 * n_chunks + 4

    def kernel(*refs):
        x_f = refs[0:n_chunks]
        x_b = refs[n_chunks:2 * n_chunks]
        w_f = refs[2 * n_chunks:3 * n_chunks]
        w_b = refs[3 * n_chunks:4 * n_chunks]
        b_f, b_b, u_f, u_b = refs[4 * n_chunks:n_in]
        y_f_ref, y_b_ref, stats_ref = refs[n_in:n_in + 3]
        hf_sc, hb_sc = refs[n_in + 3:n_in + 5]

        batch, hidden = hf_sc.shape
        g = pl.program_id(0)

        @pl.when(g == 0)
        def _init():
            hf_sc[...] = jnp.zeros_like(hf_sc)
            hb_sc[...] = jnp.zeros_like(hb_sc)
            stats_ref[...] = jnp.zeros_like(stats_ref)

        # Hoisted, h-independent pre-activations: one (TT*B, d) @ (d, H) MXU
        # pass per chunk & direction instead of TT tiny per-step matmuls.
        acc_f = None
        acc_b = None
        for k in range(n_chunks):
            wkf = w_f[k][...]
            wkb = w_b[k][...]
            xf = x_f[k][0]
            xb = x_b[k][0]
            if xf.dtype != wkf.dtype:   # static check; wrapper pre-casts, so
                xf = xf.astype(wkf.dtype)  # this is normally a no-op.
            if xb.dtype != wkb.dtype:
                xb = xb.astype(wkb.dtype)
            pf = jnp.dot(xf, wkf, preferred_element_type=jnp.float32)
            pb = jnp.dot(xb, wkb, preferred_element_type=jnp.float32)
            acc_f = pf if acc_f is None else acc_f + pf
            acc_b = pb if acc_b is None else acc_b + pb
        pre_f = acc_f + b_f[...]          # (TT*B, H)
        pre_b = acc_b + b_b[...]          # (TT*B, H)

        uf = u_f[...]
        ub = u_b[...]
        hf = hf_sc[...]
        hb = hb_sc[...]

        # Running BN accumulators kept in vregs from the live f32 hidden state
        # (no y read-back, no per-step concat).
        sum_f = jnp.zeros((batch, hidden), jnp.float32)
        sum_b = jnp.zeros((batch, hidden), jnp.float32)
        ssq_f = jnp.zeros((batch, hidden), jnp.float32)
        ssq_b = jnp.zeros((batch, hidden), jnp.float32)

        # Sequential elementwise recurrence over the TT timesteps in this
        # block (fully unrolled; all slice offsets are static multiples of the
        # sublane-aligned batch).  Forward walks local steps 0..TT-1, backward
        # walks TT-1..0 of its reversed block.
        for j in range(tt):
            lo_f = j * batch
            lo_b = (tt - 1 - j) * batch
            hf = jnp.maximum(pre_f[lo_f:lo_f + batch, :] + uf * hf, 0.0)
            hb = jnp.maximum(pre_b[lo_b:lo_b + batch, :] + ub * hb, 0.0)
            y_f_ref[0, lo_f:lo_f + batch, :] = hf.astype(y_f_ref.dtype)
            y_b_ref[0, lo_b:lo_b + batch, :] = hb.astype(y_b_ref.dtype)
            sum_f += hf
            sum_b += hb
            ssq_f += hf * hf
            ssq_b += hb * hb

        hf_sc[...] = hf
        hb_sc[...] = hb

        if batch_valid < batch:
            # Exclude zero-padded batch rows from the statistics.
            row = jax.lax.broadcasted_iota(jnp.int32, (batch, hidden), 0)
            mask = (row < batch_valid).astype(jnp.float32)
            sum_f = sum_f * mask
            sum_b = sum_b * mask
            ssq_f = ssq_f * mask
            ssq_b = ssq_b * mask

        # One sublane (XLU) reduce per grid step, accumulated directly into
        # the resident constant-index stats output block.
        stats_ref[...] += jnp.concatenate(
            [jnp.sum(sum_f, axis=0, keepdims=True),
             jnp.sum(sum_b, axis=0, keepdims=True),
             jnp.sum(ssq_f, axis=0, keepdims=True),
             jnp.sum(ssq_b, axis=0, keepdims=True)], axis=0)

    return kernel


def bidir_indrnn_layer(chunks, w_f_list, w_b_list, b_f, b_b, u_f, u_b,
                       *, time_block, batch_valid,
                       act_dtype=jnp.bfloat16, matmul_dtype=jnp.bfloat16,
                       vmem_limit_bytes=None):
    """One bidirectional IndRNN layer as a single fused pallas_call.

    chunks: list of (NB, TT*B, d_k) arrays in blocked time-major layout.
    Returns (y_f, y_b, stats); y_* are (NB, TT*B, H) in act_dtype,
    stats is (4, H) f32 = [sum_f; sum_b; sumsq_f; sumsq_b].
    """
    nb, tb, _ = chunks[0].shape
    hidden = w_f_list[0].shape[1]
    batch = tb // time_block
    n_chunks = len(chunks)

    w_f_list = [w.astype(matmul_dtype) for w in w_f_list]
    w_b_list = [w.astype(matmul_dtype) for w in w_b_list]

    in_specs = []
    for c in chunks:          # forward-order time blocks
        in_specs.append(pl.BlockSpec((1, tb, c.shape[2]), lambda g: (g, 0, 0)))
    for c in chunks:          # reversed block order feeds the backward dir
        in_specs.append(pl.BlockSpec((1, tb, c.shape[2]),
                                     lambda g, _nb=nb: (_nb - 1 - g, 0, 0)))
    for w in w_f_list + w_b_list:   # constant index -> held resident, no re-DMA
        in_specs.append(pl.BlockSpec(w.shape, lambda g: (0, 0)))
    for _ in range(4):              # b_f, b_b, u_f, u_b
        in_specs.append(pl.BlockSpec((1, hidden), lambda g: (0, 0)))

    out_shape = (
        jax.ShapeDtypeStruct((nb, tb, hidden), act_dtype),
        jax.ShapeDtypeStruct((nb, tb, hidden), act_dtype),
        jax.ShapeDtypeStruct((4, hidden), jnp.float32),
    )
    out_specs = (
        pl.BlockSpec((1, tb, hidden), lambda g: (g, 0, 0)),
        pl.BlockSpec((1, tb, hidden), lambda g, _nb=nb: (_nb - 1 - g, 0, 0)),
        pl.BlockSpec((4, hidden), lambda g: (0, 0)),
    )
    scratch = [
        pltpu.VMEM((batch, hidden), jnp.float32),   # forward hidden state
        pltpu.VMEM((batch, hidden), jnp.float32),   # backward hidden state
    ]
    compiler_kwargs = dict(dimension_semantics=("arbitrary",))  # sequential
    if vmem_limit_bytes is not None:
        compiler_kwargs["vmem_limit_bytes"] = int(vmem_limit_bytes)

    return pl.pallas_call(
        _make_bidir_kernel(n_chunks, time_block, batch_valid),
        out_shape=out_shape,
        grid_spec=pltpu.PrefetchScalarGridSpec(
            num_scalar_prefetch=0,
            grid=(nb,),
            in_specs=in_specs,
            out_specs=out_specs,
            scratch_shapes=scratch,
        ),
        compiler_params=pltpu.CompilerParams(**compiler_kwargs),
    )(*chunks, *chunks, *w_f_list, *w_b_list, b_f, b_b, u_f, u_b)


# ----------------------------------------------------------------------------
# Parameter construction (deterministic; mirrors Net.__init__ shapes).
# ----------------------------------------------------------------------------
def init_params(key, input_size, hidden_size, n_layer=2):
    layers = []
    in_size = input_size
    for layer_idx in range(n_layer):
        key, kwf, kwb, kuf = jax.random.split(key, 4)
        w_f = 0.1 * jax.random.normal(kwf, (in_size, hidden_size), jnp.float32)
        w_b = 0.1 * jax.random.normal(kwb, (in_size, hidden_size), jnp.float32)
        if layer_idx == 0:
            # recurrent_inits[0]: uniform(-RECURRENT_MAX, RECURRENT_MAX)
            u_f = jax.random.uniform(kuf, (1, hidden_size), jnp.float32,
                                     -RECURRENT_MAX, RECURRENT_MAX)
            u_b = jax.random.uniform(jax.random.fold_in(kuf, 1),
                                     (1, hidden_size), jnp.float32,
                                     -RECURRENT_MAX, RECURRENT_MAX)
        else:
            # recurrent_inits[>=1]: constant 1
            u_f = jnp.ones((1, hidden_size), jnp.float32)
            u_b = jnp.ones((1, hidden_size), jnp.float32)
        layers.append(dict(
            w_f=w_f, b_f=jnp.zeros((1, hidden_size), jnp.float32), u_f=u_f,
            w_b=w_b, b_b=jnp.zeros((1, hidden_size), jnp.float32), u_b=u_b,
        ))
        in_size = 2 * hidden_size  # bidirectional concat feeds next layer

    key, kfc = jax.random.split(key)
    fc_w = 0.01 * jax.random.normal(kfc, (2 * hidden_size, IRNN_CLASSES),
                                    jnp.float32)   # fc.weight.normal_(0, 0.01)
    fc_b = jnp.full((IRNN_CLASSES,), 0.1, jnp.float32)  # fc.bias.fill_(0.1)
    # NOTE: `self.lin` in the PyTorch module is never used in forward(); omitted.
    return dict(layers=layers, fc_w=fc_w, fc_b=fc_b)


# ----------------------------------------------------------------------------
# Full forward pass.
# ----------------------------------------------------------------------------
def net_forward(params, x_btd, *, batch_norm=True, time_block=None,
                act_dtype=jnp.bfloat16, matmul_dtype=jnp.bfloat16):
    """x_btd: (B, T, input_size) -> logits (B, IRNN_CLASSES).

    On v5e prefer act_dtype=matmul_dtype=jnp.float32 (no bf16 VALU there).
    """
    hidden_true = params["layers"][0]["w_f"].shape[1]
    hidden = _round_up(hidden_true, 128)      # lane-dense hidden dimension
    eps = 1e-5

    b_true, t_len, in_size = x_btd.shape
    # Sublane alignment of the per-timestep (batch, hidden) tiles: 16 rows when
    # activations are stored packed (bf16), 8 for f32.
    b_mult = 16 if jnp.dtype(act_dtype).itemsize < 4 else 8
    b_pad = _round_up(b_true, b_mult)
    if b_pad != b_true:
        x_btd = jnp.pad(x_btd, ((0, b_pad - b_true), (0, 0), (0, 0)))

    x = jnp.transpose(x_btd, (1, 0, 2)).astype(jnp.float32)   # (T, B, I)
    if time_block is None:
        time_block = _choose_time_block(t_len, b_pad)
    assert t_len % time_block == 0, "T must be divisible by time_block"
    nb = t_len // time_block
    tb = time_block * b_pad

    # Blocked time-major layout (NB, TT*B, D): contiguous reshape (no copy),
    # pre-cast once to the MXU dtype (feedback: don't cast per grid step).
    chunks = [x.reshape(nb, tb, in_size).astype(matmul_dtype)]
    chunk_dims_true = [in_size]
    chunk_mean = [None]
    chunk_inv = [None]

    for layer in params["layers"]:
        # Recurrent weights clamped to |u| <= RECURRENT_MAX (hidden_max_abs).
        u_f = _pad_cols(jnp.clip(layer["u_f"], -RECURRENT_MAX, RECURRENT_MAX),
                        hidden)
        u_b = _pad_cols(jnp.clip(layer["u_b"], -RECURRENT_MAX, RECURRENT_MAX),
                        hidden)
        b_f = _pad_cols(layer["b_f"], hidden)
        b_b = _pad_cols(layer["b_b"], hidden)

        # Split the (D_in, H) input weights per chunk, pad rows/cols so padded
        # hidden features stay exactly zero, and fold the previous layer's
        # BatchNorm (purely affine) into weights + bias:
        #   y_norm @ W == y @ (inv_std[:, None] * W) - (mean * inv_std) @ W
        w_f_list, w_b_list = [], []
        off = 0
        for c, d_true, m, s in zip(chunks, chunk_dims_true,
                                   chunk_mean, chunk_inv):
            d_pad = c.shape[2]
            wf = _pad_rows(_pad_cols(layer["w_f"][off:off + d_true], hidden),
                           d_pad)
            wb = _pad_rows(_pad_cols(layer["w_b"][off:off + d_true], hidden),
                           d_pad)
            if s is not None:
                b_f = b_f - (m * s) @ wf
                b_b = b_b - (m * s) @ wb
                wf = s[:, None] * wf
                wb = s[:, None] * wb
            w_f_list.append(wf)
            w_b_list.append(wb)
            off += d_true

        # Raise the scoped-VMEM limit only if the tile budget needs it.
        est = _vmem_bytes_estimate(
            tb, [c.shape[2] for c in chunks], hidden,
            jnp.dtype(chunks[0].dtype).itemsize,
            jnp.dtype(act_dtype).itemsize,
            jnp.dtype(matmul_dtype).itemsize)
        vmem_limit = None
        if est > (28 << 20):
            # TODO(synk): on v7x (64 MiB physical VMEM) prefer shrinking
            # time_block instead of raising the limit much past ~48 MiB.
            vmem_limit = min(est * 5 // 4, 100 << 20)

        y_f, y_b, stats = bidir_indrnn_layer(
            chunks, w_f_list, w_b_list, b_f, b_b, u_f, u_b,
            time_block=time_block, batch_valid=b_true,
            act_dtype=act_dtype, matmul_dtype=matmul_dtype,
            vmem_limit_bytes=vmem_limit)

        if batch_norm:
            n = jnp.float32(t_len * b_true)
            mean_f, mean_b = stats[0] / n, stats[1] / n
            var_f = jnp.maximum(stats[2] / n - mean_f * mean_f, 0.0)
            var_b = jnp.maximum(stats[3] / n - mean_b * mean_b, 0.0)
            chunk_mean = [mean_f, mean_b]
            chunk_inv = [jax.lax.rsqrt(var_f + eps), jax.lax.rsqrt(var_b + eps)]
        else:
            chunk_mean = [None, None]
            chunk_inv = [None, None]
        chunks = [y_f, y_b]
        chunk_dims_true = [hidden_true, hidden_true]

    # Classifier on y[:, -1, :]; the last layer's BatchNorm is folded into the
    # fc weights.  (B, 2H) @ (2H, 2) is too small to be worth its own
    # pallas_call -> plain XLA dot.
    lo = (time_block - 1) * b_pad
    y_last_f = chunks[0][nb - 1, lo:lo + b_pad, :].astype(jnp.float32)
    y_last_b = chunks[1][nb - 1, lo:lo + b_pad, :].astype(jnp.float32)
    wf = _pad_rows(params["fc_w"][:hidden_true], hidden)
    wb = _pad_rows(params["fc_w"][hidden_true:], hidden)
    bias = params["fc_b"]
    if chunk_inv[0] is not None:
        bias = (bias - (chunk_mean[0] * chunk_inv[0]) @ wf
                     - (chunk_mean[1] * chunk_inv[1]) @ wb)
        wf = chunk_inv[0][:, None] * wf
        wb = chunk_inv[1][:, None] * wb
    logits = y_last_f @ wf + y_last_b @ wb + bias
    return logits[:b_true]


if __name__ == "__main__":
    # Small but layout-friendly demo shapes: hidden lane-dense (128), batch a
    # multiple of 16 (bf16 activations), T = time_steps from the spec.
    B, T, INPUT_SIZE, HIDDEN = 16, TIME_STEPS, 16, 128

    key = jax.random.PRNGKey(0)
    key, kx = jax.random.split(key)
    x = jax.random.normal(kx, (B, T, INPUT_SIZE), jnp.float32)
    params = init_params(key, INPUT_SIZE, HIDDEN, n_layer=2)

    fwd = jax.jit(functools.partial(net_forward))
    out = jax.block_until_ready(fwd(params, x))
    assert out.shape == (B, IRNN_CLASSES), out.shape
    assert jnp.all(jnp.isfinite(out))
    print("KERNEL_OK")
</pallas_src>

<mosaic_0001>
module attributes {stable_mosaic.version = 11 : i64} {
  func.func @kernel(%arg0: i32, %arg1: memref<1x400x16xbf16, #tpu.memory_space<vmem>>, %arg2: memref<1x400x16xbf16, #tpu.memory_space<vmem>>, %arg3: memref<16x128xbf16, #tpu.memory_space<vmem>>, %arg4: memref<16x128xbf16, #tpu.memory_space<vmem>>, %arg5: memref<1x128xf32, #tpu.memory_space<vmem>>, %arg6: memref<1x128xf32, #tpu.memory_space<vmem>>, %arg7: memref<1x128xf32, #tpu.memory_space<vmem>>, %arg8: memref<1x128xf32, #tpu.memory_space<vmem>>, %arg9: memref<1x400x128xbf16, #tpu.memory_space<vmem>>, %arg10: memref<1x400x128xbf16, #tpu.memory_space<vmem>>, %arg11: memref<4x128xf32, #tpu.memory_space<vmem>>, %arg12: memref<16x128xf32, #tpu.memory_space<vmem>>, %arg13: memref<16x128xf32, #tpu.memory_space<vmem>>) attributes {dimension_semantics = [#tpu.dimension_semantics<arbitrary>], iteration_bounds = array<i64: 4>, scalar_prefetch = 0 : i64, scratch_operands = 2 : i64, tpu.core_type = #tpu.core_type<tc>, window_params = [{transform_indices = @transform_0, window_bounds = array<i64: 1, 400, 16>}, {transform_indices = @transform_1, window_bounds = array<i64: 1, 400, 16>}, {pipeline_mode = #tpu.pipeline_mode<synchronous>, transform_indices = @transform_2, window_bounds = array<i64: 16, 128>}, {pipeline_mode = #tpu.pipeline_mode<synchronous>, transform_indices = @transform_3, window_bounds = array<i64: 16, 128>}, {pipeline_mode = #tpu.pipeline_mode<synchronous>, transform_indices = @transform_4, window_bounds = array<i64: 1, 128>}, {pipeline_mode = #tpu.pipeline_mode<synchronous>, transform_indices = @transform_5, window_bounds = array<i64: 1, 128>}, {pipeline_mode = #tpu.pipeline_mode<synchronous>, transform_indices = @transform_6, window_bounds = array<i64: 1, 128>}, {pipeline_mode = #tpu.pipeline_mode<synchronous>, transform_indices = @transform_7, window_bounds = array<i64: 1, 128>}, {transform_indices = @transform_8, window_bounds = array<i64: 1, 400, 128>}, {transform_indices = @transform_9, window_bounds = array<i64: 1, 400, 128>}, {pipeline_mode = #tpu.pipeline_mode<synchronous>, transform_indices = @transform_10, window_bounds = array<i64: 4, 128>}]} {
    %c0_i32 = arith.constant 0 : i32
    %0 = arith.cmpi eq, %arg0, %c0_i32 : i32
    %1 = arith.extui %0 : i1 to i32
    %c0_i32_0 = arith.constant 0 : i32
    %2 = arith.cmpi ne, %1, %c0_i32_0 : i32
    scf.if %2 {
      %cst_215 = arith.constant 0.000000e+00 : f32
      %689 = vector.broadcast %cst_215 : f32 to vector<16x128xf32>
      %c0_216 = arith.constant 0 : index
      %c0_217 = arith.constant 0 : index
      %690 = vector.load %arg12[%c0_216, %c0_217] : memref<16x128xf32, #tpu.memory_space<vmem>>, vector<16x128xf32>
      tpu.vector_store %arg12[%c0_216, %c0_217], %689 {strides = array<i32>} : memref<16x128xf32, #tpu.memory_space<vmem>>, vector<16x128xf32>,
      %cst_218 = arith.constant 0.000000e+00 : f32
      %691 = vector.broadcast %cst_218 : f32 to vector<16x128xf32>
      %c0_219 = arith.constant 0 : index
      %c0_220 = arith.constant 0 : index
      %692 = vector.load %arg13[%c0_219, %c0_220] : memref<16x128xf32, #tpu.memory_space<vmem>>, vector<16x128xf32>
      tpu.vector_store %arg13[%c0_219, %c0_220], %691 {strides = array<i32>} : memref<16x128xf32, #tpu.memory_space<vmem>>, vector<16x128xf32>,
      %cst_221 = arith.constant 0.000000e+00 : f32
      %693 = vector.broadcast %cst_221 : f32 to vector<4x128xf32>
      %c0_222 = arith.constant 0 : index
      %c0_223 = arith.constant 0 : index
      %694 = vector.load %arg11[%c0_222, %c0_223] : memref<4x128xf32, #tpu.memory_space<vmem>>, vector<4x128xf32>
      tpu.vector_store %arg11[%c0_222, %c0_223], %693 {strides = array<i32>} : memref<4x128xf32, #tpu.memory_space<vmem>>, vector<4x128xf32>,
    } else {
    }
    %c0 = arith.constant 0 : index
    %c0_1 = arith.constant 0 : index
    %3 = vector.load %arg3[%c0, %c0_1] : memref<16x128xbf16, #tpu.memory_space<vmem>>, vector<16x128xbf16>
    %c0_2 = arith.constant 0 : index
    %c0_3 = arith.constant 0 : index
    %4 = vector.load %arg4[%c0_2, %c0_3] : memref<16x128xbf16, #tpu.memory_space<vmem>>, vector<16x128xbf16>
    %c0_4 = arith.constant 0 : index
    %c0_5 = arith.constant 0 : index
    %c0_6 = arith.constant 0 : index
    %5 = vector.load %arg1[%c0_4, %c0_5, %c0_6] : memref<1x400x16xbf16, #tpu.memory_space<vmem>>, vector<1x400x16xbf16>
    %6 = vector.shape_cast %5 : vector<1x400x16xbf16> to vector<400x16xbf16>
    %c0_7 = arith.constant 0 : index
    %c0_8 = arith.constant 0 : index
    %c0_9 = arith.constant 0 : index
    %7 = vector.load %arg2[%c0_7, %c0_8, %c0_9] : memref<1x400x16xbf16, #tpu.memory_space<vmem>>, vector<1x400x16xbf16>
    %8 = vector.shape_cast %7 : vector<1x400x16xbf16> to vector<400x16xbf16>
    %cst = arith.constant dense<0.000000e+00> : vector<400x128xf32>
    %9 = tpu.matmul %6, %3, %cst {dimension_numbers = #tpu.dot_dimension_numbers<[1], [0], [0], [1], [0, 0, 1, 1], [], []>} : vector<400x16xbf16>, vector<16x128xbf16>, vector<400x128xf32> -> vector<400x128xf32>
    %cst_10 = arith.constant dense<0.000000e+00> : vector<400x128xf32>
    %10 = tpu.matmul %8, %4, %cst_10 {dimension_numbers = #tpu.dot_dimension_numbers<[1], [0], [0], [1], [0, 0, 1, 1], [], []>} : vector<400x16xbf16>, vector<16x128xbf16>, vector<400x128xf32> -> vector<400x128xf32>
    %c0_11 = arith.constant 0 : index
    %c0_12 = arith.constant 0 : index
    %11 = vector.load %arg5[%c0_11, %c0_12] : memref<1x128xf32, #tpu.memory_space<vmem>>, vector<1x128xf32>
    %12 = vector.broadcast %11 : vector<1x128xf32> to vector<400x128xf32>
    %13 = arith.addf %9, %12 : vector<400x128xf32>
    %c0_13 = arith.constant 0 : index
    %c0_14 = arith.constant 0 : index
    %14 = vector.load %arg6[%c0_13, %c0_14] : memref<1x128xf32, #tpu.memory_space<vmem>>, vector<1x128xf32>
    %15 = vector.broadcast %14 : vector<1x128xf32> to vector<400x128xf32>
    %16 = arith.addf %10, %15 : vector<400x128xf32>
    %c0_15 = arith.constant 0 : index
    %c0_16 = arith.constant 0 : index
    %17 = vector.load %arg7[%c0_15, %c0_16] : memref<1x128xf32, #tpu.memory_space<vmem>>, vector<1x128xf32>
    %c0_17 = arith.constant 0 : index
    %c0_18 = arith.constant 0 : index
    %18 = vector.load %arg8[%c0_17, %c0_18] : memref<1x128xf32, #tpu.memory_space<vmem>>, vector<1x128xf32>
    %c0_19 = arith.constant 0 : index
    %c0_20 = arith.constant 0 : index
    %19 = vector.load %arg12[%c0_19, %c0_20] : memref<16x128xf32, #tpu.memory_space<vmem>>, vector<16x128xf32>
    %c0_21 = arith.constant 0 : index
    %c0_22 = arith.constant 0 : index
    %20 = vector.load %arg13[%c0_21, %c0_22] : memref<16x128xf32, #tpu.memory_space<vmem>>, vector<16x128xf32>
    %cst_23 = arith.constant 0.000000e+00 : f32
    %21 = vector.broadcast %cst_23 : f32 to vector<16x128xf32>
    %cst_24 = arith.constant 0.000000e+00 : f32
    %22 = vector.broadcast %cst_24 : f32 to vector<16x128xf32>
    %cst_25 = arith.constant 0.000000e+00 : f32
    %23 = vector.broadcast %cst_25 : f32 to vector<16x128xf32>
    %cst_26 = arith.constant 0.000000e+00 : f32
    %24 = vector.broadcast %cst_26 : f32 to vector<16x128xf32>
    %25 = vector.extract_strided_slice %13 {offsets = [0, 0], sizes = [16, 128], strides = [1, 1]} : vector<400x128xf32> to vector<16x128xf32>
    %26 = vector.broadcast %17 : vector<1x128xf32> to vector<16x128xf32>
    %27 = arith.mulf %26, %19 : vector<16x128xf32>
    %28 = arith.addf %25, %27 : vector<16x128xf32>
    %cst_27 = arith.constant 0.000000e+00 : f32
    %29 = vector.broadcast %cst_27 : f32 to vector<16x128xf32>
    %30 = arith.maximumf %28, %29 : vector<16x128xf32>
    %31 = vector.extract_strided_slice %16 {offsets = [384, 0], sizes = [16, 128], strides = [1, 1]} : vector<400x128xf32> to vector<16x128xf32>
    %32 = vector.broadcast %18 : vector<1x128xf32> to vector<16x128xf32>
    %33 = arith.mulf %32, %20 : vector<16x128xf32>
    %34 = arith.addf %31, %33 : vector<16x128xf32>
    %cst_28 = arith.constant 0.000000e+00 : f32
    %35 = vector.broadcast %cst_28 : f32 to vector<16x128xf32>
    %36 = arith.maximumf %34, %35 : vector<16x128xf32>
    %37 = arith.truncf %30 : vector<16x128xf32> to vector<16x128xbf16>
    %c0_29 = arith.constant 0 : index
    %c0_30 = arith.constant 0 : index
    %c0_31 = arith.constant 0 : index
    %38 = vector.load %arg9[%c0_29, %c0_30, %c0_31] : memref<1x400x128xbf16, #tpu.memory_space<vmem>>, vector<1x16x128xbf16>
    %39 = vector.shape_cast %38 : vector<1x16x128xbf16> to vector<16x128xbf16>
    %40 = vector.shape_cast %37 : vector<16x128xbf16> to vector<1x16x128xbf16>
    tpu.vector_store %arg9[%c0_29, %c0_30, %c0_31], %40 {strides = array<i32>} : memref<1x400x128xbf16, #tpu.memory_space<vmem>>, vector<1x16x128xbf16>,
    %41 = arith.truncf %36 : vector<16x128xf32> to vector<16x128xbf16>
    %c0_32 = arith.constant 0 : index
    %c384 = arith.constant 384 : index
    %c0_33 = arith.constant 0 : index
    %42 = vector.load %arg10[%c0_32, %c384, %c0_33] : memref<1x400x128xbf16, #tpu.memory_space<vmem>>, vector<1x16x128xbf16>
    %43 = vector.shape_cast %42 : vector<1x16x128xbf16> to vector<16x128xbf16>
    %44 = vector.shape_cast %41 : vector<16x128xbf16> to vector<1x16x128xbf16>
    tpu.vector_store %arg10[%c0_32, %c384, %c0_33], %44 {strides = array<i32>} : memref<1x400x128xbf16, #tpu.memory_space<vmem>>, vector<1x16x128xbf16>,
    %45 = arith.addf %21, %30 : vector<16x128xf32>
    %46 = arith.addf %22, %36 : vector<16x128xf32>
    %47 = arith.mulf %30, %30 : vector<16x128xf32>
    %48 = arith.addf %23, %47 : vector<16x128xf32>
    %49 = arith.mulf %36, %36 : vector<16x128xf32>
    %50 = arith.addf %24, %49 : vector<16x128xf32>
    %51 = vector.extract_strided_slice %13 {offsets = [16, 0], sizes = [16, 128], strides = [1, 1]} : vector<400x128xf32> to vector<16x128xf32>
    %52 = vector.broadcast %17 : vector<1x128xf32> to vector<16x128xf32>
    %53 = arith.mulf %52, %30 : vector<16x128xf32>
    %54 = arith.addf %51, %53 : vector<16x128xf32>
    %cst_34 = arith.constant 0.000000e+00 : f32
    %55 = vector.broadcast %cst_34 : f32 to vector<16x128xf32>
    %56 = arith.maximumf %54, %55 : vector<16x128xf32>
    %57 = vector.extract_strided_slice %16 {offsets = [368, 0], sizes = [16, 128], strides = [1, 1]} : vector<400x128xf32> to vector<16x128xf32>
    %58 = vector.broadcast %18 : vector<1x128xf32> to vector<16x128xf32>
    %59 = arith.mulf %58, %36 : vector<16x128xf32>
    %60 = arith.addf %57, %59 : vector<16x128xf32>
    %cst_35 = arith.constant 0.000000e+00 : f32
    %61 = vector.broadcast %cst_35 : f32 to vector<16x128xf32>
    %62 = arith.maximumf %60, %61 : vector<16x128xf32>
    %63 = arith.truncf %56 : vector<16x128xf32> to vector<16x128xbf16>
    %c0_36 = arith.constant 0 : index
    %c16 = arith.constant 16 : index
    %c0_37 = arith.constant 0 : index
    %64 = vector.load %arg9[%c0_36, %c16, %c0_37] : memref<1x400x128xbf16, #tpu.memory_space<vmem>>, vector<1x16x128xbf16>
    %65 = vector.shape_cast %64 : vector<1x16x128xbf16> to vector<16x128xbf16>
    %66 = vector.shape_cast %63 : vector<16x128xbf16> to vector<1x16x128xbf16>
    tpu.vector_store %arg9[%c0_36, %c16, %c0_37], %66 {strides = array<i32>} : memref<1x400x128xbf16, #tpu.memory_space<vmem>>, vector<1x16x128xbf16>,
    %67 = arith.truncf %62 : vector<16x128xf32> to vector<16x128xbf16>
    %c0_38 = arith.constant 0 : index
    %c368 = arith.constant 368 : index
    %c0_39 = arith.constant 0 : index
    %68 = vector.load %arg10[%c0_38, %c368, %c0_39] : memref<1x400x128xbf16, #tpu.memory_space<vmem>>, vector<1x16x128xbf16>
    %69 = vector.shape_cast %68 : vector<1x16x128xbf16> to vector<16x128xbf16>
    %70 = vector.shape_cast %67 : vector<16x128xbf16> to vector<1x16x128xbf16>
    tpu.vector_store %arg10[%c0_38, %c368, %c0_39], %70 {strides = array<i32>} : memref<1x400x128xbf16, #tpu.memory_space<vmem>>, vector<1x16x128xbf16>,
    %71 = arith.addf %45, %56 : vector<16x128xf32>
    %72 = arith.addf %46, %62 : vector<16x128xf32>
    %73 = arith.mulf %56, %56 : vector<16x128xf32>
    %74 = arith.addf %48, %73 : vector<16x128xf32>
    %75 = arith.mulf %62, %62 : vector<16x128xf32>
    %76 = arith.addf %50, %75 : vector<16x128xf32>
    %77 = vector.extract_strided_slice %13 {offsets = [32, 0], sizes = [16, 128], strides = [1, 1]} : vector<400x128xf32> to vector<16x128xf32>
    %78 = vector.broadcast %17 : vector<1x128xf32> to vector<16x128xf32>
    %79 = arith.mulf %78, %56 : vector<16x128xf32>
    %80 = arith.addf %77, %79 : vector<16x128xf32>
    %cst_40 = arith.constant 0.000000e+00 : f32
    %81 = vector.broadcast %cst_40 : f32 to vector<16x128xf32>
    %82 = arith.maximumf %80, %81 : vector<16x128xf32>
    %83 = vector.extract_strided_slice %16 {offsets = [352, 0], sizes = [16, 128], strides = [1, 1]} : vector<400x128xf32> to vector<16x128xf32>
    %84 = vector.broadcast %18 : vector<1x128xf32> to vector<16x128xf32>
    %85 = arith.mulf %84, %62 : vector<16x128xf32>
    %86 = arith.addf %83, %85 : vector<16x128xf32>
    %cst_41 = arith.constant 0.000000e+00 : f32
    %87 = vector.broadcast %cst_41 : f32 to vector<16x128xf32>
    %88 = arith.maximumf %86, %87 : vector<16x128xf32>
    %89 = arith.truncf %82 : vector<16x128xf32> to vector<16x128xbf16>
    %c0_42 = arith.constant 0 : index
    %c32 = arith.constant 32 : index
    %c0_43 = arith.constant 0 : index
    %90 = vector.load %arg9[%c0_42, %c32, %c0_43] : memref<1x400x128xbf16, #tpu.memory_space<vmem>>, vector<1x16x128xbf16>
    %91 = vector.shape_cast %90 : vector<1x16x128xbf16> to vector<16x128xbf16>
    %92 = vector.shape_cast %89 : vector<16x128xbf16> to vector<1x16x128xbf16>
    tpu.vector_store %arg9[%c0_42, %c32, %c0_43], %92 {strides = array<i32>} : memref<1x400x128xbf16, #tpu.memory_space<vmem>>, vector<1x16x128xbf16>,
    %93 = arith.truncf %88 : vector<16x128xf32> to vector<16x128xbf16>
    %c0_44 = arith.constant 0 : index
    %c352 = arith.constant 352 : index
    %c0_45 = arith.constant 0 : index
    %94 = vector.load %arg10[%c0_44, %c352, %c0_45] : memref<1x400x128xbf16, #tpu.memory_space<vmem>>, vector<1x16x128xbf16>
    %95 = vector.shape_cast %94 : vector<1x16x128xbf16> to vector<16x128xbf16>
    %96 = vector.shape_cast %93 : vector<16x128xbf16> to vector<1x16x128xbf16>
    tpu.vector_store %arg10[%c0_44, %c352, %c0_45], %96 {strides = array<i32>} : memref<1x400x128xbf16, #tpu.memory_space<vmem>>, vector<1x16x128xbf16>,
    %97 = arith.addf %71, %82 : vector<16x128xf32>
    %98 = arith.addf %72, %88 : vector<16x128xf32>
    %99 = arith.mulf %82, %82 : vector<16x128xf32>
    %100 = arith.addf %74, %99 : vector<16x128xf32>
    %101 = arith.mulf %88, %88 : vector<16x128xf32>
    %102 = arith.addf %76, %101 : vector<16x128xf32>
    %103 = vector.extract_strided_slice %13 {offsets = [48, 0], sizes = [16, 128], strides = [1, 1]} : vector<400x128xf32> to vector<16x128xf32>
    %104 = vector.broadcast %17 : vector<1x128xf32> to vector<16x128xf32>
    %105 = arith.mulf %104, %82 : vector<16x128xf32>
    %106 = arith.addf %103, %105 : vector<16x128xf32>
    %cst_46 = arith.constant 0.000000e+00 : f32
    %107 = vector.broadcast %cst_46 : f32 to vector<16x128xf32>
    %108 = arith.maximumf %106, %107 : vector<16x128xf32>
    %109 = vector.extract_strided_slice %16 {offsets = [336, 0], sizes = [16, 128], strides = [1, 1]} : vector<400x128xf32> to vector<16x128xf32>
    %110 = vector.broadcast %18 : vector<1x128xf32> to vector<16x128xf32>
    %111 = arith.mulf %110, %88 : vector<16x128xf32>
    %112 = arith.addf %109, %111 : vector<16x128xf32>
    %cst_47 = arith.constant 0.000000e+00 : f32
    %113 = vector.broadcast %cst_47 : f32 to vector<16x128xf32>
    %114 = arith.maximumf %112, %113 : vector<16x128xf32>
    %115 = arith.truncf %108 : vector<16x128xf32> to vector<16x128xbf16>
    %c0_48 = arith.constant 0 : index
    %c48 = arith.constant 48 : index
    %c0_49 = arith.constant 0 : index
    %116 = vector.load %arg9[%c0_48, %c48, %c0_49] : memref<1x400x128xbf16, #tpu.memory_space<vmem>>, vector<1x16x128xbf16>
    %117 = vector.shape_cast %116 : vector<1x16x128xbf16> to vector<16x128xbf16>
    %118 = vector.shape_cast %115 : vector<16x128xbf16> to vector<1x16x128xbf16>
    tpu.vector_store %arg9[%c0_48, %c48, %c0_49], %118 {strides = array<i32>} : memref<1x400x128xbf16, #tpu.memory_space<vmem>>, vector<1x16x128xbf16>,
    %119 = arith.truncf %114 : vector<16x128xf32> to vector<16x128xbf16>
    %c0_50 = arith.constant 0 : index
    %c336 = arith.constant 336 : index
    %c0_51 = arith.constant 0 : index
    %120 = vector.load %arg10[%c0_50, %c336, %c0_51] : memref<1x400x128xbf16, #tpu.memory_space<vmem>>, vector<1x16x128xbf16>
    %121 = vector.shape_cast %120 : vector<1x16x128xbf16> to vector<16x128xbf16>
    %122 = vector.shape_cast %119 : vector<16x128xbf16> to vector<1x16x128xbf16>
    tpu.vector_store %arg10[%c0_50, %c336, %c0_51], %122 {strides = array<i32>} : memref<1x400x128xbf16, #tpu.memory_space<vmem>>, vector<1x16x128xbf16>,
    %123 = arith.addf %97, %108 : vector<16x128xf32>
    %124 = arith.addf %98, %114 : vector<16x128xf32>
    %125 = arith.mulf %108, %108 : vector<16x128xf32>
    %126 = arith.addf %100, %125 : vector<16x128xf32>
    %127 = arith.mulf %114, %114 : vector<16x128xf32>
    %128 = arith.addf %102, %127 : vector<16x128xf32>
    %129 = vector.extract_strided_slice %13 {offsets = [64, 0], sizes = [16, 128], strides = [1, 1]} : vector<400x128xf32> to vector<16x128xf32>
    %130 = vector.broadcast %17 : vector<1x128xf32> to vector<16x128xf32>
    %131 = arith.mulf %130, %108 : vector<16x128xf32>
    %132 = arith.addf %129, %131 : vector<16x128xf32>
    %cst_52 = arith.constant 0.000000e+00 : f32
    %133 = vector.broadcast %cst_52 : f32 to vector<16x128xf32>
    %134 = arith.maximumf %132, %133 : vector<16x128xf32>
    %135 = vector.extract_strided_slice %16 {offsets = [320, 0], sizes = [16, 128], strides = [1, 1]} : vector<400x128xf32> to vector<16x128xf32>
    %136 = vector.broadcast %18 : vector<1x128xf32> to vector<16x128xf32>
    %137 = arith.mulf %136, %114 : vector<16x128xf32>
    %138 = arith.addf %135, %137 : vector<16x128xf32>
    %cst_53 = arith.constant 0.000000e+00 : f32
    %139 = vector.broadcast %cst_53 : f32 to vector<16x128xf32>
    %140 = arith.maximumf %138, %139 : vector<16x128xf32>
    %141 = arith.truncf %134 : vector<16x128xf32> to vector<16x128xbf16>
    %c0_54 = arith.constant 0 : index
    %c64 = arith.constant 64 : index
    %c0_55 = arith.constant 0 : index
    %142 = vector.load %arg9[%c0_54, %c64, %c0_55] : memref<1x400x128xbf16, #tpu.memory_space<vmem>>, vector<1x16x128xbf16>
    %143 = vector.shape_cast %142 : vector<1x16x128xbf16> to vector<16x128xbf16>
    %144 = vector.shape_cast %141 : vector<16x128xbf16> to vector<1x16x128xbf16>
    tpu.vector_store %arg9[%c0_54, %c64, %c0_55], %144 {strides = array<i32>} : memref<1x400x128xbf16, #tpu.memory_space<vmem>>, vector<1x16x128xbf16>,
    %145 = arith.truncf %140 : vector<16x128xf32> to vector<16x128xbf16>
    %c0_56 = arith.constant 0 : index
    %c320 = arith.constant 320 : index
    %c0_57 = arith.constant 0 : index
    %146 = vector.load %arg10[%c0_56, %c320, %c0_57] : memref<1x400x128xbf16, #tpu.memory_space<vmem>>, vector<1x16x128xbf16>
    %147 = vector.shape_cast %146 : vector<1x16x128xbf16> to vector<16x128xbf16>
    %148 = vector.shape_cast %145 : vector<16x128xbf16> to vector<1x16x128xbf16>
    tpu.vector_store %arg10[%c0_56, %c320, %c0_57], %148 {strides = array<i32>} : memref<1x400x128xbf16, #tpu.memory_space<vmem>>, vector<1x16x128xbf16>,
    %149 = arith.addf %123, %134 : vector<16x128xf32>
    %150 = arith.addf %124, %140 : vector<16x128xf32>
    %151 = arith.mulf %134, %134 : vector<16x128xf32>
    %152 = arith.addf %126, %151 : vector<16x128xf32>
    %153 = arith.mulf %140, %140 : vector<16x128xf32>
    %154 = arith.addf %128, %153 : vector<16x128xf32>
    %155 = vector.extract_strided_slice %13 {offsets = [80, 0], sizes = [16, 128], strides = [1, 1]} : vector<400x128xf32> to vector<16x128xf32>
    %156 = vector.broadcast %17 : vector<1x128xf32> to vector<16x128xf32>
    %157 = arith.mulf %156, %134 : vector<16x128xf32>
    %158 = arith.addf %155, %157 : vector<16x128xf32>
    %cst_58 = arith.constant 0.000000e+00 : f32
    %159 = vector.broadcast %cst_58 : f32 to vector<16x128xf32>
    %160 = arith.maximumf %158, %159 : vector<16x128xf32>
    %161 = vector.extract_strided_slice %16 {offsets = [304, 0], sizes = [16, 128], strides = [1, 1]} : vector<400x128xf32> to vector<16x128xf32>
    %162 = vector.broadcast %18 : vector<1x128xf32> to vector<16x128xf32>
    %163 = arith.mulf %162, %140 : vector<16x128xf32>
    %164 = arith.addf %161, %163 : vector<16x128xf32>
    %cst_59 = arith.constant 0.000000e+00 : f32
    %165 = vector.broadcast %cst_59 : f32 to vector<16x128xf32>
    %166 = arith.maximumf %164, %165 : vector<16x128xf32>
    %167 = arith.truncf %160 : vector<16x128xf32> to vector<16x128xbf16>
    %c0_60 = arith.constant 0 : index
    %c80 = arith.constant 80 : index
    %c0_61 = arith.constant 0 : index
    %168 = vector.load %arg9[%c0_60, %c80, %c0_61] : memref<1x400x128xbf16, #tpu.memory_space<vmem>>, vector<1x16x128xbf16>
    %169 = vector.shape_cast %168 : vector<1x16x128xbf16> to vector<16x128xbf16>
    %170 = vector.shape_cast %167 : vector<16x128xbf16> to vector<1x16x128xbf16>
    tpu.vector_store %arg9[%c0_60, %c80, %c0_61], %170 {strides = array<i32>} : memref<1x400x128xbf16, #tpu.memory_space<vmem>>, vector<1x16x128xbf16>,
    %171 = arith.truncf %166 : vector<16x128xf32> to vector<16x128xbf16>
    %c0_62 = arith.constant 0 : index
    %c304 = arith.constant 304 : index
    %c0_63 = arith.constant 0 : index
    %172 = vector.load %arg10[%c0_62, %c304, %c0_63] : memref<1x400x128xbf16, #tpu.memory_space<vmem>>, vector<1x16x128xbf16>
    %173 = vector.shape_cast %172 : vector<1x16x128xbf16> to vector<16x128xbf16>
    %174 = vector.shape_cast %171 : vector<16x128xbf16> to vector<1x16x128xbf16>
    tpu.vector_store %arg10[%c0_62, %c304, %c0_63], %174 {strides = array<i32>} : memref<1x400x128xbf16, #tpu.memory_space<vmem>>, vector<1x16x128xbf16>,
    %175 = arith.addf %149, %160 : vector<16x128xf32>
    %176 = arith.addf %150, %166 : vector<16x128xf32>
    %177 = arith.mulf %160, %160 : vector<16x128xf32>
    %178 = arith.addf %152, %177 : vector<16x128xf32>
    %179 = arith.mulf %166, %166 : vector<16x128xf32>
    %180 = arith.addf %154, %179 : vector<16x128xf32>
    %181 = vector.extract_strided_slice %13 {offsets = [96, 0], sizes = [16, 128], strides = [1, 1]} : vector<400x128xf32> to vector<16x128xf32>
    %182 = vector.broadcast %17 : vector<1x128xf32> to vector<16x128xf32>
    %183 = arith.mulf %182, %160 : vector<16x128xf32>
    %184 = arith.addf %181, %183 : vector<16x128xf32>
    %cst_64 = arith.constant 0.000000e+00 : f32
    %185 = vector.broadcast %cst_64 : f32 to vector<16x128xf32>
    %186 = arith.maximumf %184, %185 : vector<16x128xf32>
    %187 = vector.extract_strided_slice %16 {offsets = [288, 0], sizes = [16, 128], strides = [1, 1]} : vector<400x128xf32> to vector<16x128xf32>
    %188 = vector.broadcast %18 : vector<1x128xf32> to vector<16x128xf32>
    %189 = arith.mulf %188, %166 : vector<16x128xf32>
    %190 = arith.addf %187, %189 : vector<16x128xf32>
    %cst_65 = arith.constant 0.000000e+00 : f32
    %191 = vector.broadcast %cst_65 : f32 to vector<16x128xf32>
    %192 = arith.maximumf %190, %191 : vector<16x128xf32>
    %193 = arith.truncf %186 : vector<16x128xf32> to vector<16x128xbf16>
    %c0_66 = arith.constant 0 : index
    %c96 = arith.constant 96 : index
    %c0_67 = arith.constant 0 : index
    %194 = vector.load %arg9[%c0_66, %c96, %c0_67] : memref<1x400x128xbf16, #tpu.memory_space<vmem>>, vector<1x16x128xbf16>
    %195 = vector.shape_cast %194 : vector<1x16x128xbf16> to vector<16x128xbf16>
    %196 = vector.shape_cast %193 : vector<16x128xbf16> to vector<1x16x128xbf16>
    tpu.vector_store %arg9[%c0_66, %c96, %c0_67], %196 {strides = array<i32>} : memref<1x400x128xbf16, #tpu.memory_space<vmem>>, vector<1x16x128xbf16>,
    %197 = arith.truncf %192 : vector<16x128xf32> to vector<16x128xbf16>
    %c0_68 = arith.constant 0 : index
    %c288 = arith.constant 288 : index
    %c0_69 = arith.constant 0 : index
    %198 = vector.load %arg10[%c0_68, %c288, %c0_69] : memref<1x400x128xbf16, #tpu.memory_space<vmem>>, vector<1x16x128xbf16>
    %199 = vector.shape_cast %198 : vector<1x16x128xbf16> to vector<16x128xbf16>
    %200 = vector.shape_cast %197 : vector<16x128xbf16> to vector<1x16x128xbf16>
    tpu.vector_store %arg10[%c0_68, %c288, %c0_69], %200 {strides = array<i32>} : memref<1x400x128xbf16, #tpu.memory_space<vmem>>, vector<1x16x128xbf16>,
    %201 = arith.addf %175, %186 : vector<16x128xf32>
    %202 = arith.addf %176, %192 : vector<16x128xf32>
    %203 = arith.mulf %186, %186 : vector<16x128xf32>
    %204 = arith.addf %178, %203 : vector<16x128xf32>
    %205 = arith.mulf %192, %192 : vector<16x128xf32>
    %206 = arith.addf %180, %205 : vector<16x128xf32>
    %207 = vector.extract_strided_slice %13 {offsets = [112, 0], sizes = [16, 128], strides = [1, 1]} : vector<400x128xf32> to vector<16x128xf32>
    %208 = vector.broadcast %17 : vector<1x128xf32> to vector<16x128xf32>
    %209 = arith.mulf %208, %186 : vector<16x128xf32>
    %210 = arith.addf %207, %209 : vector<16x128xf32>
    %cst_70 = arith.constant 0.000000e+00 : f32
    %211 = vector.broadcast %cst_70 : f32 to vector<16x128xf32>
    %212 = arith.maximumf %210, %211 : vector<16x128xf32>
    %213 = vector.extract_strided_slice %16 {offsets = [272, 0], sizes = [16, 128], strides = [1, 1]} : vector<400x128xf32> to vector<16x128xf32>
    %214 = vector.broadcast %18 : vector<1x128xf32> to vector<16x128xf32>
    %215 = arith.mulf %214, %192 : vector<16x128xf32>
    %216 = arith.addf %213, %215 : vector<16x128xf32>
    %cst_71 = arith.constant 0.000000e+00 : f32
    %217 = vector.broadcast %cst_71 : f32 to vector<16x128xf32>
    %218 = arith.maximumf %216, %217 : vector<16x128xf32>
    %219 = arith.truncf %212 : vector<16x128xf32> to vector<16x128xbf16>
    %c0_72 = arith.constant 0 : index
    %c112 = arith.constant 112 : index
    %c0_73 = arith.constant 0 : index
    %220 = vector.load %arg9[%c0_72, %c112, %c0_73] : memref<1x400x128xbf16, #tpu.memory_space<vmem>>, vector<1x16x128xbf16>
    %221 = vector.shape_cast %220 : vector<1x16x128xbf16> to vector<16x128xbf16>
    %222 = vector.shape_cast %219 : vector<16x128xbf16> to vector<1x16x128xbf16>
    tpu.vector_store %arg9[%c0_72, %c112, %c0_73], %222 {strides = array<i32>} : memref<1x400x128xbf16, #tpu.memory_space<vmem>>, vector<1x16x128xbf16>,
    %223 = arith.truncf %218 : vector<16x128xf32> to vector<16x128xbf16>
    %c0_74 = arith.constant 0 : index
    %c272 = arith.constant 272 : index
    %c0_75 = arith.constant 0 : index
    %224 = vector.load %arg10[%c0_74, %c272, %c0_75] : memref<1x400x128xbf16, #tpu.memory_space<vmem>>, vector<1x16x128xbf16>
    %225 = vector.shape_cast %224 : vector<1x16x128xbf16> to vector<16x128xbf16>
    %226 = vector.shape_cast %223 : vector<16x128xbf16> to vector<1x16x128xbf16>
    tpu.vector_store %arg10[%c0_74, %c272, %c0_75], %226 {strides = array<i32>} : memref<1x400x128xbf16, #tpu.memory_space<vmem>>, vector<1x16x128xbf16>,
    %227 = arith.addf %201, %212 : vector<16x128xf32>
    %228 = arith.addf %202, %218 : vector<16x128xf32>
    %229 = arith.mulf %212, %212 : vector<16x128xf32>
    %230 = arith.addf %204, %229 : vector<16x128xf32>
    %231 = arith.mulf %218, %218 : vector<16x128xf32>
    %232 = arith.addf %206, %231 : vector<16x128xf32>
    %233 = vector.extract_strided_slice %13 {offsets = [128, 0], sizes = [16, 128], strides = [1, 1]} : vector<400x128xf32> to vector<16x128xf32>
    %234 = vector.broadcast %17 : vector<1x128xf32> to vector<16x128xf32>
    %235 = arith.mulf %234, %212 : vector<16x128xf32>
    %236 = arith.addf %233, %235 : vector<16x128xf32>
    %cst_76 = arith.constant 0.000000e+00 : f32
    %237 = vector.broadcast %cst_76 : f32 to vector<16x128xf32>
    %238 = arith.maximumf %236, %237 : vector<16x128xf32>
    %239 = vector.extract_strided_slice %16 {offsets = [256, 0], sizes = [16, 128], strides = [1, 1]} : vector<400x128xf32> to vector<16x128xf32>
    %240 = vector.broadcast %18 : vector<1x128xf32> to vector<16x128xf32>
    %241 = arith.mulf %240, %218 : vector<16x128xf32>
    %242 = arith.addf %239, %241 : vector<16x128xf32>
    %cst_77 = arith.constant 0.000000e+00 : f32
    %243 = vector.broadcast %cst_77 : f32 to vector<16x128xf32>
    %244 = arith.maximumf %242, %243 : vector<16x128xf32>
    %245 = arith.truncf %238 : vector<16x128xf32> to vector<16x128xbf16>
    %c0_78 = arith.constant 0 : index
    %c128 = arith.constant 128 : index
    %c0_79 = arith.constant 0 : index
    %246 = vector.load %arg9[%c0_78, %c128, %c0_79] : memref<1x400x128xbf16, #tpu.memory_space<vmem>>, vector<1x16x128xbf16>
    %247 = vector.shape_cast %246 : vector<1x16x128xbf16> to vector<16x128xbf16>
    %248 = vector.shape_cast %245 : vector<16x128xbf16> to vector<1x16x128xbf16>
    tpu.vector_store %arg9[%c0_78, %c128, %c0_79], %248 {strides = array<i32>} : memref<1x400x128xbf16, #tpu.memory_space<vmem>>, vector<1x16x128xbf16>,
    %249 = arith.truncf %244 : vector<16x128xf32> to vector<16x128xbf16>
    %c0_80 = arith.constant 0 : index
    %c256 = arith.constant 256 : index
    %c0_81 = arith.constant 0 : index
    %250 = vector.load %arg10[%c0_80, %c256, %c0_81] : memref<1x400x128xbf16, #tpu.memory_space<vmem>>, vector<1x16x128xbf16>
    %251 = vector.shape_cast %250 : vector<1x16x128xbf16> to vector<16x128xbf16>
    %252 = vector.shape_cast %249 : vector<16x128xbf16> to vector<1x16x128xbf16>
    tpu.vector_store %arg10[%c0_80, %c256, %c0_81], %252 {strides = array<i32>} : memref<1x400x128xbf16, #tpu.memory_space<vmem>>, vector<1x16x128xbf16>,
    %253 = arith.addf %227, %238 : vector<16x128xf32>
    %254 = arith.addf %228, %244 : vector<16x128xf32>
    %255 = arith.mulf %238, %238 : vector<16x128xf32>
    %256 = arith.addf %230, %255 : vector<16x128xf32>
    %257 = arith.mulf %244, %244 : vector<16x128xf32>
    %258 = arith.addf %232, %257 : vector<16x128xf32>
    %259 = vector.extract_strided_slice %13 {offsets = [144, 0], sizes = [16, 128], strides = [1, 1]} : vector<400x128xf32> to vector<16x128xf32>
    %260 = vector.broadcast %17 : vector<1x128xf32> to vector<16x128xf32>
    %261 = arith.mulf %260, %238 : vector<16x128xf32>
    %262 = arith.addf %259, %261 : vector<16x128xf32>
    %cst_82 = arith.constant 0.000000e+00 : f32
    %263 = vector.broadcast %cst_82 : f32 to vector<16x128xf32>
    %264 = arith.maximumf %262, %263 : vector<16x128xf32>
    %265 = vector.extract_strided_slice %16 {offsets = [240, 0], sizes = [16, 128], strides = [1, 1]} : vector<400x128xf32> to vector<16x128xf32>
    %266 = vector.broadcast %18 : vector<1x128xf32> to vector<16x128xf32>
    %267 = arith.mulf %266, %244 : vector<16x128xf32>
    %268 = arith.addf %265, %267 : vector<16x128xf32>
    %cst_83 = arith.constant 0.000000e+00 : f32
    %269 = vector.broadcast %cst_83 : f32 to vector<16x128xf32>
    %270 = arith.maximumf %268, %269 : vector<16x128xf32>
    %271 = arith.truncf %264 : vector<16x128xf32> to vector<16x128xbf16>
    %c0_84 = arith.constant 0 : index
    %c144 = arith.constant 144 : index
    %c0_85 = arith.constant 0 : index
    %272 = vector.load %arg9[%c0_84, %c144, %c0_85] : memref<1x400x128xbf16, #tpu.memory_space<vmem>>, vector<1x16x128xbf16>
    %273 = vector.shape_cast %272 : vector<1x16x128xbf16> to vector<16x128xbf16>
    %274 = vector.shape_cast %271 : vector<16x128xbf16> to vector<1x16x128xbf16>
    tpu.vector_store %arg9[%c0_84, %c144, %c0_85], %274 {strides = array<i32>} : memref<1x400x128xbf16, #tpu.memory_space<vmem>>, vector<1x16x128xbf16>,
    %275 = arith.truncf %270 : vector<16x128xf32> to vector<16x128xbf16>
    %c0_86 = arith.constant 0 : index
    %c240 = arith.constant 240 : index
    %c0_87 = arith.constant 0 : index
    %276 = vector.load %arg10[%c0_86, %c240, %c0_87] : memref<1x400x128xbf16, #tpu.memory_space<vmem>>, vector<1x16x128xbf16>
    %277 = vector.shape_cast %276 : vector<1x16x128xbf16> to vector<16x128xbf16>
    %278 = vector.shape_cast %275 : vector<16x128xbf16> to vector<1x16x128xbf16>
    tpu.vector_store %arg10[%c0_86, %c240, %c0_87], %278 {strides = array<i32>} : memref<1x400x128xbf16, #tpu.memory_space<vmem>>, vector<1x16x128xbf16>,
    %279 = arith.addf %253, %264 : vector<16x128xf32>
    %280 = arith.addf %254, %270 : vector<16x128xf32>
    %281 = arith.mulf %264, %264 : vector<16x128xf32>
    %282 = arith.addf %256, %281 : vector<16x128xf32>
    %283 = arith.mulf %270, %270 : vector<16x128xf32>
    %284 = arith.addf %258, %283 : vector<16x128xf32>
    %285 = vector.extract_strided_slice %13 {offsets = [160, 0], sizes = [16, 128], strides = [1, 1]} : vector<400x128xf32> to vector<16x128xf32>
    %286 = vector.broadcast %17 : vector<1x128xf32> to vector<16x128xf32>
    %287 = arith.mulf %286, %264 : vector<16x128xf32>
    %288 = arith.addf %285, %287 : vector<16x128xf32>
    %cst_88 = arith.constant 0.000000e+00 : f32
    %289 = vector.broadcast %cst_88 : f32 to vector<16x128xf32>
    %290 = arith.maximumf %288, %289 : vector<16x128xf32>
    %291 = vector.extract_strided_slice %16 {offsets = [224, 0], sizes = [16, 128], strides = [1, 1]} : vector<400x128xf32> to vector<16x128xf32>
    %292 = vector.broadcast %18 : vector<1x128xf32> to vector<16x128xf32>
    %293 = arith.mulf %292, %270 : vector<16x128xf32>
    %294 = arith.addf %291, %293 : vector<16x128xf32>
    %cst_89 = arith.constant 0.000000e+00 : f32
    %295 = vector.broadcast %cst_89 : f32 to vector<16x128xf32>
    %296 = arith.maximumf %294, %295 : vector<16x128xf32>
    %297 = arith.truncf %290 : vector<16x128xf32> to vector<16x128xbf16>
    %c0_90 = arith.constant 0 : index
    %c160 = arith.constant 160 : index
    %c0_91 = arith.constant 0 : index
    %298 = vector.load %arg9[%c0_90, %c160, %c0_91] : memref<1x400x128xbf16, #tpu.memory_space<vmem>>, vector<1x16x128xbf16>
    %299 = vector.shape_cast %298 : vector<1x16x128xbf16> to vector<16x128xbf16>
    %300 = vector.shape_cast %297 : vector<16x128xbf16> to vector<1x16x128xbf16>
    tpu.vector_store %arg9[%c0_90, %c160, %c0_91], %300 {strides = array<i32>} : memref<1x400x128xbf16, #tpu.memory_space<vmem>>, vector<1x16x128xbf16>,
    %301 = arith.truncf %296 : vector<16x128xf32> to vector<16x128xbf16>
    %c0_92 = arith.constant 0 : index
    %c224 = arith.constant 224 : index
    %c0_93 = arith.constant 0 : index
    %302 = vector.load %arg10[%c0_92, %c224, %c0_93] : memref<1x400x128xbf16, #tpu.memory_space<vmem>>, vector<1x16x128xbf16>
    %303 = vector.shape_cast %302 : vector<1x16x128xbf16> to vector<16x128xbf16>
    %304 = vector.shape_cast %301 : vector<16x128xbf16> to vector<1x16x128xbf16>
    tpu.vector_store %arg10[%c0_92, %c224, %c0_93], %304 {strides = array<i32>} : memref<1x400x128xbf16, #tpu.memory_space<vmem>>, vector<1x16x128xbf16>,
    %305 = arith.addf %279, %290 : vector<16x128xf32>
    %306 = arith.addf %280, %296 : vector<16x128xf32>
    %307 = arith.mulf %290, %290 : vector<16x128xf32>
    %308 = arith.addf %282, %307 : vector<16x128xf32>
    %309 = arith.mulf %296, %296 : vector<16x128xf32>
    %310 = arith.addf %284, %309 : vector<16x128xf32>
    %311 = vector.extract_strided_slice %13 {offsets = [176, 0], sizes = [16, 128], strides = [1, 1]} : vector<400x128xf32> to vector<16x128xf32>
    %312 = vector.broadcast %17 : vector<1x128xf32> to vector<16x128xf32>
    %313 = arith.mulf %312, %290 : vector<16x128xf32>
    %314 = arith.addf %311, %313 : vector<16x128xf32>
    %cst_94 = arith.constant 0.000000e+00 : f32
    %315 = vector.broadcast %cst_94 : f32 to vector<16x128xf32>
    %316 = arith.maximumf %314, %315 : vector<16x128xf32>
    %317 = vector.extract_strided_slice %16 {offsets = [208, 0], sizes = [16, 128], strides = [1, 1]} : vector<400x128xf32> to vector<16x128xf32>
    %318 = vector.broadcast %18 : vector<1x128xf32> to vector<16x128xf32>
    %319 = arith.mulf %318, %296 : vector<16x128xf32>
    %320 = arith.addf %317, %319 : vector<16x128xf32>
    %cst_95 = arith.constant 0.000000e+00 : f32
    %321 = vector.broadcast %cst_95 : f32 to vector<16x128xf32>
    %322 = arith.maximumf %320, %321 : vector<16x128xf32>
    %323 = arith.truncf %316 : vector<16x128xf32> to vector<16x128xbf16>
    %c0_96 = arith.constant 0 : index
    %c176 = arith.constant 176 : index
    %c0_97 = arith.constant 0 : index
    %324 = vector.load %arg9[%c0_96, %c176, %c0_97] : memref<1x400x128xbf16, #tpu.memory_space<vmem>>, vector<1x16x128xbf16>
    %325 = vector.shape_cast %324 : vector<1x16x128xbf16> to vector<16x128xbf16>
    %326 = vector.shape_cast %323 : vector<16x128xbf16> to vector<1x16x128xbf16>
    tpu.vector_store %arg9[%c0_96, %c176, %c0_97], %326 {strides = array<i32>} : memref<1x400x128xbf16, #tpu.memory_space<vmem>>, vector<1x16x128xbf16>,
    %327 = arith.truncf %322 : vector<16x128xf32> to vector<16x128xbf16>
    %c0_98 = arith.constant 0 : index
    %c208 = arith.constant 208 : index
    %c0_99 = arith.constant 0 : index
    %328 = vector.load %arg10[%c0_98, %c208, %c0_99] : memref<1x400x128xbf16, #tpu.memory_space<vmem>>, vector<1x16x128xbf16>
    %329 = vector.shape_cast %328 : vector<1x16x128xbf16> to vector<16x128xbf16>
    %330 = vector.shape_cast %327 : vector<16x128xbf16> to vector<1x16x128xbf16>
    tpu.vector_store %arg10[%c0_98, %c208, %c0_99], %330 {strides = array<i32>} : memref<1x400x128xbf16, #tpu.memory_space<vmem>>, vector<1x16x128xbf16>,
    %331 = arith.addf %305, %316 : vector<16x128xf32>
    %332 = arith.addf %306, %322 : vector<16x128xf32>
    %333 = arith.mulf %316, %316 : vector<16x128xf32>
    %334 = arith.addf %308, %333 : vector<16x128xf32>
    %335 = arith.mulf %322, %322 : vector<16x128xf32>
    %336 = arith.addf %310, %335 : vector<16x128xf32>
    %337 = vector.extract_strided_slice %13 {offsets = [192, 0], sizes = [16, 128], strides = [1, 1]} : vector<400x128xf32> to vector<16x128xf32>
    %338 = vector.broadcast %17 : vector<1x128xf32> to vector<16x128xf32>
    %339 = arith.mulf %338, %316 : vector<16x128xf32>
    %340 = arith.addf %337, %339 : vector<16x128xf32>
    %cst_100 = arith.constant 0.000000e+00 : f32
    %341 = vector.broadcast %cst_100 : f32 to vector<16x128xf32>
    %342 = arith.maximumf %340, %341 : vector<16x128xf32>
    %343 = vector.extract_strided_slice %16 {offsets = [192, 0], sizes = [16, 128], strides = [1, 1]} : vector<400x128xf32> to vector<16x128xf32>
    %344 = vector.broadcast %18 : vector<1x128xf32> to vector<16x128xf32>
    %345 = arith.mulf %344, %322 : vector<16x128xf32>
    %346 = arith.addf %343, %345 : vector<16x128xf32>
    %cst_101 = arith.constant 0.000000e+00 : f32
    %347 = vector.broadcast %cst_101 : f32 to vector<16x128xf32>
    %348 = arith.maximumf %346, %347 : vector<16x128xf32>
    %349 = arith.truncf %342 : vector<16x128xf32> to vector<16x128xbf16>
    %c0_102 = arith.constant 0 : index
    %c192 = arith.constant 192 : index
    %c0_103 = arith.constant 0 : index
    %350 = vector.load %arg9[%c0_102, %c192, %c0_103] : memref<1x400x128xbf16, #tpu.memory_space<vmem>>, vector<1x16x128xbf16>
    %351 = vector.shape_cast %350 : vector<1x16x128xbf16> to vector<16x128xbf16>
    %352 = vector.shape_cast %349 : vector<16x128xbf16> to vector<1x16x128xbf16>
    tpu.vector_store %arg9[%c0_102, %c192, %c0_103], %352 {strides = array<i32>} : memref<1x400x128xbf16, #tpu.memory_space<vmem>>, vector<1x16x128xbf16>,
    %353 = arith.truncf %348 : vector<16x128xf32> to vector<16x128xbf16>
    %c0_104 = arith.constant 0 : index
    %c192_105 = arith.constant 192 : index
    %c0_106 = arith.constant 0 : index
    %354 = vector.load %arg10[%c0_104, %c192_105, %c0_106] : memref<1x400x128xbf16, #tpu.memory_space<vmem>>, vector<1x16x128xbf16>
    %355 = vector.shape_cast %354 : vector<1x16x128xbf16> to vector<16x128xbf16>
    %356 = vector.shape_cast %353 : vector<16x128xbf16> to vector<1x16x128xbf16>
    tpu.vector_store %arg10[%c0_104, %c192_105, %c0_106], %356 {strides = array<i32>} : memref<1x400x128xbf16, #tpu.memory_space<vmem>>, vector<1x16x128xbf16>,
    %357 = arith.addf %331, %342 : vector<16x128xf32>
    %358 = arith.addf %332, %348 : vector<16x128xf32>
    %359 = arith.mulf %342, %342 : vector<16x128xf32>
    %360 = arith.addf %334, %359 : vector<16x128xf32>
    %361 = arith.mulf %348, %348 : vector<16x128xf32>
    %362 = arith.addf %336, %361 : vector<16x128xf32>
    %363 = vector.extract_strided_slice %13 {offsets = [208, 0], sizes = [16, 128], strides = [1, 1]} : vector<400x128xf32> to vector<16x128xf32>
    %364 = vector.broadcast %17 : vector<1x128xf32> to vector<16x128xf32>
    %365 = arith.mulf %364, %342 : vector<16x128xf32>
    %366 = arith.addf %363, %365 : vector<16x128xf32>
    %cst_107 = arith.constant 0.000000e+00 : f32
    %367 = vector.broadcast %cst_107 : f32 to vector<16x128xf32>
    %368 = arith.maximumf %366, %367 : vector<16x128xf32>
    %369 = vector.extract_strided_slice %16 {offsets = [176, 0], sizes = [16, 128], strides = [1, 1]} : vector<400x128xf32> to vector<16x128xf32>
    %370 = vector.broadcast %18 : vector<1x128xf32> to vector<16x128xf32>
    %371 = arith.mulf %370, %348 : vector<16x128xf32>
    %372 = arith.addf %369, %371 : vector<16x128xf32>
    %cst_108 = arith.constant 0.000000e+00 : f32
    %373 = vector.broadcast %cst_108 : f32 to vector<16x128xf32>
    %374 = arith.maximumf %372, %373 : vector<16x128xf32>
    %375 = arith.truncf %368 : vector<16x128xf32> to vector<16x128xbf16>
    %c0_109 = arith.constant 0 : index
    %c208_110 = arith.constant 208 : index
    %c0_111 = arith.constant 0 : index
    %376 = vector.load %arg9[%c0_109, %c208_110, %c0_111] : memref<1x400x128xbf16, #tpu.memory_space<vmem>>, vector<1x16x128xbf16>
    %377 = vector.shape_cast %376 : vector<1x16x128xbf16> to vector<16x128xbf16>
    %378 = vector.shape_cast %375 : vector<16x128xbf16> to vector<1x16x128xbf16>
    tpu.vector_store %arg9[%c0_109, %c208_110, %c0_111], %378 {strides = array<i32>} : memref<1x400x128xbf16, #tpu.memory_space<vmem>>, vector<1x16x128xbf16>,
    %379 = arith.truncf %374 : vector<16x128xf32> to vector<16x128xbf16>
    %c0_112 = arith.constant 0 : index
    %c176_113 = arith.constant 176 : index
    %c0_114 = arith.constant 0 : index
    %380 = vector.load %arg10[%c0_112, %c176_113, %c0_114] : memref<1x400x128xbf16, #tpu.memory_space<vmem>>, vector<1x16x128xbf16>
    %381 = vector.shape_cast %380 : vector<1x16x128xbf16> to vector<16x128xbf16>
    %382 = vector.shape_cast %379 : vector<16x128xbf16> to vector<1x16x128xbf16>
    tpu.vector_store %arg10[%c0_112, %c176_113, %c0_114], %382 {strides = array<i32>} : memref<1x400x128xbf16, #tpu.memory_space<vmem>>, vector<1x16x128xbf16>,
    %383 = arith.addf %357, %368 : vector<16x128xf32>
    %384 = arith.addf %358, %374 : vector<16x128xf32>
    %385 = arith.mulf %368, %368 : vector<16x128xf32>
    %386 = arith.addf %360, %385 : vector<16x128xf32>
    %387 = arith.mulf %374, %374 : vector<16x128xf32>
    %388 = arith.addf %362, %387 : vector<16x128xf32>
    %389 = vector.extract_strided_slice %13 {offsets = [224, 0], sizes = [16, 128], strides = [1, 1]} : vector<400x128xf32> to vector<16x128xf32>
    %390 = vector.broadcast %17 : vector<1x128xf32> to vector<16x128xf32>
    %391 = arith.mulf %390, %368 : vector<16x128xf32>
    %392 = arith.addf %389, %391 : vector<16x128xf32>
    %cst_115 = arith.constant 0.000000e+00 : f32
    %393 = vector.broadcast %cst_115 : f32 to vector<16x128xf32>
    %394 = arith.maximumf %392, %393 : vector<16x128xf32>
    %395 = vector.extract_strided_slice %16 {offsets = [160, 0], sizes = [16, 128], strides = [1, 1]} : vector<400x128xf32> to vector<16x128xf32>
    %396 = vector.broadcast %18 : vector<1x128xf32> to vector<16x128xf32>
    %397 = arith.mulf %396, %374 : vector<16x128xf32>
    %398 = arith.addf %395, %397 : vector<16x128xf32>
    %cst_116 = arith.constant 0.000000e+00 : f32
    %399 = vector.broadcast %cst_116 : f32 to vector<16x128xf32>
    %400 = arith.maximumf %398, %399 : vector<16x128xf32>
    %401 = arith.truncf %394 : vector<16x128xf32> to vector<16x128xbf16>
    %c0_117 = arith.constant 0 : index
    %c224_118 = arith.constant 224 : index
    %c0_119 = arith.constant 0 : index
    %402 = vector.load %arg9[%c0_117, %c224_118, %c0_119] : memref<1x400x128xbf16, #tpu.memory_space<vmem>>, vector<1x16x128xbf16>
    %403 = vector.shape_cast %402 : vector<1x16x128xbf16> to vector<16x128xbf16>
    %404 = vector.shape_cast %401 : vector<16x128xbf16> to vector<1x16x128xbf16>
    tpu.vector_store %arg9[%c0_117, %c224_118, %c0_119], %404 {strides = array<i32>} : memref<1x400x128xbf16, #tpu.memory_space<vmem>>, vector<1x16x128xbf16>,
    %405 = arith.truncf %400 : vector<16x128xf32> to vector<16x128xbf16>
    %c0_120 = arith.constant 0 : index
    %c160_121 = arith.constant 160 : index
    %c0_122 = arith.constant 0 : index
    %406 = vector.load %arg10[%c0_120, %c160_121, %c0_122] : memref<1x400x128xbf16, #tpu.memory_space<vmem>>, vector<1x16x128xbf16>
    %407 = vector.shape_cast %406 : vector<1x16x128xbf16> to vector<16x128xbf16>
    %408 = vector.shape_cast %405 : vector<16x128xbf16> to vector<1x16x128xbf16>
    tpu.vector_store %arg10[%c0_120, %c160_121, %c0_122], %408 {strides = array<i32>} : memref<1x400x128xbf16, #tpu.memory_space<vmem>>, vector<1x16x128xbf16>,
    %409 = arith.addf %383, %394 : vector<16x128xf32>
    %410 = arith.addf %384, %400 : vector<16x128xf32>
    %411 = arith.mulf %394, %394 : vector<16x128xf32>
    %412 = arith.addf %386, %411 : vector<16x128xf32>
    %413 = arith.mulf %400, %400 : vector<16x128xf32>
    %414 = arith.addf %388, %413 : vector<16x128xf32>
    %415 = vector.extract_strided_slice %13 {offsets = [240, 0], sizes = [16, 128], strides = [1, 1]} : vector<400x128xf32> to vector<16x128xf32>
    %416 = vector.broadcast %17 : vector<1x128xf32> to vector<16x128xf32>
    %417 = arith.mulf %416, %394 : vector<16x128xf32>
    %418 = arith.addf %415, %417 : vector<16x128xf32>
    %cst_123 = arith.constant 0.000000e+00 : f32
    %419 = vector.broadcast %cst_123 : f32 to vector<16x128xf32>
    %420 = arith.maximumf %418, %419 : vector<16x128xf32>
    %421 = vector.extract_strided_slice %16 {offsets = [144, 0], sizes = [16, 128], strides = [1, 1]} : vector<400x128xf32> to vector<16x128xf32>
    %422 = vector.broadcast %18 : vector<1x128xf32> to vector<16x128xf32>
    %423 = arith.mulf %422, %400 : vector<16x128xf32>
    %424 = arith.addf %421, %423 : vector<16x128xf32>
    %cst_124 = arith.constant 0.000000e+00 : f32
    %425 = vector.broadcast %cst_124 : f32 to vector<16x128xf32>
    %426 = arith.maximumf %424, %425 : vector<16x128xf32>
    %427 = arith.truncf %420 : vector<16x128xf32> to vector<16x128xbf16>
    %c0_125 = arith.constant 0 : index
    %c240_126 = arith.constant 240 : index
    %c0_127 = arith.constant 0 : index
    %428 = vector.load %arg9[%c0_125, %c240_126, %c0_127] : memref<1x400x128xbf16, #tpu.memory_space<vmem>>, vector<1x16x128xbf16>
    %429 = vector.shape_cast %428 : vector<1x16x128xbf16> to vector<16x128xbf16>
    %430 = vector.shape_cast %427 : vector<16x128xbf16> to vector<1x16x128xbf16>
    tpu.vector_store %arg9[%c0_125, %c240_126, %c0_127], %430 {strides = array<i32>} : memref<1x400x128xbf16, #tpu.memory_space<vmem>>, vector<1x16x128xbf16>,
    %431 = arith.truncf %426 : vector<16x128xf32> to vector<16x128xbf16>
    %c0_128 = arith.constant 0 : index
    %c144_129 = arith.constant 144 : index
    %c0_130 = arith.constant 0 : index
    %432 = vector.load %arg10[%c0_128, %c144_129, %c0_130] : memref<1x400x128xbf16, #tpu.memory_space<vmem>>, vector<1x16x128xbf16>
    %433 = vector.shape_cast %432 : vector<1x16x128xbf16> to vector<16x128xbf16>
    %434 = vector.shape_cast %431 : vector<16x128xbf16> to vector<1x16x128xbf16>
    tpu.vector_store %arg10[%c0_128, %c144_129, %c0_130], %434 {strides = array<i32>} : memref<1x400x128xbf16, #tpu.memory_space<vmem>>, vector<1x16x128xbf16>,
    %435 = arith.addf %409, %420 : vector<16x128xf32>
    %436 = arith.addf %410, %426 : vector<16x128xf32>
    %437 = arith.mulf %420, %420 : vector<16x128xf32>
    %438 = arith.addf %412, %437 : vector<16x128xf32>
    %439 = arith.mulf %426, %426 : vector<16x128xf32>
    %440 = arith.addf %414, %439 : vector<16x128xf32>
    %441 = vector.extract_strided_slice %13 {offsets = [256, 0], sizes = [16, 128], strides = [1, 1]} : vector<400x128xf32> to vector<16x128xf32>
    %442 = vector.broadcast %17 : vector<1x128xf32> to vector<16x128xf32>
    %443 = arith.mulf %442, %420 : vector<16x128xf32>
    %444 = arith.addf %441, %443 : vector<16x128xf32>
    %cst_131 = arith.constant 0.000000e+00 : f32
    %445 = vector.broadcast %cst_131 : f32 to vector<16x128xf32>
    %446 = arith.maximumf %444, %445 : vector<16x128xf32>
    %447 = vector.extract_strided_slice %16 {offsets = [128, 0], sizes = [16, 128], strides = [1, 1]} : vector<400x128xf32> to vector<16x128xf32>
    %448 = vector.broadcast %18 : vector<1x128xf32> to vector<16x128xf32>
    %449 = arith.mulf %448, %426 : vector<16x128xf32>
    %450 = arith.addf %447, %449 : vector<16x128xf32>
    %cst_132 = arith.constant 0.000000e+00 : f32
    %451 = vector.broadcast %cst_132 : f32 to vector<16x128xf32>
    %452 = arith.maximumf %450, %451 : vector<16x128xf32>
    %453 = arith.truncf %446 : vector<16x128xf32> to vector<16x128xbf16>
    %c0_133 = arith.constant 0 : index
    %c256_134 = arith.constant 256 : index
    %c0_135 = arith.constant 0 : index
    %454 = vector.load %arg9[%c0_133, %c256_134, %c0_135] : memref<1x400x128xbf16, #tpu.memory_space<vmem>>, vector<1x16x128xbf16>
    %455 = vector.shape_cast %454 : vector<1x16x128xbf16> to vector<16x128xbf16>
    %456 = vector.shape_cast %453 : vector<16x128xbf16> to vector<1x16x128xbf16>
    tpu.vector_store %arg9[%c0_133, %c256_134, %c0_135], %456 {strides = array<i32>} : memref<1x400x128xbf16, #tpu.memory_space<vmem>>, vector<1x16x128xbf16>,
    %457 = arith.truncf %452 : vector<16x128xf32> to vector<16x128xbf16>
    %c0_136 = arith.constant 0 : index
    %c128_137 = arith.constant 128 : index
    %c0_138 = arith.constant 0 : index
    %458 = vector.load %arg10[%c0_136, %c128_137, %c0_138] : memref<1x400x128xbf16, #tpu.memory_space<vmem>>, vector<1x16x128xbf16>
    %459 = vector.shape_cast %458 : vector<1x16x128xbf16> to vector<16x128xbf16>
    %460 = vector.shape_cast %457 : vector<16x128xbf16> to vector<1x16x128xbf16>
    tpu.vector_store %arg10[%c0_136, %c128_137, %c0_138], %460 {strides = array<i32>} : memref<1x400x128xbf16, #tpu.memory_space<vmem>>, vector<1x16x128xbf16>,
    %461 = arith.addf %435, %446 : vector<16x128xf32>
    %462 = arith.addf %436, %452 : vector<16x128xf32>
    %463 = arith.mulf %446, %446 : vector<16x128xf32>
    %464 = arith.addf %438, %463 : vector<16x128xf32>
    %465 = arith.mulf %452, %452 : vector<16x128xf32>
    %466 = arith.addf %440, %465 : vector<16x128xf32>
    %467 = vector.extract_strided_slice %13 {offsets = [272, 0], sizes = [16, 128], strides = [1, 1]} : vector<400x128xf32> to vector<16x128xf32>
    %468 = vector.broadcast %17 : vector<1x128xf32> to vector<16x128xf32>
    %469 = arith.mulf %468, %446 : vector<16x128xf32>
    %470 = arith.addf %467, %469 : vector<16x128xf32>
    %cst_139 = arith.constant 0.000000e+00 : f32
    %471 = vector.broadcast %cst_139 : f32 to vector<16x128xf32>
    %472 = arith.maximumf %470, %471 : vector<16x128xf32>
    %473 = vector.extract_strided_slice %16 {offsets = [112, 0], sizes = [16, 128], strides = [1, 1]} : vector<400x128xf32> to vector<16x128xf32>
    %474 = vector.broadcast %18 : vector<1x128xf32> to vector<16x128xf32>
    %475 = arith.mulf %474, %452 : vector<16x128xf32>
    %476 = arith.addf %473, %475 : vector<16x128xf32>
    %cst_140 = arith.constant 0.000000e+00 : f32
    %477 = vector.broadcast %cst_140 : f32 to vector<16x128xf32>
    %478 = arith.maximumf %476, %477 : vector<16x128xf32>
    %479 = arith.truncf %472 : vector<16x128xf32> to vector<16x128xbf16>
    %c0_141 = arith.constant 0 : index
    %c272_142 = arith.constant 272 : index
    %c0_143 = arith.constant 0 : index
    %480 = vector.load %arg9[%c0_141, %c272_142, %c0_143] : memref<1x400x128xbf16, #tpu.memory_space<vmem>>, vector<1x16x128xbf16>
    %481 = vector.shape_cast %480 : vector<1x16x128xbf16> to vector<16x128xbf16>
    %482 = vector.shape_cast %479 : vector<16x128xbf16> to vector<1x16x128xbf16>
    tpu.vector_store %arg9[%c0_141, %c272_142, %c0_143], %482 {strides = array<i32>} : memref<1x400x128xbf16, #tpu.memory_space<vmem>>, vector<1x16x128xbf16>,
    %483 = arith.truncf %478 : vector<16x128xf32> to vector<16x128xbf16>
    %c0_144 = arith.constant 0 : index
    %c112_145 = arith.constant 112 : index
    %c0_146 = arith.constant 0 : index
    %484 = vector.load %arg10[%c0_144, %c112_145, %c0_146] : memref<1x400x128xbf16, #tpu.memory_space<vmem>>, vector<1x16x128xbf16>
    %485 = vector.shape_cast %484 : vector<1x16x128xbf16> to vector<16x128xbf16>
    %486 = vector.shape_cast %483 : vector<16x128xbf16> to vector<1x16x128xbf16>
    tpu.vector_store %arg10[%c0_144, %c112_145, %c0_146], %486 {strides = array<i32>} : memref<1x400x128xbf16, #tpu.memory_space<vmem>>, vector<1x16x128xbf16>,
    %487 = arith.addf %461, %472 : vector<16x128xf32>
    %488 = arith.addf %462, %478 : vector<16x128xf32>
    %489 = arith.mulf %472, %472 : vector<16x128xf32>
    %490 = arith.addf %464, %489 : vector<16x128xf32>
    %491 = arith.mulf %478, %478 : vector<16x128xf32>
    %492 = arith.addf %466, %491 : vector<16x128xf32>
    %493 = vector.extract_strided_slice %13 {offsets = [288, 0], sizes = [16, 128], strides = [1, 1]} : vector<400x128xf32> to vector<16x128xf32>
    %494 = vector.broadcast %17 : vector<1x128xf32> to vector<16x128xf32>
    %495 = arith.mulf %494, %472 : vector<16x128xf32>
    %496 = arith.addf %493, %495 : vector<16x128xf32>
    %cst_147 = arith.constant 0.000000e+00 : f32
    %497 = vector.broadcast %cst_147 : f32 to vector<16x128xf32>
    %498 = arith.maximumf %496, %497 : vector<16x128xf32>
    %499 = vector.extract_strided_slice %16 {offsets = [96, 0], sizes = [16, 128], strides = [1, 1]} : vector<400x128xf32> to vector<16x128xf32>
    %500 = vector.broadcast %18 : vector<1x128xf32> to vector<16x128xf32>
    %501 = arith.mulf %500, %478 : vector<16x128xf32>
    %502 = arith.addf %499, %501 : vector<16x128xf32>
    %cst_148 = arith.constant 0.000000e+00 : f32
    %503 = vector.broadcast %cst_148 : f32 to vector<16x128xf32>
    %504 = arith.maximumf %502, %503 : vector<16x128xf32>
    %505 = arith.truncf %498 : vector<16x128xf32> to vector<16x128xbf16>
    %c0_149 = arith.constant 0 : index
    %c288_150 = arith.constant 288 : index
    %c0_151 = arith.constant 0 : index
    %506 = vector.load %arg9[%c0_149, %c288_150, %c0_151] : memref<1x400x128xbf16, #tpu.memory_space<vmem>>, vector<1x16x128xbf16>
    %507 = vector.shape_cast %506 : vector<1x16x128xbf16> to vector<16x128xbf16>
    %508 = vector.shape_cast %505 : vector<16x128xbf16> to vector<1x16x128xbf16>
    tpu.vector_store %arg9[%c0_149, %c288_150, %c0_151], %508 {strides = array<i32>} : memref<1x400x128xbf16, #tpu.memory_space<vmem>>, vector<1x16x128xbf16>,
    %509 = arith.truncf %504 : vector<16x128xf32> to vector<16x128xbf16>
    %c0_152 = arith.constant 0 : index
    %c96_153 = arith.constant 96 : index
    %c0_154 = arith.constant 0 : index
    %510 = vector.load %arg10[%c0_152, %c96_153, %c0_154] : memref<1x400x128xbf16, #tpu.memory_space<vmem>>, vector<1x16x128xbf16>
    %511 = vector.shape_cast %510 : vector<1x16x128xbf16> to vector<16x128xbf16>
    %512 = vector.shape_cast %509 : vector<16x128xbf16> to vector<1x16x128xbf16>
    tpu.vector_store %arg10[%c0_152, %c96_153, %c0_154], %512 {strides = array<i32>} : memref<1x400x128xbf16, #tpu.memory_space<vmem>>, vector<1x16x128xbf16>,
    %513 = arith.addf %487, %498 : vector<16x128xf32>
    %514 = arith.addf %488, %504 : vector<16x128xf32>
    %515 = arith.mulf %498, %498 : vector<16x128xf32>
    %516 = arith.addf %490, %515 : vector<16x128xf32>
    %517 = arith.mulf %504, %504 : vector<16x128xf32>
    %518 = arith.addf %492, %517 : vector<16x128xf32>
    %519 = vector.extract_strided_slice %13 {offsets = [304, 0], sizes = [16, 128], strides = [1, 1]} : vector<400x128xf32> to vector<16x128xf32>
    %520 = vector.broadcast %17 : vector<1x128xf32> to vector<16x128xf32>
    %521 = arith.mulf %520, %498 : vector<16x128xf32>
    %522 = arith.addf %519, %521 : vector<16x128xf32>
    %cst_155 = arith.constant 0.000000e+00 : f32
    %523 = vector.broadcast %cst_155 : f32 to vector<16x128xf32>
    %524 = arith.maximumf %522, %523 : vector<16x128xf32>
    %525 = vector.extract_strided_slice %16 {offsets = [80, 0], sizes = [16, 128], strides = [1, 1]} : vector<400x128xf32> to vector<16x128xf32>
    %526 = vector.broadcast %18 : vector<1x128xf32> to vector<16x128xf32>
    %527 = arith.mulf %526, %504 : vector<16x128xf32>
    %528 = arith.addf %525, %527 : vector<16x128xf32>
    %cst_156 = arith.constant 0.000000e+00 : f32
    %529 = vector.broadcast %cst_156 : f32 to vector<16x128xf32>
    %530 = arith.maximumf %528, %529 : vector<16x128xf32>
    %531 = arith.truncf %524 : vector<16x128xf32> to vector<16x128xbf16>
    %c0_157 = arith.constant 0 : index
    %c304_158 = arith.constant 304 : index
    %c0_159 = arith.constant 0 : index
    %532 = vector.load %arg9[%c0_157, %c304_158, %c0_159] : memref<1x400x128xbf16, #tpu.memory_space<vmem>>, vector<1x16x128xbf16>
    %533 = vector.shape_cast %532 : vector<1x16x128xbf16> to vector<16x128xbf16>
    %534 = vector.shape_cast %531 : vector<16x128xbf16> to vector<1x16x128xbf16>
    tpu.vector_store %arg9[%c0_157, %c304_158, %c0_159], %534 {strides = array<i32>} : memref<1x400x128xbf16, #tpu.memory_space<vmem>>, vector<1x16x128xbf16>,
    %535 = arith.truncf %530 : vector<16x128xf32> to vector<16x128xbf16>
    %c0_160 = arith.constant 0 : index
    %c80_161 = arith.constant 80 : index
    %c0_162 = arith.constant 0 : index
    %536 = vector.load %arg10[%c0_160, %c80_161, %c0_162] : memref<1x400x128xbf16, #tpu.memory_space<vmem>>, vector<1x16x128xbf16>
    %537 = vector.shape_cast %536 : vector<1x16x128xbf16> to vector<16x128xbf16>
    %538 = vector.shape_cast %535 : vector<16x128xbf16> to vector<1x16x128xbf16>
    tpu.vector_store %arg10[%c0_160, %c80_161, %c0_162], %538 {strides = array<i32>} : memref<1x400x128xbf16, #tpu.memory_space<vmem>>, vector<1x16x128xbf16>,
    %539 = arith.addf %513, %524 : vector<16x128xf32>
    %540 = arith.addf %514, %530 : vector<16x128xf32>
    %541 = arith.mulf %524, %524 : vector<16x128xf32>
    %542 = arith.addf %516, %541 : vector<16x128xf32>
    %543 = arith.mulf %530, %530 : vector<16x128xf32>
    %544 = arith.addf %518, %543 : vector<16x128xf32>
    %545 = vector.extract_strided_slice %13 {offsets = [320, 0], sizes = [16, 128], strides = [1, 1]} : vector<400x128xf32> to vector<16x128xf32>
    %546 = vector.broadcast %17 : vector<1x128xf32> to vector<16x128xf32>
    %547 = arith.mulf %546, %524 : vector<16x128xf32>
    %548 = arith.addf %545, %547 : vector<16x128xf32>
    %cst_163 = arith.constant 0.000000e+00 : f32
    %549 = vector.broadcast %cst_163 : f32 to vector<16x128xf32>
    %550 = arith.maximumf %548, %549 : vector<16x128xf32>
    %551 = vector.extract_strided_slice %16 {offsets = [64, 0], sizes = [16, 128], strides = [1, 1]} : vector<400x128xf32> to vector<16x128xf32>
    %552 = vector.broadcast %18 : vector<1x128xf32> to vector<16x128xf32>
    %553 = arith.mulf %552, %530 : vector<16x128xf32>
    %554 = arith.addf %551, %553 : vector<16x128xf32>
    %cst_164 = arith.constant 0.000000e+00 : f32
    %555 = vector.broadcast %cst_164 : f32 to vector<16x128xf32>
    %556 = arith.maximumf %554, %555 : vector<16x128xf32>
    %557 = arith.truncf %550 : vector<16x128xf32> to vector<16x128xbf16>
    %c0_165 = arith.constant 0 : index
    %c320_166 = arith.constant 320 : index
    %c0_167 = arith.constant 0 : index
    %558 = vector.load %arg9[%c0_165, %c320_166, %c0_167] : memref<1x400x128xbf16, #tpu.memory_space<vmem>>, vector<1x16x128xbf16>
    %559 = vector.shape_cast %558 : vector<1x16x128xbf16> to vector<16x128xbf16>
    %560 = vector.shape_cast %557 : vector<16x128xbf16> to vector<1x16x128xbf16>
    tpu.vector_store %arg9[%c0_165, %c320_166, %c0_167], %560 {strides = array<i32>} : memref<1x400x128xbf16, #tpu.memory_space<vmem>>, vector<1x16x128xbf16>,
    %561 = arith.truncf %556 : vector<16x128xf32> to vector<16x128xbf16>
    %c0_168 = arith.constant 0 : index
    %c64_169 = arith.constant 64 : index
    %c0_170 = arith.constant 0 : index
    %562 = vector.load %arg10[%c0_168, %c64_169, %c0_170] : memref<1x400x128xbf16, #tpu.memory_space<vmem>>, vector<1x16x128xbf16>
    %563 = vector.shape_cast %562 : vector<1x16x128xbf16> to vector<16x128xbf16>
    %564 = vector.shape_cast %561 : vector<16x128xbf16> to vector<1x16x128xbf16>
    tpu.vector_store %arg10[%c0_168, %c64_169, %c0_170], %564 {strides = array<i32>} : memref<1x400x128xbf16, #tpu.memory_space<vmem>>, vector<1x16x128xbf16>,
    %565 = arith.addf %539, %550 : vector<16x128xf32>
    %566 = arith.addf %540, %556 : vector<16x128xf32>
    %567 = arith.mulf %550, %550 : vector<16x128xf32>
    %568 = arith.addf %542, %567 : vector<16x128xf32>
    %569 = arith.mulf %556, %556 : vector<16x128xf32>
    %570 = arith.addf %544, %569 : vector<16x128xf32>
    %571 = vector.extract_strided_slice %13 {offsets = [336, 0], sizes = [16, 128], strides = [1, 1]} : vector<400x128xf32> to vector<16x128xf32>
    %572 = vector.broadcast %17 : vector<1x128xf32> to vector<16x128xf32>
    %573 = arith.mulf %572, %550 : vector<16x128xf32>
    %574 = arith.addf %571, %573 : vector<16x128xf32>
    %cst_171 = arith.constant 0.000000e+00 : f32
    %575 = vector.broadcast %cst_171 : f32 to vector<16x128xf32>
    %576 = arith.maximumf %574, %575 : vector<16x128xf32>
    %577 = vector.extract_strided_slice %16 {offsets = [48, 0], sizes = [16, 128], strides = [1, 1]} : vector<400x128xf32> to vector<16x128xf32>
    %578 = vector.broadcast %18 : vector<1x128xf32> to vector<16x128xf32>
    %579 = arith.mulf %578, %556 : vector<16x128xf32>
    %580 = arith.addf %577, %579 : vector<16x128xf32>
    %cst_172 = arith.constant 0.000000e+00 : f32
    %581 = vector.broadcast %cst_172 : f32 to vector<16x128xf32>
    %582 = arith.maximumf %580, %581 : vector<16x128xf32>
    %583 = arith.truncf %576 : vector<16x128xf32> to vector<16x128xbf16>
    %c0_173 = arith.constant 0 : index
    %c336_174 = arith.constant 336 : index
    %c0_175 = arith.constant 0 : index
    %584 = vector.load %arg9[%c0_173, %c336_174, %c0_175] : memref<1x400x128xbf16, #tpu.memory_space<vmem>>, vector<1x16x128xbf16>
    %585 = vector.shape_cast %584 : vector<1x16x128xbf16> to vector<16x128xbf16>
    %586 = vector.shape_cast %583 : vector<16x128xbf16> to vector<1x16x128xbf16>
    tpu.vector_store %arg9[%c0_173, %c336_174, %c0_175], %586 {strides = array<i32>} : memref<1x400x128xbf16, #tpu.memory_space<vmem>>, vector<1x16x128xbf16>,
    %587 = arith.truncf %582 : vector<16x128xf32> to vector<16x128xbf16>
    %c0_176 = arith.constant 0 : index
    %c48_177 = arith.constant 48 : index
    %c0_178 = arith.constant 0 : index
    %588 = vector.load %arg10[%c0_176, %c48_177, %c0_178] : memref<1x400x128xbf16, #tpu.memory_space<vmem>>, vector<1x16x128xbf16>
    %589 = vector.shape_cast %588 : vector<1x16x128xbf16> to vector<16x128xbf16>
    %590 = vector.shape_cast %587 : vector<16x128xbf16> to vector<1x16x128xbf16>
    tpu.vector_store %arg10[%c0_176, %c48_177, %c0_178], %590 {strides = array<i32>} : memref<1x400x128xbf16, #tpu.memory_space<vmem>>, vector<1x16x128xbf16>,
    %591 = arith.addf %565, %576 : vector<16x128xf32>
    %592 = arith.addf %566, %582 : vector<16x128xf32>
    %593 = arith.mulf %576, %576 : vector<16x128xf32>
    %594 = arith.addf %568, %593 : vector<16x128xf32>
    %595 = arith.mulf %582, %582 : vector<16x128xf32>
    %596 = arith.addf %570, %595 : vector<16x128xf32>
    %597 = vector.extract_strided_slice %13 {offsets = [352, 0], sizes = [16, 128], strides = [1, 1]} : vector<400x128xf32> to vector<16x128xf32>
    %598 = vector.broadcast %17 : vector<1x128xf32> to vector<16x128xf32>
    %599 = arith.mulf %598, %576 : vector<16x128xf32>
    %600 = arith.addf %597, %599 : vector<16x128xf32>
    %cst_179 = arith.constant 0.000000e+00 : f32
    %601 = vector.broadcast %cst_179 : f32 to vector<16x128xf32>
    %602 = arith.maximumf %600, %601 : vector<16x128xf32>
    %603 = vector.extract_strided_slice %16 {offsets = [32, 0], sizes = [16, 128], strides = [1, 1]} : vector<400x128xf32> to vector<16x128xf32>
    %604 = vector.broadcast %18 : vector<1x128xf32> to vector<16x128xf32>
    %605 = arith.mulf %604, %582 : vector<16x128xf32>
    %606 = arith.addf %603, %605 : vector<16x128xf32>
    %cst_180 = arith.constant 0.000000e+00 : f32
    %607 = vector.broadcast %cst_180 : f32 to vector<16x128xf32>
    %608 = arith.maximumf %606, %607 : vector<16x128xf32>
    %609 = arith.truncf %602 : vector<16x128xf32> to vector<16x128xbf16>
    %c0_181 = arith.constant 0 : index
    %c352_182 = arith.constant 352 : index
    %c0_183 = arith.constant 0 : index
    %610 = vector.load %arg9[%c0_181, %c352_182, %c0_183] : memref<1x400x128xbf16, #tpu.memory_space<vmem>>, vector<1x16x128xbf16>
    %611 = vector.shape_cast %610 : vector<1x16x128xbf16> to vector<16x128xbf16>
    %612 = vector.shape_cast %609 : vector<16x128xbf16> to vector<1x16x128xbf16>
    tpu.vector_store %arg9[%c0_181, %c352_182, %c0_183], %612 {strides = array<i32>} : memref<1x400x128xbf16, #tpu.memory_space<vmem>>, vector<1x16x128xbf16>,
    %613 = arith.truncf %608 : vector<16x128xf32> to vector<16x128xbf16>
    %c0_184 = arith.constant 0 : index
    %c32_185 = arith.constant 32 : index
    %c0_186 = arith.constant 0 : index
    %614 = vector.load %arg10[%c0_184, %c32_185, %c0_186] : memref<1x400x128xbf16, #tpu.memory_space<vmem>>, vector<1x16x128xbf16>
    %615 = vector.shape_cast %614 : vector<1x16x128xbf16> to vector<16x128xbf16>
    %616 = vector.shape_cast %613 : vector<16x128xbf16> to vector<1x16x128xbf16>
    tpu.vector_store %arg10[%c0_184, %c32_185, %c0_186], %616 {strides = array<i32>} : memref<1x400x128xbf16, #tpu.memory_space<vmem>>, vector<1x16x128xbf16>,
    %617 = arith.addf %591, %602 : vector<16x128xf32>
    %618 = arith.addf %592, %608 : vector<16x128xf32>
    %619 = arith.mulf %602, %602 : vector<16x128xf32>
    %620 = arith.addf %594, %619 : vector<16x128xf32>
    %621 = arith.mulf %608, %608 : vector<16x128xf32>
    %622 = arith.addf %596, %621 : vector<16x128xf32>
    %623 = vector.extract_strided_slice %13 {offsets = [368, 0], sizes = [16, 128], strides = [1, 1]} : vector<400x128xf32> to vector<16x128xf32>
    %624 = vector.broadcast %17 : vector<1x128xf32> to vector<16x128xf32>
    %625 = arith.mulf %624, %602 : vector<16x128xf32>
    %626 = arith.addf %623, %625 : vector<16x128xf32>
    %cst_187 = arith.constant 0.000000e+00 : f32
    %627 = vector.broadcast %cst_187 : f32 to vector<16x128xf32>
    %628 = arith.maximumf %626, %627 : vector<16x128xf32>
    %629 = vector.extract_strided_slice %16 {offsets = [16, 0], sizes = [16, 128], strides = [1, 1]} : vector<400x128xf32> to vector<16x128xf32>
    %630 = vector.broadcast %18 : vector<1x128xf32> to vector<16x128xf32>
    %631 = arith.mulf %630, %608 : vector<16x128xf32>
    %632 = arith.addf %629, %631 : vector<16x128xf32>
    %cst_188 = arith.constant 0.000000e+00 : f32
    %633 = vector.broadcast %cst_188 : f32 to vector<16x128xf32>
    %634 = arith.maximumf %632, %633 : vector<16x128xf32>
    %635 = arith.truncf %628 : vector<16x128xf32> to vector<16x128xbf16>
    %c0_189 = arith.constant 0 : index
    %c368_190 = arith.constant 368 : index
    %c0_191 = arith.constant 0 : index
    %636 = vector.load %arg9[%c0_189, %c368_190, %c0_191] : memref<1x400x128xbf16, #tpu.memory_space<vmem>>, vector<1x16x128xbf16>
    %637 = vector.shape_cast %636 : vector<1x16x128xbf16> to vector<16x128xbf16>
    %638 = vector.shape_cast %635 : vector<16x128xbf16> to vector<1x16x128xbf16>
    tpu.vector_store %arg9[%c0_189, %c368_190, %c0_191], %638 {strides = array<i32>} : memref<1x400x128xbf16, #tpu.memory_space<vmem>>, vector<1x16x128xbf16>,
    %639 = arith.truncf %634 : vector<16x128xf32> to vector<16x128xbf16>
    %c0_192 = arith.constant 0 : index
    %c16_193 = arith.constant 16 : index
    %c0_194 = arith.constant 0 : index
    %640 = vector.load %arg10[%c0_192, %c16_193, %c0_194] : memref<1x400x128xbf16, #tpu.memory_space<vmem>>, vector<1x16x128xbf16>
    %641 = vector.shape_cast %640 : vector<1x16x128xbf16> to vector<16x128xbf16>
    %642 = vector.shape_cast %639 : vector<16x128xbf16> to vector<1x16x128xbf16>
    tpu.vector_store %arg10[%c0_192, %c16_193, %c0_194], %642 {strides = array<i32>} : memref<1x400x128xbf16, #tpu.memory_space<vmem>>, vector<1x16x128xbf16>,
    %643 = arith.addf %617, %628 : vector<16x128xf32>
    %644 = arith.addf %618, %634 : vector<16x128xf32>
    %645 = arith.mulf %628, %628 : vector<16x128xf32>
    %646 = arith.addf %620, %645 : vector<16x128xf32>
    %647 = arith.mulf %634, %634 : vector<16x128xf32>
    %648 = arith.addf %622, %647 : vector<16x128xf32>
    %649 = vector.extract_strided_slice %13 {offsets = [384, 0], sizes = [16, 128], strides = [1, 1]} : vector<400x128xf32> to vector<16x128xf32>
    %650 = vector.broadcast %17 : vector<1x128xf32> to vector<16x128xf32>
    %651 = arith.mulf %650, %628 : vector<16x128xf32>
    %652 = arith.addf %649, %651 : vector<16x128xf32>
    %cst_195 = arith.constant 0.000000e+00 : f32
    %653 = vector.broadcast %cst_195 : f32 to vector<16x128xf32>
    %654 = arith.maximumf %652, %653 : vector<16x128xf32>
    %655 = vector.extract_strided_slice %16 {offsets = [0, 0], sizes = [16, 128], strides = [1, 1]} : vector<400x128xf32> to vector<16x128xf32>
    %656 = vector.broadcast %18 : vector<1x128xf32> to vector<16x128xf32>
    %657 = arith.mulf %656, %634 : vector<16x128xf32>
    %658 = arith.addf %655, %657 : vector<16x128xf32>
    %cst_196 = arith.constant 0.000000e+00 : f32
    %659 = vector.broadcast %cst_196 : f32 to vector<16x128xf32>
    %660 = arith.maximumf %658, %659 : vector<16x128xf32>
    %661 = arith.truncf %654 : vector<16x128xf32> to vector<16x128xbf16>
    %c0_197 = arith.constant 0 : index
    %c384_198 = arith.constant 384 : index
    %c0_199 = arith.constant 0 : index
    %662 = vector.load %arg9[%c0_197, %c384_198, %c0_199] : memref<1x400x128xbf16, #tpu.memory_space<vmem>>, vector<1x16x128xbf16>
    %663 = vector.shape_cast %662 : vector<1x16x128xbf16> to vector<16x128xbf16>
    %664 = vector.shape_cast %661 : vector<16x128xbf16> to vector<1x16x128xbf16>
    tpu.vector_store %arg9[%c0_197, %c384_198, %c0_199], %664 {strides = array<i32>} : memref<1x400x128xbf16, #tpu.memory_space<vmem>>, vector<1x16x128xbf16>,
    %665 = arith.truncf %660 : vector<16x128xf32> to vector<16x128xbf16>
    %c0_200 = arith.constant 0 : index
    %c0_201 = arith.constant 0 : index
    %c0_202 = arith.constant 0 : index
    %666 = vector.load %arg10[%c0_200, %c0_201, %c0_202] : memref<1x400x128xbf16, #tpu.memory_space<vmem>>, vector<1x16x128xbf16>
    %667 = vector.shape_cast %666 : vector<1x16x128xbf16> to vector<16x128xbf16>
    %668 = vector.shape_cast %665 : vector<16x128xbf16> to vector<1x16x128xbf16>
    tpu.vector_store %arg10[%c0_200, %c0_201, %c0_202], %668 {strides = array<i32>} : memref<1x400x128xbf16, #tpu.memory_space<vmem>>, vector<1x16x128xbf16>,
    %669 = arith.addf %643, %654 : vector<16x128xf32>
    %670 = arith.addf %644, %660 : vector<16x128xf32>
    %671 = arith.mulf %654, %654 : vector<16x128xf32>
    %672 = arith.addf %646, %671 : vector<16x128xf32>
    %673 = arith.mulf %660, %660 : vector<16x128xf32>
    %674 = arith.addf %648, %673 : vector<16x128xf32>
    %c0_203 = arith.constant 0 : index
    %c0_204 = arith.constant 0 : index
    %675 = vector.load %arg12[%c0_203, %c0_204] : memref<16x128xf32, #tpu.memory_space<vmem>>, vector<16x128xf32>
    tpu.vector_store %arg12[%c0_203, %c0_204], %654 {strides = array<i32>} : memref<16x128xf32, #tpu.memory_space<vmem>>, vector<16x128xf32>,
    %c0_205 = arith.constant 0 : index
    %c0_206 = arith.constant 0 : index
    %676 = vector.load %arg13[%c0_205, %c0_206] : memref<16x128xf32, #tpu.memory_space<vmem>>, vector<16x128xf32>
    tpu.vector_store %arg13[%c0_205, %c0_206], %660 {strides = array<i32>} : memref<16x128xf32, #tpu.memory_space<vmem>>, vector<16x128xf32>,
    %c0_207 = arith.constant 0 : index
    %c0_208 = arith.constant 0 : index
    %677 = vector.load %arg11[%c0_207, %c0_208] : memref<4x128xf32, #tpu.memory_space<vmem>>, vector<4x128xf32>
    %cst_209 = arith.constant dense<0.000000e+00> : vector<128xf32>
    %678 = vector.multi_reduction <add>, %669, %cst_209 [0] : vector<16x128xf32> to vector<128xf32>
    %679 = vector.shape_cast %678 : vector<128xf32> to vector<1x128xf32>
    %cst_210 = arith.constant dense<0.000000e+00> : vector<128xf32>
    %680 = vector.multi_reduction <add>, %670, %cst_210 [0] : vector<16x128xf32> to vector<128xf32>
    %681 = vector.shape_cast %680 : vector<128xf32> to vector<1x128xf32>
    %cst_211 = arith.constant dense<0.000000e+00> : vector<128xf32>
    %682 = vector.multi_reduction <add>, %672, %cst_211 [0] : vector<16x128xf32> to vector<128xf32>
    %683 = vector.shape_cast %682 : vector<128xf32> to vector<1x128xf32>
    %cst_212 = arith.constant dense<0.000000e+00> : vector<128xf32>
    %684 = vector.multi_reduction <add>, %674, %cst_212 [0] : vector<16x128xf32> to vector<128xf32>
    %685 = vector.shape_cast %684 : vector<128xf32> to vector<1x128xf32>
    %686 = tpu.concatenate %679, %681, %683, %685 in 0 : vector<1x128xf32>, vector<1x128xf32>, vector<1x128xf32>, vector<1x128xf32> -> vector<4x128xf32>
    %687 = arith.addf %677, %686 : vector<4x128xf32>
    %c0_213 = arith.constant 0 : index
    %c0_214 = arith.constant 0 : index
    %688 = vector.load %arg11[%c0_213, %c0_214] : memref<4x128xf32, #tpu.memory_space<vmem>>, vector<4x128xf32>
    tpu.vector_store %arg11[%c0_213, %c0_214], %687 {strides = array<i32>} : memref<4x128xf32, #tpu.memory_space<vmem>>, vector<4x128xf32>,
    return
  }
  func.func @transform_0(%arg0: i32) -> (i32, i32, i32) {
    %c0_i32 = arith.constant 0 : i32
    %c0_i32_0 = arith.constant 0 : i32
    %c0_i32_1 = arith.constant 0 : i32
    return %arg0, %c0_i32, %c0_i32_0 : i32, i32, i32
  }
  func.func @transform_1(%arg0: i32) -> (i32, i32, i32) {
    %c3_i32 = arith.constant 3 : i32
    %0 = arith.subi %c3_i32, %arg0 : i32
    %c0_i32 = arith.constant 0 : i32
    %c0_i32_0 = arith.constant 0 : i32
    %c0_i32_1 = arith.constant 0 : i32
    return %0, %c0_i32, %c0_i32_0 : i32, i32, i32
  }
  func.func @transform_2(%arg0: i32) -> (i32, i32) {
    %c0_i32 = arith.constant 0 : i32
    %c0_i32_0 = arith.constant 0 : i32
    %c0_i32_1 = arith.constant 0 : i32
    return %c0_i32, %c0_i32_0 : i32, i32
  }
  func.func @transform_3(%arg0: i32) -> (i32, i32) {
    %c0_i32 = arith.constant 0 : i32
    %c0_i32_0 = arith.constant 0 : i32
    %c0_i32_1 = arith.constant 0 : i32
    return %c0_i32, %c0_i32_0 : i32, i32
  }
  func.func @transform_4(%arg0: i32) -> (i32, i32) {
    %c0_i32 = arith.constant 0 : i32
    %c0_i32_0 = arith.constant 0 : i32
    %c0_i32_1 = arith.constant 0 : i32
    return %c0_i32, %c0_i32_0 : i32, i32
  }
  func.func @transform_5(%arg0: i32) -> (i32, i32) {
    %c0_i32 = arith.constant 0 : i32
    %c0_i32_0 = arith.constant 0 : i32
    %c0_i32_1 = arith.constant 0 : i32
    return %c0_i32, %c0_i32_0 : i32, i32
  }
  func.func @transform_6(%arg0: i32) -> (i32, i32) {
    %c0_i32 = arith.constant 0 : i32
    %c0_i32_0 = arith.constant 0 : i32
    %c0_i32_1 = arith.constant 0 : i32
    return %c0_i32, %c0_i32_0 : i32, i32
  }
  func.func @transform_7(%arg0: i32) -> (i32, i32) {
    %c0_i32 = arith.constant 0 : i32
    %c0_i32_0 = arith.constant 0 : i32
    %c0_i32_1 = arith.constant 0 : i32
    return %c0_i32, %c0_i32_0 : i32, i32
  }
  func.func @transform_8(%arg0: i32) -> (i32, i32, i32) {
    %c0_i32 = arith.constant 0 : i32
    %c0_i32_0 = arith.constant 0 : i32
    %c0_i32_1 = arith.constant 0 : i32
    return %arg0, %c0_i32, %c0_i32_0 : i32, i32, i32
  }
  func.func @transform_9(%arg0: i32) -> (i32, i32, i32) {
    %c3_i32 = arith.constant 3 : i32
    %0 = arith.subi %c3_i32, %arg0 : i32
    %c0_i32 = arith.constant 0 : i32
    %c0_i32_0 = arith.constant 0 : i32
    %c0_i32_1 = arith.constant 0 : i32
    return %0, %c0_i32, %c0_i32_0 : i32, i32, i32
  }
  func.func @transform_10(%arg0: i32) -> (i32, i32) {
    %c0_i32 = arith.constant 0 : i32
    %c0_i32_0 = arith.constant 0 : i32
    %c0_i32_1 = arith.constant 0 : i32
    return %c0_i32, %c0_i32_0 : i32, i32
  }
}

module attributes {stable_mosaic.version = 11 : i64} {
  func.func @kernel(%arg0: i32, %arg1: memref<1x400x128xbf16, #tpu.memory_space<vmem>>, %arg2: memref<1x400x128xbf16, #tpu.memory_space<vmem>>, %arg3: memref<1x400x128xbf16, #tpu.memory_space<vmem>>, %arg4: memref<1x400x128xbf16, #tpu.memory_space<vmem>>, %arg5: memref<128x128xbf16, #tpu.memory_space<vmem>>, %arg6: memref<128x128xbf16, #tpu.memory_space<vmem>>, %arg7: memref<128x128xbf16, #tpu.memory_space<vmem>>, %arg8: memref<128x128xbf16, #tpu.memory_space<vmem>>, %arg9: memref<1x128xf32, #tpu.memory_space<vmem>>, %arg10: memref<1x128xf32, #tpu.memory_space<vmem>>, %arg11: memref<1x128xf32, #tpu.memory_space<vmem>>, %arg12: memref<1x128xf32, #tpu.memory_space<vmem>>, %arg13: memref<1x400x128xbf16, #tpu.memory_space<vmem>>, %arg14: memref<1x400x128xbf16, #tpu.memory_space<vmem>>, %arg15: memref<4x128xf32, #tpu.memory_space<vmem>>, %arg16: memref<16x128xf32, #tpu.memory_space<vmem>>, %arg17: memref<16x128xf32, #tpu.memory_space<vmem>>) attributes {dimension_semantics = [#tpu.dimension_semantics<arbitrary>], iteration_bounds = array<i64: 4>, scalar_prefetch = 0 : i64, scratch_operands = 2 : i64, tpu.core_type = #tpu.core_type<tc>, window_params = [{transform_indices = @transform_0, window_bounds = array<i64: 1, 400, 128>}, {transform_indices = @transform_1, window_bounds = array<i64: 1, 400, 128>}, {transform_indices = @transform_2, window_bounds = array<i64: 1, 400, 128>}, {transform_indices = @transform_3, window_bounds = array<i64: 1, 400, 128>}, {pipeline_mode = #tpu.pipeline_mode<synchronous>, transform_indices = @transform_4, window_bounds = array<i64: 128, 128>}, {pipeline_mode = #tpu.pipeline_mode<synchronous>, transform_indices = @transform_5, window_bounds = array<i64: 128, 128>}, {pipeline_mode = #tpu.pipeline_mode<synchronous>, transform_indices = @transform_6, window_bounds = array<i64: 128, 128>}, {pipeline_mode = #tpu.pipeline_mode<synchronous>, transform_indices = @transform_7, window_bounds = array<i64: 128, 128>}, {pipeline_mode = #tpu.pipeline_mode<synchronous>, transform_indices = @transform_8, window_bounds = array<i64: 1, 128>}, {pipeline_mode = #tpu.pipeline_mode<synchronous>, transform_indices = @transform_9, window_bounds = array<i64: 1, 128>}, {pipeline_mode = #tpu.pipeline_mode<synchronous>, transform_indices = @transform_10, window_bounds = array<i64: 1, 128>}, {pipeline_mode = #tpu.pipeline_mode<synchronous>, transform_indices = @transform_11, window_bounds = array<i64: 1, 128>}, {transform_indices = @transform_12, window_bounds = array<i64: 1, 400, 128>}, {transform_indices = @transform_13, window_bounds = array<i64: 1, 400, 128>}, {pipeline_mode = #tpu.pipeline_mode<synchronous>, transform_indices = @transform_14, window_bounds = array<i64: 4, 128>}]} {
    %c0_i32 = arith.constant 0 : i32
    %0 = arith.cmpi eq, %arg0, %c0_i32 : i32
    %1 = arith.extui %0 : i1 to i32
    %c0_i32_0 = arith.constant 0 : i32
    %2 = arith.cmpi ne, %1, %c0_i32_0 : i32
    scf.if %2 {
      %cst_227 = arith.constant 0.000000e+00 : f32
      %699 = vector.broadcast %cst_227 : f32 to vector<16x128xf32>
      %c0_228 = arith.constant 0 : index
      %c0_229 = arith.constant 0 : index
      %700 = vector.load %arg16[%c0_228, %c0_229] : memref<16x128xf32, #tpu.memory_space<vmem>>, vector<16x128xf32>
      tpu.vector_store %arg16[%c0_228, %c0_229], %699 {strides = array<i32>} : memref<16x128xf32, #tpu.memory_space<vmem>>, vector<16x128xf32>,
      %cst_230 = arith.constant 0.000000e+00 : f32
      %701 = vector.broadcast %cst_230 : f32 to vector<16x128xf32>
      %c0_231 = arith.constant 0 : index
      %c0_232 = arith.constant 0 : index
      %702 = vector.load %arg17[%c0_231, %c0_232] : memref<16x128xf32, #tpu.memory_space<vmem>>, vector<16x128xf32>
      tpu.vector_store %arg17[%c0_231, %c0_232], %701 {strides = array<i32>} : memref<16x128xf32, #tpu.memory_space<vmem>>, vector<16x128xf32>,
      %cst_233 = arith.constant 0.000000e+00 : f32
      %703 = vector.broadcast %cst_233 : f32 to vector<4x128xf32>
      %c0_234 = arith.constant 0 : index
      %c0_235 = arith.constant 0 : index
      %704 = vector.load %arg15[%c0_234, %c0_235] : memref<4x128xf32, #tpu.memory_space<vmem>>, vector<4x128xf32>
      tpu.vector_store %arg15[%c0_234, %c0_235], %703 {strides = array<i32>} : memref<4x128xf32, #tpu.memory_space<vmem>>, vector<4x128xf32>,
    } else {
    }
    %c0 = arith.constant 0 : index
    %c0_1 = arith.constant 0 : index
    %3 = vector.load %arg5[%c0, %c0_1] : memref<128x128xbf16, #tpu.memory_space<vmem>>, vector<128x128xbf16>
    %c0_2 = arith.constant 0 : index
    %c0_3 = arith.constant 0 : index
    %4 = vector.load %arg7[%c0_2, %c0_3] : memref<128x128xbf16, #tpu.memory_space<vmem>>, vector<128x128xbf16>
    %c0_4 = arith.constant 0 : index
    %c0_5 = arith.constant 0 : index
    %c0_6 = arith.constant 0 : index
    %5 = vector.load %arg1[%c0_4, %c0_5, %c0_6] : memref<1x400x128xbf16, #tpu.memory_space<vmem>>, vector<1x400x128xbf16>
    %6 = vector.shape_cast %5 : vector<1x400x128xbf16> to vector<400x128xbf16>
    %c0_7 = arith.constant 0 : index
    %c0_8 = arith.constant 0 : index
    %c0_9 = arith.constant 0 : index
    %7 = vector.load %arg3[%c0_7, %c0_8, %c0_9] : memref<1x400x128xbf16, #tpu.memory_space<vmem>>, vector<1x400x128xbf16>
    %8 = vector.shape_cast %7 : vector<1x400x128xbf16> to vector<400x128xbf16>
    %cst = arith.constant dense<0.000000e+00> : vector<400x128xf32>
    %9 = tpu.matmul %6, %3, %cst {dimension_numbers = #tpu.dot_dimension_numbers<[1], [0], [0], [1], [0, 0, 1, 1], [], []>} : vector<400x128xbf16>, vector<128x128xbf16>, vector<400x128xf32> -> vector<400x128xf32>
    %cst_10 = arith.constant dense<0.000000e+00> : vector<400x128xf32>
    %10 = tpu.matmul %8, %4, %cst_10 {dimension_numbers = #tpu.dot_dimension_numbers<[1], [0], [0], [1], [0, 0, 1, 1], [], []>} : vector<400x128xbf16>, vector<128x128xbf16>, vector<400x128xf32> -> vector<400x128xf32>
    %c0_11 = arith.constant 0 : index
    %c0_12 = arith.constant 0 : index
    %11 = vector.load %arg6[%c0_11, %c0_12] : memref<128x128xbf16, #tpu.memory_space<vmem>>, vector<128x128xbf16>
    %c0_13 = arith.constant 0 : index
    %c0_14 = arith.constant 0 : index
    %12 = vector.load %arg8[%c0_13, %c0_14] : memref<128x128xbf16, #tpu.memory_space<vmem>>, vector<128x128xbf16>
    %c0_15 = arith.constant 0 : index
    %c0_16 = arith.constant 0 : index
    %c0_17 = arith.constant 0 : index
    %13 = vector.load %arg2[%c0_15, %c0_16, %c0_17] : memref<1x400x128xbf16, #tpu.memory_space<vmem>>, vector<1x400x128xbf16>
    %14 = vector.shape_cast %13 : vector<1x400x128xbf16> to vector<400x128xbf16>
    %c0_18 = arith.constant 0 : index
    %c0_19 = arith.constant 0 : index
    %c0_20 = arith.constant 0 : index
    %15 = vector.load %arg4[%c0_18, %c0_19, %c0_20] : memref<1x400x128xbf16, #tpu.memory_space<vmem>>, vector<1x400x128xbf16>
    %16 = vector.shape_cast %15 : vector<1x400x128xbf16> to vector<400x128xbf16>
    %cst_21 = arith.constant dense<0.000000e+00> : vector<400x128xf32>
    %17 = tpu.matmul %14, %11, %cst_21 {dimension_numbers = #tpu.dot_dimension_numbers<[1], [0], [0], [1], [0, 0, 1, 1], [], []>} : vector<400x128xbf16>, vector<128x128xbf16>, vector<400x128xf32> -> vector<400x128xf32>
    %cst_22 = arith.constant dense<0.000000e+00> : vector<400x128xf32>
    %18 = tpu.matmul %16, %12, %cst_22 {dimension_numbers = #tpu.dot_dimension_numbers<[1], [0], [0], [1], [0, 0, 1, 1], [], []>} : vector<400x128xbf16>, vector<128x128xbf16>, vector<400x128xf32> -> vector<400x128xf32>
    %19 = arith.addf %9, %17 : vector<400x128xf32>
    %20 = arith.addf %10, %18 : vector<400x128xf32>
    %c0_23 = arith.constant 0 : index
    %c0_24 = arith.constant 0 : index
    %21 = vector.load %arg9[%c0_23, %c0_24] : memref<1x128xf32, #tpu.memory_space<vmem>>, vector<1x128xf32>
    %22 = vector.broadcast %21 : vector<1x128xf32> to vector<400x128xf32>
    %23 = arith.addf %19, %22 : vector<400x128xf32>
    %c0_25 = arith.constant 0 : index
    %c0_26 = arith.constant 0 : index
    %24 = vector.load %arg10[%c0_25, %c0_26] : memref<1x128xf32, #tpu.memory_space<vmem>>, vector<1x128xf32>
    %25 = vector.broadcast %24 : vector<1x128xf32> to vector<400x128xf32>
    %26 = arith.addf %20, %25 : vector<400x128xf32>
    %c0_27 = arith.constant 0 : index
    %c0_28 = arith.constant 0 : index
    %27 = vector.load %arg11[%c0_27, %c0_28] : memref<1x128xf32, #tpu.memory_space<vmem>>, vector<1x128xf32>
    %c0_29 = arith.constant 0 : index
    %c0_30 = arith.constant 0 : index
    %28 = vector.load %arg12[%c0_29, %c0_30] : memref<1x128xf32, #tpu.memory_space<vmem>>, vector<1x128xf32>
    %c0_31 = arith.constant 0 : index
    %c0_32 = arith.constant 0 : index
    %29 = vector.load %arg16[%c0_31, %c0_32] : memref<16x128xf32, #tpu.memory_space<vmem>>, vector<16x128xf32>
    %c0_33 = arith.constant 0 : index
    %c0_34 = arith.constant 0 : index
    %30 = vector.load %arg17[%c0_33, %c0_34] : memref<16x128xf32, #tpu.memory_space<vmem>>, vector<16x128xf32>
    %cst_35 = arith.constant 0.000000e+00 : f32
    %31 = vector.broadcast %cst_35 : f32 to vector<16x128xf32>
    %cst_36 = arith.constant 0.000000e+00 : f32
    %32 = vector.broadcast %cst_36 : f32 to vector<16x128xf32>
    %cst_37 = arith.constant 0.000000e+00 : f32
    %33 = vector.broadcast %cst_37 : f32 to vector<16x128xf32>
    %cst_38 = arith.constant 0.000000e+00 : f32
    %34 = vector.broadcast %cst_38 : f32 to vector<16x128xf32>
    %35 = vector.extract_strided_slice %23 {offsets = [0, 0], sizes = [16, 128], strides = [1, 1]} : vector<400x128xf32> to vector<16x128xf32>
    %36 = vector.broadcast %27 : vector<1x128xf32> to vector<16x128xf32>
    %37 = arith.mulf %36, %29 : vector<16x128xf32>
    %38 = arith.addf %35, %37 : vector<16x128xf32>
    %cst_39 = arith.constant 0.000000e+00 : f32
    %39 = vector.broadcast %cst_39 : f32 to vector<16x128xf32>
    %40 = arith.maximumf %38, %39 : vector<16x128xf32>
    %41 = vector.extract_strided_slice %26 {offsets = [384, 0], sizes = [16, 128], strides = [1, 1]} : vector<400x128xf32> to vector<16x128xf32>
    %42 = vector.broadcast %28 : vector<1x128xf32> to vector<16x128xf32>
    %43 = arith.mulf %42, %30 : vector<16x128xf32>
    %44 = arith.addf %41, %43 : vector<16x128xf32>
    %cst_40 = arith.constant 0.000000e+00 : f32
    %45 = vector.broadcast %cst_40 : f32 to vector<16x128xf32>
    %46 = arith.maximumf %44, %45 : vector<16x128xf32>
    %47 = arith.truncf %40 : vector<16x128xf32> to vector<16x128xbf16>
    %c0_41 = arith.constant 0 : index
    %c0_42 = arith.constant 0 : index
    %c0_43 = arith.constant 0 : index
    %48 = vector.load %arg13[%c0_41, %c0_42, %c0_43] : memref<1x400x128xbf16, #tpu.memory_space<vmem>>, vector<1x16x128xbf16>
    %49 = vector.shape_cast %48 : vector<1x16x128xbf16> to vector<16x128xbf16>
    %50 = vector.shape_cast %47 : vector<16x128xbf16> to vector<1x16x128xbf16>
    tpu.vector_store %arg13[%c0_41, %c0_42, %c0_43], %50 {strides = array<i32>} : memref<1x400x128xbf16, #tpu.memory_space<vmem>>, vector<1x16x128xbf16>,
    %51 = arith.truncf %46 : vector<16x128xf32> to vector<16x128xbf16>
    %c0_44 = arith.constant 0 : index
    %c384 = arith.constant 384 : index
    %c0_45 = arith.constant 0 : index
    %52 = vector.load %arg14[%c0_44, %c384, %c0_45] : memref<1x400x128xbf16, #tpu.memory_space<vmem>>, vector<1x16x128xbf16>
    %53 = vector.shape_cast %52 : vector<1x16x128xbf16> to vector<16x128xbf16>
    %54 = vector.shape_cast %51 : vector<16x128xbf16> to vector<1x16x128xbf16>
    tpu.vector_store %arg14[%c0_44, %c384, %c0_45], %54 {strides = array<i32>} : memref<1x400x128xbf16, #tpu.memory_space<vmem>>, vector<1x16x128xbf16>,
    %55 = arith.addf %31, %40 : vector<16x128xf32>
    %56 = arith.addf %32, %46 : vector<16x128xf32>
    %57 = arith.mulf %40, %40 : vector<16x128xf32>
    %58 = arith.addf %33, %57 : vector<16x128xf32>
    %59 = arith.mulf %46, %46 : vector<16x128xf32>
    %60 = arith.addf %34, %59 : vector<16x128xf32>
    %61 = vector.extract_strided_slice %23 {offsets = [16, 0], sizes = [16, 128], strides = [1, 1]} : vector<400x128xf32> to vector<16x128xf32>
    %62 = vector.broadcast %27 : vector<1x128xf32> to vector<16x128xf32>
    %63 = arith.mulf %62, %40 : vector<16x128xf32>
    %64 = arith.addf %61, %63 : vector<16x128xf32>
    %cst_46 = arith.constant 0.000000e+00 : f32
    %65 = vector.broadcast %cst_46 : f32 to vector<16x128xf32>
    %66 = arith.maximumf %64, %65 : vector<16x128xf32>
    %67 = vector.extract_strided_slice %26 {offsets = [368, 0], sizes = [16, 128], strides = [1, 1]} : vector<400x128xf32> to vector<16x128xf32>
    %68 = vector.broadcast %28 : vector<1x128xf32> to vector<16x128xf32>
    %69 = arith.mulf %68, %46 : vector<16x128xf32>
    %70 = arith.addf %67, %69 : vector<16x128xf32>
    %cst_47 = arith.constant 0.000000e+00 : f32
    %71 = vector.broadcast %cst_47 : f32 to vector<16x128xf32>
    %72 = arith.maximumf %70, %71 : vector<16x128xf32>
    %73 = arith.truncf %66 : vector<16x128xf32> to vector<16x128xbf16>
    %c0_48 = arith.constant 0 : index
    %c16 = arith.constant 16 : index
    %c0_49 = arith.constant 0 : index
    %74 = vector.load %arg13[%c0_48, %c16, %c0_49] : memref<1x400x128xbf16, #tpu.memory_space<vmem>>, vector<1x16x128xbf16>
    %75 = vector.shape_cast %74 : vector<1x16x128xbf16> to vector<16x128xbf16>
    %76 = vector.shape_cast %73 : vector<16x128xbf16> to vector<1x16x128xbf16>
    tpu.vector_store %arg13[%c0_48, %c16, %c0_49], %76 {strides = array<i32>} : memref<1x400x128xbf16, #tpu.memory_space<vmem>>, vector<1x16x128xbf16>,
    %77 = arith.truncf %72 : vector<16x128xf32> to vector<16x128xbf16>
    %c0_50 = arith.constant 0 : index
    %c368 = arith.constant 368 : index
    %c0_51 = arith.constant 0 : index
    %78 = vector.load %arg14[%c0_50, %c368, %c0_51] : memref<1x400x128xbf16, #tpu.memory_space<vmem>>, vector<1x16x128xbf16>
    %79 = vector.shape_cast %78 : vector<1x16x128xbf16> to vector<16x128xbf16>
    %80 = vector.shape_cast %77 : vector<16x128xbf16> to vector<1x16x128xbf16>
    tpu.vector_store %arg14[%c0_50, %c368, %c0_51], %80 {strides = array<i32>} : memref<1x400x128xbf16, #tpu.memory_space<vmem>>, vector<1x16x128xbf16>,
    %81 = arith.addf %55, %66 : vector<16x128xf32>
    %82 = arith.addf %56, %72 : vector<16x128xf32>
    %83 = arith.mulf %66, %66 : vector<16x128xf32>
    %84 = arith.addf %58, %83 : vector<16x128xf32>
    %85 = arith.mulf %72, %72 : vector<16x128xf32>
    %86 = arith.addf %60, %85 : vector<16x128xf32>
    %87 = vector.extract_strided_slice %23 {offsets = [32, 0], sizes = [16, 128], strides = [1, 1]} : vector<400x128xf32> to vector<16x128xf32>
    %88 = vector.broadcast %27 : vector<1x128xf32> to vector<16x128xf32>
    %89 = arith.mulf %88, %66 : vector<16x128xf32>
    %90 = arith.addf %87, %89 : vector<16x128xf32>
    %cst_52 = arith.constant 0.000000e+00 : f32
    %91 = vector.broadcast %cst_52 : f32 to vector<16x128xf32>
    %92 = arith.maximumf %90, %91 : vector<16x128xf32>
    %93 = vector.extract_strided_slice %26 {offsets = [352, 0], sizes = [16, 128], strides = [1, 1]} : vector<400x128xf32> to vector<16x128xf32>
    %94 = vector.broadcast %28 : vector<1x128xf32> to vector<16x128xf32>
    %95 = arith.mulf %94, %72 : vector<16x128xf32>
    %96 = arith.addf %93, %95 : vector<16x128xf32>
    %cst_53 = arith.constant 0.000000e+00 : f32
    %97 = vector.broadcast %cst_53 : f32 to vector<16x128xf32>
    %98 = arith.maximumf %96, %97 : vector<16x128xf32>
    %99 = arith.truncf %92 : vector<16x128xf32> to vector<16x128xbf16>
    %c0_54 = arith.constant 0 : index
    %c32 = arith.constant 32 : index
    %c0_55 = arith.constant 0 : index
    %100 = vector.load %arg13[%c0_54, %c32, %c0_55] : memref<1x400x128xbf16, #tpu.memory_space<vmem>>, vector<1x16x128xbf16>
    %101 = vector.shape_cast %100 : vector<1x16x128xbf16> to vector<16x128xbf16>
    %102 = vector.shape_cast %99 : vector<16x128xbf16> to vector<1x16x128xbf16>
    tpu.vector_store %arg13[%c0_54, %c32, %c0_55], %102 {strides = array<i32>} : memref<1x400x128xbf16, #tpu.memory_space<vmem>>, vector<1x16x128xbf16>,
    %103 = arith.truncf %98 : vector<16x128xf32> to vector<16x128xbf16>
    %c0_56 = arith.constant 0 : index
    %c352 = arith.constant 352 : index
    %c0_57 = arith.constant 0 : index
    %104 = vector.load %arg14[%c0_56, %c352, %c0_57] : memref<1x400x128xbf16, #tpu.memory_space<vmem>>, vector<1x16x128xbf16>
    %105 = vector.shape_cast %104 : vector<1x16x128xbf16> to vector<16x128xbf16>
    %106 = vector.shape_cast %103 : vector<16x128xbf16> to vector<1x16x128xbf16>
    tpu.vector_store %arg14[%c0_56, %c352, %c0_57], %106 {strides = array<i32>} : memref<1x400x128xbf16, #tpu.memory_space<vmem>>, vector<1x16x128xbf16>,
    %107 = arith.addf %81, %92 : vector<16x128xf32>
    %108 = arith.addf %82, %98 : vector<16x128xf32>
    %109 = arith.mulf %92, %92 : vector<16x128xf32>
    %110 = arith.addf %84, %109 : vector<16x128xf32>
    %111 = arith.mulf %98, %98 : vector<16x128xf32>
    %112 = arith.addf %86, %111 : vector<16x128xf32>
    %113 = vector.extract_strided_slice %23 {offsets = [48, 0], sizes = [16, 128], strides = [1, 1]} : vector<400x128xf32> to vector<16x128xf32>
    %114 = vector.broadcast %27 : vector<1x128xf32> to vector<16x128xf32>
    %115 = arith.mulf %114, %92 : vector<16x128xf32>
    %116 = arith.addf %113, %115 : vector<16x128xf32>
    %cst_58 = arith.constant 0.000000e+00 : f32
    %117 = vector.broadcast %cst_58 : f32 to vector<16x128xf32>
    %118 = arith.maximumf %116, %117 : vector<16x128xf32>
    %119 = vector.extract_strided_slice %26 {offsets = [336, 0], sizes = [16, 128], strides = [1, 1]} : vector<400x128xf32> to vector<16x128xf32>
    %120 = vector.broadcast %28 : vector<1x128xf32> to vector<16x128xf32>
    %121 = arith.mulf %120, %98 : vector<16x128xf32>
    %122 = arith.addf %119, %121 : vector<16x128xf32>
    %cst_59 = arith.constant 0.000000e+00 : f32
    %123 = vector.broadcast %cst_59 : f32 to vector<16x128xf32>
    %124 = arith.maximumf %122, %123 : vector<16x128xf32>
    %125 = arith.truncf %118 : vector<16x128xf32> to vector<16x128xbf16>
    %c0_60 = arith.constant 0 : index
    %c48 = arith.constant 48 : index
    %c0_61 = arith.constant 0 : index
    %126 = vector.load %arg13[%c0_60, %c48, %c0_61] : memref<1x400x128xbf16, #tpu.memory_space<vmem>>, vector<1x16x128xbf16>
    %127 = vector.shape_cast %126 : vector<1x16x128xbf16> to vector<16x128xbf16>
    %128 = vector.shape_cast %125 : vector<16x128xbf16> to vector<1x16x128xbf16>
    tpu.vector_store %arg13[%c0_60, %c48, %c0_61], %128 {strides = array<i32>} : memref<1x400x128xbf16, #tpu.memory_space<vmem>>, vector<1x16x128xbf16>,
    %129 = arith.truncf %124 : vector<16x128xf32> to vector<16x128xbf16>
    %c0_62 = arith.constant 0 : index
    %c336 = arith.constant 336 : index
    %c0_63 = arith.constant 0 : index
    %130 = vector.load %arg14[%c0_62, %c336, %c0_63] : memref<1x400x128xbf16, #tpu.memory_space<vmem>>, vector<1x16x128xbf16>
    %131 = vector.shape_cast %130 : vector<1x16x128xbf16> to vector<16x128xbf16>
    %132 = vector.shape_cast %129 : vector<16x128xbf16> to vector<1x16x128xbf16>
    tpu.vector_store %arg14[%c0_62, %c336, %c0_63], %132 {strides = array<i32>} : memref<1x400x128xbf16, #tpu.memory_space<vmem>>, vector<1x16x128xbf16>,
    %133 = arith.addf %107, %118 : vector<16x128xf32>
    %134 = arith.addf %108, %124 : vector<16x128xf32>
    %135 = arith.mulf %118, %118 : vector<16x128xf32>
    %136 = arith.addf %110, %135 : vector<16x128xf32>
    %137 = arith.mulf %124, %124 : vector<16x128xf32>
    %138 = arith.addf %112, %137 : vector<16x128xf32>
    %139 = vector.extract_strided_slice %23 {offsets = [64, 0], sizes = [16, 128], strides = [1, 1]} : vector<400x128xf32> to vector<16x128xf32>
    %140 = vector.broadcast %27 : vector<1x128xf32> to vector<16x128xf32>
    %141 = arith.mulf %140, %118 : vector<16x128xf32>
    %142 = arith.addf %139, %141 : vector<16x128xf32>
    %cst_64 = arith.constant 0.000000e+00 : f32
    %143 = vector.broadcast %cst_64 : f32 to vector<16x128xf32>
    %144 = arith.maximumf %142, %143 : vector<16x128xf32>
    %145 = vector.extract_strided_slice %26 {offsets = [320, 0], sizes = [16, 128], strides = [1, 1]} : vector<400x128xf32> to vector<16x128xf32>
    %146 = vector.broadcast %28 : vector<1x128xf32> to vector<16x128xf32>
    %147 = arith.mulf %146, %124 : vector<16x128xf32>
    %148 = arith.addf %145, %147 : vector<16x128xf32>
    %cst_65 = arith.constant 0.000000e+00 : f32
    %149 = vector.broadcast %cst_65 : f32 to vector<16x128xf32>
    %150 = arith.maximumf %148, %149 : vector<16x128xf32>
    %151 = arith.truncf %144 : vector<16x128xf32> to vector<16x128xbf16>
    %c0_66 = arith.constant 0 : index
    %c64 = arith.constant 64 : index
    %c0_67 = arith.constant 0 : index
    %152 = vector.load %arg13[%c0_66, %c64, %c0_67] : memref<1x400x128xbf16, #tpu.memory_space<vmem>>, vector<1x16x128xbf16>
    %153 = vector.shape_cast %152 : vector<1x16x128xbf16> to vector<16x128xbf16>
    %154 = vector.shape_cast %151 : vector<16x128xbf16> to vector<1x16x128xbf16>
    tpu.vector_store %arg13[%c0_66, %c64, %c0_67], %154 {strides = array<i32>} : memref<1x400x128xbf16, #tpu.memory_space<vmem>>, vector<1x16x128xbf16>,
    %155 = arith.truncf %150 : vector<16x128xf32> to vector<16x128xbf16>
    %c0_68 = arith.constant 0 : index
    %c320 = arith.constant 320 : index
    %c0_69 = arith.constant 0 : index
    %156 = vector.load %arg14[%c0_68, %c320, %c0_69] : memref<1x400x128xbf16, #tpu.memory_space<vmem>>, vector<1x16x128xbf16>
    %157 = vector.shape_cast %156 : vector<1x16x128xbf16> to vector<16x128xbf16>
    %158 = vector.shape_cast %155 : vector<16x128xbf16> to vector<1x16x128xbf16>
    tpu.vector_store %arg14[%c0_68, %c320, %c0_69], %158 {strides = array<i32>} : memref<1x400x128xbf16, #tpu.memory_space<vmem>>, vector<1x16x128xbf16>,
    %159 = arith.addf %133, %144 : vector<16x128xf32>
    %160 = arith.addf %134, %150 : vector<16x128xf32>
    %161 = arith.mulf %144, %144 : vector<16x128xf32>
    %162 = arith.addf %136, %161 : vector<16x128xf32>
    %163 = arith.mulf %150, %150 : vector<16x128xf32>
    %164 = arith.addf %138, %163 : vector<16x128xf32>
    %165 = vector.extract_strided_slice %23 {offsets = [80, 0], sizes = [16, 128], strides = [1, 1]} : vector<400x128xf32> to vector<16x128xf32>
    %166 = vector.broadcast %27 : vector<1x128xf32> to vector<16x128xf32>
    %167 = arith.mulf %166, %144 : vector<16x128xf32>
    %168 = arith.addf %165, %167 : vector<16x128xf32>
    %cst_70 = arith.constant 0.000000e+00 : f32
    %169 = vector.broadcast %cst_70 : f32 to vector<16x128xf32>
    %170 = arith.maximumf %168, %169 : vector<16x128xf32>
    %171 = vector.extract_strided_slice %26 {offsets = [304, 0], sizes = [16, 128], strides = [1, 1]} : vector<400x128xf32> to vector<16x128xf32>
    %172 = vector.broadcast %28 : vector<1x128xf32> to vector<16x128xf32>
    %173 = arith.mulf %172, %150 : vector<16x128xf32>
    %174 = arith.addf %171, %173 : vector<16x128xf32>
    %cst_71 = arith.constant 0.000000e+00 : f32
    %175 = vector.broadcast %cst_71 : f32 to vector<16x128xf32>
    %176 = arith.maximumf %174, %175 : vector<16x128xf32>
    %177 = arith.truncf %170 : vector<16x128xf32> to vector<16x128xbf16>
    %c0_72 = arith.constant 0 : index
    %c80 = arith.constant 80 : index
    %c0_73 = arith.constant 0 : index
    %178 = vector.load %arg13[%c0_72, %c80, %c0_73] : memref<1x400x128xbf16, #tpu.memory_space<vmem>>, vector<1x16x128xbf16>
    %179 = vector.shape_cast %178 : vector<1x16x128xbf16> to vector<16x128xbf16>
    %180 = vector.shape_cast %177 : vector<16x128xbf16> to vector<1x16x128xbf16>
    tpu.vector_store %arg13[%c0_72, %c80, %c0_73], %180 {strides = array<i32>} : memref<1x400x128xbf16, #tpu.memory_space<vmem>>, vector<1x16x128xbf16>,
    %181 = arith.truncf %176 : vector<16x128xf32> to vector<16x128xbf16>
    %c0_74 = arith.constant 0 : index
    %c304 = arith.constant 304 : index
    %c0_75 = arith.constant 0 : index
    %182 = vector.load %arg14[%c0_74, %c304, %c0_75] : memref<1x400x128xbf16, #tpu.memory_space<vmem>>, vector<1x16x128xbf16>
    %183 = vector.shape_cast %182 : vector<1x16x128xbf16> to vector<16x128xbf16>
    %184 = vector.shape_cast %181 : vector<16x128xbf16> to vector<1x16x128xbf16>
    tpu.vector_store %arg14[%c0_74, %c304, %c0_75], %184 {strides = array<i32>} : memref<1x400x128xbf16, #tpu.memory_space<vmem>>, vector<1x16x128xbf16>,
    %185 = arith.addf %159, %170 : vector<16x128xf32>
    %186 = arith.addf %160, %176 : vector<16x128xf32>
    %187 = arith.mulf %170, %170 : vector<16x128xf32>
    %188 = arith.addf %162, %187 : vector<16x128xf32>
    %189 = arith.mulf %176, %176 : vector<16x128xf32>
    %190 = arith.addf %164, %189 : vector<16x128xf32>
    %191 = vector.extract_strided_slice %23 {offsets = [96, 0], sizes = [16, 128], strides = [1, 1]} : vector<400x128xf32> to vector<16x128xf32>
    %192 = vector.broadcast %27 : vector<1x128xf32> to vector<16x128xf32>
    %193 = arith.mulf %192, %170 : vector<16x128xf32>
    %194 = arith.addf %191, %193 : vector<16x128xf32>
    %cst_76 = arith.constant 0.000000e+00 : f32
    %195 = vector.broadcast %cst_76 : f32 to vector<16x128xf32>
    %196 = arith.maximumf %194, %195 : vector<16x128xf32>
    %197 = vector.extract_strided_slice %26 {offsets = [288, 0], sizes = [16, 128], strides = [1, 1]} : vector<400x128xf32> to vector<16x128xf32>
    %198 = vector.broadcast %28 : vector<1x128xf32> to vector<16x128xf32>
    %199 = arith.mulf %198, %176 : vector<16x128xf32>
    %200 = arith.addf %197, %199 : vector<16x128xf32>
    %cst_77 = arith.constant 0.000000e+00 : f32
    %201 = vector.broadcast %cst_77 : f32 to vector<16x128xf32>
    %202 = arith.maximumf %200, %201 : vector<16x128xf32>
    %203 = arith.truncf %196 : vector<16x128xf32> to vector<16x128xbf16>
    %c0_78 = arith.constant 0 : index
    %c96 = arith.constant 96 : index
    %c0_79 = arith.constant 0 : index
    %204 = vector.load %arg13[%c0_78, %c96, %c0_79] : memref<1x400x128xbf16, #tpu.memory_space<vmem>>, vector<1x16x128xbf16>
    %205 = vector.shape_cast %204 : vector<1x16x128xbf16> to vector<16x128xbf16>
    %206 = vector.shape_cast %203 : vector<16x128xbf16> to vector<1x16x128xbf16>
    tpu.vector_store %arg13[%c0_78, %c96, %c0_79], %206 {strides = array<i32>} : memref<1x400x128xbf16, #tpu.memory_space<vmem>>, vector<1x16x128xbf16>,
    %207 = arith.truncf %202 : vector<16x128xf32> to vector<16x128xbf16>
    %c0_80 = arith.constant 0 : index
    %c288 = arith.constant 288 : index
    %c0_81 = arith.constant 0 : index
    %208 = vector.load %arg14[%c0_80, %c288, %c0_81] : memref<1x400x128xbf16, #tpu.memory_space<vmem>>, vector<1x16x128xbf16>
    %209 = vector.shape_cast %208 : vector<1x16x128xbf16> to vector<16x128xbf16>
    %210 = vector.shape_cast %207 : vector<16x128xbf16> to vector<1x16x128xbf16>
    tpu.vector_store %arg14[%c0_80, %c288, %c0_81], %210 {strides = array<i32>} : memref<1x400x128xbf16, #tpu.memory_space<vmem>>, vector<1x16x128xbf16>,
    %211 = arith.addf %185, %196 : vector<16x128xf32>
    %212 = arith.addf %186, %202 : vector<16x128xf32>
    %213 = arith.mulf %196, %196 : vector<16x128xf32>
    %214 = arith.addf %188, %213 : vector<16x128xf32>
    %215 = arith.mulf %202, %202 : vector<16x128xf32>
    %216 = arith.addf %190, %215 : vector<16x128xf32>
    %217 = vector.extract_strided_slice %23 {offsets = [112, 0], sizes = [16, 128], strides = [1, 1]} : vector<400x128xf32> to vector<16x128xf32>
    %218 = vector.broadcast %27 : vector<1x128xf32> to vector<16x128xf32>
    %219 = arith.mulf %218, %196 : vector<16x128xf32>
    %220 = arith.addf %217, %219 : vector<16x128xf32>
    %cst_82 = arith.constant 0.000000e+00 : f32
    %221 = vector.broadcast %cst_82 : f32 to vector<16x128xf32>
    %222 = arith.maximumf %220, %221 : vector<16x128xf32>
    %223 = vector.extract_strided_slice %26 {offsets = [272, 0], sizes = [16, 128], strides = [1, 1]} : vector<400x128xf32> to vector<16x128xf32>
    %224 = vector.broadcast %28 : vector<1x128xf32> to vector<16x128xf32>
    %225 = arith.mulf %224, %202 : vector<16x128xf32>
    %226 = arith.addf %223, %225 : vector<16x128xf32>
    %cst_83 = arith.constant 0.000000e+00 : f32
    %227 = vector.broadcast %cst_83 : f32 to vector<16x128xf32>
    %228 = arith.maximumf %226, %227 : vector<16x128xf32>
    %229 = arith.truncf %222 : vector<16x128xf32> to vector<16x128xbf16>
    %c0_84 = arith.constant 0 : index
    %c112 = arith.constant 112 : index
    %c0_85 = arith.constant 0 : index
    %230 = vector.load %arg13[%c0_84, %c112, %c0_85] : memref<1x400x128xbf16, #tpu.memory_space<vmem>>, vector<1x16x128xbf16>
    %231 = vector.shape_cast %230 : vector<1x16x128xbf16> to vector<16x128xbf16>
    %232 = vector.shape_cast %229 : vector<16x128xbf16> to vector<1x16x128xbf16>
    tpu.vector_store %arg13[%c0_84, %c112, %c0_85], %232 {strides = array<i32>} : memref<1x400x128xbf16, #tpu.memory_space<vmem>>, vector<1x16x128xbf16>,
    %233 = arith.truncf %228 : vector<16x128xf32> to vector<16x128xbf16>
    %c0_86 = arith.constant 0 : index
    %c272 = arith.constant 272 : index
    %c0_87 = arith.constant 0 : index
    %234 = vector.load %arg14[%c0_86, %c272, %c0_87] : memref<1x400x128xbf16, #tpu.memory_space<vmem>>, vector<1x16x128xbf16>
    %235 = vector.shape_cast %234 : vector<1x16x128xbf16> to vector<16x128xbf16>
    %236 = vector.shape_cast %233 : vector<16x128xbf16> to vector<1x16x128xbf16>
    tpu.vector_store %arg14[%c0_86, %c272, %c0_87], %236 {strides = array<i32>} : memref<1x400x128xbf16, #tpu.memory_space<vmem>>, vector<1x16x128xbf16>,
    %237 = arith.addf %211, %222 : vector<16x128xf32>
    %238 = arith.addf %212, %228 : vector<16x128xf32>
    %239 = arith.mulf %222, %222 : vector<16x128xf32>
    %240 = arith.addf %214, %239 : vector<16x128xf32>
    %241 = arith.mulf %228, %228 : vector<16x128xf32>
    %242 = arith.addf %216, %241 : vector<16x128xf32>
    %243 = vector.extract_strided_slice %23 {offsets = [128, 0], sizes = [16, 128], strides = [1, 1]} : vector<400x128xf32> to vector<16x128xf32>
    %244 = vector.broadcast %27 : vector<1x128xf32> to vector<16x128xf32>
    %245 = arith.mulf %244, %222 : vector<16x128xf32>
    %246 = arith.addf %243, %245 : vector<16x128xf32>
    %cst_88 = arith.constant 0.000000e+00 : f32
    %247 = vector.broadcast %cst_88 : f32 to vector<16x128xf32>
    %248 = arith.maximumf %246, %247 : vector<16x128xf32>
    %249 = vector.extract_strided_slice %26 {offsets = [256, 0], sizes = [16, 128], strides = [1, 1]} : vector<400x128xf32> to vector<16x128xf32>
    %250 = vector.broadcast %28 : vector<1x128xf32> to vector<16x128xf32>
    %251 = arith.mulf %250, %228 : vector<16x128xf32>
    %252 = arith.addf %249, %251 : vector<16x128xf32>
    %cst_89 = arith.constant 0.000000e+00 : f32
    %253 = vector.broadcast %cst_89 : f32 to vector<16x128xf32>
    %254 = arith.maximumf %252, %253 : vector<16x128xf32>
    %255 = arith.truncf %248 : vector<16x128xf32> to vector<16x128xbf16>
    %c0_90 = arith.constant 0 : index
    %c128 = arith.constant 128 : index
    %c0_91 = arith.constant 0 : index
    %256 = vector.load %arg13[%c0_90, %c128, %c0_91] : memref<1x400x128xbf16, #tpu.memory_space<vmem>>, vector<1x16x128xbf16>
    %257 = vector.shape_cast %256 : vector<1x16x128xbf16> to vector<16x128xbf16>
    %258 = vector.shape_cast %255 : vector<16x128xbf16> to vector<1x16x128xbf16>
    tpu.vector_store %arg13[%c0_90, %c128, %c0_91], %258 {strides = array<i32>} : memref<1x400x128xbf16, #tpu.memory_space<vmem>>, vector<1x16x128xbf16>,
    %259 = arith.truncf %254 : vector<16x128xf32> to vector<16x128xbf16>
    %c0_92 = arith.constant 0 : index
    %c256 = arith.constant 256 : index
    %c0_93 = arith.constant 0 : index
    %260 = vector.load %arg14[%c0_92, %c256, %c0_93] : memref<1x400x128xbf16, #tpu.memory_space<vmem>>, vector<1x16x128xbf16>
    %261 = vector.shape_cast %260 : vector<1x16x128xbf16> to vector<16x128xbf16>
    %262 = vector.shape_cast %259 : vector<16x128xbf16> to vector<1x16x128xbf16>
    tpu.vector_store %arg14[%c0_92, %c256, %c0_93], %262 {strides = array<i32>} : memref<1x400x128xbf16, #tpu.memory_space<vmem>>, vector<1x16x128xbf16>,
    %263 = arith.addf %237, %248 : vector<16x128xf32>
    %264 = arith.addf %238, %254 : vector<16x128xf32>
    %265 = arith.mulf %248, %248 : vector<16x128xf32>
    %266 = arith.addf %240, %265 : vector<16x128xf32>
    %267 = arith.mulf %254, %254 : vector<16x128xf32>
    %268 = arith.addf %242, %267 : vector<16x128xf32>
    %269 = vector.extract_strided_slice %23 {offsets = [144, 0], sizes = [16, 128], strides = [1, 1]} : vector<400x128xf32> to vector<16x128xf32>
    %270 = vector.broadcast %27 : vector<1x128xf32> to vector<16x128xf32>
    %271 = arith.mulf %270, %248 : vector<16x128xf32>
    %272 = arith.addf %269, %271 : vector<16x128xf32>
    %cst_94 = arith.constant 0.000000e+00 : f32
    %273 = vector.broadcast %cst_94 : f32 to vector<16x128xf32>
    %274 = arith.maximumf %272, %273 : vector<16x128xf32>
    %275 = vector.extract_strided_slice %26 {offsets = [240, 0], sizes = [16, 128], strides = [1, 1]} : vector<400x128xf32> to vector<16x128xf32>
    %276 = vector.broadcast %28 : vector<1x128xf32> to vector<16x128xf32>
    %277 = arith.mulf %276, %254 : vector<16x128xf32>
    %278 = arith.addf %275, %277 : vector<16x128xf32>
    %cst_95 = arith.constant 0.000000e+00 : f32
    %279 = vector.broadcast %cst_95 : f32 to vector<16x128xf32>
    %280 = arith.maximumf %278, %279 : vector<16x128xf32>
    %281 = arith.truncf %274 : vector<16x128xf32> to vector<16x128xbf16>
    %c0_96 = arith.constant 0 : index
    %c144 = arith.constant 144 : index
    %c0_97 = arith.constant 0 : index
    %282 = vector.load %arg13[%c0_96, %c144, %c0_97] : memref<1x400x128xbf16, #tpu.memory_space<vmem>>, vector<1x16x128xbf16>
    %283 = vector.shape_cast %282 : vector<1x16x128xbf16> to vector<16x128xbf16>
    %284 = vector.shape_cast %281 : vector<16x128xbf16> to vector<1x16x128xbf16>
    tpu.vector_store %arg13[%c0_96, %c144, %c0_97], %284 {strides = array<i32>} : memref<1x400x128xbf16, #tpu.memory_space<vmem>>, vector<1x16x128xbf16>,
    %285 = arith.truncf %280 : vector<16x128xf32> to vector<16x128xbf16>
    %c0_98 = arith.constant 0 : index
    %c240 = arith.constant 240 : index
    %c0_99 = arith.constant 0 : index
    %286 = vector.load %arg14[%c0_98, %c240, %c0_99] : memref<1x400x128xbf16, #tpu.memory_space<vmem>>, vector<1x16x128xbf16>
    %287 = vector.shape_cast %286 : vector<1x16x128xbf16> to vector<16x128xbf16>
    %288 = vector.shape_cast %285 : vector<16x128xbf16> to vector<1x16x128xbf16>
    tpu.vector_store %arg14[%c0_98, %c240, %c0_99], %288 {strides = array<i32>} : memref<1x400x128xbf16, #tpu.memory_space<vmem>>, vector<1x16x128xbf16>,
    %289 = arith.addf %263, %274 : vector<16x128xf32>
    %290 = arith.addf %264, %280 : vector<16x128xf32>
    %291 = arith.mulf %274, %274 : vector<16x128xf32>
    %292 = arith.addf %266, %291 : vector<16x128xf32>
    %293 = arith.mulf %280, %280 : vector<16x128xf32>
    %294 = arith.addf %268, %293 : vector<16x128xf32>
    %295 = vector.extract_strided_slice %23 {offsets = [160, 0], sizes = [16, 128], strides = [1, 1]} : vector<400x128xf32> to vector<16x128xf32>
    %296 = vector.broadcast %27 : vector<1x128xf32> to vector<16x128xf32>
    %297 = arith.mulf %296, %274 : vector<16x128xf32>
    %298 = arith.addf %295, %297 : vector<16x128xf32>
    %cst_100 = arith.constant 0.000000e+00 : f32
    %299 = vector.broadcast %cst_100 : f32 to vector<16x128xf32>
    %300 = arith.maximumf %298, %299 : vector<16x128xf32>
    %301 = vector.extract_strided_slice %26 {offsets = [224, 0], sizes = [16, 128], strides = [1, 1]} : vector<400x128xf32> to vector<16x128xf32>
    %302 = vector.broadcast %28 : vector<1x128xf32> to vector<16x128xf32>
    %303 = arith.mulf %302, %280 : vector<16x128xf32>
    %304 = arith.addf %301, %303 : vector<16x128xf32>
    %cst_101 = arith.constant 0.000000e+00 : f32
    %305 = vector.broadcast %cst_101 : f32 to vector<16x128xf32>
    %306 = arith.maximumf %304, %305 : vector<16x128xf32>
    %307 = arith.truncf %300 : vector<16x128xf32> to vector<16x128xbf16>
    %c0_102 = arith.constant 0 : index
    %c160 = arith.constant 160 : index
    %c0_103 = arith.constant 0 : index
    %308 = vector.load %arg13[%c0_102, %c160, %c0_103] : memref<1x400x128xbf16, #tpu.memory_space<vmem>>, vector<1x16x128xbf16>
    %309 = vector.shape_cast %308 : vector<1x16x128xbf16> to vector<16x128xbf16>
    %310 = vector.shape_cast %307 : vector<16x128xbf16> to vector<1x16x128xbf16>
    tpu.vector_store %arg13[%c0_102, %c160, %c0_103], %310 {strides = array<i32>} : memref<1x400x128xbf16, #tpu.memory_space<vmem>>, vector<1x16x128xbf16>,
    %311 = arith.truncf %306 : vector<16x128xf32> to vector<16x128xbf16>
    %c0_104 = arith.constant 0 : index
    %c224 = arith.constant 224 : index
    %c0_105 = arith.constant 0 : index
    %312 = vector.load %arg14[%c0_104, %c224, %c0_105] : memref<1x400x128xbf16, #tpu.memory_space<vmem>>, vector<1x16x128xbf16>
    %313 = vector.shape_cast %312 : vector<1x16x128xbf16> to vector<16x128xbf16>
    %314 = vector.shape_cast %311 : vector<16x128xbf16> to vector<1x16x128xbf16>
    tpu.vector_store %arg14[%c0_104, %c224, %c0_105], %314 {strides = array<i32>} : memref<1x400x128xbf16, #tpu.memory_space<vmem>>, vector<1x16x128xbf16>,
    %315 = arith.addf %289, %300 : vector<16x128xf32>
    %316 = arith.addf %290, %306 : vector<16x128xf32>
    %317 = arith.mulf %300, %300 : vector<16x128xf32>
    %318 = arith.addf %292, %317 : vector<16x128xf32>
    %319 = arith.mulf %306, %306 : vector<16x128xf32>
    %320 = arith.addf %294, %319 : vector<16x128xf32>
    %321 = vector.extract_strided_slice %23 {offsets = [176, 0], sizes = [16, 128], strides = [1, 1]} : vector<400x128xf32> to vector<16x128xf32>
    %322 = vector.broadcast %27 : vector<1x128xf32> to vector<16x128xf32>
    %323 = arith.mulf %322, %300 : vector<16x128xf32>
    %324 = arith.addf %321, %323 : vector<16x128xf32>
    %cst_106 = arith.constant 0.000000e+00 : f32
    %325 = vector.broadcast %cst_106 : f32 to vector<16x128xf32>
    %326 = arith.maximumf %324, %325 : vector<16x128xf32>
    %327 = vector.extract_strided_slice %26 {offsets = [208, 0], sizes = [16, 128], strides = [1, 1]} : vector<400x128xf32> to vector<16x128xf32>
    %328 = vector.broadcast %28 : vector<1x128xf32> to vector<16x128xf32>
    %329 = arith.mulf %328, %306 : vector<16x128xf32>
    %330 = arith.addf %327, %329 : vector<16x128xf32>
    %cst_107 = arith.constant 0.000000e+00 : f32
    %331 = vector.broadcast %cst_107 : f32 to vector<16x128xf32>
    %332 = arith.maximumf %330, %331 : vector<16x128xf32>
    %333 = arith.truncf %326 : vector<16x128xf32> to vector<16x128xbf16>
    %c0_108 = arith.constant 0 : index
    %c176 = arith.constant 176 : index
    %c0_109 = arith.constant 0 : index
    %334 = vector.load %arg13[%c0_108, %c176, %c0_109] : memref<1x400x128xbf16, #tpu.memory_space<vmem>>, vector<1x16x128xbf16>
    %335 = vector.shape_cast %334 : vector<1x16x128xbf16> to vector<16x128xbf16>
    %336 = vector.shape_cast %333 : vector<16x128xbf16> to vector<1x16x128xbf16>
    tpu.vector_store %arg13[%c0_108, %c176, %c0_109], %336 {strides = array<i32>} : memref<1x400x128xbf16, #tpu.memory_space<vmem>>, vector<1x16x128xbf16>,
    %337 = arith.truncf %332 : vector<16x128xf32> to vector<16x128xbf16>
    %c0_110 = arith.constant 0 : index
    %c208 = arith.constant 208 : index
    %c0_111 = arith.constant 0 : index
    %338 = vector.load %arg14[%c0_110, %c208, %c0_111] : memref<1x400x128xbf16, #tpu.memory_space<vmem>>, vector<1x16x128xbf16>
    %339 = vector.shape_cast %338 : vector<1x16x128xbf16> to vector<16x128xbf16>
    %340 = vector.shape_cast %337 : vector<16x128xbf16> to vector<1x16x128xbf16>
    tpu.vector_store %arg14[%c0_110, %c208, %c0_111], %340 {strides = array<i32>} : memref<1x400x128xbf16, #tpu.memory_space<vmem>>, vector<1x16x128xbf16>,
    %341 = arith.addf %315, %326 : vector<16x128xf32>
    %342 = arith.addf %316, %332 : vector<16x128xf32>
    %343 = arith.mulf %326, %326 : vector<16x128xf32>
    %344 = arith.addf %318, %343 : vector<16x128xf32>
    %345 = arith.mulf %332, %332 : vector<16x128xf32>
    %346 = arith.addf %320, %345 : vector<16x128xf32>
    %347 = vector.extract_strided_slice %23 {offsets = [192, 0], sizes = [16, 128], strides = [1, 1]} : vector<400x128xf32> to vector<16x128xf32>
    %348 = vector.broadcast %27 : vector<1x128xf32> to vector<16x128xf32>
    %349 = arith.mulf %348, %326 : vector<16x128xf32>
    %350 = arith.addf %347, %349 : vector<16x128xf32>
    %cst_112 = arith.constant 0.000000e+00 : f32
    %351 = vector.broadcast %cst_112 : f32 to vector<16x128xf32>
    %352 = arith.maximumf %350, %351 : vector<16x128xf32>
    %353 = vector.extract_strided_slice %26 {offsets = [192, 0], sizes = [16, 128], strides = [1, 1]} : vector<400x128xf32> to vector<16x128xf32>
    %354 = vector.broadcast %28 : vector<1x128xf32> to vector<16x128xf32>
    %355 = arith.mulf %354, %332 : vector<16x128xf32>
    %356 = arith.addf %353, %355 : vector<16x128xf32>
    %cst_113 = arith.constant 0.000000e+00 : f32
    %357 = vector.broadcast %cst_113 : f32 to vector<16x128xf32>
    %358 = arith.maximumf %356, %357 : vector<16x128xf32>
    %359 = arith.truncf %352 : vector<16x128xf32> to vector<16x128xbf16>
    %c0_114 = arith.constant 0 : index
    %c192 = arith.constant 192 : index
    %c0_115 = arith.constant 0 : index
    %360 = vector.load %arg13[%c0_114, %c192, %c0_115] : memref<1x400x128xbf16, #tpu.memory_space<vmem>>, vector<1x16x128xbf16>
    %361 = vector.shape_cast %360 : vector<1x16x128xbf16> to vector<16x128xbf16>
    %362 = vector.shape_cast %359 : vector<16x128xbf16> to vector<1x16x128xbf16>
    tpu.vector_store %arg13[%c0_114, %c192, %c0_115], %362 {strides = array<i32>} : memref<1x400x128xbf16, #tpu.memory_space<vmem>>, vector<1x16x128xbf16>,
    %363 = arith.truncf %358 : vector<16x128xf32> to vector<16x128xbf16>
    %c0_116 = arith.constant 0 : index
    %c192_117 = arith.constant 192 : index
    %c0_118 = arith.constant 0 : index
    %364 = vector.load %arg14[%c0_116, %c192_117, %c0_118] : memref<1x400x128xbf16, #tpu.memory_space<vmem>>, vector<1x16x128xbf16>
    %365 = vector.shape_cast %364 : vector<1x16x128xbf16> to vector<16x128xbf16>
    %366 = vector.shape_cast %363 : vector<16x128xbf16> to vector<1x16x128xbf16>
    tpu.vector_store %arg14[%c0_116, %c192_117, %c0_118], %366 {strides = array<i32>} : memref<1x400x128xbf16, #tpu.memory_space<vmem>>, vector<1x16x128xbf16>,
    %367 = arith.addf %341, %352 : vector<16x128xf32>
    %368 = arith.addf %342, %358 : vector<16x128xf32>
    %369 = arith.mulf %352, %352 : vector<16x128xf32>
    %370 = arith.addf %344, %369 : vector<16x128xf32>
    %371 = arith.mulf %358, %358 : vector<16x128xf32>
    %372 = arith.addf %346, %371 : vector<16x128xf32>
    %373 = vector.extract_strided_slice %23 {offsets = [208, 0], sizes = [16, 128], strides = [1, 1]} : vector<400x128xf32> to vector<16x128xf32>
    %374 = vector.broadcast %27 : vector<1x128xf32> to vector<16x128xf32>
    %375 = arith.mulf %374, %352 : vector<16x128xf32>
    %376 = arith.addf %373, %375 : vector<16x128xf32>
    %cst_119 = arith.constant 0.000000e+00 : f32
    %377 = vector.broadcast %cst_119 : f32 to vector<16x128xf32>
    %378 = arith.maximumf %376, %377 : vector<16x128xf32>
    %379 = vector.extract_strided_slice %26 {offsets = [176, 0], sizes = [16, 128], strides = [1, 1]} : vector<400x128xf32> to vector<16x128xf32>
    %380 = vector.broadcast %28 : vector<1x128xf32> to vector<16x128xf32>
    %381 = arith.mulf %380, %358 : vector<16x128xf32>
    %382 = arith.addf %379, %381 : vector<16x128xf32>
    %cst_120 = arith.constant 0.000000e+00 : f32
    %383 = vector.broadcast %cst_120 : f32 to vector<16x128xf32>
    %384 = arith.maximumf %382, %383 : vector<16x128xf32>
    %385 = arith.truncf %378 : vector<16x128xf32> to vector<16x128xbf16>
    %c0_121 = arith.constant 0 : index
    %c208_122 = arith.constant 208 : index
    %c0_123 = arith.constant 0 : index
    %386 = vector.load %arg13[%c0_121, %c208_122, %c0_123] : memref<1x400x128xbf16, #tpu.memory_space<vmem>>, vector<1x16x128xbf16>
    %387 = vector.shape_cast %386 : vector<1x16x128xbf16> to vector<16x128xbf16>
    %388 = vector.shape_cast %385 : vector<16x128xbf16> to vector<1x16x128xbf16>
    tpu.vector_store %arg13[%c0_121, %c208_122, %c0_123], %388 {strides = array<i32>} : memref<1x400x128xbf16, #tpu.memory_space<vmem>>, vector<1x16x128xbf16>,
    %389 = arith.truncf %384 : vector<16x128xf32> to vector<16x128xbf16>
    %c0_124 = arith.constant 0 : index
    %c176_125 = arith.constant 176 : index
    %c0_126 = arith.constant 0 : index
    %390 = vector.load %arg14[%c0_124, %c176_125, %c0_126] : memref<1x400x128xbf16, #tpu.memory_space<vmem>>, vector<1x16x128xbf16>
    %391 = vector.shape_cast %390 : vector<1x16x128xbf16> to vector<16x128xbf16>
    %392 = vector.shape_cast %389 : vector<16x128xbf16> to vector<1x16x128xbf16>
    tpu.vector_store %arg14[%c0_124, %c176_125, %c0_126], %392 {strides = array<i32>} : memref<1x400x128xbf16, #tpu.memory_space<vmem>>, vector<1x16x128xbf16>,
    %393 = arith.addf %367, %378 : vector<16x128xf32>
    %394 = arith.addf %368, %384 : vector<16x128xf32>
    %395 = arith.mulf %378, %378 : vector<16x128xf32>
    %396 = arith.addf %370, %395 : vector<16x128xf32>
    %397 = arith.mulf %384, %384 : vector<16x128xf32>
    %398 = arith.addf %372, %397 : vector<16x128xf32>
    %399 = vector.extract_strided_slice %23 {offsets = [224, 0], sizes = [16, 128], strides = [1, 1]} : vector<400x128xf32> to vector<16x128xf32>
    %400 = vector.broadcast %27 : vector<1x128xf32> to vector<16x128xf32>
    %401 = arith.mulf %400, %378 : vector<16x128xf32>
    %402 = arith.addf %399, %401 : vector<16x128xf32>
    %cst_127 = arith.constant 0.000000e+00 : f32
    %403 = vector.broadcast %cst_127 : f32 to vector<16x128xf32>
    %404 = arith.maximumf %402, %403 : vector<16x128xf32>
    %405 = vector.extract_strided_slice %26 {offsets = [160, 0], sizes = [16, 128], strides = [1, 1]} : vector<400x128xf32> to vector<16x128xf32>
    %406 = vector.broadcast %28 : vector<1x128xf32> to vector<16x128xf32>
    %407 = arith.mulf %406, %384 : vector<16x128xf32>
    %408 = arith.addf %405, %407 : vector<16x128xf32>
    %cst_128 = arith.constant 0.000000e+00 : f32
    %409 = vector.broadcast %cst_128 : f32 to vector<16x128xf32>
    %410 = arith.maximumf %408, %409 : vector<16x128xf32>
    %411 = arith.truncf %404 : vector<16x128xf32> to vector<16x128xbf16>
    %c0_129 = arith.constant 0 : index
    %c224_130 = arith.constant 224 : index
    %c0_131 = arith.constant 0 : index
    %412 = vector.load %arg13[%c0_129, %c224_130, %c0_131] : memref<1x400x128xbf16, #tpu.memory_space<vmem>>, vector<1x16x128xbf16>
    %413 = vector.shape_cast %412 : vector<1x16x128xbf16> to vector<16x128xbf16>
    %414 = vector.shape_cast %411 : vector<16x128xbf16> to vector<1x16x128xbf16>
    tpu.vector_store %arg13[%c0_129, %c224_130, %c0_131], %414 {strides = array<i32>} : memref<1x400x128xbf16, #tpu.memory_space<vmem>>, vector<1x16x128xbf16>,
    %415 = arith.truncf %410 : vector<16x128xf32> to vector<16x128xbf16>
    %c0_132 = arith.constant 0 : index
    %c160_133 = arith.constant 160 : index
    %c0_134 = arith.constant 0 : index
    %416 = vector.load %arg14[%c0_132, %c160_133, %c0_134] : memref<1x400x128xbf16, #tpu.memory_space<vmem>>, vector<1x16x128xbf16>
    %417 = vector.shape_cast %416 : vector<1x16x128xbf16> to vector<16x128xbf16>
    %418 = vector.shape_cast %415 : vector<16x128xbf16> to vector<1x16x128xbf16>
    tpu.vector_store %arg14[%c0_132, %c160_133, %c0_134], %418 {strides = array<i32>} : memref<1x400x128xbf16, #tpu.memory_space<vmem>>, vector<1x16x128xbf16>,
    %419 = arith.addf %393, %404 : vector<16x128xf32>
    %420 = arith.addf %394, %410 : vector<16x128xf32>
    %421 = arith.mulf %404, %404 : vector<16x128xf32>
    %422 = arith.addf %396, %421 : vector<16x128xf32>
    %423 = arith.mulf %410, %410 : vector<16x128xf32>
    %424 = arith.addf %398, %423 : vector<16x128xf32>
    %425 = vector.extract_strided_slice %23 {offsets = [240, 0], sizes = [16, 128], strides = [1, 1]} : vector<400x128xf32> to vector<16x128xf32>
    %426 = vector.broadcast %27 : vector<1x128xf32> to vector<16x128xf32>
    %427 = arith.mulf %426, %404 : vector<16x128xf32>
    %428 = arith.addf %425, %427 : vector<16x128xf32>
    %cst_135 = arith.constant 0.000000e+00 : f32
    %429 = vector.broadcast %cst_135 : f32 to vector<16x128xf32>
    %430 = arith.maximumf %428, %429 : vector<16x128xf32>
    %431 = vector.extract_strided_slice %26 {offsets = [144, 0], sizes = [16, 128], strides = [1, 1]} : vector<400x128xf32> to vector<16x128xf32>
    %432 = vector.broadcast %28 : vector<1x128xf32> to vector<16x128xf32>
    %433 = arith.mulf %432, %410 : vector<16x128xf32>
    %434 = arith.addf %431, %433 : vector<16x128xf32>
    %cst_136 = arith.constant 0.000000e+00 : f32
    %435 = vector.broadcast %cst_136 : f32 to vector<16x128xf32>
    %436 = arith.maximumf %434, %435 : vector<16x128xf32>
    %437 = arith.truncf %430 : vector<16x128xf32> to vector<16x128xbf16>
    %c0_137 = arith.constant 0 : index
    %c240_138 = arith.constant 240 : index
    %c0_139 = arith.constant 0 : index
    %438 = vector.load %arg13[%c0_137, %c240_138, %c0_139] : memref<1x400x128xbf16, #tpu.memory_space<vmem>>, vector<1x16x128xbf16>
    %439 = vector.shape_cast %438 : vector<1x16x128xbf16> to vector<16x128xbf16>
    %440 = vector.shape_cast %437 : vector<16x128xbf16> to vector<1x16x128xbf16>
    tpu.vector_store %arg13[%c0_137, %c240_138, %c0_139], %440 {strides = array<i32>} : memref<1x400x128xbf16, #tpu.memory_space<vmem>>, vector<1x16x128xbf16>,
    %441 = arith.truncf %436 : vector<16x128xf32> to vector<16x128xbf16>
    %c0_140 = arith.constant 0 : index
    %c144_141 = arith.constant 144 : index
    %c0_142 = arith.constant 0 : index
    %442 = vector.load %arg14[%c0_140, %c144_141, %c0_142] : memref<1x400x128xbf16, #tpu.memory_space<vmem>>, vector<1x16x128xbf16>
    %443 = vector.shape_cast %442 : vector<1x16x128xbf16> to vector<16x128xbf16>
    %444 = vector.shape_cast %441 : vector<16x128xbf16> to vector<1x16x128xbf16>
    tpu.vector_store %arg14[%c0_140, %c144_141, %c0_142], %444 {strides = array<i32>} : memref<1x400x128xbf16, #tpu.memory_space<vmem>>, vector<1x16x128xbf16>,
    %445 = arith.addf %419, %430 : vector<16x128xf32>
    %446 = arith.addf %420, %436 : vector<16x128xf32>
    %447 = arith.mulf %430, %430 : vector<16x128xf32>
    %448 = arith.addf %422, %447 : vector<16x128xf32>
    %449 = arith.mulf %436, %436 : vector<16x128xf32>
    %450 = arith.addf %424, %449 : vector<16x128xf32>
    %451 = vector.extract_strided_slice %23 {offsets = [256, 0], sizes = [16, 128], strides = [1, 1]} : vector<400x128xf32> to vector<16x128xf32>
    %452 = vector.broadcast %27 : vector<1x128xf32> to vector<16x128xf32>
    %453 = arith.mulf %452, %430 : vector<16x128xf32>
    %454 = arith.addf %451, %453 : vector<16x128xf32>
    %cst_143 = arith.constant 0.000000e+00 : f32
    %455 = vector.broadcast %cst_143 : f32 to vector<16x128xf32>
    %456 = arith.maximumf %454, %455 : vector<16x128xf32>
    %457 = vector.extract_strided_slice %26 {offsets = [128, 0], sizes = [16, 128], strides = [1, 1]} : vector<400x128xf32> to vector<16x128xf32>
    %458 = vector.broadcast %28 : vector<1x128xf32> to vector<16x128xf32>
    %459 = arith.mulf %458, %436 : vector<16x128xf32>
    %460 = arith.addf %457, %459 : vector<16x128xf32>
    %cst_144 = arith.constant 0.000000e+00 : f32
    %461 = vector.broadcast %cst_144 : f32 to vector<16x128xf32>
    %462 = arith.maximumf %460, %461 : vector<16x128xf32>
    %463 = arith.truncf %456 : vector<16x128xf32> to vector<16x128xbf16>
    %c0_145 = arith.constant 0 : index
    %c256_146 = arith.constant 256 : index
    %c0_147 = arith.constant 0 : index
    %464 = vector.load %arg13[%c0_145, %c256_146, %c0_147] : memref<1x400x128xbf16, #tpu.memory_space<vmem>>, vector<1x16x128xbf16>
    %465 = vector.shape_cast %464 : vector<1x16x128xbf16> to vector<16x128xbf16>
    %466 = vector.shape_cast %463 : vector<16x128xbf16> to vector<1x16x128xbf16>
    tpu.vector_store %arg13[%c0_145, %c256_146, %c0_147], %466 {strides = array<i32>} : memref<1x400x128xbf16, #tpu.memory_space<vmem>>, vector<1x16x128xbf16>,
    %467 = arith.truncf %462 : vector<16x128xf32> to vector<16x128xbf16>
    %c0_148 = arith.constant 0 : index
    %c128_149 = arith.constant 128 : index
    %c0_150 = arith.constant 0 : index
    %468 = vector.load %arg14[%c0_148, %c128_149, %c0_150] : memref<1x400x128xbf16, #tpu.memory_space<vmem>>, vector<1x16x128xbf16>
    %469 = vector.shape_cast %468 : vector<1x16x128xbf16> to vector<16x128xbf16>
    %470 = vector.shape_cast %467 : vector<16x128xbf16> to vector<1x16x128xbf16>
    tpu.vector_store %arg14[%c0_148, %c128_149, %c0_150], %470 {strides = array<i32>} : memref<1x400x128xbf16, #tpu.memory_space<vmem>>, vector<1x16x128xbf16>,
    %471 = arith.addf %445, %456 : vector<16x128xf32>
    %472 = arith.addf %446, %462 : vector<16x128xf32>
    %473 = arith.mulf %456, %456 : vector<16x128xf32>
    %474 = arith.addf %448, %473 : vector<16x128xf32>
    %475 = arith.mulf %462, %462 : vector<16x128xf32>
    %476 = arith.addf %450, %475 : vector<16x128xf32>
    %477 = vector.extract_strided_slice %23 {offsets = [272, 0], sizes = [16, 128], strides = [1, 1]} : vector<400x128xf32> to vector<16x128xf32>
    %478 = vector.broadcast %27 : vector<1x128xf32> to vector<16x128xf32>
    %479 = arith.mulf %478, %456 : vector<16x128xf32>
    %480 = arith.addf %477, %479 : vector<16x128xf32>
    %cst_151 = arith.constant 0.000000e+00 : f32
    %481 = vector.broadcast %cst_151 : f32 to vector<16x128xf32>
    %482 = arith.maximumf %480, %481 : vector<16x128xf32>
    %483 = vector.extract_strided_slice %26 {offsets = [112, 0], sizes = [16, 128], strides = [1, 1]} : vector<400x128xf32> to vector<16x128xf32>
    %484 = vector.broadcast %28 : vector<1x128xf32> to vector<16x128xf32>
    %485 = arith.mulf %484, %462 : vector<16x128xf32>
    %486 = arith.addf %483, %485 : vector<16x128xf32>
    %cst_152 = arith.constant 0.000000e+00 : f32
    %487 = vector.broadcast %cst_152 : f32 to vector<16x128xf32>
    %488 = arith.maximumf %486, %487 : vector<16x128xf32>
    %489 = arith.truncf %482 : vector<16x128xf32> to vector<16x128xbf16>
    %c0_153 = arith.constant 0 : index
    %c272_154 = arith.constant 272 : index
    %c0_155 = arith.constant 0 : index
    %490 = vector.load %arg13[%c0_153, %c272_154, %c0_155] : memref<1x400x128xbf16, #tpu.memory_space<vmem>>, vector<1x16x128xbf16>
    %491 = vector.shape_cast %490 : vector<1x16x128xbf16> to vector<16x128xbf16>
    %492 = vector.shape_cast %489 : vector<16x128xbf16> to vector<1x16x128xbf16>
    tpu.vector_store %arg13[%c0_153, %c272_154, %c0_155], %492 {strides = array<i32>} : memref<1x400x128xbf16, #tpu.memory_space<vmem>>, vector<1x16x128xbf16>,
    %493 = arith.truncf %488 : vector<16x128xf32> to vector<16x128xbf16>
    %c0_156 = arith.constant 0 : index
    %c112_157 = arith.constant 112 : index
    %c0_158 = arith.constant 0 : index
    %494 = vector.load %arg14[%c0_156, %c112_157, %c0_158] : memref<1x400x128xbf16, #tpu.memory_space<vmem>>, vector<1x16x128xbf16>
    %495 = vector.shape_cast %494 : vector<1x16x128xbf16> to vector<16x128xbf16>
    %496 = vector.shape_cast %493 : vector<16x128xbf16> to vector<1x16x128xbf16>
    tpu.vector_store %arg14[%c0_156, %c112_157, %c0_158], %496 {strides = array<i32>} : memref<1x400x128xbf16, #tpu.memory_space<vmem>>, vector<1x16x128xbf16>,
    %497 = arith.addf %471, %482 : vector<16x128xf32>
    %498 = arith.addf %472, %488 : vector<16x128xf32>
    %499 = arith.mulf %482, %482 : vector<16x128xf32>
    %500 = arith.addf %474, %499 : vector<16x128xf32>
    %501 = arith.mulf %488, %488 : vector<16x128xf32>
    %502 = arith.addf %476, %501 : vector<16x128xf32>
    %503 = vector.extract_strided_slice %23 {offsets = [288, 0], sizes = [16, 128], strides = [1, 1]} : vector<400x128xf32> to vector<16x128xf32>
    %504 = vector.broadcast %27 : vector<1x128xf32> to vector<16x128xf32>
    %505 = arith.mulf %504, %482 : vector<16x128xf32>
    %506 = arith.addf %503, %505 : vector<16x128xf32>
    %cst_159 = arith.constant 0.000000e+00 : f32
    %507 = vector.broadcast %cst_159 : f32 to vector<16x128xf32>
    %508 = arith.maximumf %506, %507 : vector<16x128xf32>
    %509 = vector.extract_strided_slice %26 {offsets = [96, 0], sizes = [16, 128], strides = [1, 1]} : vector<400x128xf32> to vector<16x128xf32>
    %510 = vector.broadcast %28 : vector<1x128xf32> to vector<16x128xf32>
    %511 = arith.mulf %510, %488 : vector<16x128xf32>
    %512 = arith.addf %509, %511 : vector<16x128xf32>
    %cst_160 = arith.constant 0.000000e+00 : f32
    %513 = vector.broadcast %cst_160 : f32 to vector<16x128xf32>
    %514 = arith.maximumf %512, %513 : vector<16x128xf32>
    %515 = arith.truncf %508 : vector<16x128xf32> to vector<16x128xbf16>
    %c0_161 = arith.constant 0 : index
    %c288_162 = arith.constant 288 : index
    %c0_163 = arith.constant 0 : index
    %516 = vector.load %arg13[%c0_161, %c288_162, %c0_163] : memref<1x400x128xbf16, #tpu.memory_space<vmem>>, vector<1x16x128xbf16>
    %517 = vector.shape_cast %516 : vector<1x16x128xbf16> to vector<16x128xbf16>
    %518 = vector.shape_cast %515 : vector<16x128xbf16> to vector<1x16x128xbf16>
    tpu.vector_store %arg13[%c0_161, %c288_162, %c0_163], %518 {strides = array<i32>} : memref<1x400x128xbf16, #tpu.memory_space<vmem>>, vector<1x16x128xbf16>,
    %519 = arith.truncf %514 : vector<16x128xf32> to vector<16x128xbf16>
    %c0_164 = arith.constant 0 : index
    %c96_165 = arith.constant 96 : index
    %c0_166 = arith.constant 0 : index
    %520 = vector.load %arg14[%c0_164, %c96_165, %c0_166] : memref<1x400x128xbf16, #tpu.memory_space<vmem>>, vector<1x16x128xbf16>
    %521 = vector.shape_cast %520 : vector<1x16x128xbf16> to vector<16x128xbf16>
    %522 = vector.shape_cast %519 : vector<16x128xbf16> to vector<1x16x128xbf16>
    tpu.vector_store %arg14[%c0_164, %c96_165, %c0_166], %522 {strides = array<i32>} : memref<1x400x128xbf16, #tpu.memory_space<vmem>>, vector<1x16x128xbf16>,
    %523 = arith.addf %497, %508 : vector<16x128xf32>
    %524 = arith.addf %498, %514 : vector<16x128xf32>
    %525 = arith.mulf %508, %508 : vector<16x128xf32>
    %526 = arith.addf %500, %525 : vector<16x128xf32>
    %527 = arith.mulf %514, %514 : vector<16x128xf32>
    %528 = arith.addf %502, %527 : vector<16x128xf32>
    %529 = vector.extract_strided_slice %23 {offsets = [304, 0], sizes = [16, 128], strides = [1, 1]} : vector<400x128xf32> to vector<16x128xf32>
    %530 = vector.broadcast %27 : vector<1x128xf32> to vector<16x128xf32>
    %531 = arith.mulf %530, %508 : vector<16x128xf32>
    %532 = arith.addf %529, %531 : vector<16x128xf32>
    %cst_167 = arith.constant 0.000000e+00 : f32
    %533 = vector.broadcast %cst_167 : f32 to vector<16x128xf32>
    %534 = arith.maximumf %532, %533 : vector<16x128xf32>
    %535 = vector.extract_strided_slice %26 {offsets = [80, 0], sizes = [16, 128], strides = [1, 1]} : vector<400x128xf32> to vector<16x128xf32>
    %536 = vector.broadcast %28 : vector<1x128xf32> to vector<16x128xf32>
    %537 = arith.mulf %536, %514 : vector<16x128xf32>
    %538 = arith.addf %535, %537 : vector<16x128xf32>
    %cst_168 = arith.constant 0.000000e+00 : f32
    %539 = vector.broadcast %cst_168 : f32 to vector<16x128xf32>
    %540 = arith.maximumf %538, %539 : vector<16x128xf32>
    %541 = arith.truncf %534 : vector<16x128xf32> to vector<16x128xbf16>
    %c0_169 = arith.constant 0 : index
    %c304_170 = arith.constant 304 : index
    %c0_171 = arith.constant 0 : index
    %542 = vector.load %arg13[%c0_169, %c304_170, %c0_171] : memref<1x400x128xbf16, #tpu.memory_space<vmem>>, vector<1x16x128xbf16>
    %543 = vector.shape_cast %542 : vector<1x16x128xbf16> to vector<16x128xbf16>
    %544 = vector.shape_cast %541 : vector<16x128xbf16> to vector<1x16x128xbf16>
    tpu.vector_store %arg13[%c0_169, %c304_170, %c0_171], %544 {strides = array<i32>} : memref<1x400x128xbf16, #tpu.memory_space<vmem>>, vector<1x16x128xbf16>,
    %545 = arith.truncf %540 : vector<16x128xf32> to vector<16x128xbf16>
    %c0_172 = arith.constant 0 : index
    %c80_173 = arith.constant 80 : index
    %c0_174 = arith.constant 0 : index
    %546 = vector.load %arg14[%c0_172, %c80_173, %c0_174] : memref<1x400x128xbf16, #tpu.memory_space<vmem>>, vector<1x16x128xbf16>
    %547 = vector.shape_cast %546 : vector<1x16x128xbf16> to vector<16x128xbf16>
    %548 = vector.shape_cast %545 : vector<16x128xbf16> to vector<1x16x128xbf16>
    tpu.vector_store %arg14[%c0_172, %c80_173, %c0_174], %548 {strides = array<i32>} : memref<1x400x128xbf16, #tpu.memory_space<vmem>>, vector<1x16x128xbf16>,
    %549 = arith.addf %523, %534 : vector<16x128xf32>
    %550 = arith.addf %524, %540 : vector<16x128xf32>
    %551 = arith.mulf %534, %534 : vector<16x128xf32>
    %552 = arith.addf %526, %551 : vector<16x128xf32>
    %553 = arith.mulf %540, %540 : vector<16x128xf32>
    %554 = arith.addf %528, %553 : vector<16x128xf32>
    %555 = vector.extract_strided_slice %23 {offsets = [320, 0], sizes = [16, 128], strides = [1, 1]} : vector<400x128xf32> to vector<16x128xf32>
    %556 = vector.broadcast %27 : vector<1x128xf32> to vector<16x128xf32>
    %557 = arith.mulf %556, %534 : vector<16x128xf32>
    %558 = arith.addf %555, %557 : vector<16x128xf32>
    %cst_175 = arith.constant 0.000000e+00 : f32
    %559 = vector.broadcast %cst_175 : f32 to vector<16x128xf32>
    %560 = arith.maximumf %558, %559 : vector<16x128xf32>
    %561 = vector.extract_strided_slice %26 {offsets = [64, 0], sizes = [16, 128], strides = [1, 1]} : vector<400x128xf32> to vector<16x128xf32>
    %562 = vector.broadcast %28 : vector<1x128xf32> to vector<16x128xf32>
    %563 = arith.mulf %562, %540 : vector<16x128xf32>
    %564 = arith.addf %561, %563 : vector<16x128xf32>
    %cst_176 = arith.constant 0.000000e+00 : f32
    %565 = vector.broadcast %cst_176 : f32 to vector<16x128xf32>
    %566 = arith.maximumf %564, %565 : vector<16x128xf32>
    %567 = arith.truncf %560 : vector<16x128xf32> to vector<16x128xbf16>
    %c0_177 = arith.constant 0 : index
    %c320_178 = arith.constant 320 : index
    %c0_179 = arith.constant 0 : index
    %568 = vector.load %arg13[%c0_177, %c320_178, %c0_179] : memref<1x400x128xbf16, #tpu.memory_space<vmem>>, vector<1x16x128xbf16>
    %569 = vector.shape_cast %568 : vector<1x16x128xbf16> to vector<16x128xbf16>
    %570 = vector.shape_cast %567 : vector<16x128xbf16> to vector<1x16x128xbf16>
    tpu.vector_store %arg13[%c0_177, %c320_178, %c0_179], %570 {strides = array<i32>} : memref<1x400x128xbf16, #tpu.memory_space<vmem>>, vector<1x16x128xbf16>,
    %571 = arith.truncf %566 : vector<16x128xf32> to vector<16x128xbf16>
    %c0_180 = arith.constant 0 : index
    %c64_181 = arith.constant 64 : index
    %c0_182 = arith.constant 0 : index
    %572 = vector.load %arg14[%c0_180, %c64_181, %c0_182] : memref<1x400x128xbf16, #tpu.memory_space<vmem>>, vector<1x16x128xbf16>
    %573 = vector.shape_cast %572 : vector<1x16x128xbf16> to vector<16x128xbf16>
    %574 = vector.shape_cast %571 : vector<16x128xbf16> to vector<1x16x128xbf16>
    tpu.vector_store %arg14[%c0_180, %c64_181, %c0_182], %574 {strides = array<i32>} : memref<1x400x128xbf16, #tpu.memory_space<vmem>>, vector<1x16x128xbf16>,
    %575 = arith.addf %549, %560 : vector<16x128xf32>
    %576 = arith.addf %550, %566 : vector<16x128xf32>
    %577 = arith.mulf %560, %560 : vector<16x128xf32>
    %578 = arith.addf %552, %577 : vector<16x128xf32>
    %579 = arith.mulf %566, %566 : vector<16x128xf32>
    %580 = arith.addf %554, %579 : vector<16x128xf32>
    %581 = vector.extract_strided_slice %23 {offsets = [336, 0], sizes = [16, 128], strides = [1, 1]} : vector<400x128xf32> to vector<16x128xf32>
    %582 = vector.broadcast %27 : vector<1x128xf32> to vector<16x128xf32>
    %583 = arith.mulf %582, %560 : vector<16x128xf32>
    %584 = arith.addf %581, %583 : vector<16x128xf32>
    %cst_183 = arith.constant 0.000000e+00 : f32
    %585 = vector.broadcast %cst_183 : f32 to vector<16x128xf32>
    %586 = arith.maximumf %584, %585 : vector<16x128xf32>
    %587 = vector.extract_strided_slice %26 {offsets = [48, 0], sizes = [16, 128], strides = [1, 1]} : vector<400x128xf32> to vector<16x128xf32>
    %588 = vector.broadcast %28 : vector<1x128xf32> to vector<16x128xf32>
    %589 = arith.mulf %588, %566 : vector<16x128xf32>
    %590 = arith.addf %587, %589 : vector<16x128xf32>
    %cst_184 = arith.constant 0.000000e+00 : f32
    %591 = vector.broadcast %cst_184 : f32 to vector<16x128xf32>
    %592 = arith.maximumf %590, %591 : vector<16x128xf32>
    %593 = arith.truncf %586 : vector<16x128xf32> to vector<16x128xbf16>
    %c0_185 = arith.constant 0 : index
    %c336_186 = arith.constant 336 : index
    %c0_187 = arith.constant 0 : index
    %594 = vector.load %arg13[%c0_185, %c336_186, %c0_187] : memref<1x400x128xbf16, #tpu.memory_space<vmem>>, vector<1x16x128xbf16>
    %595 = vector.shape_cast %594 : vector<1x16x128xbf16> to vector<16x128xbf16>
    %596 = vector.shape_cast %593 : vector<16x128xbf16> to vector<1x16x128xbf16>
    tpu.vector_store %arg13[%c0_185, %c336_186, %c0_187], %596 {strides = array<i32>} : memref<1x400x128xbf16, #tpu.memory_space<vmem>>, vector<1x16x128xbf16>,
    %597 = arith.truncf %592 : vector<16x128xf32> to vector<16x128xbf16>
    %c0_188 = arith.constant 0 : index
    %c48_189 = arith.constant 48 : index
    %c0_190 = arith.constant 0 : index
    %598 = vector.load %arg14[%c0_188, %c48_189, %c0_190] : memref<1x400x128xbf16, #tpu.memory_space<vmem>>, vector<1x16x128xbf16>
    %599 = vector.shape_cast %598 : vector<1x16x128xbf16> to vector<16x128xbf16>
    %600 = vector.shape_cast %597 : vector<16x128xbf16> to vector<1x16x128xbf16>
    tpu.vector_store %arg14[%c0_188, %c48_189, %c0_190], %600 {strides = array<i32>} : memref<1x400x128xbf16, #tpu.memory_space<vmem>>, vector<1x16x128xbf16>,
    %601 = arith.addf %575, %586 : vector<16x128xf32>
    %602 = arith.addf %576, %592 : vector<16x128xf32>
    %603 = arith.mulf %586, %586 : vector<16x128xf32>
    %604 = arith.addf %578, %603 : vector<16x128xf32>
    %605 = arith.mulf %592, %592 : vector<16x128xf32>
    %606 = arith.addf %580, %605 : vector<16x128xf32>
    %607 = vector.extract_strided_slice %23 {offsets = [352, 0], sizes = [16, 128], strides = [1, 1]} : vector<400x128xf32> to vector<16x128xf32>
    %608 = vector.broadcast %27 : vector<1x128xf32> to vector<16x128xf32>
    %609 = arith.mulf %608, %586 : vector<16x128xf32>
    %610 = arith.addf %607, %609 : vector<16x128xf32>
    %cst_191 = arith.constant 0.000000e+00 : f32
    %611 = vector.broadcast %cst_191 : f32 to vector<16x128xf32>
    %612 = arith.maximumf %610, %611 : vector<16x128xf32>
    %613 = vector.extract_strided_slice %26 {offsets = [32, 0], sizes = [16, 128], strides = [1, 1]} : vector<400x128xf32> to vector<16x128xf32>
    %614 = vector.broadcast %28 : vector<1x128xf32> to vector<16x128xf32>
    %615 = arith.mulf %614, %592 : vector<16x128xf32>
    %616 = arith.addf %613, %615 : vector<16x128xf32>
    %cst_192 = arith.constant 0.000000e+00 : f32
    %617 = vector.broadcast %cst_192 : f32 to vector<16x128xf32>
    %618 = arith.maximumf %616, %617 : vector<16x128xf32>
    %619 = arith.truncf %612 : vector<16x128xf32> to vector<16x128xbf16>
    %c0_193 = arith.constant 0 : index
    %c352_194 = arith.constant 352 : index
    %c0_195 = arith.constant 0 : index
    %620 = vector.load %arg13[%c0_193, %c352_194, %c0_195] : memref<1x400x128xbf16, #tpu.memory_space<vmem>>, vector<1x16x128xbf16>
    %621 = vector.shape_cast %620 : vector<1x16x128xbf16> to vector<16x128xbf16>
    %622 = vector.shape_cast %619 : vector<16x128xbf16> to vector<1x16x128xbf16>
    tpu.vector_store %arg13[%c0_193, %c352_194, %c0_195], %622 {strides = array<i32>} : memref<1x400x128xbf16, #tpu.memory_space<vmem>>, vector<1x16x128xbf16>,
    %623 = arith.truncf %618 : vector<16x128xf32> to vector<16x128xbf16>
    %c0_196 = arith.constant 0 : index
    %c32_197 = arith.constant 32 : index
    %c0_198 = arith.constant 0 : index
    %624 = vector.load %arg14[%c0_196, %c32_197, %c0_198] : memref<1x400x128xbf16, #tpu.memory_space<vmem>>, vector<1x16x128xbf16>
    %625 = vector.shape_cast %624 : vector<1x16x128xbf16> to vector<16x128xbf16>
    %626 = vector.shape_cast %623 : vector<16x128xbf16> to vector<1x16x128xbf16>
    tpu.vector_store %arg14[%c0_196, %c32_197, %c0_198], %626 {strides = array<i32>} : memref<1x400x128xbf16, #tpu.memory_space<vmem>>, vector<1x16x128xbf16>,
    %627 = arith.addf %601, %612 : vector<16x128xf32>
    %628 = arith.addf %602, %618 : vector<16x128xf32>
    %629 = arith.mulf %612, %612 : vector<16x128xf32>
    %630 = arith.addf %604, %629 : vector<16x128xf32>
    %631 = arith.mulf %618, %618 : vector<16x128xf32>
    %632 = arith.addf %606, %631 : vector<16x128xf32>
    %633 = vector.extract_strided_slice %23 {offsets = [368, 0], sizes = [16, 128], strides = [1, 1]} : vector<400x128xf32> to vector<16x128xf32>
    %634 = vector.broadcast %27 : vector<1x128xf32> to vector<16x128xf32>
    %635 = arith.mulf %634, %612 : vector<16x128xf32>
    %636 = arith.addf %633, %635 : vector<16x128xf32>
    %cst_199 = arith.constant 0.000000e+00 : f32
    %637 = vector.broadcast %cst_199 : f32 to vector<16x128xf32>
    %638 = arith.maximumf %636, %637 : vector<16x128xf32>
    %639 = vector.extract_strided_slice %26 {offsets = [16, 0], sizes = [16, 128], strides = [1, 1]} : vector<400x128xf32> to vector<16x128xf32>
    %640 = vector.broadcast %28 : vector<1x128xf32> to vector<16x128xf32>
    %641 = arith.mulf %640, %618 : vector<16x128xf32>
    %642 = arith.addf %639, %641 : vector<16x128xf32>
    %cst_200 = arith.constant 0.000000e+00 : f32
    %643 = vector.broadcast %cst_200 : f32 to vector<16x128xf32>
    %644 = arith.maximumf %642, %643 : vector<16x128xf32>
    %645 = arith.truncf %638 : vector<16x128xf32> to vector<16x128xbf16>
    %c0_201 = arith.constant 0 : index
    %c368_202 = arith.constant 368 : index
    %c0_203 = arith.constant 0 : index
    %646 = vector.load %arg13[%c0_201, %c368_202, %c0_203] : memref<1x400x128xbf16, #tpu.memory_space<vmem>>, vector<1x16x128xbf16>
    %647 = vector.shape_cast %646 : vector<1x16x128xbf16> to vector<16x128xbf16>
    %648 = vector.shape_cast %645 : vector<16x128xbf16> to vector<1x16x128xbf16>
    tpu.vector_store %arg13[%c0_201, %c368_202, %c0_203], %648 {strides = array<i32>} : memref<1x400x128xbf16, #tpu.memory_space<vmem>>, vector<1x16x128xbf16>,
    %649 = arith.truncf %644 : vector<16x128xf32> to vector<16x128xbf16>
    %c0_204 = arith.constant 0 : index
    %c16_205 = arith.constant 16 : index
    %c0_206 = arith.constant 0 : index
    %650 = vector.load %arg14[%c0_204, %c16_205, %c0_206] : memref<1x400x128xbf16, #tpu.memory_space<vmem>>, vector<1x16x128xbf16>
    %651 = vector.shape_cast %650 : vector<1x16x128xbf16> to vector<16x128xbf16>
    %652 = vector.shape_cast %649 : vector<16x128xbf16> to vector<1x16x128xbf16>
    tpu.vector_store %arg14[%c0_204, %c16_205, %c0_206], %652 {strides = array<i32>} : memref<1x400x128xbf16, #tpu.memory_space<vmem>>, vector<1x16x128xbf16>,
    %653 = arith.addf %627, %638 : vector<16x128xf32>
    %654 = arith.addf %628, %644 : vector<16x128xf32>
    %655 = arith.mulf %638, %638 : vector<16x128xf32>
    %656 = arith.addf %630, %655 : vector<16x128xf32>
    %657 = arith.mulf %644, %644 : vector<16x128xf32>
    %658 = arith.addf %632, %657 : vector<16x128xf32>
    %659 = vector.extract_strided_slice %23 {offsets = [384, 0], sizes = [16, 128], strides = [1, 1]} : vector<400x128xf32> to vector<16x128xf32>
    %660 = vector.broadcast %27 : vector<1x128xf32> to vector<16x128xf32>
    %661 = arith.mulf %660, %638 : vector<16x128xf32>
    %662 = arith.addf %659, %661 : vector<16x128xf32>
    %cst_207 = arith.constant 0.000000e+00 : f32
    %663 = vector.broadcast %cst_207 : f32 to vector<16x128xf32>
    %664 = arith.maximumf %662, %663 : vector<16x128xf32>
    %665 = vector.extract_strided_slice %26 {offsets = [0, 0], sizes = [16, 128], strides = [1, 1]} : vector<400x128xf32> to vector<16x128xf32>
    %666 = vector.broadcast %28 : vector<1x128xf32> to vector<16x128xf32>
    %667 = arith.mulf %666, %644 : vector<16x128xf32>
    %668 = arith.addf %665, %667 : vector<16x128xf32>
    %cst_208 = arith.constant 0.000000e+00 : f32
    %669 = vector.broadcast %cst_208 : f32 to vector<16x128xf32>
    %670 = arith.maximumf %668, %669 : vector<16x128xf32>
    %671 = arith.truncf %664 : vector<16x128xf32> to vector<16x128xbf16>
    %c0_209 = arith.constant 0 : index
    %c384_210 = arith.constant 384 : index
    %c0_211 = arith.constant 0 : index
    %672 = vector.load %arg13[%c0_209, %c384_210, %c0_211] : memref<1x400x128xbf16, #tpu.memory_space<vmem>>, vector<1x16x128xbf16>
    %673 = vector.shape_cast %672 : vector<1x16x128xbf16> to vector<16x128xbf16>
    %674 = vector.shape_cast %671 : vector<16x128xbf16> to vector<1x16x128xbf16>
    tpu.vector_store %arg13[%c0_209, %c384_210, %c0_211], %674 {strides = array<i32>} : memref<1x400x128xbf16, #tpu.memory_space<vmem>>, vector<1x16x128xbf16>,
    %675 = arith.truncf %670 : vector<16x128xf32> to vector<16x128xbf16>
    %c0_212 = arith.constant 0 : index
    %c0_213 = arith.constant 0 : index
    %c0_214 = arith.constant 0 : index
    %676 = vector.load %arg14[%c0_212, %c0_213, %c0_214] : memref<1x400x128xbf16, #tpu.memory_space<vmem>>, vector<1x16x128xbf16>
    %677 = vector.shape_cast %676 : vector<1x16x128xbf16> to vector<16x128xbf16>
    %678 = vector.shape_cast %675 : vector<16x128xbf16> to vector<1x16x128xbf16>
    tpu.vector_store %arg14[%c0_212, %c0_213, %c0_214], %678 {strides = array<i32>} : memref<1x400x128xbf16, #tpu.memory_space<vmem>>, vector<1x16x128xbf16>,
    %679 = arith.addf %653, %664 : vector<16x128xf32>
    %680 = arith.addf %654, %670 : vector<16x128xf32>
    %681 = arith.mulf %664, %664 : vector<16x128xf32>
    %682 = arith.addf %656, %681 : vector<16x128xf32>
    %683 = arith.mulf %670, %670 : vector<16x128xf32>
    %684 = arith.addf %658, %683 : vector<16x128xf32>
    %c0_215 = arith.constant 0 : index
    %c0_216 = arith.constant 0 : index
    %685 = vector.load %arg16[%c0_215, %c0_216] : memref<16x128xf32, #tpu.memory_space<vmem>>, vector<16x128xf32>
    tpu.vector_store %arg16[%c0_215, %c0_216], %664 {strides = array<i32>} : memref<16x128xf32, #tpu.memory_space<vmem>>, vector<16x128xf32>,
    %c0_217 = arith.constant 0 : index
    %c0_218 = arith.constant 0 : index
    %686 = vector.load %arg17[%c0_217, %c0_218] : memref<16x128xf32, #tpu.memory_space<vmem>>, vector<16x128xf32>
    tpu.vector_store %arg17[%c0_217, %c0_218], %670 {strides = array<i32>} : memref<16x128xf32, #tpu.memory_space<vmem>>, vector<16x128xf32>,
    %c0_219 = arith.constant 0 : index
    %c0_220 = arith.constant 0 : index
    %687 = vector.load %arg15[%c0_219, %c0_220] : memref<4x128xf32, #tpu.memory_space<vmem>>, vector<4x128xf32>
    %cst_221 = arith.constant dense<0.000000e+00> : vector<128xf32>
    %688 = vector.multi_reduction <add>, %679, %cst_221 [0] : vector<16x128xf32> to vector<128xf32>
    %689 = vector.shape_cast %688 : vector<128xf32> to vector<1x128xf32>
    %cst_222 = arith.constant dense<0.000000e+00> : vector<128xf32>
    %690 = vector.multi_reduction <add>, %680, %cst_222 [0] : vector<16x128xf32> to vector<128xf32>
    %691 = vector.shape_cast %690 : vector<128xf32> to vector<1x128xf32>
    %cst_223 = arith.constant dense<0.000000e+00> : vector<128xf32>
    %692 = vector.multi_reduction <add>, %682, %cst_223 [0] : vector<16x128xf32> to vector<128xf32>
    %693 = vector.shape_cast %692 : vector<128xf32> to vector<1x128xf32>
    %cst_224 = arith.constant dense<0.000000e+00> : vector<128xf32>
    %694 = vector.multi_reduction <add>, %684, %cst_224 [0] : vector<16x128xf32> to vector<128xf32>
    %695 = vector.shape_cast %694 : vector<128xf32> to vector<1x128xf32>
    %696 = tpu.concatenate %689, %691, %693, %695 in 0 : vector<1x128xf32>, vector<1x128xf32>, vector<1x128xf32>, vector<1x128xf32> -> vector<4x128xf32>
    %697 = arith.addf %687, %696 : vector<4x128xf32>
    %c0_225 = arith.constant 0 : index
    %c0_226 = arith.constant 0 : index
    %698 = vector.load %arg15[%c0_225, %c0_226] : memref<4x128xf32, #tpu.memory_space<vmem>>, vector<4x128xf32>
    tpu.vector_store %arg15[%c0_225, %c0_226], %697 {strides = array<i32>} : memref<4x128xf32, #tpu.memory_space<vmem>>, vector<4x128xf32>,
    return
  }
  func.func @transform_0(%arg0: i32) -> (i32, i32, i32) {
    %c0_i32 = arith.constant 0 : i32
    %c0_i32_0 = arith.constant 0 : i32
    %c0_i32_1 = arith.constant 0 : i32
    return %arg0, %c0_i32, %c0_i32_0 : i32, i32, i32
  }
  func.func @transform_1(%arg0: i32) -> (i32, i32, i32) {
    %c0_i32 = arith.constant 0 : i32
    %c0_i32_0 = arith.constant 0 : i32
    %c0_i32_1 = arith.constant 0 : i32
    return %arg0, %c0_i32, %c0_i32_0 : i32, i32, i32
  }
  func.func @transform_2(%arg0: i32) -> (i32, i32, i32) {
    %c3_i32 = arith.constant 3 : i32
    %0 = arith.subi %c3_i32, %arg0 : i32
    %c0_i32 = arith.constant 0 : i32
    %c0_i32_0 = arith.constant 0 : i32
    %c0_i32_1 = arith.constant 0 : i32
    return %0, %c0_i32, %c0_i32_0 : i32, i32, i32
  }
  func.func @transform_3(%arg0: i32) -> (i32, i32, i32) {
    %c3_i32 = arith.constant 3 : i32
    %0 = arith.subi %c3_i32, %arg0 : i32
    %c0_i32 = arith.constant 0 : i32
    %c0_i32_0 = arith.constant 0 : i32
    %c0_i32_1 = arith.constant 0 : i32
    return %0, %c0_i32, %c0_i32_0 : i32, i32, i32
  }
  func.func @transform_4(%arg0: i32) -> (i32, i32) {
    %c0_i32 = arith.constant 0 : i32
    %c0_i32_0 = arith.constant 0 : i32
    %c0_i32_1 = arith.constant 0 : i32
    return %c0_i32, %c0_i32_0 : i32, i32
  }
  func.func @transform_5(%arg0: i32) -> (i32, i32) {
    %c0_i32 = arith.constant 0 : i32
    %c0_i32_0 = arith.constant 0 : i32
    %c0_i32_1 = arith.constant 0 : i32
    return %c0_i32, %c0_i32_0 : i32, i32
  }
  func.func @transform_6(%arg0: i32) -> (i32, i32) {
    %c0_i32 = arith.constant 0 : i32
    %c0_i32_0 = arith.constant 0 : i32
    %c0_i32_1 = arith.constant 0 : i32
    return %c0_i32, %c0_i32_0 : i32, i32
  }
  func.func @transform_7(%arg0: i32) -> (i32, i32) {
    %c0_i32 = arith.constant 0 : i32
    %c0_i32_0 = arith.constant 0 : i32
    %c0_i32_1 = arith.constant 0 : i32
    return %c0_i32, %c0_i32_0 : i32, i32
  }
  func.func @transform_8(%arg0: i32) -> (i32, i32) {
    %c0_i32 = arith.constant 0 : i32
    %c0_i32_0 = arith.constant 0 : i32
    %c0_i32_1 = arith.constant 0 : i32
    return %c0_i32, %c0_i32_0 : i32, i32
  }
  func.func @transform_9(%arg0: i32) -> (i32, i32) {
    %c0_i32 = arith.constant 0 : i32
    %c0_i32_0 = arith.constant 0 : i32
    %c0_i32_1 = arith.constant 0 : i32
    return %c0_i32, %c0_i32_0 : i32, i32
  }
  func.func @transform_10(%arg0: i32) -> (i32, i32) {
    %c0_i32 = arith.constant 0 : i32
    %c0_i32_0 = arith.constant 0 : i32
    %c0_i32_1 = arith.constant 0 : i32
    return %c0_i32, %c0_i32_0 : i32, i32
  }
  func.func @transform_11(%arg0: i32) -> (i32, i32) {
    %c0_i32 = arith.constant 0 : i32
    %c0_i32_0 = arith.constant 0 : i32
    %c0_i32_1 = arith.constant 0 : i32
    return %c0_i32, %c0_i32_0 : i32, i32
  }
  func.func @transform_12(%arg0: i32) -> (i32, i32, i32) {
    %c0_i32 = arith.constant 0 : i32
    %c0_i32_0 = arith.constant 0 : i32
    %c0_i32_1 = arith.constant 0 : i32
    return %arg0, %c0_i32, %c0_i32_0 : i32, i32, i32
  }
  func.func @transform_13(%arg0: i32) -> (i32, i32, i32) {
    %c3_i32 = arith.constant 3 : i32
    %0 = arith.subi %c3_i32, %arg0 : i32
    %c0_i32 = arith.constant 0 : i32
    %c0_i32_0 = arith.constant 0 : i32
    %c0_i32_1 = arith.constant 0 : i32
    return %0, %c0_i32, %c0_i32_0 : i32, i32, i32
  }
  func.func @transform_14(%arg0: i32) -> (i32, i32) {
    %c0_i32 = arith.constant 0 : i32
    %c0_i32_0 = arith.constant 0 : i32
    %c0_i32_1 = arith.constant 0 : i32
    return %c0_i32, %c0_i32_0 : i32, i32
  }
}

</mosaic_0001>

<llo_original>
// kernel: net_forward.2
$region0: #{net_forward.2}
  #allocation0 [shape = 'u32[]', space=smem, size = 0x4, offset = 0x4, fixed_abs, tag = 'smem constant byte address 0x4 - core index']
  #allocation1 [shape = 'u32[144,128]{1,0:T(1,128)}', space=vmem, size = 0x12000, scoped, tag = 'internal scratch']
  #allocation2 [shape = 'f32[16,128]{1,0:T(8,128)}', space=vmem, size = 0x2000, scoped, tag = 'scratch operand']
  #allocation3 [shape = 'f32[16,128]{1,0:T(8,128)}', space=vmem, size = 0x2000, scoped, tag = 'scratch operand']
  %s0 = inlined_call_operand.vmem [shape: bf16[4,400,16], index: 0, kind: input, shape index: {}, may-alias: {0,1}]
  %s1 = inlined_call_operand.vmem [shape: bf16[4,400,16], index: 1, kind: input, shape index: {}, may-alias: {0,1}]
  %s2 = inlined_call_operand.vmem [shape: bf16[16,128], index: 2, kind: input, shape index: {}]
  %s3 = inlined_call_operand.vmem [shape: bf16[16,128], index: 3, kind: input, shape index: {}]
  %s4 = inlined_call_operand.vmem [shape: f32[1,128], index: 4, kind: input, shape index: {}]
  %s5 = inlined_call_operand.vmem [shape: f32[1,128], index: 5, kind: input, shape index: {}]
  %s6 = inlined_call_operand.vmem [shape: f32[1,128], index: 6, kind: input, shape index: {}]
  %s7 = inlined_call_operand.vmem [shape: f32[1,128], index: 7, kind: input, shape index: {}]
  %s8 = inlined_call_operand.vmem [shape: bf16[4,400,128], index: 8, kind: output, shape index: {0}]
  %s9 = inlined_call_operand.vmem [shape: bf16[4,400,128], index: 9, kind: output, shape index: {1}]
  %s10 = inlined_call_operand.vmem [shape: f32[4,128], index: 10, kind: output, shape index: {2}]
  %11 = xla_tuple %s8, %s9, %s10
  %s12 = sld [smem:[#allocation0]]
  $region85: #{net_forward.2} parent=0
    _
  %s14 = ssub.s32 1, %s12
  %s15 = scalar_select 0, %s14, %s12
  loop: start=0, step=1, limit=6
  $region2: #{net_forward.2} parent=0 // loop_pre_header
    _
  $region3: #{net_forward.2} parent=0 // loop_header
    %s17 = sphi 0, %s21
    %p18 = scmp.ge.s32.totalorder %s17, 6
    %s27 = sphi 0, %s29
    %s30 = sphi 0, %s27
    %s31 = sphi 0, %s30
    %s47 = sphi 0, %s31
    %s55 = sphi 0, %s57
    %s58 = sphi 0, %s55
    %s59 = sphi 0, %s58
    %s75 = sphi 0, %s59
    %s79 = sphi 0, %s79
    %s81 = sphi 0, %s79
    %s82 = sphi 0, %s81
    %s96 = sphi 0, %s82
    %s100 = sphi 0, %s100
    %s102 = sphi 0, %s100
    %s103 = sphi 0, %s102
    %s117 = sphi 0, %s103
    %s121 = sphi 0, %s121
    %s123 = sphi 0, %s121
    %s124 = sphi 0, %s123
    %s138 = sphi 0, %s124
    %s142 = sphi 0, %s142
    %s144 = sphi 0, %s142
    %s145 = sphi 0, %s144
    %s159 = sphi 0, %s145
    %s163 = sphi 0, %s163
    %s165 = sphi 0, %s163
    %s166 = sphi 0, %s165
    %s180 = sphi 0, %s166
    %s184 = sphi 0, %s184
    %s186 = sphi 0, %s184
    %s187 = sphi 0, %s186
    %s201 = sphi 0, %s187
    %s207 = sphi 0, %s209
    %s210 = sphi 0, %s207
    %s211 = sphi 0, %s210
    %s227 = sphi 0, %s211
    %s235 = sphi 0, %s237
    %s238 = sphi 0, %s235
    %s239 = sphi 0, %s238
    %s255 = sphi 0, %s239
    %s259 = sphi 0, %s259
    %s261 = sphi 0, %s259
    %s262 = sphi 0, %s261
    %s276 = sphi 0, %s262
  $region4: #{net_forward.2} parent=0 // loop_header_branch
    %20 = sbr.rel (%p18) target = $region8
  $region5: #{net_forward.2} parent=0 // loop_body
    %s22 = ssub.s32 %s17, 1
    %s23 = ssub.s32 %s17, 2
    %s24 = sadd.s32 %s17, 1
    %s25 = ssub.s32 %s17, %s24
    %p26 = scmp.eq.s32.totalorder %s25, 0
    %s28 = sadd.s32 %s27, 1
    %s29 = scalar_select %p26, %s27, %s28
    %p32 = pneg %p26
    %p33 = scmp.eq.s32.totalorder %s17, 3
    %p34 = por %p32, %p33
    %p35 = scmp.ne.s32.totalorder %s27, %s30
    %p36 = scmp.eq.s32.totalorder %s17, 0
    %p37 = por %p35, %p36
    %p38 = scmp.ne.s32.totalorder %s27, %s30
    %p39 = scmp.eq.s32.totalorder %s22, 3
    %p40 = por %p38, %p39
    %p41 = scmp.ne.s32.totalorder %s30, %s31
    %p42 = scmp.eq.s32.totalorder %s22, 0
    %p43 = por %p41, %p42
    %p44 = scmp.ne.s32.totalorder %s30, %s31
    %p45 = scmp.eq.s32.totalorder %s23, 3
    %p46 = por %p44, %p45
    %p48 = scmp.ne.s32.totalorder %s31, %s47
    %p49 = scmp.eq.s32.totalorder %s23, 0
    %p50 = por %p48, %p49
    %s51 = ssub.s32 3, %s17
    %s52 = ssub.s32 3, %s24
    %s53 = ssub.s32 %s51, %s52
    %p54 = scmp.eq.s32.totalorder %s53, 0
    %s56 = sadd.s32 %s55, 1
    %s57 = scalar_select %p54, %s55, %s56
    %p60 = pneg %p54
    %p61 = scmp.eq.s32.totalorder %s17, 3
    %p62 = por %p60, %p61
    %p63 = scmp.ne.s32.totalorder %s55, %s58
    %p64 = scmp.eq.s32.totalorder %s17, 0
    %p65 = por %p63, %p64
    %p66 = scmp.ne.s32.totalorder %s55, %s58
    %p67 = scmp.eq.s32.totalorder %s22, 3
    %p68 = por %p66, %p67
    %p69 = scmp.ne.s32.totalorder %s58, %s59
    %p70 = scmp.eq.s32.totalorder %s22, 0
    %p71 = por %p69, %p70
    %p72 = scmp.ne.s32.totalorder %s58, %s59
    %p73 = scmp.eq.s32.totalorder %s23, 3
    %p74 = por %p72, %p73
    %p76 = scmp.ne.s32.totalorder %s59, %s75
    %p77 = scmp.eq.s32.totalorder %s23, 0
    %p78 = por %p76, %p77
    %s80 = sadd.s32 %s79, 1
    %p83 = scmp.eq.s32.totalorder %s17, 3
    %p84 = scmp.ne.s32.totalorder %s79, %s81
    %p85 = scmp.eq.s32.totalorder %s17, 0
    %p86 = por %p84, %p85
    %p87 = scmp.ne.s32.totalorder %s79, %s81
    %p88 = scmp.eq.s32.totalorder %s22, 3
    %p89 = por %p87, %p88
    %p90 = scmp.ne.s32.totalorder %s81, %s82
    %p91 = scmp.eq.s32.totalorder %s22, 0
    %p92 = por %p90, %p91
    %p93 = scmp.ne.s32.totalorder %s81, %s82
    %p94 = scmp.eq.s32.totalorder %s23, 3
    %p95 = por %p93, %p94
    %p97 = scmp.ne.s32.totalorder %s82, %s96
    %p98 = scmp.eq.s32.totalorder %s23, 0
    %p99 = por %p97, %p98
    %s101 = sadd.s32 %s100, 1
    %p104 = scmp.eq.s32.totalorder %s17, 3
    %p105 = scmp.ne.s32.totalorder %s100, %s102
    %p106 = scmp.eq.s32.totalorder %s17, 0
    %p107 = por %p105, %p106
    %p108 = scmp.ne.s32.totalorder %s100, %s102
    %p109 = scmp.eq.s32.totalorder %s22, 3
    %p110 = por %p108, %p109
    %p111 = scmp.ne.s32.totalorder %s102, %s103
    %p112 = scmp.eq.s32.totalorder %s22, 0
    %p113 = por %p111, %p112
    %p114 = scmp.ne.s32.totalorder %s102, %s103
    %p115 = scmp.eq.s32.totalorder %s23, 3
    %p116 = por %p114, %p115
    %p118 = scmp.ne.s32.totalorder %s103, %s117
    %p119 = scmp.eq.s32.totalorder %s23, 0
    %p120 = por %p118, %p119
    %s122 = sadd.s32 %s121, 1
    %p125 = scmp.eq.s32.totalorder %s17, 3
    %p126 = scmp.ne.s32.totalorder %s121, %s123
    %p127 = scmp.eq.s32.totalorder %s17, 0
    %p128 = por %p126, %p127
    %p129 = scmp.ne.s32.totalorder %s121, %s123
    %p130 = scmp.eq.s32.totalorder %s22, 3
    %p131 = por %p129, %p130
    %p132 = scmp.ne.s32.totalorder %s123, %s124
    %p133 = scmp.eq.s32.totalorder %s22, 0
    %p134 = por %p132, %p133
    %p135 = scmp.ne.s32.totalorder %s123, %s124
    %p136 = scmp.eq.s32.totalorder %s23, 3
    %p137 = por %p135, %p136
    %p139 = scmp.ne.s32.totalorder %s124, %s138
    %p140 = scmp.eq.s32.totalorder %s23, 0
    %p141 = por %p139, %p140
    %s143 = sadd.s32 %s142, 1
    %p146 = scmp.eq.s32.totalorder %s17, 3
    %p147 = scmp.ne.s32.totalorder %s142, %s144
    %p148 = scmp.eq.s32.totalorder %s17, 0
    %p149 = por %p147, %p148
    %p150 = scmp.ne.s32.totalorder %s142, %s144
    %p151 = scmp.eq.s32.totalorder %s22, 3
    %p152 = por %p150, %p151
    %p153 = scmp.ne.s32.totalorder %s144, %s145
    %p154 = scmp.eq.s32.totalorder %s22, 0
    %p155 = por %p153, %p154
    %p156 = scmp.ne.s32.totalorder %s144, %s145
    %p157 = scmp.eq.s32.totalorder %s23, 3
    %p158 = por %p156, %p157
    %p160 = scmp.ne.s32.totalorder %s145, %s159
    %p161 = scmp.eq.s32.totalorder %s23, 0
    %p162 = por %p160, %p161
    %s164 = sadd.s32 %s163, 1
    %p167 = scmp.eq.s32.totalorder %s17, 3
    %p168 = scmp.ne.s32.totalorder %s163, %s165
    %p169 = scmp.eq.s32.totalorder %s17, 0
    %p170 = por %p168, %p169
    %p171 = scmp.ne.s32.totalorder %s163, %s165
    %p172 = scmp.eq.s32.totalorder %s22, 3
    %p173 = por %p171, %p172
    %p174 = scmp.ne.s32.totalorder %s165, %s166
    %p175 = scmp.eq.s32.totalorder %s22, 0
    %p176 = por %p174, %p175
    %p177 = scmp.ne.s32.totalorder %s165, %s166
    %p178 = scmp.eq.s32.totalorder %s23, 3
    %p179 = por %p177, %p178
    %p181 = scmp.ne.s32.totalorder %s166, %s180
    %p182 = scmp.eq.s32.totalorder %s23, 0
    %p183 = por %p181, %p182
    %s185 = sadd.s32 %s184, 1
    %p188 = scmp.eq.s32.totalorder %s17, 3
    %p189 = scmp.ne.s32.totalorder %s184, %s186
    %p190 = scmp.eq.s32.totalorder %s17, 0
    %p191 = por %p189, %p190
    %p192 = scmp.ne.s32.totalorder %s184, %s186
    %p193 = scmp.eq.s32.totalorder %s22, 3
    %p194 = por %p192, %p193
    %p195 = scmp.ne.s32.totalorder %s186, %s187
    %p196 = scmp.eq.s32.totalorder %s22, 0
    %p197 = por %p195, %p196
    %p198 = scmp.ne.s32.totalorder %s186, %s187
    %p199 = scmp.eq.s32.totalorder %s23, 3
    %p200 = por %p198, %p199
    %p202 = scmp.ne.s32.totalorder %s187, %s201
    %p203 = scmp.eq.s32.totalorder %s23, 0
    %p204 = por %p202, %p203
    %s205 = ssub.s32 %s17, %s24
    %p206 = scmp.eq.s32.totalorder %s205, 0
    %s208 = sadd.s32 %s207, 1
    %s209 = scalar_select %p206, %s207, %s208
    %p212 = pneg %p206
    %p213 = scmp.eq.s32.totalorder %s17, 3
    %p214 = por %p212, %p213
    %p215 = scmp.ne.s32.totalorder %s207, %s210
    %p216 = scmp.eq.s32.totalorder %s17, 0
    %p217 = por %p215, %p216
    %p218 = scmp.ne.s32.totalorder %s207, %s210
    %p219 = scmp.eq.s32.totalorder %s22, 3
    %p220 = por %p218, %p219
    %p221 = scmp.ne.s32.totalorder %s210, %s211
    %p222 = scmp.eq.s32.totalorder %s22, 0
    %p223 = por %p221, %p222
    %p224 = scmp.ne.s32.totalorder %s210, %s211
    %p225 = scmp.eq.s32.totalorder %s23, 3
    %p226 = por %p224, %p225
    %p228 = scmp.ne.s32.totalorder %s211, %s227
    %p229 = scmp.eq.s32.totalorder %s23, 0
    %p230 = por %p228, %p229
    %s231 = ssub.s32 3, %s17
    %s232 = ssub.s32 3, %s24
    %s233 = ssub.s32 %s231, %s232
    %p234 = scmp.eq.s32.totalorder %s233, 0
    %s236 = sadd.s32 %s235, 1
    %s237 = scalar_select %p234, %s235, %s236
    %p240 = pneg %p234
    %p241 = scmp.eq.s32.totalorder %s17, 3
    %p242 = por %p240, %p241
    %p243 = scmp.ne.s32.totalorder %s235, %s238
    %p244 = scmp.eq.s32.totalorder %s17, 0
    %p245 = por %p243, %p244
    %p246 = scmp.ne.s32.totalorder %s235, %s238
    %p247 = scmp.eq.s32.totalorder %s22, 3
    %p248 = por %p246, %p247
    %p249 = scmp.ne.s32.totalorder %s238, %s239
    %p250 = scmp.eq.s32.totalorder %s22, 0
    %p251 = por %p249, %p250
    %p252 = scmp.ne.s32.totalorder %s238, %s239
    %p253 = scmp.eq.s32.totalorder %s23, 3
    %p254 = por %p252, %p253
    %p256 = scmp.ne.s32.totalorder %s239, %s255
    %p257 = scmp.eq.s32.totalorder %s23, 0
    %p258 = por %p256, %p257
    %s260 = sadd.s32 %s259, 1
    %p263 = scmp.eq.s32.totalorder %s17, 3
    %p264 = scmp.ne.s32.totalorder %s259, %s261
    %p265 = scmp.eq.s32.totalorder %s17, 0
    %p266 = por %p264, %p265
    %p267 = scmp.ne.s32.totalorder %s259, %s261
    %p268 = scmp.eq.s32.totalorder %s22, 3
    %p269 = por %p267, %p268
    %p270 = scmp.ne.s32.totalorder %s261, %s262
    %p271 = scmp.eq.s32.totalorder %s22, 0
    %p272 = por %p270, %p271
    %p273 = scmp.ne.s32.totalorder %s261, %s262
    %p274 = scmp.eq.s32.totalorder %s23, 3
    %p275 = por %p273, %p274
    %p277 = scmp.ne.s32.totalorder %s262, %s276
    %p278 = scmp.eq.s32.totalorder %s23, 0
    %p279 = por %p277, %p278
    %p280 = scmp.le.s32.totalorder 1, %s17
    %p281 = scmp.lt.s32.totalorder %s17, 5
    %p282 = pnand %p280, %p281
    %p283 = pneg %p282
    // Predicated region
    $region9: #{net_forward.2} parent=5 // pred_check
      _
    $region10: #{net_forward.2} parent=5 // pred_check_branch
      %285 = sbr.rel (%p282) target = $region12
    $region11: #{net_forward.2} parent=5 // pred_region
      %s286 = ssub.s32 %s17, 1
      // Predicated region
      $region13: #{net_forward.2} parent=11 // pred_check
        %p287 = pneg %p92
      $region14: #{net_forward.2} parent=11 // pred_check_branch
        %289 = sbr.rel (%p287) target = $region16
      $region15: #{net_forward.2} parent=11 // pred_region
        _
      $region16: #{net_forward.2} parent=11 // pred_fallthru
        _
      // Predicated region
      $region17: #{net_forward.2} parent=11 // pred_check
        %p290 = pneg %p113
      $region18: #{net_forward.2} parent=11 // pred_check_branch
        %292 = sbr.rel (%p290) target = $region20
      $region19: #{net_forward.2} parent=11 // pred_region
        _
      $region20: #{net_forward.2} parent=11 // pred_fallthru
        _
      // Predicated region
      $region21: #{net_forward.2} parent=11 // pred_check
        %p293 = pneg %p134
      $region22: #{net_forward.2} parent=11 // pred_check_branch
        %295 = sbr.rel (%p293) target = $region24
      $region23: #{net_forward.2} parent=11 // pred_region
        _
      $region24: #{net_forward.2} parent=11 // pred_fallthru
        _
      // Predicated region
      $region25: #{net_forward.2} parent=11 // pred_check
        %p296 = pneg %p155
      $region26: #{net_forward.2} parent=11 // pred_check_branch
        %298 = sbr.rel (%p296) target = $region28
      $region27: #{net_forward.2} parent=11 // pred_region
        _
      $region28: #{net_forward.2} parent=11 // pred_fallthru
        _
      // Predicated region
      $region29: #{net_forward.2} parent=11 // pred_check
        %p299 = pneg %p176
      $region30: #{net_forward.2} parent=11 // pred_check_branch
        %301 = sbr.rel (%p299) target = $region32
      $region31: #{net_forward.2} parent=11 // pred_region
        _
      $region32: #{net_forward.2} parent=11 // pred_fallthru
        _
      // Predicated region
      $region33: #{net_forward.2} parent=11 // pred_check
        %p302 = pneg %p197
      $region34: #{net_forward.2} parent=11 // pred_check_branch
        %304 = sbr.rel (%p302) target = $region36
      $region35: #{net_forward.2} parent=11 // pred_region
        _
      $region36: #{net_forward.2} parent=11 // pred_fallthru
        _
    $region12: #{net_forward.2} parent=5 // pred_fallthru
      _
    %p305 = scmp.lt.s32.totalorder %s17, 4
    // Predicated region
    $region37: #{net_forward.2} parent=5 // pred_check
      %p306 = pneg %p305
    $region38: #{net_forward.2} parent=5 // pred_check_branch
      %308 = sbr.rel (%p306) target = $region40
    $region39: #{net_forward.2} parent=5 // pred_region
      // Predicated region
      $region41: #{net_forward.2} parent=39 // pred_check
        %p309 = pneg %p37
      $region42: #{net_forward.2} parent=39 // pred_check_branch
        %311 = sbr.rel (%p309) target = $region44
      $region43: #{net_forward.2} parent=39 // pred_region
        %p312 = scmp.lt.s32.totalorder %s17, 3
        %s313 = scalar_select %p312, %s17, 3
        %s314 = smul.addr %s313, 50
        %s315 = smul.addr %s314, 4
        %s316 = scalar_lea.vmem %s0, %s315
      $region44: #{net_forward.2} parent=39 // pred_fallthru
        _
      // Predicated region
      $region45: #{net_forward.2} parent=39 // pred_check
        %p317 = pneg %p65
      $region46: #{net_forward.2} parent=39 // pred_check_branch
        %319 = sbr.rel (%p317) target = $region48
      $region47: #{net_forward.2} parent=39 // pred_region
        %s320 = ssub.s32 3, %s17
        %p321 = scmp.lt.s32.totalorder %s320, 3
        %s322 = scalar_select %p321, %s320, 3
        %s323 = smul.addr %s322, 50
        %s324 = smul.addr %s323, 4
        %s325 = scalar_lea.vmem %s1, %s324
        %s326 = ssub.s32 3, %s17
      $region48: #{net_forward.2} parent=39 // pred_fallthru
        _
    $region40: #{net_forward.2} parent=5 // pred_fallthru
      _
    %p327 = scmp.le.s32.totalorder 1, %s17
    %p328 = scmp.lt.s32.totalorder %s17, 5
    %p329 = pnand %p327, %p328
    %p330 = pneg %p329
    // Predicated region
    $region49: #{net_forward.2} parent=5 // pred_check
      _
    $region50: #{net_forward.2} parent=5 // pred_check_branch
      %332 = sbr.rel (%p329) target = $region52
    $region51: #{net_forward.2} parent=5 // pred_region
      %s333 = ssub.s32 %s17, 1
      %p334 = scmp.lt.s32.totalorder %s22, 3
      %s335 = scalar_select %p334, %s22, 3
      %s336 = smul.addr %s335, 50
      %s337 = smul.addr %s336, 4
      %s338 = scalar_lea.vmem %s0, %s337
      %p339 = pneg %p43
      %p340 = pneg %p40
      %s341 = ssub.s32 3, %s22
      %p342 = scmp.lt.s32.totalorder %s341, 3
      %s343 = scalar_select %p342, %s341, 3
      %s344 = smul.addr %s343, 50
      %s345 = smul.addr %s344, 4
      %s346 = scalar_lea.vmem %s1, %s345
      %p347 = pneg %p71
      %p348 = pneg %p68
      %p349 = pneg %p92
      %p350 = pneg %p89
      %p351 = pneg %p113
      %p352 = pneg %p110
      %p353 = pneg %p134
      %p354 = pneg %p131
      %p355 = pneg %p155
      %p356 = pneg %p152
      %p357 = pneg %p176
      %p358 = pneg %p173
      %p359 = pneg %p197
      %p360 = pneg %p194
      %p361 = pneg %p223
      %p362 = pneg %p220
      %p363 = scmp.lt.s32.totalorder %s22, 3
      %s364 = scalar_select %p363, %s22, 3
      %s365 = smul.addr %s364, 50
      %s366 = smul.addr %s365, 4
      %s367 = scalar_lea.vmem %s8, %s366
      %p368 = pneg %p251
      %p369 = pneg %p248
      %s370 = ssub.s32 3, %s22
      %p371 = scmp.lt.s32.totalorder %s370, 3
      %s372 = scalar_select %p371, %s370, 3
      %s373 = smul.addr %s372, 50
      %s374 = smul.addr %s373, 4
      %s375 = scalar_lea.vmem %s9, %s374
      %p376 = pneg %p272
      %p377 = pneg %p269
      %p378 = scmp.lt.s32.totalorder %s22, 3
      %s379 = scalar_select %p378, %s22, 3
      %s380 = smul.addr %s379, 50
      %s381 = smul.addr %s380, 4
      %s382 = scalar_lea.vmem %s0, %s381
      %s383 = ssub.s32 3, %s22
      %p384 = scmp.lt.s32.totalorder %s383, 3
      %s385 = scalar_select %p384, %s383, 3
      %s386 = smul.addr %s385, 50
      %s387 = smul.addr %s386, 4
      %s388 = scalar_lea.vmem %s1, %s387
      %s389 = ssub.s32 3, %s22
      %p390 = scmp.lt.s32.totalorder %s22, 3
      %s391 = scalar_select %p390, %s22, 3
      %s392 = smul.addr %s391, 50
      %s393 = smul.addr %s392, 4
      %s394 = scalar_lea.vmem %s8, %s393
      %s395 = ssub.s32 3, %s22
      %p396 = scmp.lt.s32.totalorder %s395, 3
      %s397 = scalar_select %p396, %s395, 3
      %s398 = smul.addr %s397, 50
      %s399 = smul.addr %s398, 4
      %s400 = scalar_lea.vmem %s9, %s399
      %s401 = ssub.s32 3, %s22
      %p403 = scmp.eq.s32.totalorder %s22, 0
      // Predicated region
      $region53: #{net_forward.2} parent=51 // pred_check
        %p404 = pneg %p403
      $region54: #{net_forward.2} parent=51 // pred_check_branch
        %406 = sbr.rel (%p404) target = $region56
      $region55: #{net_forward.2} parent=51 // pred_region
        %407 = vst [vmem:[#allocation2] sm:$0xff] 0.0
        %408 = vst [vmem:[#allocation2 + $0x8] sm:$0xff] 0.0
        %409 = vst [vmem:[#allocation3] sm:$0xff] 0.0
        %410 = vst [vmem:[#allocation3 + $0x8] sm:$0xff] 0.0
        %411 = vst [vmem:[%s10] sm:$0xf] 0.0
      $region56: #{net_forward.2} parent=51 // pred_fallthru
        _
      %v412 = vld [vmem:[%s2] sm:$0xf]
      %v413 = vld [vmem:[%s2 + $0x4] sm:$0xf]
      %v414 = vld [vmem:[%s3] sm:$0xf]
      %v415 = vld [vmem:[%s3 + $0x4] sm:$0xf]
      %v416 = vld [vmem:[%s382] sm:$0xf]
      %v417 = vld [vmem:[%s382 + $0x4] sm:$0xf]
      %v418 = vld [vmem:[%s382 + $0x8] sm:$0xf]
      %v419 = vld [vmem:[%s382 + $0xc] sm:$0xf]
      %v420 = vld [vmem:[%s382 + $0x10] sm:$0xf]
      %v421 = vld [vmem:[%s382 + $0x14] sm:$0xf]
      %v422 = vld [vmem:[%s382 + $0x18] sm:$0xf]
      %v423 = vld [vmem:[%s382 + $0x1c] sm:$0xf]
      %v424 = vld [vmem:[%s382 + $0x20] sm:$0xf]
      %v425 = vld [vmem:[%s382 + $0x24] sm:$0xf]
      %v426 = vld [vmem:[%s382 + $0x28] sm:$0xf]
      %v427 = vld [vmem:[%s382 + $0x2c] sm:$0xf]
      %v428 = vld [vmem:[%s382 + $0x30] sm:$0xf]
      %v429 = vld [vmem:[%s382 + $0x34] sm:$0xf]
      %v430 = vld [vmem:[%s382 + $0x38] sm:$0xf]
      %v431 = vld [vmem:[%s382 + $0x3c] sm:$0xf]
      %v432 = vld [vmem:[%s382 + $0x40] sm:$0xf]
      %v433 = vld [vmem:[%s382 + $0x44] sm:$0xf]
      %v434 = vld [vmem:[%s382 + $0x48] sm:$0xf]
      %v435 = vld [vmem:[%s382 + $0x4c] sm:$0xf]
      %v436 = vld [vmem:[%s382 + $0x50] sm:$0xf]
      %v437 = vld [vmem:[%s382 + $0x54] sm:$0xf]
      %v438 = vld [vmem:[%s382 + $0x58] sm:$0xf]
      %v439 = vld [vmem:[%s382 + $0x5c] sm:$0xf]
      %v440 = vld [vmem:[%s382 + $0x60] sm:$0xf]
      %v441 = vld [vmem:[%s382 + $0x64] sm:$0xf]
      %v442 = vld [vmem:[%s382 + $0x68] sm:$0xf]
      %v443 = vld [vmem:[%s382 + $0x6c] sm:$0xf]
      %v444 = vld [vmem:[%s382 + $0x70] sm:$0xf]
      %v445 = vld [vmem:[%s382 + $0x74] sm:$0xf]
      %v446 = vld [vmem:[%s382 + $0x78] sm:$0xf]
      %v447 = vld [vmem:[%s382 + $0x7c] sm:$0xf]
      %v448 = vld [vmem:[%s382 + $0x80] sm:$0xf]
      %v449 = vld [vmem:[%s382 + $0x84] sm:$0xf]
      %v450 = vld [vmem:[%s382 + $0x88] sm:$0xf]
      %v451 = vld [vmem:[%s382 + $0x8c] sm:$0xf]
      %v452 = vld [vmem:[%s382 + $0x90] sm:$0xf]
      %v453 = vld [vmem:[%s382 + $0x94] sm:$0xf]
      %v454 = vld [vmem:[%s382 + $0x98] sm:$0xf]
      %v455 = vld [vmem:[%s382 + $0x9c] sm:$0xf]
      %v456 = vld [vmem:[%s382 + $0xa0] sm:$0xf]
      %v457 = vld [vmem:[%s382 + $0xa4] sm:$0xf]
      %v458 = vld [vmem:[%s382 + $0xa8] sm:$0xf]
      %v459 = vld [vmem:[%s382 + $0xac] sm:$0xf]
      %v460 = vld [vmem:[%s382 + $0xb0] sm:$0xf]
      %v461 = vld [vmem:[%s382 + $0xb4] sm:$0xf]
      %v462 = vld [vmem:[%s382 + $0xb8] sm:$0xf]
      %v463 = vld [vmem:[%s382 + $0xbc] sm:$0xf]
      %v464 = vld [vmem:[%s382 + $0xc0] sm:$0xf]
      %v465 = vld [vmem:[%s382 + $0xc4] sm:$0xf]
      %v466 = vld [vmem:[%s388] sm:$0xf]
      %v467 = vld [vmem:[%s388 + $0x4] sm:$0xf]
      %v468 = vld [vmem:[%s388 + $0x8] sm:$0xf]
      %v469 = vld [vmem:[%s388 + $0xc] sm:$0xf]
      %v470 = vld [vmem:[%s388 + $0x10] sm:$0xf]
      %v471 = vld [vmem:[%s388 + $0x14] sm:$0xf]
      %v472 = vld [vmem:[%s388 + $0x18] sm:$0xf]
      %v473 = vld [vmem:[%s388 + $0x1c] sm:$0xf]
      %v474 = vld [vmem:[%s388 + $0x20] sm:$0xf]
      %v475 = vld [vmem:[%s388 + $0x24] sm:$0xf]
      %v476 = vld [vmem:[%s388 + $0x28] sm:$0xf]
      %v477 = vld [vmem:[%s388 + $0x2c] sm:$0xf]
      %v478 = vld [vmem:[%s388 + $0x30] sm:$0xf]
      %v479 = vld [vmem:[%s388 + $0x34] sm:$0xf]
      %v480 = vld [vmem:[%s388 + $0x38] sm:$0xf]
      %v481 = vld [vmem:[%s388 + $0x3c] sm:$0xf]
      %v482 = vld [vmem:[%s388 + $0x40] sm:$0xf]
      %v483 = vld [vmem:[%s388 + $0x44] sm:$0xf]
      %v484 = vld [vmem:[%s388 + $0x48] sm:$0xf]
      %v485 = vld [vmem:[%s388 + $0x4c] sm:$0xf]
      %v486 = vld [vmem:[%s388 + $0x50] sm:$0xf]
      %v487 = vld [vmem:[%s388 + $0x54] sm:$0xf]
      %v488 = vld [vmem:[%s388 + $0x58] sm:$0xf]
      %v489 = vld [vmem:[%s388 + $0x5c] sm:$0xf]
      %v490 = vld [vmem:[%s388 + $0x60] sm:$0xf]
      %v491 = vld [vmem:[%s388 + $0x64] sm:$0xf]
      %v492 = vld [vmem:[%s388 + $0x68] sm:$0xf]
      %v493 = vld [vmem:[%s388 + $0x6c] sm:$0xf]
      %v494 = vld [vmem:[%s388 + $0x70] sm:$0xf]
      %v495 = vld [vmem:[%s388 + $0x74] sm:$0xf]
      %v496 = vld [vmem:[%s388 + $0x78] sm:$0xf]
      %v497 = vld [vmem:[%s388 + $0x7c] sm:$0xf]
      %v498 = vld [vmem:[%s388 + $0x80] sm:$0xf]
      %v499 = vld [vmem:[%s388 + $0x84] sm:$0xf]
      %v500 = vld [vmem:[%s388 + $0x88] sm:$0xf]
      %v501 = vld [vmem:[%s388 + $0x8c] sm:$0xf]
      %v502 = vld [vmem:[%s388 + $0x90] sm:$0xf]
      %v503 = vld [vmem:[%s388 + $0x94] sm:$0xf]
      %v504 = vld [vmem:[%s388 + $0x98] sm:$0xf]
      %v505 = vld [vmem:[%s388 + $0x9c] sm:$0xf]
      %v506 = vld [vmem:[%s388 + $0xa0] sm:$0xf]
      %v507 = vld [vmem:[%s388 + $0xa4] sm:$0xf]
      %v508 = vld [vmem:[%s388 + $0xa8] sm:$0xf]
      %v509 = vld [vmem:[%s388 + $0xac] sm:$0xf]
      %v510 = vld [vmem:[%s388 + $0xb0] sm:$0xf]
      %v511 = vld [vmem:[%s388 + $0xb4] sm:$0xf]
      %v512 = vld [vmem:[%s388 + $0xb8] sm:$0xf]
      %v513 = vld [vmem:[%s388 + $0xbc] sm:$0xf]
      %v514 = vld [vmem:[%s388 + $0xc0] sm:$0xf]
      %v515 = vld [vmem:[%s388 + $0xc4] sm:$0xf]
      %v516 = vld [vmem:[%s4] sm:$0x1]
      %v518 = vlaneseq
      %v519 = vshrl.u32 %v518, 7
      %v520 = vsub.s32 0, %v519
      %v521 = vrot.slane %v516, %v520
      %v573 = vunpack.c.l.b16 %v416
      %v574 = vunpack.c.l.b16 %v417
      %v575 = vunpack.c.l.b16 %v418
      %v576 = vunpack.c.l.b16 %v419
      %v577 = vunpack.c.l.b16 %v420
      %v578 = vunpack.c.l.b16 %v421
      %v579 = vunpack.c.l.b16 %v422
      %v580 = vunpack.c.l.b16 %v423
      %v581 = vunpack.c.l.b16 %v424
      %v582 = vunpack.c.l.b16 %v425
      %v583 = vunpack.c.l.b16 %v426
      %v584 = vunpack.c.l.b16 %v427
      %v585 = vunpack.c.l.b16 %v428
      %v586 = vunpack.c.l.b16 %v429
      %v587 = vunpack.c.l.b16 %v430
      %v588 = vunpack.c.l.b16 %v431
      %v589 = vunpack.c.l.b16 %v432
      %v590 = vunpack.c.l.b16 %v433
      %v591 = vunpack.c.l.b16 %v434
      %v592 = vunpack.c.l.b16 %v435
      %v593 = vunpack.c.l.b16 %v436
      %v594 = vunpack.c.l.b16 %v437
      %v595 = vunpack.c.l.b16 %v438
      %v596 = vunpack.c.l.b16 %v439
      %v597 = vunpack.c.l.b16 %v440
      %v598 = vunpack.c.l.b16 %v441
      %v599 = vunpack.c.l.b16 %v442
      %v600 = vunpack.c.l.b16 %v443
      %v601 = vunpack.c.l.b16 %v444
      %v602 = vunpack.c.l.b16 %v445
      %v603 = vunpack.c.l.b16 %v446
      %v604 = vunpack.c.l.b16 %v447
      %v605 = vunpack.c.l.b16 %v448
      %v606 = vunpack.c.l.b16 %v449
      %v607 = vunpack.c.l.b16 %v450
      %v608 = vunpack.c.l.b16 %v451
      %v609 = vunpack.c.l.b16 %v452
      %v610 = vunpack.c.l.b16 %v453
      %v611 = vunpack.c.l.b16 %v454
      %v612 = vunpack.c.l.b16 %v455
      %v613 = vunpack.c.l.b16 %v456
      %v614 = vunpack.c.l.b16 %v457
      %v615 = vunpack.c.l.b16 %v458
      %v616 = vunpack.c.l.b16 %v459
      %v617 = vunpack.c.l.b16 %v460
      %v618 = vunpack.c.l.b16 %v461
      %v619 = vunpack.c.l.b16 %v462
      %v620 = vunpack.c.l.b16 %v463
      %v621 = vunpack.c.l.b16 %v464
      %v622 = vunpack.c.l.b16 %v465
      %v623 = vpack.c.b16 %v574, %v573
      %v624 = vpack.c.b16 %v576, %v575
      %v625 = vpack.c.b16 %v578, %v577
      %v626 = vpack.c.b16 %v580, %v579
      %v627 = vpack.c.b16 %v582, %v581
      %v628 = vpack.c.b16 %v584, %v583
      %v629 = vpack.c.b16 %v586, %v585
      %v630 = vpack.c.b16 %v588, %v587
      %v631 = vpack.c.b16 %v590, %v589
      %v632 = vpack.c.b16 %v592, %v591
      %v633 = vpack.c.b16 %v594, %v593
      %v634 = vpack.c.b16 %v596, %v595
      %v635 = vpack.c.b16 %v598, %v597
      %v636 = vpack.c.b16 %v600, %v599
      %v637 = vpack.c.b16 %v602, %v601
      %v638 = vpack.c.b16 %v604, %v603
      %v639 = vpack.c.b16 %v606, %v605
      %v640 = vpack.c.b16 %v608, %v607
      %v641 = vpack.c.b16 %v610, %v609
      %v642 = vpack.c.b16 %v612, %v611
      %v643 = vpack.c.b16 %v614, %v613
      %v644 = vpack.c.b16 %v616, %v615
      %v645 = vpack.c.b16 %v618, %v617
      %v646 = vpack.c.b16 %v620, %v619
      %v647 = vpack.c.b16 %v622, %v621
      %v650 = vunpack.c.l.b16 %v412
      %v651 = vunpack.c.l.b16 %v413
      %v652 = vpack.c.b16 %v651, %v650
      %vm654 = vcmask 130048
      %v656 = vsel %vm654, %v623, 0
      %v659 = vsel %vm654, %v624, 0
      %v662 = vsel %vm654, %v625, 0
      %v665 = vsel %vm654, %v626, 0
      %v668 = vsel %vm654, %v627, 0
      %v671 = vsel %vm654, %v628, 0
      %v674 = vsel %vm654, %v629, 0
      %v677 = vsel %vm654, %v630, 0
      %v680 = vsel %vm654, %v631, 0
      %v683 = vsel %vm654, %v632, 0
      %v686 = vsel %vm654, %v633, 0
      %v689 = vsel %vm654, %v634, 0
      %v692 = vsel %vm654, %v635, 0
      %v695 = vsel %vm654, %v636, 0
      %v698 = vsel %vm654, %v637, 0
      %v701 = vsel %vm654, %v638, 0
      %v704 = vsel %vm654, %v639, 0
      %v707 = vsel %vm654, %v640, 0
      %v710 = vsel %vm654, %v641, 0
      %v713 = vsel %vm654, %v642, 0
      %v716 = vsel %vm654, %v643, 0
      %v719 = vsel %vm654, %v644, 0
      %v722 = vsel %vm654, %v645, 0
      %v725 = vsel %vm654, %v646, 0
      %v728 = vsel %vm654, %v647, 0
      %730 = vmatprep.subr.bf16.mxu0 0
      %731 = vmatpush1.bf16.msra.mxu0 0
      %732 = vmatprep.subr.bf16.mxu0 0
      %733 = vmatpush1.bf16.msra.mxu0 0
      %734 = vmatprep.subr.bf16.mxu0 0
      %735 = vmatpush1.bf16.msra.mxu0 0
      %736 = vmatprep.subr.bf16.mxu0 0
      %737 = vmatpush1.bf16.msra.mxu0 0
      %738 = vmatprep.subr.bf16.mxu0 0
      %739 = vmatpush1.bf16.msra.mxu0 0
      %740 = vmatprep.subr.bf16.mxu0 0
      %741 = vmatpush1.bf16.msra.mxu0 0
      %742 = vmatprep.subr.bf16.mxu0 0
      %743 = vmatpush1.bf16.msra.mxu0 0
      %744 = vmatprep.subr.bf16.mxu0 0
      %745 = vmatpush1.bf16.msra.mxu0 %v652
      %746 = vmatprep.subr.bf16.mxu0 0
      %747 = vmatpush2.bf16.msra.mxu0 0
      %748 = vmatprep.subr.bf16.mxu0 0
      %749 = vmatpush2.bf16.msra.mxu0 0
      %750 = vmatprep.subr.bf16.mxu0 0
      %751 = vmatpush2.bf16.msra.mxu0 0
      %752 = vmatprep.subr.bf16.mxu0 0
      %753 = vmatpush2.bf16.msra.mxu0 0
      %754 = vmatprep.subr.bf16.mxu0 0
      %755 = vmatpush2.bf16.msra.mxu0 0
      %756 = vmatprep.subr.bf16.mxu0 0
      %757 = vmatpush2.bf16.msra.mxu0 0
      %758 = vmatprep.subr.bf16.mxu0 0
      %759 = vmatpush2.bf16.msra.mxu0 0
      %760 = vmatprep.subr.bf16.mxu0 0
      %761 = vmatpush2.bf16.msra.mxu0 0
      %762 = vmatprep.mubr.bf16.mxu0 0
      %763 = vmatmul.mubr.bf16.gmra.mxu0 %v656
      %v764 = vpop.f32.mrf.mxu0
      %v765 = vadd.f32 %v521, %v764
      %v766 = vpop.f32.mrf.mxu0
      %v767 = vpop.f32.mrf.mxu0
      %v768 = vadd.f32 %v521, %v767
      %v769 = vpop.f32.mrf.mxu0
      %770 = vmatprep.mubr.bf16.mxu0 0
      %771 = vmatmul.mubr.bf16.gmra.mxu0 %v659
      %v772 = vpop.f32.mrf.mxu0
      %v773 = vadd.f32 %v521, %v772
      %v774 = vpop.f32.mrf.mxu0
      %v775 = vpop.f32.mrf.mxu0
      %v776 = vadd.f32 %v521, %v775
      %v777 = vpop.f32.mrf.mxu0
      %778 = vmatprep.mubr.bf16.mxu0 0
      %779 = vmatmul.mubr.bf16.gmra.mxu0 %v662
      %v780 = vpop.f32.mrf.mxu0
      %v781 = vadd.f32 %v521, %v780
      %v782 = vpop.f32.mrf.mxu0
      %v783 = vpop.f32.mrf.mxu0
      %v784 = vadd.f32 %v521, %v783
      %v785 = vpop.f32.mrf.mxu0
      %786 = vmatprep.mubr.bf16.mxu0 0
      %787 = vmatmul.mubr.bf16.gmra.mxu0 %v665
      %v788 = vpop.f32.mrf.mxu0
      %v789 = vadd.f32 %v521, %v788
      %v790 = vpop.f32.mrf.mxu0
      %v791 = vpop.f32.mrf.mxu0
      %v792 = vadd.f32 %v521, %v791
      %v793 = vpop.f32.mrf.mxu0
      %794 = vmatprep.mubr.bf16.mxu0 0
      %795 = vmatmul.mubr.bf16.gmra.mxu0 %v668
      %v796 = vpop.f32.mrf.mxu0
      %v797 = vadd.f32 %v521, %v796
      %v798 = vpop.f32.mrf.mxu0
      %v799 = vpop.f32.mrf.mxu0
      %v800 = vadd.f32 %v521, %v799
      %v801 = vpop.f32.mrf.mxu0
      %802 = vmatprep.mubr.bf16.mxu0 0
      %803 = vmatmul.mubr.bf16.gmra.mxu0 %v671
      %v804 = vpop.f32.mrf.mxu0
      %v805 = vadd.f32 %v521, %v804
      %v806 = vpop.f32.mrf.mxu0
      %v807 = vpop.f32.mrf.mxu0
      %v808 = vadd.f32 %v521, %v807
      %v809 = vpop.f32.mrf.mxu0
      %810 = vmatprep.mubr.bf16.mxu0 0
      %811 = vmatmul.mubr.bf16.gmra.mxu0 %v674
      %v812 = vpop.f32.mrf.mxu0
      %v813 = vadd.f32 %v521, %v812
      %v814 = vpop.f32.mrf.mxu0
      %v815 = vpop.f32.mrf.mxu0
      %v816 = vadd.f32 %v521, %v815
      %v817 = vpop.f32.mrf.mxu0
      %818 = vmatprep.mubr.bf16.mxu0 0
      %819 = vmatmul.mubr.bf16.gmra.mxu0 %v677
      %v820 = vpop.f32.mrf.mxu0
      %v821 = vadd.f32 %v521, %v820
      %v822 = vpop.f32.mrf.mxu0
      %v823 = vpop.f32.mrf.mxu0
      %v824 = vadd.f32 %v521, %v823
      %v825 = vpop.f32.mrf.mxu0
      %826 = vmatprep.mubr.bf16.mxu0 0
      %827 = vmatmul.mubr.bf16.gmra.mxu0 %v680
      %v828 = vpop.f32.mrf.mxu0
      %v829 = vadd.f32 %v521, %v828
      %v830 = vpop.f32.mrf.mxu0
      %v831 = vpop.f32.mrf.mxu0
      %v832 = vadd.f32 %v521, %v831
      %v833 = vpop.f32.mrf.mxu0
      %834 = vmatprep.mubr.bf16.mxu0 0
      %835 = vmatmul.mubr.bf16.gmra.mxu0 %v683
      %v836 = vpop.f32.mrf.mxu0
      %v837 = vadd.f32 %v521, %v836
      %v838 = vpop.f32.mrf.mxu0
      %v839 = vpop.f32.mrf.mxu0
      %v840 = vadd.f32 %v521, %v839
      %v841 = vpop.f32.mrf.mxu0
      %842 = vmatprep.mubr.bf16.mxu0 0
      %843 = vmatmul.mubr.bf16.gmra.mxu0 %v686
      %v844 = vpop.f32.mrf.mxu0
      %v845 = vadd.f32 %v521, %v844
      %v846 = vpop.f32.mrf.mxu0
      %v847 = vpop.f32.mrf.mxu0
      %v848 = vadd.f32 %v521, %v847
      %v849 = vpop.f32.mrf.mxu0
      %850 = vmatprep.mubr.bf16.mxu0 0
      %851 = vmatmul.mubr.bf16.gmra.mxu0 %v689
      %v852 = vpop.f32.mrf.mxu0
      %v853 = vadd.f32 %v521, %v852
      %v854 = vpop.f32.mrf.mxu0
      %v855 = vpop.f32.mrf.mxu0
      %v856 = vadd.f32 %v521, %v855
      %v857 = vpop.f32.mrf.mxu0
      %858 = vmatprep.mubr.bf16.mxu0 0
      %859 = vmatmul.mubr.bf16.gmra.mxu0 %v692
      %v860 = vpop.f32.mrf.mxu0
      %v861 = vadd.f32 %v521, %v860
      %v862 = vpop.f32.mrf.mxu0
      %v863 = vpop.f32.mrf.mxu0
      %v864 = vadd.f32 %v521, %v863
      %v865 = vpop.f32.mrf.mxu0
      %866 = vmatprep.mubr.bf16.mxu0 0
      %867 = vmatmul.mubr.bf16.gmra.mxu0 %v695
      %v868 = vpop.f32.mrf.mxu0
      %v869 = vadd.f32 %v521, %v868
      %v870 = vpop.f32.mrf.mxu0
      %v871 = vpop.f32.mrf.mxu0
      %v872 = vadd.f32 %v521, %v871
      %v873 = vpop.f32.mrf.mxu0
      %874 = vmatprep.mubr.bf16.mxu0 0
      %875 = vmatmul.mubr.bf16.gmra.mxu0 %v698
      %v876 = vpop.f32.mrf.mxu0
      %v877 = vadd.f32 %v521, %v876
      %v878 = vpop.f32.mrf.mxu0
      %v879 = vpop.f32.mrf.mxu0
      %v880 = vadd.f32 %v521, %v879
      %v881 = vpop.f32.mrf.mxu0
      %882 = vmatprep.mubr.bf16.mxu0 0
      %883 = vmatmul.mubr.bf16.gmra.mxu0 %v701
      %v884 = vpop.f32.mrf.mxu0
      %v885 = vadd.f32 %v521, %v884
      %v886 = vpop.f32.mrf.mxu0
      %v887 = vpop.f32.mrf.mxu0
      %v888 = vadd.f32 %v521, %v887
      %v889 = vpop.f32.mrf.mxu0
      %890 = vmatprep.mubr.bf16.mxu0 0
      %891 = vmatmul.mubr.bf16.gmra.mxu0 %v704
      %v892 = vpop.f32.mrf.mxu0
      %v893 = vadd.f32 %v521, %v892
      %v894 = vpop.f32.mrf.mxu0
      %v895 = vpop.f32.mrf.mxu0
      %v896 = vadd.f32 %v521, %v895
      %v897 = vpop.f32.mrf.mxu0
      %898 = vmatprep.mubr.bf16.mxu0 0
      %899 = vmatmul.mubr.bf16.gmra.mxu0 %v707
      %v900 = vpop.f32.mrf.mxu0
      %v901 = vadd.f32 %v521, %v900
      %v902 = vpop.f32.mrf.mxu0
      %v903 = vpop.f32.mrf.mxu0
      %v904 = vadd.f32 %v521, %v903
      %v905 = vpop.f32.mrf.mxu0
      %906 = vmatprep.mubr.bf16.mxu0 0
      %907 = vmatmul.mubr.bf16.gmra.mxu0 %v710
      %v908 = vpop.f32.mrf.mxu0
      %v909 = vadd.f32 %v521, %v908
      %v910 = vpop.f32.mrf.mxu0
      %v911 = vpop.f32.mrf.mxu0
      %v912 = vadd.f32 %v521, %v911
      %v913 = vpop.f32.mrf.mxu0
      %914 = vmatprep.mubr.bf16.mxu0 0
      %915 = vmatmul.mubr.bf16.gmra.mxu0 %v713
      %v916 = vpop.f32.mrf.mxu0
      %v917 = vadd.f32 %v521, %v916
      %v918 = vpop.f32.mrf.mxu0
      %v919 = vpop.f32.mrf.mxu0
      %v920 = vadd.f32 %v521, %v919
      %v921 = vpop.f32.mrf.mxu0
      %922 = vmatprep.mubr.bf16.mxu0 0
      %923 = vmatmul.mubr.bf16.gmra.mxu0 %v716
      %v924 = vpop.f32.mrf.mxu0
      %v925 = vadd.f32 %v521, %v924
      %v926 = vpop.f32.mrf.mxu0
      %v927 = vpop.f32.mrf.mxu0
      %v928 = vadd.f32 %v521, %v927
      %v929 = vpop.f32.mrf.mxu0
      %930 = vmatprep.mubr.bf16.mxu0 0
      %931 = vmatmul.mubr.bf16.gmra.mxu0 %v719
      %v932 = vpop.f32.mrf.mxu0
      %v933 = vadd.f32 %v521, %v932
      %v934 = vpop.f32.mrf.mxu0
      %v935 = vpop.f32.mrf.mxu0
      %v936 = vadd.f32 %v521, %v935
      %v937 = vpop.f32.mrf.mxu0
      %938 = vmatprep.mubr.bf16.mxu0 0
      %939 = vmatmul.mubr.bf16.gmra.mxu0 %v722
      %v940 = vpop.f32.mrf.mxu0
      %v941 = vadd.f32 %v521, %v940
      %v942 = vpop.f32.mrf.mxu0
      %v943 = vpop.f32.mrf.mxu0
      %v944 = vadd.f32 %v521, %v943
      %v945 = vpop.f32.mrf.mxu0
      %946 = vmatprep.mubr.bf16.mxu0 0
      %947 = vmatmul.mubr.bf16.gmra.mxu0 %v725
      %v948 = vpop.f32.mrf.mxu0
      %v949 = vadd.f32 %v521, %v948
      %v950 = vpop.f32.mrf.mxu0
      %v951 = vpop.f32.mrf.mxu0
      %v952 = vadd.f32 %v521, %v951
      %v953 = vpop.f32.mrf.mxu0
      %954 = vmatprep.mubr.bf16.mxu0 0
      %955 = vmatmul.mubr.bf16.gmra.mxu0 %v728
      %v956 = vpop.f32.mrf.mxu0
      %v957 = vadd.f32 %v521, %v956
      %v958 = vpop.f32.mrf.mxu0
      %v959 = vpop.f32.mrf.mxu0
      %v960 = vadd.f32 %v521, %v959
      %v961 = vpop.f32.mrf.mxu0
      %962 = vdwg.mxu0
      %v963 = vld [vmem:[%s5] sm:$0x1]
      %v965 = vlaneseq
      %v966 = vshrl.u32 %v965, 7
      %v967 = vsub.s32 0, %v966
      %v968 = vrot.slane %v963, %v967
      %v1020 = vunpack.c.l.b16 %v466
      %v1021 = vunpack.c.l.b16 %v467
      %v1022 = vunpack.c.l.b16 %v468
      %v1023 = vunpack.c.l.b16 %v469
      %v1024 = vunpack.c.l.b16 %v470
      %v1025 = vunpack.c.l.b16 %v471
      %v1026 = vunpack.c.l.b16 %v472
      %v1027 = vunpack.c.l.b16 %v473
      %v1028 = vunpack.c.l.b16 %v474
      %v1029 = vunpack.c.l.b16 %v475
      %v1030 = vunpack.c.l.b16 %v476
      %v1031 = vunpack.c.l.b16 %v477
      %v1032 = vunpack.c.l.b16 %v478
      %v1033 = vunpack.c.l.b16 %v479
      %v1034 = vunpack.c.l.b16 %v480
      %v1035 = vunpack.c.l.b16 %v481
      %v1036 = vunpack.c.l.b16 %v482
      %v1037 = vunpack.c.l.b16 %v483
      %v1038 = vunpack.c.l.b16 %v484
      %v1039 = vunpack.c.l.b16 %v485
      %v1040 = vunpack.c.l.b16 %v486
      %v1041 = vunpack.c.l.b16 %v487
      %v1042 = vunpack.c.l.b16 %v488
      %v1043 = vunpack.c.l.b16 %v489
      %v1044 = vunpack.c.l.b16 %v490
      %v1045 = vunpack.c.l.b16 %v491
      %v1046 = vunpack.c.l.b16 %v492
      %v1047 = vunpack.c.l.b16 %v493
      %v1048 = vunpack.c.l.b16 %v494
      %v1049 = vunpack.c.l.b16 %v495
      %v1050 = vunpack.c.l.b16 %v496
      %v1051 = vunpack.c.l.b16 %v497
      %v1052 = vunpack.c.l.b16 %v498
      %v1053 = vunpack.c.l.b16 %v499
      %v1054 = vunpack.c.l.b16 %v500
      %v1055 = vunpack.c.l.b16 %v501
      %v1056 = vunpack.c.l.b16 %v502
      %v1057 = vunpack.c.l.b16 %v503
      %v1058 = vunpack.c.l.b16 %v504
      %v1059 = vunpack.c.l.b16 %v505
      %v1060 = vunpack.c.l.b16 %v506
      %v1061 = vunpack.c.l.b16 %v507
      %v1062 = vunpack.c.l.b16 %v508
      %v1063 = vunpack.c.l.b16 %v509
      %v1064 = vunpack.c.l.b16 %v510
      %v1065 = vunpack.c.l.b16 %v511
      %v1066 = vunpack.c.l.b16 %v512
      %v1067 = vunpack.c.l.b16 %v513
      %v1068 = vunpack.c.l.b16 %v514
      %v1069 = vunpack.c.l.b16 %v515
      %v1070 = vpack.c.b16 %v1021, %v1020
      %v1071 = vpack.c.b16 %v1023, %v1022
      %v1072 = vpack.c.b16 %v1025, %v1024
      %v1073 = vpack.c.b16 %v1027, %v1026
      %v1074 = vpack.c.b16 %v1029, %v1028
      %v1075 = vpack.c.b16 %v1031, %v1030
      %v1076 = vpack.c.b16 %v1033, %v1032
      %v1077 = vpack.c.b16 %v1035, %v1034
      %v1078 = vpack.c.b16 %v1037, %v1036
      %v1079 = vpack.c.b16 %v1039, %v1038
      %v1080 = vpack.c.b16 %v1041, %v1040
      %v1081 = vpack.c.b16 %v1043, %v1042
      %v1082 = vpack.c.b16 %v1045, %v1044
      %v1083 = vpack.c.b16 %v1047, %v1046
      %v1084 = vpack.c.b16 %v1049, %v1048
      %v1085 = vpack.c.b16 %v1051, %v1050
      %v1086 = vpack.c.b16 %v1053, %v1052
      %v1087 = vpack.c.b16 %v1055, %v1054
      %v1088 = vpack.c.b16 %v1057, %v1056
      %v1089 = vpack.c.b16 %v1059, %v1058
      %v1090 = vpack.c.b16 %v1061, %v1060
      %v1091 = vpack.c.b16 %v1063, %v1062
      %v1092 = vpack.c.b16 %v1065, %v1064
      %v1093 = vpack.c.b16 %v1067, %v1066
      %v1094 = vpack.c.b16 %v1069, %v1068
      %v1097 = vunpack.c.l.b16 %v414
      %v1098 = vunpack.c.l.b16 %v415
      %v1099 = vpack.c.b16 %v1098, %v1097
      %v1102 = vsel %vm654, %v1070, 0
      %v1105 = vsel %vm654, %v1071, 0
      %v1108 = vsel %vm654, %v1072, 0
      %v1111 = vsel %vm654, %v1073, 0
      %v1114 = vsel %vm654, %v1074, 0
      %v1117 = vsel %vm654, %v1075, 0
      %v1120 = vsel %vm654, %v1076, 0
      %v1123 = vsel %vm654, %v1077, 0
      %v1126 = vsel %vm654, %v1078, 0
      %v1129 = vsel %vm654, %v1079, 0
      %v1132 = vsel %vm654, %v1080, 0
      %v1135 = vsel %vm654, %v1081, 0
      %v1138 = vsel %vm654, %v1082, 0
      %v1141 = vsel %vm654, %v1083, 0
      %v1144 = vsel %vm654, %v1084, 0
      %v1147 = vsel %vm654, %v1085, 0
      %v1150 = vsel %vm654, %v1086, 0
      %v1153 = vsel %vm654, %v1087, 0
      %v1156 = vsel %vm654, %v1088, 0
      %v1159 = vsel %vm654, %v1089, 0
      %v1162 = vsel %vm654, %v1090, 0
      %v1165 = vsel %vm654, %v1091, 0
      %v1168 = vsel %vm654, %v1092, 0
      %v1171 = vsel %vm654, %v1093, 0
      %v1174 = vsel %vm654, %v1094, 0
      %1176 = vmatprep.subr.bf16.mxu0 0
      %1177 = vmatpush1.bf16.msra.mxu0 0
      %1178 = vmatprep.subr.bf16.mxu0 0
      %1179 = vmatpush1.bf16.msra.mxu0 0
      %1180 = vmatprep.subr.bf16.mxu0 0
      %1181 = vmatpush1.bf16.msra.mxu0 0
      %1182 = vmatprep.subr.bf16.mxu0 0
      %1183 = vmatpush1.bf16.msra.mxu0 0
      %1184 = vmatprep.subr.bf16.mxu0 0
      %1185 = vmatpush1.bf16.msra.mxu0 0
      %1186 = vmatprep.subr.bf16.mxu0 0
      %1187 = vmatpush1.bf16.msra.mxu0 0
      %1188 = vmatprep.subr.bf16.mxu0 0
      %1189 = vmatpush1.bf16.msra.mxu0 0
      %1190 = vmatprep.subr.bf16.mxu0 0
      %1191 = vmatpush1.bf16.msra.mxu0 %v1099
      %1192 = vmatprep.subr.bf16.mxu0 0
      %1193 = vmatpush2.bf16.msra.mxu0 0
      %1194 = vmatprep.subr.bf16.mxu0 0
      %1195 = vmatpush2.bf16.msra.mxu0 0
      %1196 = vmatprep.subr.bf16.mxu0 0
      %1197 = vmatpush2.bf16.msra.mxu0 0
      %1198 = vmatprep.subr.bf16.mxu0 0
      %1199 = vmatpush2.bf16.msra.mxu0 0
      %1200 = vmatprep.subr.bf16.mxu0 0
      %1201 = vmatpush2.bf16.msra.mxu0 0
      %1202 = vmatprep.subr.bf16.mxu0 0
      %1203 = vmatpush2.bf16.msra.mxu0 0
      %1204 = vmatprep.subr.bf16.mxu0 0
      %1205 = vmatpush2.bf16.msra.mxu0 0
      %1206 = vmatprep.subr.bf16.mxu0 0
      %1207 = vmatpush2.bf16.msra.mxu0 0
      %1208 = vmatprep.mubr.bf16.mxu0 0
      %1209 = vmatmul.mubr.bf16.gmra.mxu0 %v1102
      %v1210 = vpop.f32.mrf.mxu0
      %v1211 = vadd.f32 %v968, %v1210
      %v1212 = vpop.f32.mrf.mxu0
      %v1213 = vpop.f32.mrf.mxu0
      %v1214 = vadd.f32 %v968, %v1213
      %v1215 = vpop.f32.mrf.mxu0
      %1216 = vmatprep.mubr.bf16.mxu0 0
      %1217 = vmatmul.mubr.bf16.gmra.mxu0 %v1105
      %v1218 = vpop.f32.mrf.mxu0
      %v1219 = vadd.f32 %v968, %v1218
      %v1220 = vpop.f32.mrf.mxu0
      %v1221 = vpop.f32.mrf.mxu0
      %v1222 = vadd.f32 %v968, %v1221
      %v1223 = vpop.f32.mrf.mxu0
      %1224 = vmatprep.mubr.bf16.mxu0 0
      %1225 = vmatmul.mubr.bf16.gmra.mxu0 %v1108
      %v1226 = vpop.f32.mrf.mxu0
      %v1227 = vadd.f32 %v968, %v1226
      %v1228 = vpop.f32.mrf.mxu0
      %v1229 = vpop.f32.mrf.mxu0
      %v1230 = vadd.f32 %v968, %v1229
      %v1231 = vpop.f32.mrf.mxu0
      %1232 = vmatprep.mubr.bf16.mxu0 0
      %1233 = vmatmul.mubr.bf16.gmra.mxu0 %v1111
      %v1234 = vpop.f32.mrf.mxu0
      %v1235 = vadd.f32 %v968, %v1234
      %v1236 = vpop.f32.mrf.mxu0
      %v1237 = vpop.f32.mrf.mxu0
      %v1238 = vadd.f32 %v968, %v1237
      %v1239 = vpop.f32.mrf.mxu0
      %1240 = vmatprep.mubr.bf16.mxu0 0
      %1241 = vmatmul.mubr.bf16.gmra.mxu0 %v1114
      %v1242 = vpop.f32.mrf.mxu0
      %v1243 = vadd.f32 %v968, %v1242
      %v1244 = vpop.f32.mrf.mxu0
      %v1245 = vpop.f32.mrf.mxu0
      %v1246 = vadd.f32 %v968, %v1245
      %v1247 = vpop.f32.mrf.mxu0
      %1248 = vmatprep.mubr.bf16.mxu0 0
      %1249 = vmatmul.mubr.bf16.gmra.mxu0 %v1117
      %v1250 = vpop.f32.mrf.mxu0
      %v1251 = vadd.f32 %v968, %v1250
      %v1252 = vpop.f32.mrf.mxu0
      %v1253 = vpop.f32.mrf.mxu0
      %v1254 = vadd.f32 %v968, %v1253
      %v1255 = vpop.f32.mrf.mxu0
      %1256 = vmatprep.mubr.bf16.mxu0 0
      %1257 = vmatmul.mubr.bf16.gmra.mxu0 %v1120
      %v1258 = vpop.f32.mrf.mxu0
      %v1259 = vadd.f32 %v968, %v1258
      %v1260 = vpop.f32.mrf.mxu0
      %v1261 = vpop.f32.mrf.mxu0
      %v1262 = vadd.f32 %v968, %v1261
      %v1263 = vpop.f32.mrf.mxu0
      %1264 = vmatprep.mubr.bf16.mxu0 0
      %1265 = vmatmul.mubr.bf16.gmra.mxu0 %v1123
      %v1266 = vpop.f32.mrf.mxu0
      %v1267 = vadd.f32 %v968, %v1266
      %v1268 = vpop.f32.mrf.mxu0
      %v1269 = vpop.f32.mrf.mxu0
      %v1270 = vadd.f32 %v968, %v1269
      %v1271 = vpop.f32.mrf.mxu0
      %1272 = vmatprep.mubr.bf16.mxu0 0
      %1273 = vmatmul.mubr.bf16.gmra.mxu0 %v1126
      %v1274 = vpop.f32.mrf.mxu0
      %v1275 = vadd.f32 %v968, %v1274
      %v1276 = vpop.f32.mrf.mxu0
      %v1277 = vpop.f32.mrf.mxu0
      %v1278 = vadd.f32 %v968, %v1277
      %v1279 = vpop.f32.mrf.mxu0
      %1280 = vmatprep.mubr.bf16.mxu0 0
      %1281 = vmatmul.mubr.bf16.gmra.mxu0 %v1129
      %v1282 = vpop.f32.mrf.mxu0
      %v1283 = vadd.f32 %v968, %v1282
      %v1284 = vpop.f32.mrf.mxu0
      %v1285 = vpop.f32.mrf.mxu0
      %v1286 = vadd.f32 %v968, %v1285
      %v1287 = vpop.f32.mrf.mxu0
      %1288 = vmatprep.mubr.bf16.mxu0 0
      %1289 = vmatmul.mubr.bf16.gmra.mxu0 %v1132
      %v1290 = vpop.f32.mrf.mxu0
      %v1291 = vadd.f32 %v968, %v1290
      %v1292 = vpop.f32.mrf.mxu0
      %v1293 = vpop.f32.mrf.mxu0
      %v1294 = vadd.f32 %v968, %v1293
      %v1295 = vpop.f32.mrf.mxu0
      %1296 = vmatprep.mubr.bf16.mxu0 0
      %1297 = vmatmul.mubr.bf16.gmra.mxu0 %v1135
      %v1298 = vpop.f32.mrf.mxu0
      %v1299 = vadd.f32 %v968, %v1298
      %v1300 = vpop.f32.mrf.mxu0
      %v1301 = vpop.f32.mrf.mxu0
      %v1302 = vadd.f32 %v968, %v1301
      %v1303 = vpop.f32.mrf.mxu0
      %1304 = vmatprep.mubr.bf16.mxu0 0
      %1305 = vmatmul.mubr.bf16.gmra.mxu0 %v1138
      %v1306 = vpop.f32.mrf.mxu0
      %v1307 = vadd.f32 %v968, %v1306
      %v1308 = vpop.f32.mrf.mxu0
      %v1309 = vpop.f32.mrf.mxu0
      %v1310 = vadd.f32 %v968, %v1309
      %v1311 = vpop.f32.mrf.mxu0
      %1312 = vmatprep.mubr.bf16.mxu0 0
      %1313 = vmatmul.mubr.bf16.gmra.mxu0 %v1141
      %v1314 = vpop.f32.mrf.mxu0
      %v1315 = vadd.f32 %v968, %v1314
      %v1316 = vpop.f32.mrf.mxu0
      %v1317 = vpop.f32.mrf.mxu0
      %v1318 = vadd.f32 %v968, %v1317
      %v1319 = vpop.f32.mrf.mxu0
      %1320 = vmatprep.mubr.bf16.mxu0 0
      %1321 = vmatmul.mubr.bf16.gmra.mxu0 %v1144
      %v1322 = vpop.f32.mrf.mxu0
      %v1323 = vadd.f32 %v968, %v1322
      %v1324 = vpop.f32.mrf.mxu0
      %v1325 = vpop.f32.mrf.mxu0
      %v1326 = vadd.f32 %v968, %v1325
      %v1327 = vpop.f32.mrf.mxu0
      %1328 = vmatprep.mubr.bf16.mxu0 0
      %1329 = vmatmul.mubr.bf16.gmra.mxu0 %v1147
      %v1330 = vpop.f32.mrf.mxu0
      %v1331 = vadd.f32 %v968, %v1330
      %v1332 = vpop.f32.mrf.mxu0
      %v1333 = vpop.f32.mrf.mxu0
      %v1334 = vadd.f32 %v968, %v1333
      %v1335 = vpop.f32.mrf.mxu0
      %1336 = vmatprep.mubr.bf16.mxu0 0
      %1337 = vmatmul.mubr.bf16.gmra.mxu0 %v1150
      %v1338 = vpop.f32.mrf.mxu0
      %v1339 = vadd.f32 %v968, %v1338
      %v1340 = vpop.f32.mrf.mxu0
      %v1341 = vpop.f32.mrf.mxu0
      %v1342 = vadd.f32 %v968, %v1341
      %v1343 = vpop.f32.mrf.mxu0
      %1344 = vmatprep.mubr.bf16.mxu0 0
      %1345 = vmatmul.mubr.bf16.gmra.mxu0 %v1153
      %v1346 = vpop.f32.mrf.mxu0
      %v1347 = vadd.f32 %v968, %v1346
      %v1348 = vpop.f32.mrf.mxu0
      %v1349 = vpop.f32.mrf.mxu0
      %v1350 = vadd.f32 %v968, %v1349
      %v1351 = vpop.f32.mrf.mxu0
      %1352 = vmatprep.mubr.bf16.mxu0 0
      %1353 = vmatmul.mubr.bf16.gmra.mxu0 %v1156
      %v1354 = vpop.f32.mrf.mxu0
      %v1355 = vadd.f32 %v968, %v1354
      %v1356 = vpop.f32.mrf.mxu0
      %v1357 = vpop.f32.mrf.mxu0
      %v1358 = vadd.f32 %v968, %v1357
      %v1359 = vpop.f32.mrf.mxu0
      %1360 = vmatprep.mubr.bf16.mxu0 0
      %1361 = vmatmul.mubr.bf16.gmra.mxu0 %v1159
      %v1362 = vpop.f32.mrf.mxu0
      %v1363 = vadd.f32 %v968, %v1362
      %v1364 = vpop.f32.mrf.mxu0
      %v1365 = vpop.f32.mrf.mxu0
      %v1366 = vadd.f32 %v968, %v1365
      %v1367 = vpop.f32.mrf.mxu0
      %1368 = vmatprep.mubr.bf16.mxu0 0
      %1369 = vmatmul.mubr.bf16.gmra.mxu0 %v1162
      %v1370 = vpop.f32.mrf.mxu0
      %v1371 = vadd.f32 %v968, %v1370
      %v1372 = vpop.f32.mrf.mxu0
      %v1373 = vpop.f32.mrf.mxu0
      %v1374 = vadd.f32 %v968, %v1373
      %v1375 = vpop.f32.mrf.mxu0
      %1376 = vmatprep.mubr.bf16.mxu0 0
      %1377 = vmatmul.mubr.bf16.gmra.mxu0 %v1165
      %v1378 = vpop.f32.mrf.mxu0
      %v1379 = vadd.f32 %v968, %v1378
      %v1380 = vpop.f32.mrf.mxu0
      %v1381 = vpop.f32.mrf.mxu0
      %v1382 = vadd.f32 %v968, %v1381
      %v1383 = vpop.f32.mrf.mxu0
      %1384 = vmatprep.mubr.bf16.mxu0 0
      %1385 = vmatmul.mubr.bf16.gmra.mxu0 %v1168
      %v1386 = vpop.f32.mrf.mxu0
      %v1387 = vadd.f32 %v968, %v1386
      %v1388 = vpop.f32.mrf.mxu0
      %v1389 = vpop.f32.mrf.mxu0
      %v1390 = vadd.f32 %v968, %v1389
      %v1391 = vpop.f32.mrf.mxu0
      %1392 = vmatprep.mubr.bf16.mxu0 0
      %1393 = vmatmul.mubr.bf16.gmra.mxu0 %v1171
      %v1394 = vpop.f32.mrf.mxu0
      %v1395 = vadd.f32 %v968, %v1394
      %v1396 = vpop.f32.mrf.mxu0
      %v1397 = vpop.f32.mrf.mxu0
      %v1398 = vadd.f32 %v968, %v1397
      %v1399 = vpop.f32.mrf.mxu0
      %1400 = vmatprep.mubr.bf16.mxu0 0
      %1401 = vmatmul.mubr.bf16.gmra.mxu0 %v1174
      %v1402 = vpop.f32.mrf.mxu0
      %v1403 = vadd.f32 %v968, %v1402
      %v1404 = vpop.f32.mrf.mxu0
      %v1405 = vpop.f32.mrf.mxu0
      %v1406 = vadd.f32 %v968, %v1405
      %v1407 = vpop.f32.mrf.mxu0
      %1408 = vdwg.mxu0
      %v1409 = vld [vmem:[%s6] sm:$0x1]
      %v1410 = vld [vmem:[%s7] sm:$0x1]
      %v1411 = vld [vmem:[#allocation2] sm:$0xff]
      %v1412 = vld [vmem:[#allocation2 + $0x8] sm:$0xff]
      %v1413 = vld [vmem:[#allocation3] sm:$0xff]
      %v1414 = vld [vmem:[#allocation3 + $0x8] sm:$0xff]
      %v1416 = vlaneseq
      %v1417 = vshrl.u32 %v1416, 7
      %v1418 = vsub.s32 0, %v1417
      %v1419 = vrot.slane %v1409, %v1418
      %v1421 = vmul.f32 %v1419, %v1411
      %v1422 = vmul.f32 %v1419, %v1412
      %v1423 = vadd.f32 %v765, %v1421
      %v1424 = vadd.f32 %v768, %v1422
      %v1425 = vmax.f32 %v1423, 0.0
      %v1426 = vmax.f32 %v1424, 0.0
      %v1428 = vlaneseq
      %v1429 = vshrl.u32 %v1428, 7
      %v1430 = vsub.s32 0, %v1429
      %v1431 = vrot.slane %v1410, %v1430
      %v1433 = vmul.f32 %v1431, %v1413
      %v1434 = vmul.f32 %v1431, %v1414
      %v1435 = vadd.f32 %v1403, %v1433
      %v1436 = vadd.f32 %v1406, %v1434
      %v1437 = vmax.f32 %v1435, 0.0
      %v1438 = vmax.f32 %v1436, 0.0
      %v1439 = vpack.c.bf16 %v1426, %v1425
      %v1441 = vunpack.c.l.b16 %v1439
      %v1442 = vunpack.c.h.b16 %v1439
      %v1443 = vpack.c.b16 %v1441, %v1441
      %v1444 = vpack.c.b16 %v1442, %v1442
      %1447 = vst [vmem:[%s394] sm:$0xf] %v1443
      %1448 = vst [vmem:[%s394 + $0x4] sm:$0xf] %v1444
      %v1449 = vpack.c.bf16 %v1438, %v1437
      %v1451 = vunpack.c.l.b16 %v1449
      %v1452 = vunpack.c.h.b16 %v1449
      %v1453 = vpack.c.b16 %v1451, %v1451
      %v1454 = vpack.c.b16 %v1452, %v1452
      %1457 = vst [vmem:[%s400 + $0xc0] sm:$0xf] %v1453
      %1458 = vst [vmem:[%s400 + $0xc4] sm:$0xf] %v1454
      %v1459 = vadd.f32 %v1425, 0.0
      %v1460 = vadd.f32 %v1426, 0.0
      %v1461 = vadd.f32 %v1437, 0.0
      %v1462 = vadd.f32 %v1438, 0.0
      %v1463 = vmul.f32 %v1425, %v1425
      %v1464 = vmul.f32 %v1426, %v1426
      %v1465 = vadd.f32 %v1463, 0.0
      %v1466 = vadd.f32 %v1464, 0.0
      %v1467 = vmul.f32 %v1437, %v1437
      %v1468 = vmul.f32 %v1438, %v1438
      %v1469 = vadd.f32 %v1467, 0.0
      %v1470 = vadd.f32 %v1468, 0.0
      %v1471 = vmul.f32 %v1419, %v1425
      %v1472 = vmul.f32 %v1419, %v1426
      %v1473 = vadd.f32 %v773, %v1471
      %v1474 = vadd.f32 %v776, %v1472
      %v1475 = vmax.f32 %v1473, 0.0
      %v1476 = vmax.f32 %v1474, 0.0
      %v1477 = vmul.f32 %v1431, %v1437
      %v1478 = vmul.f32 %v1431, %v1438
      %v1479 = vadd.f32 %v1395, %v1477
      %v1480 = vadd.f32 %v1398, %v1478
      %v1481 = vmax.f32 %v1479, 0.0
      %v1482 = vmax.f32 %v1480, 0.0
      %v1483 = vpack.c.bf16 %v1476, %v1475
      %v1485 = vunpack.c.l.b16 %v1483
      %v1486 = vunpack.c.h.b16 %v1483
      %v1487 = vpack.c.b16 %v1485, %v1485
      %v1488 = vpack.c.b16 %v1486, %v1486
      %1491 = vst [vmem:[%s394 + $0x8] sm:$0xf] %v1487
      %1492 = vst [vmem:[%s394 + $0xc] sm:$0xf] %v1488
      %v1493 = vpack.c.bf16 %v1482, %v1481
      %v1495 = vunpack.c.l.b16 %v1493
      %v1496 = vunpack.c.h.b16 %v1493
      %v1497 = vpack.c.b16 %v1495, %v1495
      %v1498 = vpack.c.b16 %v1496, %v1496
      %1501 = vst [vmem:[%s400 + $0xb8] sm:$0xf] %v1497
      %1502 = vst [vmem:[%s400 + $0xbc] sm:$0xf] %v1498
      %v1503 = vadd.f32 %v1459, %v1475
      %v1504 = vadd.f32 %v1460, %v1476
      %v1505 = vadd.f32 %v1461, %v1481
      %v1506 = vadd.f32 %v1462, %v1482
      %v1507 = vmul.f32 %v1475, %v1475
      %v1508 = vmul.f32 %v1476, %v1476
      %v1509 = vadd.f32 %v1465, %v1507
      %v1510 = vadd.f32 %v1466, %v1508
      %v1511 = vmul.f32 %v1481, %v1481
      %v1512 = vmul.f32 %v1482, %v1482
      %v1513 = vadd.f32 %v1469, %v1511
      %v1514 = vadd.f32 %v1470, %v1512
      %v1515 = vmul.f32 %v1419, %v1475
      %v1516 = vmul.f32 %v1419, %v1476
      %v1517 = vadd.f32 %v781, %v1515
      %v1518 = vadd.f32 %v784, %v1516
      %v1519 = vmax.f32 %v1517, 0.0
      %v1520 = vmax.f32 %v1518, 0.0
      %v1521 = vmul.f32 %v1431, %v1481
      %v1522 = vmul.f32 %v1431, %v1482
      %v1523 = vadd.f32 %v1387, %v1521
      %v1524 = vadd.f32 %v1390, %v1522
      %v1525 = vmax.f32 %v1523, 0.0
      %v1526 = vmax.f32 %v1524, 0.0
      %v1527 = vpack.c.bf16 %v1520, %v1519
      %v1529 = vunpack.c.l.b16 %v1527
      %v1530 = vunpack.c.h.b16 %v1527
      %v1531 = vpack.c.b16 %v1529, %v1529
      %v1532 = vpack.c.b16 %v1530, %v1530
      %1535 = vst [vmem:[%s394 + $0x10] sm:$0xf] %v1531
      %1536 = vst [vmem:[%s394 + $0x14] sm:$0xf] %v1532
      %v1537 = vpack.c.bf16 %v1526, %v1525
      %v1539 = vunpack.c.l.b16 %v1537
      %v1540 = vunpack.c.h.b16 %v1537
      %v1541 = vpack.c.b16 %v1539, %v1539
      %v1542 = vpack.c.b16 %v1540, %v1540
      %1545 = vst [vmem:[%s400 + $0xb0] sm:$0xf] %v1541
      %1546 = vst [vmem:[%s400 + $0xb4] sm:$0xf] %v1542
      %v1547 = vadd.f32 %v1503, %v1519
      %v1548 = vadd.f32 %v1504, %v1520
      %v1549 = vadd.f32 %v1505, %v1525
      %v1550 = vadd.f32 %v1506, %v1526
      %v1551 = vmul.f32 %v1519, %v1519
      %v1552 = vmul.f32 %v1520, %v1520
      %v1553 = vadd.f32 %v1509, %v1551
      %v1554 = vadd.f32 %v1510, %v1552
      %v1555 = vmul.f32 %v1525, %v1525
      %v1556 = vmul.f32 %v1526, %v1526
      %v1557 = vadd.f32 %v1513, %v1555
      %v1558 = vadd.f32 %v1514, %v1556
      %v1559 = vmul.f32 %v1419, %v1519
      %v1560 = vmul.f32 %v1419, %v1520
      %v1561 = vadd.f32 %v789, %v1559
      %v1562 = vadd.f32 %v792, %v1560
      %v1563 = vmax.f32 %v1561, 0.0
      %v1564 = vmax.f32 %v1562, 0.0
      %v1565 = vmul.f32 %v1431, %v1525
      %v1566 = vmul.f32 %v1431, %v1526
      %v1567 = vadd.f32 %v1379, %v1565
      %v1568 = vadd.f32 %v1382, %v1566
      %v1569 = vmax.f32 %v1567, 0.0
      %v1570 = vmax.f32 %v1568, 0.0
      %v1571 = vpack.c.bf16 %v1564, %v1563
      %v1573 = vunpack.c.l.b16 %v1571
      %v1574 = vunpack.c.h.b16 %v1571
      %v1575 = vpack.c.b16 %v1573, %v1573
      %v1576 = vpack.c.b16 %v1574, %v1574
      %1579 = vst [vmem:[%s394 + $0x18] sm:$0xf] %v1575
      %1580 = vst [vmem:[%s394 + $0x1c] sm:$0xf] %v1576
      %v1581 = vpack.c.bf16 %v1570, %v1569
      %v1583 = vunpack.c.l.b16 %v1581
      %v1584 = vunpack.c.h.b16 %v1581
      %v1585 = vpack.c.b16 %v1583, %v1583
      %v1586 = vpack.c.b16 %v1584, %v1584
      %1589 = vst [vmem:[%s400 + $0xa8] sm:$0xf] %v1585
      %1590 = vst [vmem:[%s400 + $0xac] sm:$0xf] %v1586
      %v1591 = vadd.f32 %v1547, %v1563
      %v1592 = vadd.f32 %v1548, %v1564
      %v1593 = vadd.f32 %v1549, %v1569
      %v1594 = vadd.f32 %v1550, %v1570
      %v1595 = vmul.f32 %v1563, %v1563
      %v1596 = vmul.f32 %v1564, %v1564
      %v1597 = vadd.f32 %v1553, %v1595
      %v1598 = vadd.f32 %v1554, %v1596
      %v1599 = vmul.f32 %v1569, %v1569
      %v1600 = vmul.f32 %v1570, %v1570
      %v1601 = vadd.f32 %v1557, %v1599
      %v1602 = vadd.f32 %v1558, %v1600
      %v1603 = vmul.f32 %v1419, %v1563
      %v1604 = vmul.f32 %v1419, %v1564
      %v1605 = vadd.f32 %v797, %v1603
      %v1606 = vadd.f32 %v800, %v1604
      %v1607 = vmax.f32 %v1605, 0.0
      %v1608 = vmax.f32 %v1606, 0.0
      %v1609 = vmul.f32 %v1431, %v1569
      %v1610 = vmul.f32 %v1431, %v1570
      %v1611 = vadd.f32 %v1371, %v1609
      %v1612 = vadd.f32 %v1374, %v1610
      %v1613 = vmax.f32 %v1611, 0.0
      %v1614 = vmax.f32 %v1612, 0.0
      %v1615 = vpack.c.bf16 %v1608, %v1607
      %v1617 = vunpack.c.l.b16 %v1615
      %v1618 = vunpack.c.h.b16 %v1615
      %v1619 = vpack.c.b16 %v1617, %v1617
      %v1620 = vpack.c.b16 %v1618, %v1618
      %1623 = vst [vmem:[%s394 + $0x20] sm:$0xf] %v1619
      %1624 = vst [vmem:[%s394 + $0x24] sm:$0xf] %v1620
      %v1625 = vpack.c.bf16 %v1614, %v1613
      %v1627 = vunpack.c.l.b16 %v1625
      %v1628 = vunpack.c.h.b16 %v1625
      %v1629 = vpack.c.b16 %v1627, %v1627
      %v1630 = vpack.c.b16 %v1628, %v1628
      %1633 = vst [vmem:[%s400 + $0xa0] sm:$0xf] %v1629
      %1634 = vst [vmem:[%s400 + $0xa4] sm:$0xf] %v1630
      %v1635 = vadd.f32 %v1591, %v1607
      %v1636 = vadd.f32 %v1592, %v1608
      %v1637 = vadd.f32 %v1593, %v1613
      %v1638 = vadd.f32 %v1594, %v1614
      %v1639 = vmul.f32 %v1607, %v1607
      %v1640 = vmul.f32 %v1608, %v1608
      %v1641 = vadd.f32 %v1597, %v1639
      %v1642 = vadd.f32 %v1598, %v1640
      %v1643 = vmul.f32 %v1613, %v1613
      %v1644 = vmul.f32 %v1614, %v1614
      %v1645 = vadd.f32 %v1601, %v1643
      %v1646 = vadd.f32 %v1602, %v1644
      %v1647 = vmul.f32 %v1419, %v1607
      %v1648 = vmul.f32 %v1419, %v1608
      %v1649 = vadd.f32 %v805, %v1647
      %v1650 = vadd.f32 %v808, %v1648
      %v1651 = vmax.f32 %v1649, 0.0
      %v1652 = vmax.f32 %v1650, 0.0
      %v1653 = vmul.f32 %v1431, %v1613
      %v1654 = vmul.f32 %v1431, %v1614
      %v1655 = vadd.f32 %v1363, %v1653
      %v1656 = vadd.f32 %v1366, %v1654
      %v1657 = vmax.f32 %v1655, 0.0
      %v1658 = vmax.f32 %v1656, 0.0
      %v1659 = vpack.c.bf16 %v1652, %v1651
      %v1661 = vunpack.c.l.b16 %v1659
      %v1662 = vunpack.c.h.b16 %v1659
      %v1663 = vpack.c.b16 %v1661, %v1661
      %v1664 = vpack.c.b16 %v1662, %v1662
      %1667 = vst [vmem:[%s394 + $0x28] sm:$0xf] %v1663
      %1668 = vst [vmem:[%s394 + $0x2c] sm:$0xf] %v1664
      %v1669 = vpack.c.bf16 %v1658, %v1657
      %v1671 = vunpack.c.l.b16 %v1669
      %v1672 = vunpack.c.h.b16 %v1669
      %v1673 = vpack.c.b16 %v1671, %v1671
      %v1674 = vpack.c.b16 %v1672, %v1672
      %1677 = vst [vmem:[%s400 + $0x98] sm:$0xf] %v1673
      %1678 = vst [vmem:[%s400 + $0x9c] sm:$0xf] %v1674
      %v1679 = vadd.f32 %v1635, %v1651
      %v1680 = vadd.f32 %v1636, %v1652
      %v1681 = vadd.f32 %v1637, %v1657
      %v1682 = vadd.f32 %v1638, %v1658
      %v1683 = vmul.f32 %v1651, %v1651
      %v1684 = vmul.f32 %v1652, %v1652
      %v1685 = vadd.f32 %v1641, %v1683
      %v1686 = vadd.f32 %v1642, %v1684
      %v1687 = vmul.f32 %v1657, %v1657
      %v1688 = vmul.f32 %v1658, %v1658
      %v1689 = vadd.f32 %v1645, %v1687
      %v1690 = vadd.f32 %v1646, %v1688
      %v1691 = vmul.f32 %v1419, %v1651
      %v1692 = vmul.f32 %v1419, %v1652
      %v1693 = vadd.f32 %v813, %v1691
      %v1694 = vadd.f32 %v816, %v1692
      %v1695 = vmax.f32 %v1693, 0.0
      %v1696 = vmax.f32 %v1694, 0.0
      %v1697 = vmul.f32 %v1431, %v1657
      %v1698 = vmul.f32 %v1431, %v1658
      %v1699 = vadd.f32 %v1355, %v1697
      %v1700 = vadd.f32 %v1358, %v1698
      %v1701 = vmax.f32 %v1699, 0.0
      %v1702 = vmax.f32 %v1700, 0.0
      %v1703 = vpack.c.bf16 %v1696, %v1695
      %v1705 = vunpack.c.l.b16 %v1703
      %v1706 = vunpack.c.h.b16 %v1703
      %v1707 = vpack.c.b16 %v1705, %v1705
      %v1708 = vpack.c.b16 %v1706, %v1706
      %1711 = vst [vmem:[%s394 + $0x30] sm:$0xf] %v1707
      %1712 = vst [vmem:[%s394 + $0x34] sm:$0xf] %v1708
      %v1713 = vpack.c.bf16 %v1702, %v1701
      %v1715 = vunpack.c.l.b16 %v1713
      %v1716 = vunpack.c.h.b16 %v1713
      %v1717 = vpack.c.b16 %v1715, %v1715
      %v1718 = vpack.c.b16 %v1716, %v1716
      %1721 = vst [vmem:[%s400 + $0x90] sm:$0xf] %v1717
      %1722 = vst [vmem:[%s400 + $0x94] sm:$0xf] %v1718
      %v1723 = vadd.f32 %v1679, %v1695
      %v1724 = vadd.f32 %v1680, %v1696
      %v1725 = vadd.f32 %v1681, %v1701
      %v1726 = vadd.f32 %v1682, %v1702
      %v1727 = vmul.f32 %v1695, %v1695
      %v1728 = vmul.f32 %v1696, %v1696
      %v1729 = vadd.f32 %v1685, %v1727
      %v1730 = vadd.f32 %v1686, %v1728
      %v1731 = vmul.f32 %v1701, %v1701
      %v1732 = vmul.f32 %v1702, %v1702
      %v1733 = vadd.f32 %v1689, %v1731
      %v1734 = vadd.f32 %v1690, %v1732
      %v1735 = vmul.f32 %v1419, %v1695
      %v1736 = vmul.f32 %v1419, %v1696
      %v1737 = vadd.f32 %v821, %v1735
      %v1738 = vadd.f32 %v824, %v1736
      %v1739 = vmax.f32 %v1737, 0.0
      %v1740 = vmax.f32 %v1738, 0.0
      %v1741 = vmul.f32 %v1431, %v1701
      %v1742 = vmul.f32 %v1431, %v1702
      %v1743 = vadd.f32 %v1347, %v1741
      %v1744 = vadd.f32 %v1350, %v1742
      %v1745 = vmax.f32 %v1743, 0.0
      %v1746 = vmax.f32 %v1744, 0.0
      %v1747 = vpack.c.bf16 %v1740, %v1739
      %v1749 = vunpack.c.l.b16 %v1747
      %v1750 = vunpack.c.h.b16 %v1747
      %v1751 = vpack.c.b16 %v1749, %v1749
      %v1752 = vpack.c.b16 %v1750, %v1750
      %1755 = vst [vmem:[%s394 + $0x38] sm:$0xf] %v1751
      %1756 = vst [vmem:[%s394 + $0x3c] sm:$0xf] %v1752
      %v1757 = vpack.c.bf16 %v1746, %v1745
      %v1759 = vunpack.c.l.b16 %v1757
      %v1760 = vunpack.c.h.b16 %v1757
      %v1761 = vpack.c.b16 %v1759, %v1759
      %v1762 = vpack.c.b16 %v1760, %v1760
      %1765 = vst [vmem:[%s400 + $0x88] sm:$0xf] %v1761
      %1766 = vst [vmem:[%s400 + $0x8c] sm:$0xf] %v1762
      %v1767 = vadd.f32 %v1723, %v1739
      %v1768 = vadd.f32 %v1724, %v1740
      %v1769 = vadd.f32 %v1725, %v1745
      %v1770 = vadd.f32 %v1726, %v1746
      %v1771 = vmul.f32 %v1739, %v1739
      %v1772 = vmul.f32 %v1740, %v1740
      %v1773 = vadd.f32 %v1729, %v1771
      %v1774 = vadd.f32 %v1730, %v1772
      %v1775 = vmul.f32 %v1745, %v1745
      %v1776 = vmul.f32 %v1746, %v1746
      %v1777 = vadd.f32 %v1733, %v1775
      %v1778 = vadd.f32 %v1734, %v1776
      %v1779 = vmul.f32 %v1419, %v1739
      %v1780 = vmul.f32 %v1419, %v1740
      %v1781 = vadd.f32 %v829, %v1779
      %v1782 = vadd.f32 %v832, %v1780
      %v1783 = vmax.f32 %v1781, 0.0
      %v1784 = vmax.f32 %v1782, 0.0
      %v1785 = vmul.f32 %v1431, %v1745
      %v1786 = vmul.f32 %v1431, %v1746
      %v1787 = vadd.f32 %v1339, %v1785
      %v1788 = vadd.f32 %v1342, %v1786
      %v1789 = vmax.f32 %v1787, 0.0
      %v1790 = vmax.f32 %v1788, 0.0
      %v1791 = vpack.c.bf16 %v1784, %v1783
      %v1793 = vunpack.c.l.b16 %v1791
      %v1794 = vunpack.c.h.b16 %v1791
      %v1795 = vpack.c.b16 %v1793, %v1793
      %v1796 = vpack.c.b16 %v1794, %v1794
      %1799 = vst [vmem:[%s394 + $0x40] sm:$0xf] %v1795
      %1800 = vst [vmem:[%s394 + $0x44] sm:$0xf] %v1796
      %v1801 = vpack.c.bf16 %v1790, %v1789
      %v1803 = vunpack.c.l.b16 %v1801
      %v1804 = vunpack.c.h.b16 %v1801
      %v1805 = vpack.c.b16 %v1803, %v1803
      %v1806 = vpack.c.b16 %v1804, %v1804
      %1809 = vst [vmem:[%s400 + $0x80] sm:$0xf] %v1805
      %1810 = vst [vmem:[%s400 + $0x84] sm:$0xf] %v1806
      %v1811 = vadd.f32 %v1767, %v1783
      %v1812 = vadd.f32 %v1768, %v1784
      %v1813 = vadd.f32 %v1769, %v1789
      %v1814 = vadd.f32 %v1770, %v1790
      %v1815 = vmul.f32 %v1783, %v1783
      %v1816 = vmul.f32 %v1784, %v1784
      %v1817 = vadd.f32 %v1773, %v1815
      %v1818 = vadd.f32 %v1774, %v1816
      %v1819 = vmul.f32 %v1789, %v1789
      %v1820 = vmul.f32 %v1790, %v1790
      %v1821 = vadd.f32 %v1777, %v1819
      %v1822 = vadd.f32 %v1778, %v1820
      %v1823 = vmul.f32 %v1419, %v1783
      %v1824 = vmul.f32 %v1419, %v1784
      %v1825 = vadd.f32 %v837, %v1823
      %v1826 = vadd.f32 %v840, %v1824
      %v1827 = vmax.f32 %v1825, 0.0
      %v1828 = vmax.f32 %v1826, 0.0
      %v1829 = vmul.f32 %v1431, %v1789
      %v1830 = vmul.f32 %v1431, %v1790
      %v1831 = vadd.f32 %v1331, %v1829
      %v1832 = vadd.f32 %v1334, %v1830
      %v1833 = vmax.f32 %v1831, 0.0
      %v1834 = vmax.f32 %v1832, 0.0
      %v1835 = vpack.c.bf16 %v1828, %v1827
      %v1837 = vunpack.c.l.b16 %v1835
      %v1838 = vunpack.c.h.b16 %v1835
      %v1839 = vpack.c.b16 %v1837, %v1837
      %v1840 = vpack.c.b16 %v1838, %v1838
      %1843 = vst [vmem:[%s394 + $0x48] sm:$0xf] %v1839
      %1844 = vst [vmem:[%s394 + $0x4c] sm:$0xf] %v1840
      %v1845 = vpack.c.bf16 %v1834, %v1833
      %v1847 = vunpack.c.l.b16 %v1845
      %v1848 = vunpack.c.h.b16 %v1845
      %v1849 = vpack.c.b16 %v1847, %v1847
      %v1850 = vpack.c.b16 %v1848, %v1848
      %1853 = vst [vmem:[%s400 + $0x78] sm:$0xf] %v1849
      %1854 = vst [vmem:[%s400 + $0x7c] sm:$0xf] %v1850
      %v1855 = vadd.f32 %v1811, %v1827
      %v1856 = vadd.f32 %v1812, %v1828
      %v1857 = vadd.f32 %v1813, %v1833
      %v1858 = vadd.f32 %v1814, %v1834
      %v1859 = vmul.f32 %v1827, %v1827
      %v1860 = vmul.f32 %v1828, %v1828
      %v1861 = vadd.f32 %v1817, %v1859
      %v1862 = vadd.f32 %v1818, %v1860
      %v1863 = vmul.f32 %v1833, %v1833
      %v1864 = vmul.f32 %v1834, %v1834
      %v1865 = vadd.f32 %v1821, %v1863
      %v1866 = vadd.f32 %v1822, %v1864
      %v1867 = vmul.f32 %v1419, %v1827
      %v1868 = vmul.f32 %v1419, %v1828
      %v1869 = vadd.f32 %v845, %v1867
      %v1870 = vadd.f32 %v848, %v1868
      %v1871 = vmax.f32 %v1869, 0.0
      %v1872 = vmax.f32 %v1870, 0.0
      %v1873 = vmul.f32 %v1431, %v1833
      %v1874 = vmul.f32 %v1431, %v1834
      %v1875 = vadd.f32 %v1323, %v1873
      %v1876 = vadd.f32 %v1326, %v1874
      %v1877 = vmax.f32 %v1875, 0.0
      %v1878 = vmax.f32 %v1876, 0.0
      %v1879 = vpack.c.bf16 %v1872, %v1871
      %v1881 = vunpack.c.l.b16 %v1879
      %v1882 = vunpack.c.h.b16 %v1879
      %v1883 = vpack.c.b16 %v1881, %v1881
      %v1884 = vpack.c.b16 %v1882, %v1882
      %1887 = vst [vmem:[%s394 + $0x50] sm:$0xf] %v1883
      %1888 = vst [vmem:[%s394 + $0x54] sm:$0xf] %v1884
      %v1889 = vpack.c.bf16 %v1878, %v1877
      %v1891 = vunpack.c.l.b16 %v1889
      %v1892 = vunpack.c.h.b16 %v1889
      %v1893 = vpack.c.b16 %v1891, %v1891
      %v1894 = vpack.c.b16 %v1892, %v1892
      %1897 = vst [vmem:[%s400 + $0x70] sm:$0xf] %v1893
      %1898 = vst [vmem:[%s400 + $0x74] sm:$0xf] %v1894
      %v1899 = vadd.f32 %v1855, %v1871
      %v1900 = vadd.f32 %v1856, %v1872
      %v1901 = vadd.f32 %v1857, %v1877
      %v1902 = vadd.f32 %v1858, %v1878
      %v1903 = vmul.f32 %v1871, %v1871
      %v1904 = vmul.f32 %v1872, %v1872
      %v1905 = vadd.f32 %v1861, %v1903
      %v1906 = vadd.f32 %v1862, %v1904
      %v1907 = vmul.f32 %v1877, %v1877
      %v1908 = vmul.f32 %v1878, %v1878
      %v1909 = vadd.f32 %v1865, %v1907
      %v1910 = vadd.f32 %v1866, %v1908
      %v1911 = vmul.f32 %v1419, %v1871
      %v1912 = vmul.f32 %v1419, %v1872
      %v1913 = vadd.f32 %v853, %v1911
      %v1914 = vadd.f32 %v856, %v1912
      %v1915 = vmax.f32 %v1913, 0.0
      %v1916 = vmax.f32 %v1914, 0.0
      %v1917 = vmul.f32 %v1431, %v1877
      %v1918 = vmul.f32 %v1431, %v1878
      %v1919 = vadd.f32 %v1315, %v1917
      %v1920 = vadd.f32 %v1318, %v1918
      %v1921 = vmax.f32 %v1919, 0.0
      %v1922 = vmax.f32 %v1920, 0.0
      %v1923 = vpack.c.bf16 %v1916, %v1915
      %v1925 = vunpack.c.l.b16 %v1923
      %v1926 = vunpack.c.h.b16 %v1923
      %v1927 = vpack.c.b16 %v1925, %v1925
      %v1928 = vpack.c.b16 %v1926, %v1926
      %1931 = vst [vmem:[%s394 + $0x58] sm:$0xf] %v1927
      %1932 = vst [vmem:[%s394 + $0x5c] sm:$0xf] %v1928
      %v1933 = vpack.c.bf16 %v1922, %v1921
      %v1935 = vunpack.c.l.b16 %v1933
      %v1936 = vunpack.c.h.b16 %v1933
      %v1937 = vpack.c.b16 %v1935, %v1935
      %v1938 = vpack.c.b16 %v1936, %v1936
      %1941 = vst [vmem:[%s400 + $0x68] sm:$0xf] %v1937
      %1942 = vst [vmem:[%s400 + $0x6c] sm:$0xf] %v1938
      %v1943 = vadd.f32 %v1899, %v1915
      %v1944 = vadd.f32 %v1900, %v1916
      %v1945 = vadd.f32 %v1901, %v1921
      %v1946 = vadd.f32 %v1902, %v1922
      %v1947 = vmul.f32 %v1915, %v1915
      %v1948 = vmul.f32 %v1916, %v1916
      %v1949 = vadd.f32 %v1905, %v1947
      %v1950 = vadd.f32 %v1906, %v1948
      %v1951 = vmul.f32 %v1921, %v1921
      %v1952 = vmul.f32 %v1922, %v1922
      %v1953 = vadd.f32 %v1909, %v1951
      %v1954 = vadd.f32 %v1910, %v1952
      %v1955 = vmul.f32 %v1419, %v1915
      %v1956 = vmul.f32 %v1419, %v1916
      %v1957 = vadd.f32 %v861, %v1955
      %v1958 = vadd.f32 %v864, %v1956
      %v1959 = vmax.f32 %v1957, 0.0
      %v1960 = vmax.f32 %v1958, 0.0
      %v1961 = vmul.f32 %v1431, %v1921
      %v1962 = vmul.f32 %v1431, %v1922
      %v1963 = vadd.f32 %v1307, %v1961
      %v1964 = vadd.f32 %v1310, %v1962
      %v1965 = vmax.f32 %v1963, 0.0
      %v1966 = vmax.f32 %v1964, 0.0
      %v1967 = vpack.c.bf16 %v1960, %v1959
      %v1969 = vunpack.c.l.b16 %v1967
      %v1970 = vunpack.c.h.b16 %v1967
      %v1971 = vpack.c.b16 %v1969, %v1969
      %v1972 = vpack.c.b16 %v1970, %v1970
      %1975 = vst [vmem:[%s394 + $0x60] sm:$0xf] %v1971
      %1976 = vst [vmem:[%s394 + $0x64] sm:$0xf] %v1972
      %v1977 = vpack.c.bf16 %v1966, %v1965
      %v1979 = vunpack.c.l.b16 %v1977
      %v1980 = vunpack.c.h.b16 %v1977
      %v1981 = vpack.c.b16 %v1979, %v1979
      %v1982 = vpack.c.b16 %v1980, %v1980
      %1985 = vst [vmem:[%s400 + $0x60] sm:$0xf] %v1981
      %1986 = vst [vmem:[%s400 + $0x64] sm:$0xf] %v1982
      %v1987 = vadd.f32 %v1943, %v1959
      %v1988 = vadd.f32 %v1944, %v1960
      %v1989 = vadd.f32 %v1945, %v1965
      %v1990 = vadd.f32 %v1946, %v1966
      %v1991 = vmul.f32 %v1959, %v1959
      %v1992 = vmul.f32 %v1960, %v1960
      %v1993 = vadd.f32 %v1949, %v1991
      %v1994 = vadd.f32 %v1950, %v1992
      %v1995 = vmul.f32 %v1965, %v1965
      %v1996 = vmul.f32 %v1966, %v1966
      %v1997 = vadd.f32 %v1953, %v1995
      %v1998 = vadd.f32 %v1954, %v1996
      %v1999 = vmul.f32 %v1419, %v1959
      %v2000 = vmul.f32 %v1419, %v1960
      %v2001 = vadd.f32 %v869, %v1999
      %v2002 = vadd.f32 %v872, %v2000
      %v2003 = vmax.f32 %v2001, 0.0
      %v2004 = vmax.f32 %v2002, 0.0
      %v2005 = vmul.f32 %v1431, %v1965
      %v2006 = vmul.f32 %v1431, %v1966
      %v2007 = vadd.f32 %v1299, %v2005
      %v2008 = vadd.f32 %v1302, %v2006
      %v2009 = vmax.f32 %v2007, 0.0
      %v2010 = vmax.f32 %v2008, 0.0
      %v2011 = vpack.c.bf16 %v2004, %v2003
      %v2013 = vunpack.c.l.b16 %v2011
      %v2014 = vunpack.c.h.b16 %v2011
      %v2015 = vpack.c.b16 %v2013, %v2013
      %v2016 = vpack.c.b16 %v2014, %v2014
      %2019 = vst [vmem:[%s394 + $0x68] sm:$0xf] %v2015
      %2020 = vst [vmem:[%s394 + $0x6c] sm:$0xf] %v2016
      %v2021 = vpack.c.bf16 %v2010, %v2009
      %v2023 = vunpack.c.l.b16 %v2021
      %v2024 = vunpack.c.h.b16 %v2021
      %v2025 = vpack.c.b16 %v2023, %v2023
      %v2026 = vpack.c.b16 %v2024, %v2024
      %2029 = vst [vmem:[%s400 + $0x58] sm:$0xf] %v2025
      %2030 = vst [vmem:[%s400 + $0x5c] sm:$0xf] %v2026
      %v2031 = vadd.f32 %v1987, %v2003
      %v2032 = vadd.f32 %v1988, %v2004
      %v2033 = vadd.f32 %v1989, %v2009
      %v2034 = vadd.f32 %v1990, %v2010
      %v2035 = vmul.f32 %v2003, %v2003
      %v2036 = vmul.f32 %v2004, %v2004
      %v2037 = vadd.f32 %v1993, %v2035
      %v2038 = vadd.f32 %v1994, %v2036
      %v2039 = vmul.f32 %v2009, %v2009
      %v2040 = vmul.f32 %v2010, %v2010
      %v2041 = vadd.f32 %v1997, %v2039
      %v2042 = vadd.f32 %v1998, %v2040
      %v2043 = vmul.f32 %v1419, %v2003
      %v2044 = vmul.f32 %v1419, %v2004
      %v2045 = vadd.f32 %v877, %v2043
      %v2046 = vadd.f32 %v880, %v2044
      %v2047 = vmax.f32 %v2045, 0.0
      %v2048 = vmax.f32 %v2046, 0.0
      %v2049 = vmul.f32 %v1431, %v2009
      %v2050 = vmul.f32 %v1431, %v2010
      %v2051 = vadd.f32 %v1291, %v2049
      %v2052 = vadd.f32 %v1294, %v2050
      %v2053 = vmax.f32 %v2051, 0.0
      %v2054 = vmax.f32 %v2052, 0.0
      %v2055 = vpack.c.bf16 %v2048, %v2047
      %v2057 = vunpack.c.l.b16 %v2055
      %v2058 = vunpack.c.h.b16 %v2055
      %v2059 = vpack.c.b16 %v2057, %v2057
      %v2060 = vpack.c.b16 %v2058, %v2058
      %2063 = vst [vmem:[%s394 + $0x70] sm:$0xf] %v2059
      %2064 = vst [vmem:[%s394 + $0x74] sm:$0xf] %v2060
      %v2065 = vpack.c.bf16 %v2054, %v2053
      %v2067 = vunpack.c.l.b16 %v2065
      %v2068 = vunpack.c.h.b16 %v2065
      %v2069 = vpack.c.b16 %v2067, %v2067
      %v2070 = vpack.c.b16 %v2068, %v2068
      %2073 = vst [vmem:[%s400 + $0x50] sm:$0xf] %v2069
      %2074 = vst [vmem:[%s400 + $0x54] sm:$0xf] %v2070
      %v2075 = vadd.f32 %v2031, %v2047
      %v2076 = vadd.f32 %v2032, %v2048
      %v2077 = vadd.f32 %v2033, %v2053
      %v2078 = vadd.f32 %v2034, %v2054
      %v2079 = vmul.f32 %v2047, %v2047
      %v2080 = vmul.f32 %v2048, %v2048
      %v2081 = vadd.f32 %v2037, %v2079
      %v2082 = vadd.f32 %v2038, %v2080
      %v2083 = vmul.f32 %v2053, %v2053
      %v2084 = vmul.f32 %v2054, %v2054
      %v2085 = vadd.f32 %v2041, %v2083
      %v2086 = vadd.f32 %v2042, %v2084
      %v2087 = vmul.f32 %v1419, %v2047
      %v2088 = vmul.f32 %v1419, %v2048
      %v2089 = vadd.f32 %v885, %v2087
      %v2090 = vadd.f32 %v888, %v2088
      %v2091 = vmax.f32 %v2089, 0.0
      %v2092 = vmax.f32 %v2090, 0.0
      %v2093 = vmul.f32 %v1431, %v2053
      %v2094 = vmul.f32 %v1431, %v2054
      %v2095 = vadd.f32 %v1283, %v2093
      %v2096 = vadd.f32 %v1286, %v2094
      %v2097 = vmax.f32 %v2095, 0.0
      %v2098 = vmax.f32 %v2096, 0.0
      %v2099 = vpack.c.bf16 %v2092, %v2091
      %v2101 = vunpack.c.l.b16 %v2099
      %v2102 = vunpack.c.h.b16 %v2099
      %v2103 = vpack.c.b16 %v2101, %v2101
      %v2104 = vpack.c.b16 %v2102, %v2102
      %2107 = vst [vmem:[%s394 + $0x78] sm:$0xf] %v2103
      %2108 = vst [vmem:[%s394 + $0x7c] sm:$0xf] %v2104
      %v2109 = vpack.c.bf16 %v2098, %v2097
      %v2111 = vunpack.c.l.b16 %v2109
      %v2112 = vunpack.c.h.b16 %v2109
      %v2113 = vpack.c.b16 %v2111, %v2111
      %v2114 = vpack.c.b16 %v2112, %v2112
      %2117 = vst [vmem:[%s400 + $0x48] sm:$0xf] %v2113
      %2118 = vst [vmem:[%s400 + $0x4c] sm:$0xf] %v2114
      %v2119 = vadd.f32 %v2075, %v2091
      %v2120 = vadd.f32 %v2076, %v2092
      %v2121 = vadd.f32 %v2077, %v2097
      %v2122 = vadd.f32 %v2078, %v2098
      %v2123 = vmul.f32 %v2091, %v2091
      %v2124 = vmul.f32 %v2092, %v2092
      %v2125 = vadd.f32 %v2081, %v2123
      %v2126 = vadd.f32 %v2082, %v2124
      %v2127 = vmul.f32 %v2097, %v2097
      %v2128 = vmul.f32 %v2098, %v2098
      %v2129 = vadd.f32 %v2085, %v2127
      %v2130 = vadd.f32 %v2086, %v2128
      %v2131 = vmul.f32 %v1419, %v2091
      %v2132 = vmul.f32 %v1419, %v2092
      %v2133 = vadd.f32 %v893, %v2131
      %v2134 = vadd.f32 %v896, %v2132
      %v2135 = vmax.f32 %v2133, 0.0
      %v2136 = vmax.f32 %v2134, 0.0
      %v2137 = vmul.f32 %v1431, %v2097
      %v2138 = vmul.f32 %v1431, %v2098
      %v2139 = vadd.f32 %v1275, %v2137
      %v2140 = vadd.f32 %v1278, %v2138
      %v2141 = vmax.f32 %v2139, 0.0
      %v2142 = vmax.f32 %v2140, 0.0
      %v2143 = vpack.c.bf16 %v2136, %v2135
      %v2145 = vunpack.c.l.b16 %v2143
      %v2146 = vunpack.c.h.b16 %v2143
      %v2147 = vpack.c.b16 %v2145, %v2145
      %v2148 = vpack.c.b16 %v2146, %v2146
      %2151 = vst [vmem:[%s394 + $0x80] sm:$0xf] %v2147
      %2152 = vst [vmem:[%s394 + $0x84] sm:$0xf] %v2148
      %v2153 = vpack.c.bf16 %v2142, %v2141
      %v2155 = vunpack.c.l.b16 %v2153
      %v2156 = vunpack.c.h.b16 %v2153
      %v2157 = vpack.c.b16 %v2155, %v2155
      %v2158 = vpack.c.b16 %v2156, %v2156
      %2161 = vst [vmem:[%s400 + $0x40] sm:$0xf] %v2157
      %2162 = vst [vmem:[%s400 + $0x44] sm:$0xf] %v2158
      %v2163 = vadd.f32 %v2119, %v2135
      %v2164 = vadd.f32 %v2120, %v2136
      %v2165 = vadd.f32 %v2121, %v2141
      %v2166 = vadd.f32 %v2122, %v2142
      %v2167 = vmul.f32 %v2135, %v2135
      %v2168 = vmul.f32 %v2136, %v2136
      %v2169 = vadd.f32 %v2125, %v2167
      %v2170 = vadd.f32 %v2126, %v2168
      %v2171 = vmul.f32 %v2141, %v2141
      %v2172 = vmul.f32 %v2142, %v2142
      %v2173 = vadd.f32 %v2129, %v2171
      %v2174 = vadd.f32 %v2130, %v2172
      %v2175 = vmul.f32 %v1419, %v2135
      %v2176 = vmul.f32 %v1419, %v2136
      %v2177 = vadd.f32 %v901, %v2175
      %v2178 = vadd.f32 %v904, %v2176
      %v2179 = vmax.f32 %v2177, 0.0
      %v2180 = vmax.f32 %v2178, 0.0
      %v2181 = vmul.f32 %v1431, %v2141
      %v2182 = vmul.f32 %v1431, %v2142
      %v2183 = vadd.f32 %v1267, %v2181
      %v2184 = vadd.f32 %v1270, %v2182
      %v2185 = vmax.f32 %v2183, 0.0
      %v2186 = vmax.f32 %v2184, 0.0
      %v2187 = vpack.c.bf16 %v2180, %v2179
      %v2189 = vunpack.c.l.b16 %v2187
      %v2190 = vunpack.c.h.b16 %v2187
      %v2191 = vpack.c.b16 %v2189, %v2189
      %v2192 = vpack.c.b16 %v2190, %v2190
      %2195 = vst [vmem:[%s394 + $0x88] sm:$0xf] %v2191
      %2196 = vst [vmem:[%s394 + $0x8c] sm:$0xf] %v2192
      %v2197 = vpack.c.bf16 %v2186, %v2185
      %v2199 = vunpack.c.l.b16 %v2197
      %v2200 = vunpack.c.h.b16 %v2197
      %v2201 = vpack.c.b16 %v2199, %v2199
      %v2202 = vpack.c.b16 %v2200, %v2200
      %2205 = vst [vmem:[%s400 + $0x38] sm:$0xf] %v2201
      %2206 = vst [vmem:[%s400 + $0x3c] sm:$0xf] %v2202
      %v2207 = vadd.f32 %v2163, %v2179
      %v2208 = vadd.f32 %v2164, %v2180
      %v2209 = vadd.f32 %v2165, %v2185
      %v2210 = vadd.f32 %v2166, %v2186
      %v2211 = vmul.f32 %v2179, %v2179
      %v2212 = vmul.f32 %v2180, %v2180
      %v2213 = vadd.f32 %v2169, %v2211
      %v2214 = vadd.f32 %v2170, %v2212
      %v2215 = vmul.f32 %v2185, %v2185
      %v2216 = vmul.f32 %v2186, %v2186
      %v2217 = vadd.f32 %v2173, %v2215
      %v2218 = vadd.f32 %v2174, %v2216
      %v2219 = vmul.f32 %v1419, %v2179
      %v2220 = vmul.f32 %v1419, %v2180
      %v2221 = vadd.f32 %v909, %v2219
      %v2222 = vadd.f32 %v912, %v2220
      %v2223 = vmax.f32 %v2221, 0.0
      %v2224 = vmax.f32 %v2222, 0.0
      %v2225 = vmul.f32 %v1431, %v2185
      %v2226 = vmul.f32 %v1431, %v2186
      %v2227 = vadd.f32 %v1259, %v2225
      %v2228 = vadd.f32 %v1262, %v2226
      %v2229 = vmax.f32 %v2227, 0.0
      %v2230 = vmax.f32 %v2228, 0.0
      %v2231 = vpack.c.bf16 %v2224, %v2223
      %v2233 = vunpack.c.l.b16 %v2231
      %v2234 = vunpack.c.h.b16 %v2231
      %v2235 = vpack.c.b16 %v2233, %v2233
      %v2236 = vpack.c.b16 %v2234, %v2234
      %2239 = vst [vmem:[%s394 + $0x90] sm:$0xf] %v2235
      %2240 = vst [vmem:[%s394 + $0x94] sm:$0xf] %v2236
      %v2241 = vpack.c.bf16 %v2230, %v2229
      %v2243 = vunpack.c.l.b16 %v2241
      %v2244 = vunpack.c.h.b16 %v2241
      %v2245 = vpack.c.b16 %v2243, %v2243
      %v2246 = vpack.c.b16 %v2244, %v2244
      %2249 = vst [vmem:[%s400 + $0x30] sm:$0xf] %v2245
      %2250 = vst [vmem:[%s400 + $0x34] sm:$0xf] %v2246
      %v2251 = vadd.f32 %v2207, %v2223
      %v2252 = vadd.f32 %v2208, %v2224
      %v2253 = vadd.f32 %v2209, %v2229
      %v2254 = vadd.f32 %v2210, %v2230
      %v2255 = vmul.f32 %v2223, %v2223
      %v2256 = vmul.f32 %v2224, %v2224
      %v2257 = vadd.f32 %v2213, %v2255
      %v2258 = vadd.f32 %v2214, %v2256
      %v2259 = vmul.f32 %v2229, %v2229
      %v2260 = vmul.f32 %v2230, %v2230
      %v2261 = vadd.f32 %v2217, %v2259
      %v2262 = vadd.f32 %v2218, %v2260
      %v2263 = vmul.f32 %v1419, %v2223
      %v2264 = vmul.f32 %v1419, %v2224
      %v2265 = vadd.f32 %v917, %v2263
      %v2266 = vadd.f32 %v920, %v2264
      %v2267 = vmax.f32 %v2265, 0.0
      %v2268 = vmax.f32 %v2266, 0.0
      %v2269 = vmul.f32 %v1431, %v2229
      %v2270 = vmul.f32 %v1431, %v2230
      %v2271 = vadd.f32 %v1251, %v2269
      %v2272 = vadd.f32 %v1254, %v2270
      %v2273 = vmax.f32 %v2271, 0.0
      %v2274 = vmax.f32 %v2272, 0.0
      %v2275 = vpack.c.bf16 %v2268, %v2267
      %v2277 = vunpack.c.l.b16 %v2275
      %v2278 = vunpack.c.h.b16 %v2275
      %v2279 = vpack.c.b16 %v2277, %v2277
      %v2280 = vpack.c.b16 %v2278, %v2278
      %2283 = vst [vmem:[%s394 + $0x98] sm:$0xf] %v2279
      %2284 = vst [vmem:[%s394 + $0x9c] sm:$0xf] %v2280
      %v2285 = vpack.c.bf16 %v2274, %v2273
      %v2287 = vunpack.c.l.b16 %v2285
      %v2288 = vunpack.c.h.b16 %v2285
      %v2289 = vpack.c.b16 %v2287, %v2287
      %v2290 = vpack.c.b16 %v2288, %v2288
      %2293 = vst [vmem:[%s400 + $0x28] sm:$0xf] %v2289
      %2294 = vst [vmem:[%s400 + $0x2c] sm:$0xf] %v2290
      %v2295 = vadd.f32 %v2251, %v2267
      %v2296 = vadd.f32 %v2252, %v2268
      %v2297 = vadd.f32 %v2253, %v2273
      %v2298 = vadd.f32 %v2254, %v2274
      %v2299 = vmul.f32 %v2267, %v2267
      %v2300 = vmul.f32 %v2268, %v2268
      %v2301 = vadd.f32 %v2257, %v2299
      %v2302 = vadd.f32 %v2258, %v2300
      %v2303 = vmul.f32 %v2273, %v2273
      %v2304 = vmul.f32 %v2274, %v2274
      %v2305 = vadd.f32 %v2261, %v2303
      %v2306 = vadd.f32 %v2262, %v2304
      %v2307 = vmul.f32 %v1419, %v2267
      %v2308 = vmul.f32 %v1419, %v2268
      %v2309 = vadd.f32 %v925, %v2307
      %v2310 = vadd.f32 %v928, %v2308
      %v2311 = vmax.f32 %v2309, 0.0
      %v2312 = vmax.f32 %v2310, 0.0
      %v2313 = vmul.f32 %v1431, %v2273
      %v2314 = vmul.f32 %v1431, %v2274
      %v2315 = vadd.f32 %v1243, %v2313
      %v2316 = vadd.f32 %v1246, %v2314
      %v2317 = vmax.f32 %v2315, 0.0
      %v2318 = vmax.f32 %v2316, 0.0
      %v2319 = vpack.c.bf16 %v2312, %v2311
      %v2321 = vunpack.c.l.b16 %v2319
      %v2322 = vunpack.c.h.b16 %v2319
      %v2323 = vpack.c.b16 %v2321, %v2321
      %v2324 = vpack.c.b16 %v2322, %v2322
      %2327 = vst [vmem:[%s394 + $0xa0] sm:$0xf] %v2323
      %2328 = vst [vmem:[%s394 + $0xa4] sm:$0xf] %v2324
      %v2329 = vpack.c.bf16 %v2318, %v2317
      %v2331 = vunpack.c.l.b16 %v2329
      %v2332 = vunpack.c.h.b16 %v2329
      %v2333 = vpack.c.b16 %v2331, %v2331
      %v2334 = vpack.c.b16 %v2332, %v2332
      %2337 = vst [vmem:[%s400 + $0x20] sm:$0xf] %v2333
      %2338 = vst [vmem:[%s400 + $0x24] sm:$0xf] %v2334
      %v2339 = vadd.f32 %v2295, %v2311
      %v2340 = vadd.f32 %v2296, %v2312
      %v2341 = vadd.f32 %v2297, %v2317
      %v2342 = vadd.f32 %v2298, %v2318
      %v2343 = vmul.f32 %v2311, %v2311
      %v2344 = vmul.f32 %v2312, %v2312
      %v2345 = vadd.f32 %v2301, %v2343
      %v2346 = vadd.f32 %v2302, %v2344
      %v2347 = vmul.f32 %v2317, %v2317
      %v2348 = vmul.f32 %v2318, %v2318
      %v2349 = vadd.f32 %v2305, %v2347
      %v2350 = vadd.f32 %v2306, %v2348
      %v2351 = vmul.f32 %v1419, %v2311
      %v2352 = vmul.f32 %v1419, %v2312
      %v2353 = vadd.f32 %v933, %v2351
      %v2354 = vadd.f32 %v936, %v2352
      %v2355 = vmax.f32 %v2353, 0.0
      %v2356 = vmax.f32 %v2354, 0.0
      %v2357 = vmul.f32 %v1431, %v2317
      %v2358 = vmul.f32 %v1431, %v2318
      %v2359 = vadd.f32 %v1235, %v2357
      %v2360 = vadd.f32 %v1238, %v2358
      %v2361 = vmax.f32 %v2359, 0.0
      %v2362 = vmax.f32 %v2360, 0.0
      %v2363 = vpack.c.bf16 %v2356, %v2355
      %v2365 = vunpack.c.l.b16 %v2363
      %v2366 = vunpack.c.h.b16 %v2363
      %v2367 = vpack.c.b16 %v2365, %v2365
      %v2368 = vpack.c.b16 %v2366, %v2366
      %2371 = vst [vmem:[%s394 + $0xa8] sm:$0xf] %v2367
      %2372 = vst [vmem:[%s394 + $0xac] sm:$0xf] %v2368
      %v2373 = vpack.c.bf16 %v2362, %v2361
      %v2375 = vunpack.c.l.b16 %v2373
      %v2376 = vunpack.c.h.b16 %v2373
      %v2377 = vpack.c.b16 %v2375, %v2375
      %v2378 = vpack.c.b16 %v2376, %v2376
      %2381 = vst [vmem:[%s400 + $0x18] sm:$0xf] %v2377
      %2382 = vst [vmem:[%s400 + $0x1c] sm:$0xf] %v2378
      %v2383 = vadd.f32 %v2339, %v2355
      %v2384 = vadd.f32 %v2340, %v2356
      %v2385 = vadd.f32 %v2341, %v2361
      %v2386 = vadd.f32 %v2342, %v2362
      %v2387 = vmul.f32 %v2355, %v2355
      %v2388 = vmul.f32 %v2356, %v2356
      %v2389 = vadd.f32 %v2345, %v2387
      %v2390 = vadd.f32 %v2346, %v2388
      %v2391 = vmul.f32 %v2361, %v2361
      %v2392 = vmul.f32 %v2362, %v2362
      %v2393 = vadd.f32 %v2349, %v2391
      %v2394 = vadd.f32 %v2350, %v2392
      %v2395 = vmul.f32 %v1419, %v2355
      %v2396 = vmul.f32 %v1419, %v2356
      %v2397 = vadd.f32 %v941, %v2395
      %v2398 = vadd.f32 %v944, %v2396
      %v2399 = vmax.f32 %v2397, 0.0
      %v2400 = vmax.f32 %v2398, 0.0
      %v2401 = vmul.f32 %v1431, %v2361
      %v2402 = vmul.f32 %v1431, %v2362
      %v2403 = vadd.f32 %v1227, %v2401
      %v2404 = vadd.f32 %v1230, %v2402
      %v2405 = vmax.f32 %v2403, 0.0
      %v2406 = vmax.f32 %v2404, 0.0
      %v2407 = vpack.c.bf16 %v2400, %v2399
      %v2409 = vunpack.c.l.b16 %v2407
      %v2410 = vunpack.c.h.b16 %v2407
      %v2411 = vpack.c.b16 %v2409, %v2409
      %v2412 = vpack.c.b16 %v2410, %v2410
      %2415 = vst [vmem:[%s394 + $0xb0] sm:$0xf] %v2411
      %2416 = vst [vmem:[%s394 + $0xb4] sm:$0xf] %v2412
      %v2417 = vpack.c.bf16 %v2406, %v2405
      %v2419 = vunpack.c.l.b16 %v2417
      %v2420 = vunpack.c.h.b16 %v2417
      %v2421 = vpack.c.b16 %v2419, %v2419
      %v2422 = vpack.c.b16 %v2420, %v2420
      %2425 = vst [vmem:[%s400 + $0x10] sm:$0xf] %v2421
      %2426 = vst [vmem:[%s400 + $0x14] sm:$0xf] %v2422
      %v2427 = vadd.f32 %v2383, %v2399
      %v2428 = vadd.f32 %v2384, %v2400
      %v2429 = vadd.f32 %v2385, %v2405
      %v2430 = vadd.f32 %v2386, %v2406
      %v2431 = vmul.f32 %v2399, %v2399
      %v2432 = vmul.f32 %v2400, %v2400
      %v2433 = vadd.f32 %v2389, %v2431
      %v2434 = vadd.f32 %v2390, %v2432
      %v2435 = vmul.f32 %v2405, %v2405
      %v2436 = vmul.f32 %v2406, %v2406
      %v2437 = vadd.f32 %v2393, %v2435
      %v2438 = vadd.f32 %v2394, %v2436
      %v2439 = vmul.f32 %v1419, %v2399
      %v2440 = vmul.f32 %v1419, %v2400
      %v2441 = vadd.f32 %v949, %v2439
      %v2442 = vadd.f32 %v952, %v2440
      %v2443 = vmax.f32 %v2441, 0.0
      %v2444 = vmax.f32 %v2442, 0.0
      %v2445 = vmul.f32 %v1431, %v2405
      %v2446 = vmul.f32 %v1431, %v2406
      %v2447 = vadd.f32 %v1219, %v2445
      %v2448 = vadd.f32 %v1222, %v2446
      %v2449 = vmax.f32 %v2447, 0.0
      %v2450 = vmax.f32 %v2448, 0.0
      %v2451 = vpack.c.bf16 %v2444, %v2443
      %v2453 = vunpack.c.l.b16 %v2451
      %v2454 = vunpack.c.h.b16 %v2451
      %v2455 = vpack.c.b16 %v2453, %v2453
      %v2456 = vpack.c.b16 %v2454, %v2454
      %2459 = vst [vmem:[%s394 + $0xb8] sm:$0xf] %v2455
      %2460 = vst [vmem:[%s394 + $0xbc] sm:$0xf] %v2456
      %v2461 = vpack.c.bf16 %v2450, %v2449
      %v2463 = vunpack.c.l.b16 %v2461
      %v2464 = vunpack.c.h.b16 %v2461
      %v2465 = vpack.c.b16 %v2463, %v2463
      %v2466 = vpack.c.b16 %v2464, %v2464
      %2469 = vst [vmem:[%s400 + $0x8] sm:$0xf] %v2465
      %2470 = vst [vmem:[%s400 + $0xc] sm:$0xf] %v2466
      %v2471 = vadd.f32 %v2427, %v2443
      %v2472 = vadd.f32 %v2428, %v2444
      %v2473 = vadd.f32 %v2429, %v2449
      %v2474 = vadd.f32 %v2430, %v2450
      %v2475 = vmul.f32 %v2443, %v2443
      %v2476 = vmul.f32 %v2444, %v2444
      %v2477 = vadd.f32 %v2433, %v2475
      %v2478 = vadd.f32 %v2434, %v2476
      %v2479 = vmul.f32 %v2449, %v2449
      %v2480 = vmul.f32 %v2450, %v2450
      %v2481 = vadd.f32 %v2437, %v2479
      %v2482 = vadd.f32 %v2438, %v2480
      %v2483 = vmul.f32 %v1419, %v2443
      %v2484 = vmul.f32 %v1419, %v2444
      %v2485 = vadd.f32 %v957, %v2483
      %v2486 = vadd.f32 %v960, %v2484
      %v2487 = vmax.f32 %v2485, 0.0
      %v2488 = vmax.f32 %v2486, 0.0
      %v2489 = vmul.f32 %v1431, %v2449
      %v2490 = vmul.f32 %v1431, %v2450
      %v2491 = vadd.f32 %v1211, %v2489
      %v2492 = vadd.f32 %v1214, %v2490
      %v2493 = vmax.f32 %v2491, 0.0
      %v2494 = vmax.f32 %v2492, 0.0
      %v2495 = vpack.c.bf16 %v2488, %v2487
      %v2497 = vunpack.c.l.b16 %v2495
      %v2498 = vunpack.c.h.b16 %v2495
      %v2499 = vpack.c.b16 %v2497, %v2497
      %v2500 = vpack.c.b16 %v2498, %v2498
      %2503 = vst [vmem:[%s394 + $0xc0] sm:$0xf] %v2499
      %2504 = vst [vmem:[%s394 + $0xc4] sm:$0xf] %v2500
      %v2505 = vpack.c.bf16 %v2494, %v2493
      %v2507 = vunpack.c.l.b16 %v2505
      %v2508 = vunpack.c.h.b16 %v2505
      %v2509 = vpack.c.b16 %v2507, %v2507
      %v2510 = vpack.c.b16 %v2508, %v2508
      %2513 = vst [vmem:[%s400] sm:$0xf] %v2509
      %2514 = vst [vmem:[%s400 + $0x4] sm:$0xf] %v2510
      %v2515 = vadd.f32 %v2471, %v2487
      %v2516 = vadd.f32 %v2472, %v2488
      %v2517 = vadd.f32 %v2473, %v2493
      %v2518 = vadd.f32 %v2474, %v2494
      %v2519 = vmul.f32 %v2487, %v2487
      %v2520 = vmul.f32 %v2488, %v2488
      %v2521 = vadd.f32 %v2477, %v2519
      %v2522 = vadd.f32 %v2478, %v2520
      %v2523 = vmul.f32 %v2493, %v2493
      %v2524 = vmul.f32 %v2494, %v2494
      %v2525 = vadd.f32 %v2481, %v2523
      %v2526 = vadd.f32 %v2482, %v2524
      %2527 = vst [vmem:[#allocation2] sm:$0xff] %v2487
      %2528 = vst [vmem:[#allocation2 + $0x8] sm:$0xff] %v2488
      %2529 = vst [vmem:[#allocation3] sm:$0xff] %v2493
      %2530 = vst [vmem:[#allocation3 + $0x8] sm:$0xff] %v2494
      %v2531 = vld [vmem:[%s10] sm:$0xf]
      %v2532 = vadd.f32 %v2515, %v2516
      %v2533 = vrot.slane %v2532, 4
      %v2534 = vadd.f32 %v2532, %v2533
      %v2535 = vrot.slane %v2534, 2
      %v2536 = vadd.f32 %v2534, %v2535
      %v2537 = vrot.slane %v2536, 1
      %v2538 = vadd.f32 %v2536, %v2537
      %v2539 = vadd.f32 %v2517, %v2518
      %v2540 = vrot.slane %v2539, 4
      %v2541 = vadd.f32 %v2539, %v2540
      %v2542 = vrot.slane %v2541, 2
      %v2543 = vadd.f32 %v2541, %v2542
      %v2544 = vrot.slane %v2543, 1
      %v2545 = vadd.f32 %v2543, %v2544
      %v2546 = vadd.f32 %v2521, %v2522
      %v2547 = vrot.slane %v2546, 4
      %v2548 = vadd.f32 %v2546, %v2547
      %v2549 = vrot.slane %v2548, 2
      %v2550 = vadd.f32 %v2548, %v2549
      %v2551 = vrot.slane %v2550, 1
      %v2552 = vadd.f32 %v2550, %v2551
      %v2553 = vadd.f32 %v2525, %v2526
      %v2554 = vrot.slane %v2553, 4
      %v2555 = vadd.f32 %v2553, %v2554
      %v2556 = vrot.slane %v2555, 2
      %v2557 = vadd.f32 %v2555, %v2556
      %v2558 = vrot.slane %v2557, 1
      %v2559 = vadd.f32 %v2557, %v2558
      %vm2560 = vcmask 1040384
      %v2561 = vsel %vm2560, %v2538, %v2545
      %vm2562 = vcmask 1041408
      %v2563 = vsel %vm2562, %v2561, %v2552
      %vm2564 = vcmask 1042432
      %v2565 = vsel %vm2564, %v2563, %v2559
      %v2566 = vadd.f32 %v2531, %v2565
      %2567 = vst [vmem:[%s10] sm:$0xf] %v2566
      %p2568 = scmp.lt.s32.totalorder %s22, 3
      %s2569 = scalar_select %p2568, %s22, 3
      %s2570 = smul.addr %s2569, 50
      %s2571 = smul.addr %s2570, 4
      %s2572 = scalar_lea.vmem %s8, %s2571
      %s2573 = ssub.s32 3, %s22
      %p2574 = scmp.lt.s32.totalorder %s2573, 3
      %s2575 = scalar_select %p2574, %s2573, 3
      %s2576 = smul.addr %s2575, 50
      %s2577 = smul.addr %s2576, 4
      %s2578 = scalar_lea.vmem %s9, %s2577
      // Predicated region
      $region57: #{net_forward.2} parent=51 // pred_check
        %p2579 = pneg %p220
      $region58: #{net_forward.2} parent=51 // pred_check_branch
        %2581 = sbr.rel (%p2579) target = $region60
      $region59: #{net_forward.2} parent=51 // pred_region
        _
      $region60: #{net_forward.2} parent=51 // pred_fallthru
        _
      // Predicated region
      $region61: #{net_forward.2} parent=51 // pred_check
        %p2582 = pneg %p248
      $region62: #{net_forward.2} parent=51 // pred_check_branch
        %2584 = sbr.rel (%p2582) target = $region64
      $region63: #{net_forward.2} parent=51 // pred_region
        %s2585 = ssub.s32 3, %s22
      $region64: #{net_forward.2} parent=51 // pred_fallthru
        _
      // Predicated region
      $region65: #{net_forward.2} parent=51 // pred_check
        %p2586 = pneg %p269
      $region66: #{net_forward.2} parent=51 // pred_check_branch
        %2588 = sbr.rel (%p2586) target = $region68
      $region67: #{net_forward.2} parent=51 // pred_region
        _
      $region68: #{net_forward.2} parent=51 // pred_fallthru
        _
      // Predicated region
      $region69: #{net_forward.2} parent=51 // pred_check
        %p2589 = pneg %p269
      $region70: #{net_forward.2} parent=51 // pred_check_branch
        %2591 = sbr.rel (%p2589) target = $region72
      $region71: #{net_forward.2} parent=51 // pred_region
        _
      $region72: #{net_forward.2} parent=51 // pred_fallthru
        _
    $region52: #{net_forward.2} parent=5 // pred_fallthru
      _
    %p2592 = scmp.le.s32.totalorder 2, %s17
    // Predicated region
    $region73: #{net_forward.2} parent=5 // pred_check
      %p2593 = pneg %p2592
    $region74: #{net_forward.2} parent=5 // pred_check_branch
      %2595 = sbr.rel (%p2593) target = $region76
    $region75: #{net_forward.2} parent=5 // pred_region
      %s2596 = ssub.s32 %s17, 2
      // Predicated region
      $region77: #{net_forward.2} parent=75 // pred_check
        %p2597 = pneg %p226
      $region78: #{net_forward.2} parent=75 // pred_check_branch
        %2599 = sbr.rel (%p2597) target = $region80
      $region79: #{net_forward.2} parent=75 // pred_region
        %p2600 = scmp.lt.s32.totalorder %s23, 3
        %s2601 = scalar_select %p2600, %s23, 3
        %s2602 = smul.addr %s2601, 50
        %s2603 = smul.addr %s2602, 4
        %s2604 = scalar_lea.vmem %s8, %s2603
      $region80: #{net_forward.2} parent=75 // pred_fallthru
        _
      // Predicated region
      $region81: #{net_forward.2} parent=75 // pred_check
        %p2605 = pneg %p254
      $region82: #{net_forward.2} parent=75 // pred_check_branch
        %2607 = sbr.rel (%p2605) target = $region84
      $region83: #{net_forward.2} parent=75 // pred_region
        %s2608 = ssub.s32 3, %s23
        %p2609 = scmp.lt.s32.totalorder %s2608, 3
        %s2610 = scalar_select %p2609, %s2608, 3
        %s2611 = smul.addr %s2610, 50
        %s2612 = smul.addr %s2611, 4
        %s2613 = scalar_lea.vmem %s9, %s2612
      $region84: #{net_forward.2} parent=75 // pred_fallthru
        _
    $region76: #{net_forward.2} parent=5 // pred_fallthru
      _
  $region6: #{net_forward.2} parent=0 // loop_footer
    %s21 = sadd.s32 1, %s17
  $region7: #{net_forward.2} parent=0 // loop_footer_branch
    %16 = sbr.rel target = $region3
  $region8: #{net_forward.2} parent=0 // loop_exit
    _

// kernel: net_forward.3
$region0: #{net_forward.3}
  #allocation0 [shape = 'u32[]', space=smem, size = 0x4, offset = 0x4, fixed_abs, tag = 'smem constant byte address 0x4 - core index']
  #allocation1 [shape = 'u32[144,128]{1,0:T(1,128)}', space=vmem, size = 0x12000, scoped, tag = 'internal scratch']
  #allocation2 [shape = 'f32[16,128]{1,0:T(8,128)}', space=vmem, size = 0x2000, scoped, tag = 'scratch operand']
  #allocation3 [shape = 'f32[16,128]{1,0:T(8,128)}', space=vmem, size = 0x2000, scoped, tag = 'scratch operand']
  %s0 = inlined_call_operand.vmem [shape: bf16[4,400,128], index: 0, kind: input, shape index: {}, may-alias: {0,2}]
  %s1 = inlined_call_operand.vmem [shape: bf16[4,400,128], index: 1, kind: input, shape index: {}, may-alias: {1,3}]
  %s2 = inlined_call_operand.vmem [shape: bf16[4,400,128], index: 2, kind: input, shape index: {}, may-alias: {0,2}]
  %s3 = inlined_call_operand.vmem [shape: bf16[4,400,128], index: 3, kind: input, shape index: {}, may-alias: {1,3}]
  %s4 = inlined_call_operand.vmem [shape: bf16[128,128], index: 4, kind: input, shape index: {}]
  %s5 = inlined_call_operand.vmem [shape: bf16[128,128], index: 5, kind: input, shape index: {}]
  %s6 = inlined_call_operand.vmem [shape: bf16[128,128], index: 6, kind: input, shape index: {}]
  %s7 = inlined_call_operand.vmem [shape: bf16[128,128], index: 7, kind: input, shape index: {}]
  %s8 = inlined_call_operand.vmem [shape: f32[1,128], index: 8, kind: input, shape index: {}]
  %s9 = inlined_call_operand.vmem [shape: f32[1,128], index: 9, kind: input, shape index: {}]
  %s10 = inlined_call_operand.vmem [shape: f32[1,128], index: 10, kind: input, shape index: {}]
  %s11 = inlined_call_operand.vmem [shape: f32[1,128], index: 11, kind: input, shape index: {}]
  %s12 = inlined_call_operand.vmem [shape: bf16[4,400,128], index: 12, kind: output, shape index: {0}]
  %s13 = inlined_call_operand.vmem [shape: bf16[4,400,128], index: 13, kind: output, shape index: {1}]
  %s14 = inlined_call_operand.vmem [shape: f32[4,128], index: 14, kind: output, shape index: {2}]
  %15 = xla_tuple %s12, %s13, %s14
  %s16 = sld [smem:[#allocation0]]
  $region101: #{net_forward.3} parent=0
    _
  %s18 = ssub.s32 1, %s16
  %s19 = scalar_select 0, %s18, %s16
  loop: start=0, step=1, limit=6
  $region2: #{net_forward.3} parent=0 // loop_pre_header
    _
  $region3: #{net_forward.3} parent=0 // loop_header
    %s21 = sphi 0, %s25
    %p22 = scmp.ge.s32.totalorder %s21, 6
    %s31 = sphi 0, %s33
    %s34 = sphi 0, %s31
    %s35 = sphi 0, %s34
    %s51 = sphi 0, %s35
    %s57 = sphi 0, %s59
    %s60 = sphi 0, %s57
    %s61 = sphi 0, %s60
    %s77 = sphi 0, %s61
    %s85 = sphi 0, %s87
    %s88 = sphi 0, %s85
    %s89 = sphi 0, %s88
    %s105 = sphi 0, %s89
    %s113 = sphi 0, %s115
    %s116 = sphi 0, %s113
    %s117 = sphi 0, %s116
    %s133 = sphi 0, %s117
    %s137 = sphi 0, %s137
    %s139 = sphi 0, %s137
    %s140 = sphi 0, %s139
    %s154 = sphi 0, %s140
    %s158 = sphi 0, %s158
    %s160 = sphi 0, %s158
    %s161 = sphi 0, %s160
    %s175 = sphi 0, %s161
    %s179 = sphi 0, %s179
    %s181 = sphi 0, %s179
    %s182 = sphi 0, %s181
    %s196 = sphi 0, %s182
    %s200 = sphi 0, %s200
    %s202 = sphi 0, %s200
    %s203 = sphi 0, %s202
    %s217 = sphi 0, %s203
    %s221 = sphi 0, %s221
    %s223 = sphi 0, %s221
    %s224 = sphi 0, %s223
    %s238 = sphi 0, %s224
    %s242 = sphi 0, %s242
    %s244 = sphi 0, %s242
    %s245 = sphi 0, %s244
    %s259 = sphi 0, %s245
    %s263 = sphi 0, %s263
    %s265 = sphi 0, %s263
    %s266 = sphi 0, %s265
    %s280 = sphi 0, %s266
    %s284 = sphi 0, %s284
    %s286 = sphi 0, %s284
    %s287 = sphi 0, %s286
    %s301 = sphi 0, %s287
    %s307 = sphi 0, %s309
    %s310 = sphi 0, %s307
    %s311 = sphi 0, %s310
    %s327 = sphi 0, %s311
    %s335 = sphi 0, %s337
    %s338 = sphi 0, %s335
    %s339 = sphi 0, %s338
    %s355 = sphi 0, %s339
    %s359 = sphi 0, %s359
    %s361 = sphi 0, %s359
    %s362 = sphi 0, %s361
    %s376 = sphi 0, %s362
  $region4: #{net_forward.3} parent=0 // loop_header_branch
    %24 = sbr.rel (%p22) target = $region8
  $region5: #{net_forward.3} parent=0 // loop_body
    %s26 = ssub.s32 %s21, 1
    %s27 = ssub.s32 %s21, 2
    %s28 = sadd.s32 %s21, 1
    %s29 = ssub.s32 %s21, %s28
    %p30 = scmp.eq.s32.totalorder %s29, 0
    %s32 = sadd.s32 %s31, 1
    %s33 = scalar_select %p30, %s31, %s32
    %p36 = pneg %p30
    %p37 = scmp.eq.s32.totalorder %s21, 3
    %p38 = por %p36, %p37
    %p39 = scmp.ne.s32.totalorder %s31, %s34
    %p40 = scmp.eq.s32.totalorder %s21, 0
    %p41 = por %p39, %p40
    %p42 = scmp.ne.s32.totalorder %s31, %s34
    %p43 = scmp.eq.s32.totalorder %s26, 3
    %p44 = por %p42, %p43
    %p45 = scmp.ne.s32.totalorder %s34, %s35
    %p46 = scmp.eq.s32.totalorder %s26, 0
    %p47 = por %p45, %p46
    %p48 = scmp.ne.s32.totalorder %s34, %s35
    %p49 = scmp.eq.s32.totalorder %s27, 3
    %p50 = por %p48, %p49
    %p52 = scmp.ne.s32.totalorder %s35, %s51
    %p53 = scmp.eq.s32.totalorder %s27, 0
    %p54 = por %p52, %p53
    %s55 = ssub.s32 %s21, %s28
    %p56 = scmp.eq.s32.totalorder %s55, 0
    %s58 = sadd.s32 %s57, 1
    %s59 = scalar_select %p56, %s57, %s58
    %p62 = pneg %p56
    %p63 = scmp.eq.s32.totalorder %s21, 3
    %p64 = por %p62, %p63
    %p65 = scmp.ne.s32.totalorder %s57, %s60
    %p66 = scmp.eq.s32.totalorder %s21, 0
    %p67 = por %p65, %p66
    %p68 = scmp.ne.s32.totalorder %s57, %s60
    %p69 = scmp.eq.s32.totalorder %s26, 3
    %p70 = por %p68, %p69
    %p71 = scmp.ne.s32.totalorder %s60, %s61
    %p72 = scmp.eq.s32.totalorder %s26, 0
    %p73 = por %p71, %p72
    %p74 = scmp.ne.s32.totalorder %s60, %s61
    %p75 = scmp.eq.s32.totalorder %s27, 3
    %p76 = por %p74, %p75
    %p78 = scmp.ne.s32.totalorder %s61, %s77
    %p79 = scmp.eq.s32.totalorder %s27, 0
    %p80 = por %p78, %p79
    %s81 = ssub.s32 3, %s21
    %s82 = ssub.s32 3, %s28
    %s83 = ssub.s32 %s81, %s82
    %p84 = scmp.eq.s32.totalorder %s83, 0
    %s86 = sadd.s32 %s85, 1
    %s87 = scalar_select %p84, %s85, %s86
    %p90 = pneg %p84
    %p91 = scmp.eq.s32.totalorder %s21, 3
    %p92 = por %p90, %p91
    %p93 = scmp.ne.s32.totalorder %s85, %s88
    %p94 = scmp.eq.s32.totalorder %s21, 0
    %p95 = por %p93, %p94
    %p96 = scmp.ne.s32.totalorder %s85, %s88
    %p97 = scmp.eq.s32.totalorder %s26, 3
    %p98 = por %p96, %p97
    %p99 = scmp.ne.s32.totalorder %s88, %s89
    %p100 = scmp.eq.s32.totalorder %s26, 0
    %p101 = por %p99, %p100
    %p102 = scmp.ne.s32.totalorder %s88, %s89
    %p103 = scmp.eq.s32.totalorder %s27, 3
    %p104 = por %p102, %p103
    %p106 = scmp.ne.s32.totalorder %s89, %s105
    %p107 = scmp.eq.s32.totalorder %s27, 0
    %p108 = por %p106, %p107
    %s109 = ssub.s32 3, %s21
    %s110 = ssub.s32 3, %s28
    %s111 = ssub.s32 %s109, %s110
    %p112 = scmp.eq.s32.totalorder %s111, 0
    %s114 = sadd.s32 %s113, 1
    %s115 = scalar_select %p112, %s113, %s114
    %p118 = pneg %p112
    %p119 = scmp.eq.s32.totalorder %s21, 3
    %p120 = por %p118, %p119
    %p121 = scmp.ne.s32.totalorder %s113, %s116
    %p122 = scmp.eq.s32.totalorder %s21, 0
    %p123 = por %p121, %p122
    %p124 = scmp.ne.s32.totalorder %s113, %s116
    %p125 = scmp.eq.s32.totalorder %s26, 3
    %p126 = por %p124, %p125
    %p127 = scmp.ne.s32.totalorder %s116, %s117
    %p128 = scmp.eq.s32.totalorder %s26, 0
    %p129 = por %p127, %p128
    %p130 = scmp.ne.s32.totalorder %s116, %s117
    %p131 = scmp.eq.s32.totalorder %s27, 3
    %p132 = por %p130, %p131
    %p134 = scmp.ne.s32.totalorder %s117, %s133
    %p135 = scmp.eq.s32.totalorder %s27, 0
    %p136 = por %p134, %p135
    %s138 = sadd.s32 %s137, 1
    %p141 = scmp.eq.s32.totalorder %s21, 3
    %p142 = scmp.ne.s32.totalorder %s137, %s139
    %p143 = scmp.eq.s32.totalorder %s21, 0
    %p144 = por %p142, %p143
    %p145 = scmp.ne.s32.totalorder %s137, %s139
    %p146 = scmp.eq.s32.totalorder %s26, 3
    %p147 = por %p145, %p146
    %p148 = scmp.ne.s32.totalorder %s139, %s140
    %p149 = scmp.eq.s32.totalorder %s26, 0
    %p150 = por %p148, %p149
    %p151 = scmp.ne.s32.totalorder %s139, %s140
    %p152 = scmp.eq.s32.totalorder %s27, 3
    %p153 = por %p151, %p152
    %p155 = scmp.ne.s32.totalorder %s140, %s154
    %p156 = scmp.eq.s32.totalorder %s27, 0
    %p157 = por %p155, %p156
    %s159 = sadd.s32 %s158, 1
    %p162 = scmp.eq.s32.totalorder %s21, 3
    %p163 = scmp.ne.s32.totalorder %s158, %s160
    %p164 = scmp.eq.s32.totalorder %s21, 0
    %p165 = por %p163, %p164
    %p166 = scmp.ne.s32.totalorder %s158, %s160
    %p167 = scmp.eq.s32.totalorder %s26, 3
    %p168 = por %p166, %p167
    %p169 = scmp.ne.s32.totalorder %s160, %s161
    %p170 = scmp.eq.s32.totalorder %s26, 0
    %p171 = por %p169, %p170
    %p172 = scmp.ne.s32.totalorder %s160, %s161
    %p173 = scmp.eq.s32.totalorder %s27, 3
    %p174 = por %p172, %p173
    %p176 = scmp.ne.s32.totalorder %s161, %s175
    %p177 = scmp.eq.s32.totalorder %s27, 0
    %p178 = por %p176, %p177
    %s180 = sadd.s32 %s179, 1
    %p183 = scmp.eq.s32.totalorder %s21, 3
    %p184 = scmp.ne.s32.totalorder %s179, %s181
    %p185 = scmp.eq.s32.totalorder %s21, 0
    %p186 = por %p184, %p185
    %p187 = scmp.ne.s32.totalorder %s179, %s181
    %p188 = scmp.eq.s32.totalorder %s26, 3
    %p189 = por %p187, %p188
    %p190 = scmp.ne.s32.totalorder %s181, %s182
    %p191 = scmp.eq.s32.totalorder %s26, 0
    %p192 = por %p190, %p191
    %p193 = scmp.ne.s32.totalorder %s181, %s182
    %p194 = scmp.eq.s32.totalorder %s27, 3
    %p195 = por %p193, %p194
    %p197 = scmp.ne.s32.totalorder %s182, %s196
    %p198 = scmp.eq.s32.totalorder %s27, 0
    %p199 = por %p197, %p198
    %s201 = sadd.s32 %s200, 1
    %p204 = scmp.eq.s32.totalorder %s21, 3
    %p205 = scmp.ne.s32.totalorder %s200, %s202
    %p206 = scmp.eq.s32.totalorder %s21, 0
    %p207 = por %p205, %p206
    %p208 = scmp.ne.s32.totalorder %s200, %s202
    %p209 = scmp.eq.s32.totalorder %s26, 3
    %p210 = por %p208, %p209
    %p211 = scmp.ne.s32.totalorder %s202, %s203
    %p212 = scmp.eq.s32.totalorder %s26, 0
    %p213 = por %p211, %p212
    %p214 = scmp.ne.s32.totalorder %s202, %s203
    %p215 = scmp.eq.s32.totalorder %s27, 3
    %p216 = por %p214, %p215
    %p218 = scmp.ne.s32.totalorder %s203, %s217
    %p219 = scmp.eq.s32.totalorder %s27, 0
    %p220 = por %p218, %p219
    %s222 = sadd.s32 %s221, 1
    %p225 = scmp.eq.s32.totalorder %s21, 3
    %p226 = scmp.ne.s32.totalorder %s221, %s223
    %p227 = scmp.eq.s32.totalorder %s21, 0
    %p228 = por %p226, %p227
    %p229 = scmp.ne.s32.totalorder %s221, %s223
    %p230 = scmp.eq.s32.totalorder %s26, 3
    %p231 = por %p229, %p230
    %p232 = scmp.ne.s32.totalorder %s223, %s224
    %p233 = scmp.eq.s32.totalorder %s26, 0
    %p234 = por %p232, %p233
    %p235 = scmp.ne.s32.totalorder %s223, %s224
    %p236 = scmp.eq.s32.totalorder %s27, 3
    %p237 = por %p235, %p236
    %p239 = scmp.ne.s32.totalorder %s224, %s238
    %p240 = scmp.eq.s32.totalorder %s27, 0
    %p241 = por %p239, %p240
    %s243 = sadd.s32 %s242, 1
    %p246 = scmp.eq.s32.totalorder %s21, 3
    %p247 = scmp.ne.s32.totalorder %s242, %s244
    %p248 = scmp.eq.s32.totalorder %s21, 0
    %p249 = por %p247, %p248
    %p250 = scmp.ne.s32.totalorder %s242, %s244
    %p251 = scmp.eq.s32.totalorder %s26, 3
    %p252 = por %p250, %p251
    %p253 = scmp.ne.s32.totalorder %s244, %s245
    %p254 = scmp.eq.s32.totalorder %s26, 0
    %p255 = por %p253, %p254
    %p256 = scmp.ne.s32.totalorder %s244, %s245
    %p257 = scmp.eq.s32.totalorder %s27, 3
    %p258 = por %p256, %p257
    %p260 = scmp.ne.s32.totalorder %s245, %s259
    %p261 = scmp.eq.s32.totalorder %s27, 0
    %p262 = por %p260, %p261
    %s264 = sadd.s32 %s263, 1
    %p267 = scmp.eq.s32.totalorder %s21, 3
    %p268 = scmp.ne.s32.totalorder %s263, %s265
    %p269 = scmp.eq.s32.totalorder %s21, 0
    %p270 = por %p268, %p269
    %p271 = scmp.ne.s32.totalorder %s263, %s265
    %p272 = scmp.eq.s32.totalorder %s26, 3
    %p273 = por %p271, %p272
    %p274 = scmp.ne.s32.totalorder %s265, %s266
    %p275 = scmp.eq.s32.totalorder %s26, 0
    %p276 = por %p274, %p275
    %p277 = scmp.ne.s32.totalorder %s265, %s266
    %p278 = scmp.eq.s32.totalorder %s27, 3
    %p279 = por %p277, %p278
    %p281 = scmp.ne.s32.totalorder %s266, %s280
    %p282 = scmp.eq.s32.totalorder %s27, 0
    %p283 = por %p281, %p282
    %s285 = sadd.s32 %s284, 1
    %p288 = scmp.eq.s32.totalorder %s21, 3
    %p289 = scmp.ne.s32.totalorder %s284, %s286
    %p290 = scmp.eq.s32.totalorder %s21, 0
    %p291 = por %p289, %p290
    %p292 = scmp.ne.s32.totalorder %s284, %s286
    %p293 = scmp.eq.s32.totalorder %s26, 3
    %p294 = por %p292, %p293
    %p295 = scmp.ne.s32.totalorder %s286, %s287
    %p296 = scmp.eq.s32.totalorder %s26, 0
    %p297 = por %p295, %p296
    %p298 = scmp.ne.s32.totalorder %s286, %s287
    %p299 = scmp.eq.s32.totalorder %s27, 3
    %p300 = por %p298, %p299
    %p302 = scmp.ne.s32.totalorder %s287, %s301
    %p303 = scmp.eq.s32.totalorder %s27, 0
    %p304 = por %p302, %p303
    %s305 = ssub.s32 %s21, %s28
    %p306 = scmp.eq.s32.totalorder %s305, 0
    %s308 = sadd.s32 %s307, 1
    %s309 = scalar_select %p306, %s307, %s308
    %p312 = pneg %p306
    %p313 = scmp.eq.s32.totalorder %s21, 3
    %p314 = por %p312, %p313
    %p315 = scmp.ne.s32.totalorder %s307, %s310
    %p316 = scmp.eq.s32.totalorder %s21, 0
    %p317 = por %p315, %p316
    %p318 = scmp.ne.s32.totalorder %s307, %s310
    %p319 = scmp.eq.s32.totalorder %s26, 3
    %p320 = por %p318, %p319
    %p321 = scmp.ne.s32.totalorder %s310, %s311
    %p322 = scmp.eq.s32.totalorder %s26, 0
    %p323 = por %p321, %p322
    %p324 = scmp.ne.s32.totalorder %s310, %s311
    %p325 = scmp.eq.s32.totalorder %s27, 3
    %p326 = por %p324, %p325
    %p328 = scmp.ne.s32.totalorder %s311, %s327
    %p329 = scmp.eq.s32.totalorder %s27, 0
    %p330 = por %p328, %p329
    %s331 = ssub.s32 3, %s21
    %s332 = ssub.s32 3, %s28
    %s333 = ssub.s32 %s331, %s332
    %p334 = scmp.eq.s32.totalorder %s333, 0
    %s336 = sadd.s32 %s335, 1
    %s337 = scalar_select %p334, %s335, %s336
    %p340 = pneg %p334
    %p341 = scmp.eq.s32.totalorder %s21, 3
    %p342 = por %p340, %p341
    %p343 = scmp.ne.s32.totalorder %s335, %s338
    %p344 = scmp.eq.s32.totalorder %s21, 0
    %p345 = por %p343, %p344
    %p346 = scmp.ne.s32.totalorder %s335, %s338
    %p347 = scmp.eq.s32.totalorder %s26, 3
    %p348 = por %p346, %p347
    %p349 = scmp.ne.s32.totalorder %s338, %s339
    %p350 = scmp.eq.s32.totalorder %s26, 0
    %p351 = por %p349, %p350
    %p352 = scmp.ne.s32.totalorder %s338, %s339
    %p353 = scmp.eq.s32.totalorder %s27, 3
    %p354 = por %p352, %p353
    %p356 = scmp.ne.s32.totalorder %s339, %s355
    %p357 = scmp.eq.s32.totalorder %s27, 0
    %p358 = por %p356, %p357
    %s360 = sadd.s32 %s359, 1
    %p363 = scmp.eq.s32.totalorder %s21, 3
    %p364 = scmp.ne.s32.totalorder %s359, %s361
    %p365 = scmp.eq.s32.totalorder %s21, 0
    %p366 = por %p364, %p365
    %p367 = scmp.ne.s32.totalorder %s359, %s361
    %p368 = scmp.eq.s32.totalorder %s26, 3
    %p369 = por %p367, %p368
    %p370 = scmp.ne.s32.totalorder %s361, %s362
    %p371 = scmp.eq.s32.totalorder %s26, 0
    %p372 = por %p370, %p371
    %p373 = scmp.ne.s32.totalorder %s361, %s362
    %p374 = scmp.eq.s32.totalorder %s27, 3
    %p375 = por %p373, %p374
    %p377 = scmp.ne.s32.totalorder %s362, %s376
    %p378 = scmp.eq.s32.totalorder %s27, 0
    %p379 = por %p377, %p378
    %p380 = scmp.le.s32.totalorder 1, %s21
    %p381 = scmp.lt.s32.totalorder %s21, 5
    %p382 = pnand %p380, %p381
    %p383 = pneg %p382
    // Predicated region
    $region9: #{net_forward.3} parent=5 // pred_check
      _
    $region10: #{net_forward.3} parent=5 // pred_check_branch
      %385 = sbr.rel (%p382) target = $region12
    $region11: #{net_forward.3} parent=5 // pred_region
      %s386 = ssub.s32 %s21, 1
      // Predicated region
      $region13: #{net_forward.3} parent=11 // pred_check
        %p387 = pneg %p150
      $region14: #{net_forward.3} parent=11 // pred_check_branch
        %389 = sbr.rel (%p387) target = $region16
      $region15: #{net_forward.3} parent=11 // pred_region
        _
      $region16: #{net_forward.3} parent=11 // pred_fallthru
        _
      // Predicated region
      $region17: #{net_forward.3} parent=11 // pred_check
        %p390 = pneg %p171
      $region18: #{net_forward.3} parent=11 // pred_check_branch
        %392 = sbr.rel (%p390) target = $region20
      $region19: #{net_forward.3} parent=11 // pred_region
        _
      $region20: #{net_forward.3} parent=11 // pred_fallthru
        _
      // Predicated region
      $region21: #{net_forward.3} parent=11 // pred_check
        %p393 = pneg %p192
      $region22: #{net_forward.3} parent=11 // pred_check_branch
        %395 = sbr.rel (%p393) target = $region24
      $region23: #{net_forward.3} parent=11 // pred_region
        _
      $region24: #{net_forward.3} parent=11 // pred_fallthru
        _
      // Predicated region
      $region25: #{net_forward.3} parent=11 // pred_check
        %p396 = pneg %p213
      $region26: #{net_forward.3} parent=11 // pred_check_branch
        %398 = sbr.rel (%p396) target = $region28
      $region27: #{net_forward.3} parent=11 // pred_region
        _
      $region28: #{net_forward.3} parent=11 // pred_fallthru
        _
      // Predicated region
      $region29: #{net_forward.3} parent=11 // pred_check
        %p399 = pneg %p234
      $region30: #{net_forward.3} parent=11 // pred_check_branch
        %401 = sbr.rel (%p399) target = $region32
      $region31: #{net_forward.3} parent=11 // pred_region
        _
      $region32: #{net_forward.3} parent=11 // pred_fallthru
        _
      // Predicated region
      $region33: #{net_forward.3} parent=11 // pred_check
        %p402 = pneg %p255
      $region34: #{net_forward.3} parent=11 // pred_check_branch
        %404 = sbr.rel (%p402) target = $region36
      $region35: #{net_forward.3} parent=11 // pred_region
        _
      $region36: #{net_forward.3} parent=11 // pred_fallthru
        _
      // Predicated region
      $region37: #{net_forward.3} parent=11 // pred_check
        %p405 = pneg %p276
      $region38: #{net_forward.3} parent=11 // pred_check_branch
        %407 = sbr.rel (%p405) target = $region40
      $region39: #{net_forward.3} parent=11 // pred_region
        _
      $region40: #{net_forward.3} parent=11 // pred_fallthru
        _
      // Predicated region
      $region41: #{net_forward.3} parent=11 // pred_check
        %p408 = pneg %p297
      $region42: #{net_forward.3} parent=11 // pred_check_branch
        %410 = sbr.rel (%p408) target = $region44
      $region43: #{net_forward.3} parent=11 // pred_region
        _
      $region44: #{net_forward.3} parent=11 // pred_fallthru
        _
    $region12: #{net_forward.3} parent=5 // pred_fallthru
      _
    %p411 = scmp.lt.s32.totalorder %s21, 4
    // Predicated region
    $region45: #{net_forward.3} parent=5 // pred_check
      %p412 = pneg %p411
    $region46: #{net_forward.3} parent=5 // pred_check_branch
      %414 = sbr.rel (%p412) target = $region48
    $region47: #{net_forward.3} parent=5 // pred_region
      // Predicated region
      $region49: #{net_forward.3} parent=47 // pred_check
        %p415 = pneg %p41
      $region50: #{net_forward.3} parent=47 // pred_check_branch
        %417 = sbr.rel (%p415) target = $region52
      $region51: #{net_forward.3} parent=47 // pred_region
        %p418 = scmp.lt.s32.totalorder %s21, 3
        %s419 = scalar_select %p418, %s21, 3
        %s420 = smul.addr %s419, 50
        %s421 = smul.addr %s420, 4
        %s422 = scalar_lea.vmem %s0, %s421
      $region52: #{net_forward.3} parent=47 // pred_fallthru
        _
      // Predicated region
      $region53: #{net_forward.3} parent=47 // pred_check
        %p423 = pneg %p67
      $region54: #{net_forward.3} parent=47 // pred_check_branch
        %425 = sbr.rel (%p423) target = $region56
      $region55: #{net_forward.3} parent=47 // pred_region
        %p426 = scmp.lt.s32.totalorder %s21, 3
        %s427 = scalar_select %p426, %s21, 3
        %s428 = smul.addr %s427, 50
        %s429 = smul.addr %s428, 4
        %s430 = scalar_lea.vmem %s1, %s429
      $region56: #{net_forward.3} parent=47 // pred_fallthru
        _
      // Predicated region
      $region57: #{net_forward.3} parent=47 // pred_check
        %p431 = pneg %p95
      $region58: #{net_forward.3} parent=47 // pred_check_branch
        %433 = sbr.rel (%p431) target = $region60
      $region59: #{net_forward.3} parent=47 // pred_region
        %s434 = ssub.s32 3, %s21
        %p435 = scmp.lt.s32.totalorder %s434, 3
        %s436 = scalar_select %p435, %s434, 3
        %s437 = smul.addr %s436, 50
        %s438 = smul.addr %s437, 4
        %s439 = scalar_lea.vmem %s2, %s438
        %s440 = ssub.s32 3, %s21
      $region60: #{net_forward.3} parent=47 // pred_fallthru
        _
      // Predicated region
      $region61: #{net_forward.3} parent=47 // pred_check
        %p441 = pneg %p123
      $region62: #{net_forward.3} parent=47 // pred_check_branch
        %443 = sbr.rel (%p441) target = $region64
      $region63: #{net_forward.3} parent=47 // pred_region
        %s444 = ssub.s32 3, %s21
        %p445 = scmp.lt.s32.totalorder %s444, 3
        %s446 = scalar_select %p445, %s444, 3
        %s447 = smul.addr %s446, 50
        %s448 = smul.addr %s447, 4
        %s449 = scalar_lea.vmem %s3, %s448
        %s450 = ssub.s32 3, %s21
      $region64: #{net_forward.3} parent=47 // pred_fallthru
        _
    $region48: #{net_forward.3} parent=5 // pred_fallthru
      _
    %p451 = scmp.le.s32.totalorder 1, %s21
    %p452 = scmp.lt.s32.totalorder %s21, 5
    %p453 = pnand %p451, %p452
    %p454 = pneg %p453
    // Predicated region
    $region65: #{net_forward.3} parent=5 // pred_check
      _
    $region66: #{net_forward.3} parent=5 // pred_check_branch
      %456 = sbr.rel (%p453) target = $region68
    $region67: #{net_forward.3} parent=5 // pred_region
      %s457 = ssub.s32 %s21, 1
      %p458 = scmp.lt.s32.totalorder %s26, 3
      %s459 = scalar_select %p458, %s26, 3
      %s460 = smul.addr %s459, 50
      %s461 = smul.addr %s460, 4
      %s462 = scalar_lea.vmem %s0, %s461
      %p463 = pneg %p47
      %p464 = pneg %p44
      %p465 = scmp.lt.s32.totalorder %s26, 3
      %s466 = scalar_select %p465, %s26, 3
      %s467 = smul.addr %s466, 50
      %s468 = smul.addr %s467, 4
      %s469 = scalar_lea.vmem %s1, %s468
      %p470 = pneg %p73
      %p471 = pneg %p70
      %s472 = ssub.s32 3, %s26
      %p473 = scmp.lt.s32.totalorder %s472, 3
      %s474 = scalar_select %p473, %s472, 3
      %s475 = smul.addr %s474, 50
      %s476 = smul.addr %s475, 4
      %s477 = scalar_lea.vmem %s2, %s476
      %p478 = pneg %p101
      %p479 = pneg %p98
      %s480 = ssub.s32 3, %s26
      %p481 = scmp.lt.s32.totalorder %s480, 3
      %s482 = scalar_select %p481, %s480, 3
      %s483 = smul.addr %s482, 50
      %s484 = smul.addr %s483, 4
      %s485 = scalar_lea.vmem %s3, %s484
      %p486 = pneg %p129
      %p487 = pneg %p126
      %p488 = pneg %p150
      %p489 = pneg %p147
      %p490 = pneg %p171
      %p491 = pneg %p168
      %p492 = pneg %p192
      %p493 = pneg %p189
      %p494 = pneg %p213
      %p495 = pneg %p210
      %p496 = pneg %p234
      %p497 = pneg %p231
      %p498 = pneg %p255
      %p499 = pneg %p252
      %p500 = pneg %p276
      %p501 = pneg %p273
      %p502 = pneg %p297
      %p503 = pneg %p294
      %p504 = pneg %p323
      %p505 = pneg %p320
      %p506 = scmp.lt.s32.totalorder %s26, 3
      %s507 = scalar_select %p506, %s26, 3
      %s508 = smul.addr %s507, 50
      %s509 = smul.addr %s508, 4
      %s510 = scalar_lea.vmem %s12, %s509
      %p511 = pneg %p351
      %p512 = pneg %p348
      %s513 = ssub.s32 3, %s26
      %p514 = scmp.lt.s32.totalorder %s513, 3
      %s515 = scalar_select %p514, %s513, 3
      %s516 = smul.addr %s515, 50
      %s517 = smul.addr %s516, 4
      %s518 = scalar_lea.vmem %s13, %s517
      %p519 = pneg %p372
      %p520 = pneg %p369
      %p521 = scmp.lt.s32.totalorder %s26, 3
      %s522 = scalar_select %p521, %s26, 3
      %s523 = smul.addr %s522, 50
      %s524 = smul.addr %s523, 4
      %s525 = scalar_lea.vmem %s0, %s524
      %p526 = scmp.lt.s32.totalorder %s26, 3
      %s527 = scalar_select %p526, %s26, 3
      %s528 = smul.addr %s527, 50
      %s529 = smul.addr %s528, 4
      %s530 = scalar_lea.vmem %s1, %s529
      %s531 = ssub.s32 3, %s26
      %p532 = scmp.lt.s32.totalorder %s531, 3
      %s533 = scalar_select %p532, %s531, 3
      %s534 = smul.addr %s533, 50
      %s535 = smul.addr %s534, 4
      %s536 = scalar_lea.vmem %s2, %s535
      %s537 = ssub.s32 3, %s26
      %s538 = ssub.s32 3, %s26
      %p539 = scmp.lt.s32.totalorder %s538, 3
      %s540 = scalar_select %p539, %s538, 3
      %s541 = smul.addr %s540, 50
      %s542 = smul.addr %s541, 4
      %s543 = scalar_lea.vmem %s3, %s542
      %s544 = ssub.s32 3, %s26
      %p545 = scmp.lt.s32.totalorder %s26, 3
      %s546 = scalar_select %p545, %s26, 3
      %s547 = smul.addr %s546, 50
      %s548 = smul.addr %s547, 4
      %s549 = scalar_lea.vmem %s12, %s548
      %s550 = ssub.s32 3, %s26
      %p551 = scmp.lt.s32.totalorder %s550, 3
      %s552 = scalar_select %p551, %s550, 3
      %s553 = smul.addr %s552, 50
      %s554 = smul.addr %s553, 4
      %s555 = scalar_lea.vmem %s13, %s554
      %s556 = ssub.s32 3, %s26
      %p558 = scmp.eq.s32.totalorder %s26, 0
      // Predicated region
      $region69: #{net_forward.3} parent=67 // pred_check
        %p559 = pneg %p558
      $region70: #{net_forward.3} parent=67 // pred_check_branch
        %561 = sbr.rel (%p559) target = $region72
      $region71: #{net_forward.3} parent=67 // pred_region
        %562 = vst [vmem:[#allocation2] sm:$0xff] 0.0
        %563 = vst [vmem:[#allocation2 + $0x8] sm:$0xff] 0.0
        %564 = vst [vmem:[#allocation3] sm:$0xff] 0.0
        %565 = vst [vmem:[#allocation3 + $0x8] sm:$0xff] 0.0
        %566 = vst [vmem:[%s14] sm:$0xf] 0.0
      $region72: #{net_forward.3} parent=67 // pred_fallthru
        _
      %v567 = vld [vmem:[%s4] sm:$0xf]
      %v568 = vld [vmem:[%s4 + $0x4] sm:$0xf]
      %v569 = vld [vmem:[%s4 + $0x8] sm:$0xf]
      %v570 = vld [vmem:[%s4 + $0xc] sm:$0xf]
      %v571 = vld [vmem:[%s4 + $0x10] sm:$0xf]
      %v572 = vld [vmem:[%s4 + $0x14] sm:$0xf]
      %v573 = vld [vmem:[%s4 + $0x18] sm:$0xf]
      %v574 = vld [vmem:[%s4 + $0x1c] sm:$0xf]
      %v575 = vld [vmem:[%s4 + $0x20] sm:$0xf]
      %v576 = vld [vmem:[%s4 + $0x24] sm:$0xf]
      %v577 = vld [vmem:[%s4 + $0x28] sm:$0xf]
      %v578 = vld [vmem:[%s4 + $0x2c] sm:$0xf]
      %v579 = vld [vmem:[%s4 + $0x30] sm:$0xf]
      %v580 = vld [vmem:[%s4 + $0x34] sm:$0xf]
      %v581 = vld [vmem:[%s4 + $0x38] sm:$0xf]
      %v582 = vld [vmem:[%s4 + $0x3c] sm:$0xf]
      %v583 = vld [vmem:[%s6] sm:$0xf]
      %v584 = vld [vmem:[%s6 + $0x4] sm:$0xf]
      %v585 = vld [vmem:[%s6 + $0x8] sm:$0xf]
      %v586 = vld [vmem:[%s6 + $0xc] sm:$0xf]
      %v587 = vld [vmem:[%s6 + $0x10] sm:$0xf]
      %v588 = vld [vmem:[%s6 + $0x14] sm:$0xf]
      %v589 = vld [vmem:[%s6 + $0x18] sm:$0xf]
      %v590 = vld [vmem:[%s6 + $0x1c] sm:$0xf]
      %v591 = vld [vmem:[%s6 + $0x20] sm:$0xf]
      %v592 = vld [vmem:[%s6 + $0x24] sm:$0xf]
      %v593 = vld [vmem:[%s6 + $0x28] sm:$0xf]
      %v594 = vld [vmem:[%s6 + $0x2c] sm:$0xf]
      %v595 = vld [vmem:[%s6 + $0x30] sm:$0xf]
      %v596 = vld [vmem:[%s6 + $0x34] sm:$0xf]
      %v597 = vld [vmem:[%s6 + $0x38] sm:$0xf]
      %v598 = vld [vmem:[%s6 + $0x3c] sm:$0xf]
      %v599 = vld [vmem:[%s525] sm:$0xf]
      %v600 = vld [vmem:[%s525 + $0x4] sm:$0xf]
      %v601 = vld [vmem:[%s525 + $0x8] sm:$0xf]
      %v602 = vld [vmem:[%s525 + $0xc] sm:$0xf]
      %v603 = vld [vmem:[%s525 + $0x10] sm:$0xf]
      %v604 = vld [vmem:[%s525 + $0x14] sm:$0xf]
      %v605 = vld [vmem:[%s525 + $0x18] sm:$0xf]
      %v606 = vld [vmem:[%s525 + $0x1c] sm:$0xf]
      %v607 = vld [vmem:[%s525 + $0x20] sm:$0xf]
      %v608 = vld [vmem:[%s525 + $0x24] sm:$0xf]
      %v609 = vld [vmem:[%s525 + $0x28] sm:$0xf]
      %v610 = vld [vmem:[%s525 + $0x2c] sm:$0xf]
      %v611 = vld [vmem:[%s525 + $0x30] sm:$0xf]
      %v612 = vld [vmem:[%s525 + $0x34] sm:$0xf]
      %v613 = vld [vmem:[%s525 + $0x38] sm:$0xf]
      %v614 = vld [vmem:[%s525 + $0x3c] sm:$0xf]
      %v615 = vld [vmem:[%s525 + $0x40] sm:$0xf]
      %v616 = vld [vmem:[%s525 + $0x44] sm:$0xf]
      %v617 = vld [vmem:[%s525 + $0x48] sm:$0xf]
      %v618 = vld [vmem:[%s525 + $0x4c] sm:$0xf]
      %v619 = vld [vmem:[%s525 + $0x50] sm:$0xf]
      %v620 = vld [vmem:[%s525 + $0x54] sm:$0xf]
      %v621 = vld [vmem:[%s525 + $0x58] sm:$0xf]
      %v622 = vld [vmem:[%s525 + $0x5c] sm:$0xf]
      %v623 = vld [vmem:[%s525 + $0x60] sm:$0xf]
      %v624 = vld [vmem:[%s525 + $0x64] sm:$0xf]
      %v625 = vld [vmem:[%s525 + $0x68] sm:$0xf]
      %v626 = vld [vmem:[%s525 + $0x6c] sm:$0xf]
      %v627 = vld [vmem:[%s525 + $0x70] sm:$0xf]
      %v628 = vld [vmem:[%s525 + $0x74] sm:$0xf]
      %v629 = vld [vmem:[%s525 + $0x78] sm:$0xf]
      %v630 = vld [vmem:[%s525 + $0x7c] sm:$0xf]
      %v631 = vld [vmem:[%s525 + $0x80] sm:$0xf]
      %v632 = vld [vmem:[%s525 + $0x84] sm:$0xf]
      %v633 = vld [vmem:[%s525 + $0x88] sm:$0xf]
      %v634 = vld [vmem:[%s525 + $0x8c] sm:$0xf]
      %v635 = vld [vmem:[%s525 + $0x90] sm:$0xf]
      %v636 = vld [vmem:[%s525 + $0x94] sm:$0xf]
      %v637 = vld [vmem:[%s525 + $0x98] sm:$0xf]
      %v638 = vld [vmem:[%s525 + $0x9c] sm:$0xf]
      %v639 = vld [vmem:[%s525 + $0xa0] sm:$0xf]
      %v640 = vld [vmem:[%s525 + $0xa4] sm:$0xf]
      %v641 = vld [vmem:[%s525 + $0xa8] sm:$0xf]
      %v642 = vld [vmem:[%s525 + $0xac] sm:$0xf]
      %v643 = vld [vmem:[%s525 + $0xb0] sm:$0xf]
      %v644 = vld [vmem:[%s525 + $0xb4] sm:$0xf]
      %v645 = vld [vmem:[%s525 + $0xb8] sm:$0xf]
      %v646 = vld [vmem:[%s525 + $0xbc] sm:$0xf]
      %v647 = vld [vmem:[%s525 + $0xc0] sm:$0xf]
      %v648 = vld [vmem:[%s525 + $0xc4] sm:$0xf]
      %v649 = vld [vmem:[%s536] sm:$0xf]
      %v650 = vld [vmem:[%s536 + $0x4] sm:$0xf]
      %v651 = vld [vmem:[%s536 + $0x8] sm:$0xf]
      %v652 = vld [vmem:[%s536 + $0xc] sm:$0xf]
      %v653 = vld [vmem:[%s536 + $0x10] sm:$0xf]
      %v654 = vld [vmem:[%s536 + $0x14] sm:$0xf]
      %v655 = vld [vmem:[%s536 + $0x18] sm:$0xf]
      %v656 = vld [vmem:[%s536 + $0x1c] sm:$0xf]
      %v657 = vld [vmem:[%s536 + $0x20] sm:$0xf]
      %v658 = vld [vmem:[%s536 + $0x24] sm:$0xf]
      %v659 = vld [vmem:[%s536 + $0x28] sm:$0xf]
      %v660 = vld [vmem:[%s536 + $0x2c] sm:$0xf]
      %v661 = vld [vmem:[%s536 + $0x30] sm:$0xf]
      %v662 = vld [vmem:[%s536 + $0x34] sm:$0xf]
      %v663 = vld [vmem:[%s536 + $0x38] sm:$0xf]
      %v664 = vld [vmem:[%s536 + $0x3c] sm:$0xf]
      %v665 = vld [vmem:[%s536 + $0x40] sm:$0xf]
      %v666 = vld [vmem:[%s536 + $0x44] sm:$0xf]
      %v667 = vld [vmem:[%s536 + $0x48] sm:$0xf]
      %v668 = vld [vmem:[%s536 + $0x4c] sm:$0xf]
      %v669 = vld [vmem:[%s536 + $0x50] sm:$0xf]
      %v670 = vld [vmem:[%s536 + $0x54] sm:$0xf]
      %v671 = vld [vmem:[%s536 + $0x58] sm:$0xf]
      %v672 = vld [vmem:[%s536 + $0x5c] sm:$0xf]
      %v673 = vld [vmem:[%s536 + $0x60] sm:$0xf]
      %v674 = vld [vmem:[%s536 + $0x64] sm:$0xf]
      %v675 = vld [vmem:[%s536 + $0x68] sm:$0xf]
      %v676 = vld [vmem:[%s536 + $0x6c] sm:$0xf]
      %v677 = vld [vmem:[%s536 + $0x70] sm:$0xf]
      %v678 = vld [vmem:[%s536 + $0x74] sm:$0xf]
      %v679 = vld [vmem:[%s536 + $0x78] sm:$0xf]
      %v680 = vld [vmem:[%s536 + $0x7c] sm:$0xf]
      %v681 = vld [vmem:[%s536 + $0x80] sm:$0xf]
      %v682 = vld [vmem:[%s536 + $0x84] sm:$0xf]
      %v683 = vld [vmem:[%s536 + $0x88] sm:$0xf]
      %v684 = vld [vmem:[%s536 + $0x8c] sm:$0xf]
      %v685 = vld [vmem:[%s536 + $0x90] sm:$0xf]
      %v686 = vld [vmem:[%s536 + $0x94] sm:$0xf]
      %v687 = vld [vmem:[%s536 + $0x98] sm:$0xf]
      %v688 = vld [vmem:[%s536 + $0x9c] sm:$0xf]
      %v689 = vld [vmem:[%s536 + $0xa0] sm:$0xf]
      %v690 = vld [vmem:[%s536 + $0xa4] sm:$0xf]
      %v691 = vld [vmem:[%s536 + $0xa8] sm:$0xf]
      %v692 = vld [vmem:[%s536 + $0xac] sm:$0xf]
      %v693 = vld [vmem:[%s536 + $0xb0] sm:$0xf]
      %v694 = vld [vmem:[%s536 + $0xb4] sm:$0xf]
      %v695 = vld [vmem:[%s536 + $0xb8] sm:$0xf]
      %v696 = vld [vmem:[%s536 + $0xbc] sm:$0xf]
      %v697 = vld [vmem:[%s536 + $0xc0] sm:$0xf]
      %v698 = vld [vmem:[%s536 + $0xc4] sm:$0xf]
      %v699 = vld [vmem:[%s5] sm:$0xf]
      %v700 = vld [vmem:[%s5 + $0x4] sm:$0xf]
      %v701 = vld [vmem:[%s5 + $0x8] sm:$0xf]
      %v702 = vld [vmem:[%s5 + $0xc] sm:$0xf]
      %v703 = vld [vmem:[%s5 + $0x10] sm:$0xf]
      %v704 = vld [vmem:[%s5 + $0x14] sm:$0xf]
      %v705 = vld [vmem:[%s5 + $0x18] sm:$0xf]
      %v706 = vld [vmem:[%s5 + $0x1c] sm:$0xf]
      %v707 = vld [vmem:[%s5 + $0x20] sm:$0xf]
      %v708 = vld [vmem:[%s5 + $0x24] sm:$0xf]
      %v709 = vld [vmem:[%s5 + $0x28] sm:$0xf]
      %v710 = vld [vmem:[%s5 + $0x2c] sm:$0xf]
      %v711 = vld [vmem:[%s5 + $0x30] sm:$0xf]
      %v712 = vld [vmem:[%s5 + $0x34] sm:$0xf]
      %v713 = vld [vmem:[%s5 + $0x38] sm:$0xf]
      %v714 = vld [vmem:[%s5 + $0x3c] sm:$0xf]
      %v715 = vld [vmem:[%s7] sm:$0xf]
      %v716 = vld [vmem:[%s7 + $0x4] sm:$0xf]
      %v717 = vld [vmem:[%s7 + $0x8] sm:$0xf]
      %v718 = vld [vmem:[%s7 + $0xc] sm:$0xf]
      %v719 = vld [vmem:[%s7 + $0x10] sm:$0xf]
      %v720 = vld [vmem:[%s7 + $0x14] sm:$0xf]
      %v721 = vld [vmem:[%s7 + $0x18] sm:$0xf]
      %v722 = vld [vmem:[%s7 + $0x1c] sm:$0xf]
      %v723 = vld [vmem:[%s7 + $0x20] sm:$0xf]
      %v724 = vld [vmem:[%s7 + $0x24] sm:$0xf]
      %v725 = vld [vmem:[%s7 + $0x28] sm:$0xf]
      %v726 = vld [vmem:[%s7 + $0x2c] sm:$0xf]
      %v727 = vld [vmem:[%s7 + $0x30] sm:$0xf]
      %v728 = vld [vmem:[%s7 + $0x34] sm:$0xf]
      %v729 = vld [vmem:[%s7 + $0x38] sm:$0xf]
      %v730 = vld [vmem:[%s7 + $0x3c] sm:$0xf]
      %v731 = vld [vmem:[%s530] sm:$0xf]
      %v732 = vld [vmem:[%s530 + $0x4] sm:$0xf]
      %v733 = vld [vmem:[%s530 + $0x8] sm:$0xf]
      %v734 = vld [vmem:[%s530 + $0xc] sm:$0xf]
      %v735 = vld [vmem:[%s530 + $0x10] sm:$0xf]
      %v736 = vld [vmem:[%s530 + $0x14] sm:$0xf]
      %v737 = vld [vmem:[%s530 + $0x18] sm:$0xf]
      %v738 = vld [vmem:[%s530 + $0x1c] sm:$0xf]
      %v739 = vld [vmem:[%s530 + $0x20] sm:$0xf]
      %v740 = vld [vmem:[%s530 + $0x24] sm:$0xf]
      %v741 = vld [vmem:[%s530 + $0x28] sm:$0xf]
      %v742 = vld [vmem:[%s530 + $0x2c] sm:$0xf]
      %v743 = vld [vmem:[%s530 + $0x30] sm:$0xf]
      %v744 = vld [vmem:[%s530 + $0x34] sm:$0xf]
      %v745 = vld [vmem:[%s530 + $0x38] sm:$0xf]
      %v746 = vld [vmem:[%s530 + $0x3c] sm:$0xf]
      %v747 = vld [vmem:[%s530 + $0x40] sm:$0xf]
      %v748 = vld [vmem:[%s530 + $0x44] sm:$0xf]
      %v749 = vld [vmem:[%s530 + $0x48] sm:$0xf]
      %v750 = vld [vmem:[%s530 + $0x4c] sm:$0xf]
      %v751 = vld [vmem:[%s530 + $0x50] sm:$0xf]
      %v752 = vld [vmem:[%s530 + $0x54] sm:$0xf]
      %v753 = vld [vmem:[%s530 + $0x58] sm:$0xf]
      %v754 = vld [vmem:[%s530 + $0x5c] sm:$0xf]
      %v755 = vld [vmem:[%s530 + $0x60] sm:$0xf]
      %v756 = vld [vmem:[%s530 + $0x64] sm:$0xf]
      %v757 = vld [vmem:[%s530 + $0x68] sm:$0xf]
      %v758 = vld [vmem:[%s530 + $0x6c] sm:$0xf]
      %v759 = vld [vmem:[%s530 + $0x70] sm:$0xf]
      %v760 = vld [vmem:[%s530 + $0x74] sm:$0xf]
      %v761 = vld [vmem:[%s530 + $0x78] sm:$0xf]
      %v762 = vld [vmem:[%s530 + $0x7c] sm:$0xf]
      %v763 = vld [vmem:[%s530 + $0x80] sm:$0xf]
      %v764 = vld [vmem:[%s530 + $0x84] sm:$0xf]
      %v765 = vld [vmem:[%s530 + $0x88] sm:$0xf]
      %v766 = vld [vmem:[%s530 + $0x8c] sm:$0xf]
      %v767 = vld [vmem:[%s530 + $0x90] sm:$0xf]
      %v768 = vld [vmem:[%s530 + $0x94] sm:$0xf]
      %v769 = vld [vmem:[%s530 + $0x98] sm:$0xf]
      %v770 = vld [vmem:[%s530 + $0x9c] sm:$0xf]
      %v771 = vld [vmem:[%s530 + $0xa0] sm:$0xf]
      %v772 = vld [vmem:[%s530 + $0xa4] sm:$0xf]
      %v773 = vld [vmem:[%s530 + $0xa8] sm:$0xf]
      %v774 = vld [vmem:[%s530 + $0xac] sm:$0xf]
      %v775 = vld [vmem:[%s530 + $0xb0] sm:$0xf]
      %v776 = vld [vmem:[%s530 + $0xb4] sm:$0xf]
      %v777 = vld [vmem:[%s530 + $0xb8] sm:$0xf]
      %v778 = vld [vmem:[%s530 + $0xbc] sm:$0xf]
      %v779 = vld [vmem:[%s530 + $0xc0] sm:$0xf]
      %v780 = vld [vmem:[%s530 + $0xc4] sm:$0xf]
      %v781 = vld [vmem:[%s543] sm:$0xf]
      %v782 = vld [vmem:[%s543 + $0x4] sm:$0xf]
      %v783 = vld [vmem:[%s543 + $0x8] sm:$0xf]
      %v784 = vld [vmem:[%s543 + $0xc] sm:$0xf]
      %v785 = vld [vmem:[%s543 + $0x10] sm:$0xf]
      %v786 = vld [vmem:[%s543 + $0x14] sm:$0xf]
      %v787 = vld [vmem:[%s543 + $0x18] sm:$0xf]
      %v788 = vld [vmem:[%s543 + $0x1c] sm:$0xf]
      %v789 = vld [vmem:[%s543 + $0x20] sm:$0xf]
      %v790 = vld [vmem:[%s543 + $0x24] sm:$0xf]
      %v791 = vld [vmem:[%s543 + $0x28] sm:$0xf]
      %v792 = vld [vmem:[%s543 + $0x2c] sm:$0xf]
      %v793 = vld [vmem:[%s543 + $0x30] sm:$0xf]
      %v794 = vld [vmem:[%s543 + $0x34] sm:$0xf]
      %v795 = vld [vmem:[%s543 + $0x38] sm:$0xf]
      %v796 = vld [vmem:[%s543 + $0x3c] sm:$0xf]
      %v797 = vld [vmem:[%s543 + $0x40] sm:$0xf]
      %v798 = vld [vmem:[%s543 + $0x44] sm:$0xf]
      %v799 = vld [vmem:[%s543 + $0x48] sm:$0xf]
      %v800 = vld [vmem:[%s543 + $0x4c] sm:$0xf]
      %v801 = vld [vmem:[%s543 + $0x50] sm:$0xf]
      %v802 = vld [vmem:[%s543 + $0x54] sm:$0xf]
      %v803 = vld [vmem:[%s543 + $0x58] sm:$0xf]
      %v804 = vld [vmem:[%s543 + $0x5c] sm:$0xf]
      %v805 = vld [vmem:[%s543 + $0x60] sm:$0xf]
      %v806 = vld [vmem:[%s543 + $0x64] sm:$0xf]
      %v807 = vld [vmem:[%s543 + $0x68] sm:$0xf]
      %v808 = vld [vmem:[%s543 + $0x6c] sm:$0xf]
      %v809 = vld [vmem:[%s543 + $0x70] sm:$0xf]
      %v810 = vld [vmem:[%s543 + $0x74] sm:$0xf]
      %v811 = vld [vmem:[%s543 + $0x78] sm:$0xf]
      %v812 = vld [vmem:[%s543 + $0x7c] sm:$0xf]
      %v813 = vld [vmem:[%s543 + $0x80] sm:$0xf]
      %v814 = vld [vmem:[%s543 + $0x84] sm:$0xf]
      %v815 = vld [vmem:[%s543 + $0x88] sm:$0xf]
      %v816 = vld [vmem:[%s543 + $0x8c] sm:$0xf]
      %v817 = vld [vmem:[%s543 + $0x90] sm:$0xf]
      %v818 = vld [vmem:[%s543 + $0x94] sm:$0xf]
      %v819 = vld [vmem:[%s543 + $0x98] sm:$0xf]
      %v820 = vld [vmem:[%s543 + $0x9c] sm:$0xf]
      %v821 = vld [vmem:[%s543 + $0xa0] sm:$0xf]
      %v822 = vld [vmem:[%s543 + $0xa4] sm:$0xf]
      %v823 = vld [vmem:[%s543 + $0xa8] sm:$0xf]
      %v824 = vld [vmem:[%s543 + $0xac] sm:$0xf]
      %v825 = vld [vmem:[%s543 + $0xb0] sm:$0xf]
      %v826 = vld [vmem:[%s543 + $0xb4] sm:$0xf]
      %v827 = vld [vmem:[%s543 + $0xb8] sm:$0xf]
      %v828 = vld [vmem:[%s543 + $0xbc] sm:$0xf]
      %v829 = vld [vmem:[%s543 + $0xc0] sm:$0xf]
      %v830 = vld [vmem:[%s543 + $0xc4] sm:$0xf]
      %v881 = vunpack.c.l.b16 %v731
      %v882 = vunpack.c.l.b16 %v732
      %v883 = vunpack.c.l.b16 %v733
      %v884 = vunpack.c.l.b16 %v734
      %v885 = vunpack.c.l.b16 %v735
      %v886 = vunpack.c.l.b16 %v736
      %v887 = vunpack.c.l.b16 %v737
      %v888 = vunpack.c.l.b16 %v738
      %v889 = vunpack.c.l.b16 %v739
      %v890 = vunpack.c.l.b16 %v740
      %v891 = vunpack.c.l.b16 %v741
      %v892 = vunpack.c.l.b16 %v742
      %v893 = vunpack.c.l.b16 %v743
      %v894 = vunpack.c.l.b16 %v744
      %v895 = vunpack.c.l.b16 %v745
      %v896 = vunpack.c.l.b16 %v746
      %v897 = vunpack.c.l.b16 %v747
      %v898 = vunpack.c.l.b16 %v748
      %v899 = vunpack.c.l.b16 %v749
      %v900 = vunpack.c.l.b16 %v750
      %v901 = vunpack.c.l.b16 %v751
      %v902 = vunpack.c.l.b16 %v752
      %v903 = vunpack.c.l.b16 %v753
      %v904 = vunpack.c.l.b16 %v754
      %v905 = vunpack.c.l.b16 %v755
      %v906 = vunpack.c.l.b16 %v756
      %v907 = vunpack.c.l.b16 %v757
      %v908 = vunpack.c.l.b16 %v758
      %v909 = vunpack.c.l.b16 %v759
      %v910 = vunpack.c.l.b16 %v760
      %v911 = vunpack.c.l.b16 %v761
      %v912 = vunpack.c.l.b16 %v762
      %v913 = vunpack.c.l.b16 %v763
      %v914 = vunpack.c.l.b16 %v764
      %v915 = vunpack.c.l.b16 %v765
      %v916 = vunpack.c.l.b16 %v766
      %v917 = vunpack.c.l.b16 %v767
      %v918 = vunpack.c.l.b16 %v768
      %v919 = vunpack.c.l.b16 %v769
      %v920 = vunpack.c.l.b16 %v770
      %v921 = vunpack.c.l.b16 %v771
      %v922 = vunpack.c.l.b16 %v772
      %v923 = vunpack.c.l.b16 %v773
      %v924 = vunpack.c.l.b16 %v774
      %v925 = vunpack.c.l.b16 %v775
      %v926 = vunpack.c.l.b16 %v776
      %v927 = vunpack.c.l.b16 %v777
      %v928 = vunpack.c.l.b16 %v778
      %v929 = vunpack.c.l.b16 %v779
      %v930 = vunpack.c.l.b16 %v780
      %v931 = vpack.c.b16 %v882, %v881
      %v932 = vpack.c.b16 %v884, %v883
      %v933 = vpack.c.b16 %v886, %v885
      %v934 = vpack.c.b16 %v888, %v887
      %v935 = vpack.c.b16 %v890, %v889
      %v936 = vpack.c.b16 %v892, %v891
      %v937 = vpack.c.b16 %v894, %v893
      %v938 = vpack.c.b16 %v896, %v895
      %v939 = vpack.c.b16 %v898, %v897
      %v940 = vpack.c.b16 %v900, %v899
      %v941 = vpack.c.b16 %v902, %v901
      %v942 = vpack.c.b16 %v904, %v903
      %v943 = vpack.c.b16 %v906, %v905
      %v944 = vpack.c.b16 %v908, %v907
      %v945 = vpack.c.b16 %v910, %v909
      %v946 = vpack.c.b16 %v912, %v911
      %v947 = vpack.c.b16 %v914, %v913
      %v948 = vpack.c.b16 %v916, %v915
      %v949 = vpack.c.b16 %v918, %v917
      %v950 = vpack.c.b16 %v920, %v919
      %v951 = vpack.c.b16 %v922, %v921
      %v952 = vpack.c.b16 %v924, %v923
      %v953 = vpack.c.b16 %v926, %v925
      %v954 = vpack.c.b16 %v928, %v927
      %v955 = vpack.c.b16 %v930, %v929
      %v997 = vunpack.c.l.b16 %v699
      %v998 = vunpack.c.l.b16 %v700
      %v999 = vunpack.c.l.b16 %v701
      %v1000 = vunpack.c.l.b16 %v702
      %v1001 = vunpack.c.l.b16 %v703
      %v1002 = vunpack.c.l.b16 %v704
      %v1003 = vunpack.c.l.b16 %v705
      %v1004 = vunpack.c.l.b16 %v706
      %v1005 = vunpack.c.l.b16 %v707
      %v1006 = vunpack.c.l.b16 %v708
      %v1007 = vunpack.c.l.b16 %v709
      %v1008 = vunpack.c.l.b16 %v710
      %v1009 = vunpack.c.l.b16 %v711
      %v1010 = vunpack.c.l.b16 %v712
      %v1011 = vunpack.c.l.b16 %v713
      %v1012 = vunpack.c.l.b16 %v714
      %v1013 = vpack.c.b16 %v998, %v997
      %v1014 = vpack.c.b16 %v1000, %v999
      %v1015 = vpack.c.b16 %v1002, %v1001
      %v1016 = vpack.c.b16 %v1004, %v1003
      %v1017 = vpack.c.b16 %v1006, %v1005
      %v1018 = vpack.c.b16 %v1008, %v1007
      %v1019 = vpack.c.b16 %v1010, %v1009
      %v1020 = vpack.c.b16 %v1012, %v1011
      %1029 = vmatprep.subr.bf16.mxu0 0
      %1030 = vmatpush1.bf16.msra.mxu0 %v1020
      %1031 = vmatprep.subr.bf16.mxu0 0
      %1032 = vmatpush1.bf16.msra.mxu0 %v1019
      %1033 = vmatprep.subr.bf16.mxu0 0
      %1034 = vmatpush1.bf16.msra.mxu0 %v1018
      %1035 = vmatprep.subr.bf16.mxu0 0
      %1036 = vmatpush1.bf16.msra.mxu0 %v1017
      %1037 = vmatprep.subr.bf16.mxu0 0
      %1038 = vmatpush1.bf16.msra.mxu0 %v1016
      %1039 = vmatprep.subr.bf16.mxu0 0
      %1040 = vmatpush1.bf16.msra.mxu0 %v1015
      %1041 = vmatprep.subr.bf16.mxu0 0
      %1042 = vmatpush1.bf16.msra.mxu0 %v1014
      %1043 = vmatprep.subr.bf16.mxu0 0
      %1044 = vmatpush1.bf16.msra.mxu0 %v1013
      %1045 = vmatprep.subr.bf16.mxu0 0
      %1046 = vmatpush2.bf16.msra.mxu0 0
      %1047 = vmatprep.subr.bf16.mxu0 0
      %1048 = vmatpush2.bf16.msra.mxu0 0
      %1049 = vmatprep.subr.bf16.mxu0 0
      %1050 = vmatpush2.bf16.msra.mxu0 0
      %1051 = vmatprep.subr.bf16.mxu0 0
      %1052 = vmatpush2.bf16.msra.mxu0 0
      %1053 = vmatprep.subr.bf16.mxu0 0
      %1054 = vmatpush2.bf16.msra.mxu0 0
      %1055 = vmatprep.subr.bf16.mxu0 0
      %1056 = vmatpush2.bf16.msra.mxu0 0
      %1057 = vmatprep.subr.bf16.mxu0 0
      %1058 = vmatpush2.bf16.msra.mxu0 0
      %1059 = vmatprep.subr.bf16.mxu0 0
      %1060 = vmatpush2.bf16.msra.mxu0 0
      %1061 = vmatprep.mubr.bf16.mxu0 0
      %1062 = vmatmul.mubr.bf16.gmra.mxu0 %v931
      %v1063 = vpop.f32.mrf.mxu0
      %v1064 = vadd.f32 0.0, %v1063
      %v1065 = vpop.f32.mrf.mxu0
      %v1066 = vpop.f32.mrf.mxu0
      %v1067 = vadd.f32 0.0, %v1066
      %v1068 = vpop.f32.mrf.mxu0
      %1069 = vmatprep.mubr.bf16.mxu0 0
      %1070 = vmatmul.mubr.bf16.gmra.mxu0 %v932
      %v1071 = vpop.f32.mrf.mxu0
      %v1072 = vadd.f32 0.0, %v1071
      %v1073 = vpop.f32.mrf.mxu0
      %v1074 = vpop.f32.mrf.mxu0
      %v1075 = vadd.f32 0.0, %v1074
      %v1076 = vpop.f32.mrf.mxu0
      %1077 = vmatprep.mubr.bf16.mxu0 0
      %1078 = vmatmul.mubr.bf16.gmra.mxu0 %v933
      %v1079 = vpop.f32.mrf.mxu0
      %v1080 = vadd.f32 0.0, %v1079
      %v1081 = vpop.f32.mrf.mxu0
      %v1082 = vpop.f32.mrf.mxu0
      %v1083 = vadd.f32 0.0, %v1082
      %v1084 = vpop.f32.mrf.mxu0
      %1085 = vmatprep.mubr.bf16.mxu0 0
      %1086 = vmatmul.mubr.bf16.gmra.mxu0 %v934
      %v1087 = vpop.f32.mrf.mxu0
      %v1088 = vadd.f32 0.0, %v1087
      %v1089 = vpop.f32.mrf.mxu0
      %v1090 = vpop.f32.mrf.mxu0
      %v1091 = vadd.f32 0.0, %v1090
      %v1092 = vpop.f32.mrf.mxu0
      %1093 = vmatprep.mubr.bf16.mxu0 0
      %1094 = vmatmul.mubr.bf16.gmra.mxu0 %v935
      %v1095 = vpop.f32.mrf.mxu0
      %v1096 = vadd.f32 0.0, %v1095
      %v1097 = vpop.f32.mrf.mxu0
      %v1098 = vpop.f32.mrf.mxu0
      %v1099 = vadd.f32 0.0, %v1098
      %v1100 = vpop.f32.mrf.mxu0
      %1101 = vmatprep.mubr.bf16.mxu0 0
      %1102 = vmatmul.mubr.bf16.gmra.mxu0 %v936
      %v1103 = vpop.f32.mrf.mxu0
      %v1104 = vadd.f32 0.0, %v1103
      %v1105 = vpop.f32.mrf.mxu0
      %v1106 = vpop.f32.mrf.mxu0
      %v1107 = vadd.f32 0.0, %v1106
      %v1108 = vpop.f32.mrf.mxu0
      %1109 = vmatprep.mubr.bf16.mxu0 0
      %1110 = vmatmul.mubr.bf16.gmra.mxu0 %v937
      %v1111 = vpop.f32.mrf.mxu0
      %v1112 = vadd.f32 0.0, %v1111
      %v1113 = vpop.f32.mrf.mxu0
      %v1114 = vpop.f32.mrf.mxu0
      %v1115 = vadd.f32 0.0, %v1114
      %v1116 = vpop.f32.mrf.mxu0
      %1117 = vmatprep.mubr.bf16.mxu0 0
      %1118 = vmatmul.mubr.bf16.gmra.mxu0 %v938
      %v1119 = vpop.f32.mrf.mxu0
      %v1120 = vadd.f32 0.0, %v1119
      %v1121 = vpop.f32.mrf.mxu0
      %v1122 = vpop.f32.mrf.mxu0
      %v1123 = vadd.f32 0.0, %v1122
      %v1124 = vpop.f32.mrf.mxu0
      %1125 = vmatprep.mubr.bf16.mxu0 0
      %1126 = vmatmul.mubr.bf16.gmra.mxu0 %v939
      %v1127 = vpop.f32.mrf.mxu0
      %v1128 = vadd.f32 0.0, %v1127
      %v1129 = vpop.f32.mrf.mxu0
      %v1130 = vpop.f32.mrf.mxu0
      %v1131 = vadd.f32 0.0, %v1130
      %v1132 = vpop.f32.mrf.mxu0
      %1133 = vmatprep.mubr.bf16.mxu0 0
      %1134 = vmatmul.mubr.bf16.gmra.mxu0 %v940
      %v1135 = vpop.f32.mrf.mxu0
      %v1136 = vadd.f32 0.0, %v1135
      %v1137 = vpop.f32.mrf.mxu0
      %v1138 = vpop.f32.mrf.mxu0
      %v1139 = vadd.f32 0.0, %v1138
      %v1140 = vpop.f32.mrf.mxu0
      %1141 = vmatprep.mubr.bf16.mxu0 0
      %1142 = vmatmul.mubr.bf16.gmra.mxu0 %v941
      %v1143 = vpop.f32.mrf.mxu0
      %v1144 = vadd.f32 0.0, %v1143
      %v1145 = vpop.f32.mrf.mxu0
      %v1146 = vpop.f32.mrf.mxu0
      %v1147 = vadd.f32 0.0, %v1146
      %v1148 = vpop.f32.mrf.mxu0
      %1149 = vmatprep.mubr.bf16.mxu0 0
      %1150 = vmatmul.mubr.bf16.gmra.mxu0 %v942
      %v1151 = vpop.f32.mrf.mxu0
      %v1152 = vadd.f32 0.0, %v1151
      %v1153 = vpop.f32.mrf.mxu0
      %v1154 = vpop.f32.mrf.mxu0
      %v1155 = vadd.f32 0.0, %v1154
      %v1156 = vpop.f32.mrf.mxu0
      %1157 = vmatprep.mubr.bf16.mxu0 0
      %1158 = vmatmul.mubr.bf16.gmra.mxu0 %v943
      %v1159 = vpop.f32.mrf.mxu0
      %v1160 = vadd.f32 0.0, %v1159
      %v1161 = vpop.f32.mrf.mxu0
      %v1162 = vpop.f32.mrf.mxu0
      %v1163 = vadd.f32 0.0, %v1162
      %v1164 = vpop.f32.mrf.mxu0
      %1165 = vmatprep.mubr.bf16.mxu0 0
      %1166 = vmatmul.mubr.bf16.gmra.mxu0 %v944
      %v1167 = vpop.f32.mrf.mxu0
      %v1168 = vadd.f32 0.0, %v1167
      %v1169 = vpop.f32.mrf.mxu0
      %v1170 = vpop.f32.mrf.mxu0
      %v1171 = vadd.f32 0.0, %v1170
      %v1172 = vpop.f32.mrf.mxu0
      %1173 = vmatprep.mubr.bf16.mxu0 0
      %1174 = vmatmul.mubr.bf16.gmra.mxu0 %v945
      %v1175 = vpop.f32.mrf.mxu0
      %v1176 = vadd.f32 0.0, %v1175
      %v1177 = vpop.f32.mrf.mxu0
      %v1178 = vpop.f32.mrf.mxu0
      %v1179 = vadd.f32 0.0, %v1178
      %v1180 = vpop.f32.mrf.mxu0
      %1181 = vmatprep.mubr.bf16.mxu0 0
      %1182 = vmatmul.mubr.bf16.gmra.mxu0 %v946
      %v1183 = vpop.f32.mrf.mxu0
      %v1184 = vadd.f32 0.0, %v1183
      %v1185 = vpop.f32.mrf.mxu0
      %v1186 = vpop.f32.mrf.mxu0
      %v1187 = vadd.f32 0.0, %v1186
      %v1188 = vpop.f32.mrf.mxu0
      %1189 = vmatprep.mubr.bf16.mxu0 0
      %1190 = vmatmul.mubr.bf16.gmra.mxu0 %v947
      %v1191 = vpop.f32.mrf.mxu0
      %v1192 = vadd.f32 0.0, %v1191
      %v1193 = vpop.f32.mrf.mxu0
      %v1194 = vpop.f32.mrf.mxu0
      %v1195 = vadd.f32 0.0, %v1194
      %v1196 = vpop.f32.mrf.mxu0
      %1197 = vmatprep.mubr.bf16.mxu0 0
      %1198 = vmatmul.mubr.bf16.gmra.mxu0 %v948
      %v1199 = vpop.f32.mrf.mxu0
      %v1200 = vadd.f32 0.0, %v1199
      %v1201 = vpop.f32.mrf.mxu0
      %v1202 = vpop.f32.mrf.mxu0
      %v1203 = vadd.f32 0.0, %v1202
      %v1204 = vpop.f32.mrf.mxu0
      %1205 = vmatprep.mubr.bf16.mxu0 0
      %1206 = vmatmul.mubr.bf16.gmra.mxu0 %v949
      %v1207 = vpop.f32.mrf.mxu0
      %v1208 = vadd.f32 0.0, %v1207
      %v1209 = vpop.f32.mrf.mxu0
      %v1210 = vpop.f32.mrf.mxu0
      %v1211 = vadd.f32 0.0, %v1210
      %v1212 = vpop.f32.mrf.mxu0
      %1213 = vmatprep.mubr.bf16.mxu0 0
      %1214 = vmatmul.mubr.bf16.gmra.mxu0 %v950
      %v1215 = vpop.f32.mrf.mxu0
      %v1216 = vadd.f32 0.0, %v1215
      %v1217 = vpop.f32.mrf.mxu0
      %v1218 = vpop.f32.mrf.mxu0
      %v1219 = vadd.f32 0.0, %v1218
      %v1220 = vpop.f32.mrf.mxu0
      %1221 = vmatprep.mubr.bf16.mxu0 0
      %1222 = vmatmul.mubr.bf16.gmra.mxu0 %v951
      %v1223 = vpop.f32.mrf.mxu0
      %v1224 = vadd.f32 0.0, %v1223
      %v1225 = vpop.f32.mrf.mxu0
      %v1226 = vpop.f32.mrf.mxu0
      %v1227 = vadd.f32 0.0, %v1226
      %v1228 = vpop.f32.mrf.mxu0
      %1229 = vmatprep.mubr.bf16.mxu0 0
      %1230 = vmatmul.mubr.bf16.gmra.mxu0 %v952
      %v1231 = vpop.f32.mrf.mxu0
      %v1232 = vadd.f32 0.0, %v1231
      %v1233 = vpop.f32.mrf.mxu0
      %v1234 = vpop.f32.mrf.mxu0
      %v1235 = vadd.f32 0.0, %v1234
      %v1236 = vpop.f32.mrf.mxu0
      %1237 = vmatprep.mubr.bf16.mxu0 0
      %1238 = vmatmul.mubr.bf16.gmra.mxu0 %v953
      %v1239 = vpop.f32.mrf.mxu0
      %v1240 = vadd.f32 0.0, %v1239
      %v1241 = vpop.f32.mrf.mxu0
      %v1242 = vpop.f32.mrf.mxu0
      %v1243 = vadd.f32 0.0, %v1242
      %v1244 = vpop.f32.mrf.mxu0
      %1245 = vmatprep.mubr.bf16.mxu0 0
      %1246 = vmatmul.mubr.bf16.gmra.mxu0 %v954
      %v1247 = vpop.f32.mrf.mxu0
      %v1248 = vadd.f32 0.0, %v1247
      %v1249 = vpop.f32.mrf.mxu0
      %v1250 = vpop.f32.mrf.mxu0
      %v1251 = vadd.f32 0.0, %v1250
      %v1252 = vpop.f32.mrf.mxu0
      %1253 = vmatprep.mubr.bf16.mxu0 0
      %1254 = vmatmul.mubr.bf16.gmra.mxu0 %v955
      %v1255 = vpop.f32.mrf.mxu0
      %v1256 = vadd.f32 0.0, %v1255
      %v1257 = vpop.f32.mrf.mxu0
      %v1258 = vpop.f32.mrf.mxu0
      %v1259 = vadd.f32 0.0, %v1258
      %v1260 = vpop.f32.mrf.mxu0
      %1261 = vdwg.mxu0
      %v1312 = vunpack.c.l.b16 %v781
      %v1313 = vunpack.c.l.b16 %v782
      %v1314 = vunpack.c.l.b16 %v783
      %v1315 = vunpack.c.l.b16 %v784
      %v1316 = vunpack.c.l.b16 %v785
      %v1317 = vunpack.c.l.b16 %v786
      %v1318 = vunpack.c.l.b16 %v787
      %v1319 = vunpack.c.l.b16 %v788
      %v1320 = vunpack.c.l.b16 %v789
      %v1321 = vunpack.c.l.b16 %v790
      %v1322 = vunpack.c.l.b16 %v791
      %v1323 = vunpack.c.l.b16 %v792
      %v1324 = vunpack.c.l.b16 %v793
      %v1325 = vunpack.c.l.b16 %v794
      %v1326 = vunpack.c.l.b16 %v795
      %v1327 = vunpack.c.l.b16 %v796
      %v1328 = vunpack.c.l.b16 %v797
      %v1329 = vunpack.c.l.b16 %v798
      %v1330 = vunpack.c.l.b16 %v799
      %v1331 = vunpack.c.l.b16 %v800
      %v1332 = vunpack.c.l.b16 %v801
      %v1333 = vunpack.c.l.b16 %v802
      %v1334 = vunpack.c.l.b16 %v803
      %v1335 = vunpack.c.l.b16 %v804
      %v1336 = vunpack.c.l.b16 %v805
      %v1337 = vunpack.c.l.b16 %v806
      %v1338 = vunpack.c.l.b16 %v807
      %v1339 = vunpack.c.l.b16 %v808
      %v1340 = vunpack.c.l.b16 %v809
      %v1341 = vunpack.c.l.b16 %v810
      %v1342 = vunpack.c.l.b16 %v811
      %v1343 = vunpack.c.l.b16 %v812
      %v1344 = vunpack.c.l.b16 %v813
      %v1345 = vunpack.c.l.b16 %v814
      %v1346 = vunpack.c.l.b16 %v815
      %v1347 = vunpack.c.l.b16 %v816
      %v1348 = vunpack.c.l.b16 %v817
      %v1349 = vunpack.c.l.b16 %v818
      %v1350 = vunpack.c.l.b16 %v819
      %v1351 = vunpack.c.l.b16 %v820
      %v1352 = vunpack.c.l.b16 %v821
      %v1353 = vunpack.c.l.b16 %v822
      %v1354 = vunpack.c.l.b16 %v823
      %v1355 = vunpack.c.l.b16 %v824
      %v1356 = vunpack.c.l.b16 %v825
      %v1357 = vunpack.c.l.b16 %v826
      %v1358 = vunpack.c.l.b16 %v827
      %v1359 = vunpack.c.l.b16 %v828
      %v1360 = vunpack.c.l.b16 %v829
      %v1361 = vunpack.c.l.b16 %v830
      %v1362 = vpack.c.b16 %v1313, %v1312
      %v1363 = vpack.c.b16 %v1315, %v1314
      %v1364 = vpack.c.b16 %v1317, %v1316
      %v1365 = vpack.c.b16 %v1319, %v1318
      %v1366 = vpack.c.b16 %v1321, %v1320
      %v1367 = vpack.c.b16 %v1323, %v1322
      %v1368 = vpack.c.b16 %v1325, %v1324
      %v1369 = vpack.c.b16 %v1327, %v1326
      %v1370 = vpack.c.b16 %v1329, %v1328
      %v1371 = vpack.c.b16 %v1331, %v1330
      %v1372 = vpack.c.b16 %v1333, %v1332
      %v1373 = vpack.c.b16 %v1335, %v1334
      %v1374 = vpack.c.b16 %v1337, %v1336
      %v1375 = vpack.c.b16 %v1339, %v1338
      %v1376 = vpack.c.b16 %v1341, %v1340
      %v1377 = vpack.c.b16 %v1343, %v1342
      %v1378 = vpack.c.b16 %v1345, %v1344
      %v1379 = vpack.c.b16 %v1347, %v1346
      %v1380 = vpack.c.b16 %v1349, %v1348
      %v1381 = vpack.c.b16 %v1351, %v1350
      %v1382 = vpack.c.b16 %v1353, %v1352
      %v1383 = vpack.c.b16 %v1355, %v1354
      %v1384 = vpack.c.b16 %v1357, %v1356
      %v1385 = vpack.c.b16 %v1359, %v1358
      %v1386 = vpack.c.b16 %v1361, %v1360
      %v1428 = vunpack.c.l.b16 %v715
      %v1429 = vunpack.c.l.b16 %v716
      %v1430 = vunpack.c.l.b16 %v717
      %v1431 = vunpack.c.l.b16 %v718
      %v1432 = vunpack.c.l.b16 %v719
      %v1433 = vunpack.c.l.b16 %v720
      %v1434 = vunpack.c.l.b16 %v721
      %v1435 = vunpack.c.l.b16 %v722
      %v1436 = vunpack.c.l.b16 %v723
      %v1437 = vunpack.c.l.b16 %v724
      %v1438 = vunpack.c.l.b16 %v725
      %v1439 = vunpack.c.l.b16 %v726
      %v1440 = vunpack.c.l.b16 %v727
      %v1441 = vunpack.c.l.b16 %v728
      %v1442 = vunpack.c.l.b16 %v729
      %v1443 = vunpack.c.l.b16 %v730
      %v1444 = vpack.c.b16 %v1429, %v1428
      %v1445 = vpack.c.b16 %v1431, %v1430
      %v1446 = vpack.c.b16 %v1433, %v1432
      %v1447 = vpack.c.b16 %v1435, %v1434
      %v1448 = vpack.c.b16 %v1437, %v1436
      %v1449 = vpack.c.b16 %v1439, %v1438
      %v1450 = vpack.c.b16 %v1441, %v1440
      %v1451 = vpack.c.b16 %v1443, %v1442
      %1460 = vmatprep.subr.bf16.mxu0 0
      %1461 = vmatpush1.bf16.msra.mxu0 %v1451
      %1462 = vmatprep.subr.bf16.mxu0 0
      %1463 = vmatpush1.bf16.msra.mxu0 %v1450
      %1464 = vmatprep.subr.bf16.mxu0 0
      %1465 = vmatpush1.bf16.msra.mxu0 %v1449
      %1466 = vmatprep.subr.bf16.mxu0 0
      %1467 = vmatpush1.bf16.msra.mxu0 %v1448
      %1468 = vmatprep.subr.bf16.mxu0 0
      %1469 = vmatpush1.bf16.msra.mxu0 %v1447
      %1470 = vmatprep.subr.bf16.mxu0 0
      %1471 = vmatpush1.bf16.msra.mxu0 %v1446
      %1472 = vmatprep.subr.bf16.mxu0 0
      %1473 = vmatpush1.bf16.msra.mxu0 %v1445
      %1474 = vmatprep.subr.bf16.mxu0 0
      %1475 = vmatpush1.bf16.msra.mxu0 %v1444
      %1476 = vmatprep.subr.bf16.mxu0 0
      %1477 = vmatpush2.bf16.msra.mxu0 0
      %1478 = vmatprep.subr.bf16.mxu0 0
      %1479 = vmatpush2.bf16.msra.mxu0 0
      %1480 = vmatprep.subr.bf16.mxu0 0
      %1481 = vmatpush2.bf16.msra.mxu0 0
      %1482 = vmatprep.subr.bf16.mxu0 0
      %1483 = vmatpush2.bf16.msra.mxu0 0
      %1484 = vmatprep.subr.bf16.mxu0 0
      %1485 = vmatpush2.bf16.msra.mxu0 0
      %1486 = vmatprep.subr.bf16.mxu0 0
      %1487 = vmatpush2.bf16.msra.mxu0 0
      %1488 = vmatprep.subr.bf16.mxu0 0
      %1489 = vmatpush2.bf16.msra.mxu0 0
      %1490 = vmatprep.subr.bf16.mxu0 0
      %1491 = vmatpush2.bf16.msra.mxu0 0
      %1492 = vmatprep.mubr.bf16.mxu0 0
      %1493 = vmatmul.mubr.bf16.gmra.mxu0 %v1362
      %v1494 = vpop.f32.mrf.mxu0
      %v1495 = vadd.f32 0.0, %v1494
      %v1496 = vpop.f32.mrf.mxu0
      %v1497 = vpop.f32.mrf.mxu0
      %v1498 = vadd.f32 0.0, %v1497
      %v1499 = vpop.f32.mrf.mxu0
      %1500 = vmatprep.mubr.bf16.mxu0 0
      %1501 = vmatmul.mubr.bf16.gmra.mxu0 %v1363
      %v1502 = vpop.f32.mrf.mxu0
      %v1503 = vadd.f32 0.0, %v1502
      %v1504 = vpop.f32.mrf.mxu0
      %v1505 = vpop.f32.mrf.mxu0
      %v1506 = vadd.f32 0.0, %v1505
      %v1507 = vpop.f32.mrf.mxu0
      %1508 = vmatprep.mubr.bf16.mxu0 0
      %1509 = vmatmul.mubr.bf16.gmra.mxu0 %v1364
      %v1510 = vpop.f32.mrf.mxu0
      %v1511 = vadd.f32 0.0, %v1510
      %v1512 = vpop.f32.mrf.mxu0
      %v1513 = vpop.f32.mrf.mxu0
      %v1514 = vadd.f32 0.0, %v1513
      %v1515 = vpop.f32.mrf.mxu0
      %1516 = vmatprep.mubr.bf16.mxu0 0
      %1517 = vmatmul.mubr.bf16.gmra.mxu0 %v1365
      %v1518 = vpop.f32.mrf.mxu0
      %v1519 = vadd.f32 0.0, %v1518
      %v1520 = vpop.f32.mrf.mxu0
      %v1521 = vpop.f32.mrf.mxu0
      %v1522 = vadd.f32 0.0, %v1521
      %v1523 = vpop.f32.mrf.mxu0
      %1524 = vmatprep.mubr.bf16.mxu0 0
      %1525 = vmatmul.mubr.bf16.gmra.mxu0 %v1366
      %v1526 = vpop.f32.mrf.mxu0
      %v1527 = vadd.f32 0.0, %v1526
      %v1528 = vpop.f32.mrf.mxu0
      %v1529 = vpop.f32.mrf.mxu0
      %v1530 = vadd.f32 0.0, %v1529
      %v1531 = vpop.f32.mrf.mxu0
      %1532 = vmatprep.mubr.bf16.mxu0 0
      %1533 = vmatmul.mubr.bf16.gmra.mxu0 %v1367
      %v1534 = vpop.f32.mrf.mxu0
      %v1535 = vadd.f32 0.0, %v1534
      %v1536 = vpop.f32.mrf.mxu0
      %v1537 = vpop.f32.mrf.mxu0
      %v1538 = vadd.f32 0.0, %v1537
      %v1539 = vpop.f32.mrf.mxu0
      %1540 = vmatprep.mubr.bf16.mxu0 0
      %1541 = vmatmul.mubr.bf16.gmra.mxu0 %v1368
      %v1542 = vpop.f32.mrf.mxu0
      %v1543 = vadd.f32 0.0, %v1542
      %v1544 = vpop.f32.mrf.mxu0
      %v1545 = vpop.f32.mrf.mxu0
      %v1546 = vadd.f32 0.0, %v1545
      %v1547 = vpop.f32.mrf.mxu0
      %1548 = vmatprep.mubr.bf16.mxu0 0
      %1549 = vmatmul.mubr.bf16.gmra.mxu0 %v1369
      %v1550 = vpop.f32.mrf.mxu0
      %v1551 = vadd.f32 0.0, %v1550
      %v1552 = vpop.f32.mrf.mxu0
      %v1553 = vpop.f32.mrf.mxu0
      %v1554 = vadd.f32 0.0, %v1553
      %v1555 = vpop.f32.mrf.mxu0
      %1556 = vmatprep.mubr.bf16.mxu0 0
      %1557 = vmatmul.mubr.bf16.gmra.mxu0 %v1370
      %v1558 = vpop.f32.mrf.mxu0
      %v1559 = vadd.f32 0.0, %v1558
      %v1560 = vpop.f32.mrf.mxu0
      %v1561 = vpop.f32.mrf.mxu0
      %v1562 = vadd.f32 0.0, %v1561
      %v1563 = vpop.f32.mrf.mxu0
      %1564 = vmatprep.mubr.bf16.mxu0 0
      %1565 = vmatmul.mubr.bf16.gmra.mxu0 %v1371
      %v1566 = vpop.f32.mrf.mxu0
      %v1567 = vadd.f32 0.0, %v1566
      %v1568 = vpop.f32.mrf.mxu0
      %v1569 = vpop.f32.mrf.mxu0
      %v1570 = vadd.f32 0.0, %v1569
      %v1571 = vpop.f32.mrf.mxu0
      %1572 = vmatprep.mubr.bf16.mxu0 0
      %1573 = vmatmul.mubr.bf16.gmra.mxu0 %v1372
      %v1574 = vpop.f32.mrf.mxu0
      %v1575 = vadd.f32 0.0, %v1574
      %v1576 = vpop.f32.mrf.mxu0
      %v1577 = vpop.f32.mrf.mxu0
      %v1578 = vadd.f32 0.0, %v1577
      %v1579 = vpop.f32.mrf.mxu0
      %1580 = vmatprep.mubr.bf16.mxu0 0
      %1581 = vmatmul.mubr.bf16.gmra.mxu0 %v1373
      %v1582 = vpop.f32.mrf.mxu0
      %v1583 = vadd.f32 0.0, %v1582
      %v1584 = vpop.f32.mrf.mxu0
      %v1585 = vpop.f32.mrf.mxu0
      %v1586 = vadd.f32 0.0, %v1585
      %v1587 = vpop.f32.mrf.mxu0
      %1588 = vmatprep.mubr.bf16.mxu0 0
      %1589 = vmatmul.mubr.bf16.gmra.mxu0 %v1374
      %v1590 = vpop.f32.mrf.mxu0
      %v1591 = vadd.f32 0.0, %v1590
      %v1592 = vpop.f32.mrf.mxu0
      %v1593 = vpop.f32.mrf.mxu0
      %v1594 = vadd.f32 0.0, %v1593
      %v1595 = vpop.f32.mrf.mxu0
      %1596 = vmatprep.mubr.bf16.mxu0 0
      %1597 = vmatmul.mubr.bf16.gmra.mxu0 %v1375
      %v1598 = vpop.f32.mrf.mxu0
      %v1599 = vadd.f32 0.0, %v1598
      %v1600 = vpop.f32.mrf.mxu0
      %v1601 = vpop.f32.mrf.mxu0
      %v1602 = vadd.f32 0.0, %v1601
      %v1603 = vpop.f32.mrf.mxu0
      %1604 = vmatprep.mubr.bf16.mxu0 0
      %1605 = vmatmul.mubr.bf16.gmra.mxu0 %v1376
      %v1606 = vpop.f32.mrf.mxu0
      %v1607 = vadd.f32 0.0, %v1606
      %v1608 = vpop.f32.mrf.mxu0
      %v1609 = vpop.f32.mrf.mxu0
      %v1610 = vadd.f32 0.0, %v1609
      %v1611 = vpop.f32.mrf.mxu0
      %1612 = vmatprep.mubr.bf16.mxu0 0
      %1613 = vmatmul.mubr.bf16.gmra.mxu0 %v1377
      %v1614 = vpop.f32.mrf.mxu0
      %v1615 = vadd.f32 0.0, %v1614
      %v1616 = vpop.f32.mrf.mxu0
      %v1617 = vpop.f32.mrf.mxu0
      %v1618 = vadd.f32 0.0, %v1617
      %v1619 = vpop.f32.mrf.mxu0
      %1620 = vmatprep.mubr.bf16.mxu0 0
      %1621 = vmatmul.mubr.bf16.gmra.mxu0 %v1378
      %v1622 = vpop.f32.mrf.mxu0
      %v1623 = vadd.f32 0.0, %v1622
      %v1624 = vpop.f32.mrf.mxu0
      %v1625 = vpop.f32.mrf.mxu0
      %v1626 = vadd.f32 0.0, %v1625
      %v1627 = vpop.f32.mrf.mxu0
      %1628 = vmatprep.mubr.bf16.mxu0 0
      %1629 = vmatmul.mubr.bf16.gmra.mxu0 %v1379
      %v1630 = vpop.f32.mrf.mxu0
      %v1631 = vadd.f32 0.0, %v1630
      %v1632 = vpop.f32.mrf.mxu0
      %v1633 = vpop.f32.mrf.mxu0
      %v1634 = vadd.f32 0.0, %v1633
      %v1635 = vpop.f32.mrf.mxu0
      %1636 = vmatprep.mubr.bf16.mxu0 0
      %1637 = vmatmul.mubr.bf16.gmra.mxu0 %v1380
      %v1638 = vpop.f32.mrf.mxu0
      %v1639 = vadd.f32 0.0, %v1638
      %v1640 = vpop.f32.mrf.mxu0
      %v1641 = vpop.f32.mrf.mxu0
      %v1642 = vadd.f32 0.0, %v1641
      %v1643 = vpop.f32.mrf.mxu0
      %1644 = vmatprep.mubr.bf16.mxu0 0
      %1645 = vmatmul.mubr.bf16.gmra.mxu0 %v1381
      %v1646 = vpop.f32.mrf.mxu0
      %v1647 = vadd.f32 0.0, %v1646
      %v1648 = vpop.f32.mrf.mxu0
      %v1649 = vpop.f32.mrf.mxu0
      %v1650 = vadd.f32 0.0, %v1649
      %v1651 = vpop.f32.mrf.mxu0
      %1652 = vmatprep.mubr.bf16.mxu0 0
      %1653 = vmatmul.mubr.bf16.gmra.mxu0 %v1382
      %v1654 = vpop.f32.mrf.mxu0
      %v1655 = vadd.f32 0.0, %v1654
      %v1656 = vpop.f32.mrf.mxu0
      %v1657 = vpop.f32.mrf.mxu0
      %v1658 = vadd.f32 0.0, %v1657
      %v1659 = vpop.f32.mrf.mxu0
      %1660 = vmatprep.mubr.bf16.mxu0 0
      %1661 = vmatmul.mubr.bf16.gmra.mxu0 %v1383
      %v1662 = vpop.f32.mrf.mxu0
      %v1663 = vadd.f32 0.0, %v1662
      %v1664 = vpop.f32.mrf.mxu0
      %v1665 = vpop.f32.mrf.mxu0
      %v1666 = vadd.f32 0.0, %v1665
      %v1667 = vpop.f32.mrf.mxu0
      %1668 = vmatprep.mubr.bf16.mxu0 0
      %1669 = vmatmul.mubr.bf16.gmra.mxu0 %v1384
      %v1670 = vpop.f32.mrf.mxu0
      %v1671 = vadd.f32 0.0, %v1670
      %v1672 = vpop.f32.mrf.mxu0
      %v1673 = vpop.f32.mrf.mxu0
      %v1674 = vadd.f32 0.0, %v1673
      %v1675 = vpop.f32.mrf.mxu0
      %1676 = vmatprep.mubr.bf16.mxu0 0
      %1677 = vmatmul.mubr.bf16.gmra.mxu0 %v1385
      %v1678 = vpop.f32.mrf.mxu0
      %v1679 = vadd.f32 0.0, %v1678
      %v1680 = vpop.f32.mrf.mxu0
      %v1681 = vpop.f32.mrf.mxu0
      %v1682 = vadd.f32 0.0, %v1681
      %v1683 = vpop.f32.mrf.mxu0
      %1684 = vmatprep.mubr.bf16.mxu0 0
      %1685 = vmatmul.mubr.bf16.gmra.mxu0 %v1386
      %v1686 = vpop.f32.mrf.mxu0
      %v1687 = vadd.f32 0.0, %v1686
      %v1688 = vpop.f32.mrf.mxu0
      %v1689 = vpop.f32.mrf.mxu0
      %v1690 = vadd.f32 0.0, %v1689
      %v1691 = vpop.f32.mrf.mxu0
      %1692 = vdwg.mxu0
      %v1743 = vunpack.c.l.b16 %v599
      %v1744 = vunpack.c.l.b16 %v600
      %v1745 = vunpack.c.l.b16 %v601
      %v1746 = vunpack.c.l.b16 %v602
      %v1747 = vunpack.c.l.b16 %v603
      %v1748 = vunpack.c.l.b16 %v604
      %v1749 = vunpack.c.l.b16 %v605
      %v1750 = vunpack.c.l.b16 %v606
      %v1751 = vunpack.c.l.b16 %v607
      %v1752 = vunpack.c.l.b16 %v608
      %v1753 = vunpack.c.l.b16 %v609
      %v1754 = vunpack.c.l.b16 %v610
      %v1755 = vunpack.c.l.b16 %v611
      %v1756 = vunpack.c.l.b16 %v612
      %v1757 = vunpack.c.l.b16 %v613
      %v1758 = vunpack.c.l.b16 %v614
      %v1759 = vunpack.c.l.b16 %v615
      %v1760 = vunpack.c.l.b16 %v616
      %v1761 = vunpack.c.l.b16 %v617
      %v1762 = vunpack.c.l.b16 %v618
      %v1763 = vunpack.c.l.b16 %v619
      %v1764 = vunpack.c.l.b16 %v620
      %v1765 = vunpack.c.l.b16 %v621
      %v1766 = vunpack.c.l.b16 %v622
      %v1767 = vunpack.c.l.b16 %v623
      %v1768 = vunpack.c.l.b16 %v624
      %v1769 = vunpack.c.l.b16 %v625
      %v1770 = vunpack.c.l.b16 %v626
      %v1771 = vunpack.c.l.b16 %v627
      %v1772 = vunpack.c.l.b16 %v628
      %v1773 = vunpack.c.l.b16 %v629
      %v1774 = vunpack.c.l.b16 %v630
      %v1775 = vunpack.c.l.b16 %v631
      %v1776 = vunpack.c.l.b16 %v632
      %v1777 = vunpack.c.l.b16 %v633
      %v1778 = vunpack.c.l.b16 %v634
      %v1779 = vunpack.c.l.b16 %v635
      %v1780 = vunpack.c.l.b16 %v636
      %v1781 = vunpack.c.l.b16 %v637
      %v1782 = vunpack.c.l.b16 %v638
      %v1783 = vunpack.c.l.b16 %v639
      %v1784 = vunpack.c.l.b16 %v640
      %v1785 = vunpack.c.l.b16 %v641
      %v1786 = vunpack.c.l.b16 %v642
      %v1787 = vunpack.c.l.b16 %v643
      %v1788 = vunpack.c.l.b16 %v644
      %v1789 = vunpack.c.l.b16 %v645
      %v1790 = vunpack.c.l.b16 %v646
      %v1791 = vunpack.c.l.b16 %v647
      %v1792 = vunpack.c.l.b16 %v648
      %v1793 = vpack.c.b16 %v1744, %v1743
      %v1794 = vpack.c.b16 %v1746, %v1745
      %v1795 = vpack.c.b16 %v1748, %v1747
      %v1796 = vpack.c.b16 %v1750, %v1749
      %v1797 = vpack.c.b16 %v1752, %v1751
      %v1798 = vpack.c.b16 %v1754, %v1753
      %v1799 = vpack.c.b16 %v1756, %v1755
      %v1800 = vpack.c.b16 %v1758, %v1757
      %v1801 = vpack.c.b16 %v1760, %v1759
      %v1802 = vpack.c.b16 %v1762, %v1761
      %v1803 = vpack.c.b16 %v1764, %v1763
      %v1804 = vpack.c.b16 %v1766, %v1765
      %v1805 = vpack.c.b16 %v1768, %v1767
      %v1806 = vpack.c.b16 %v1770, %v1769
      %v1807 = vpack.c.b16 %v1772, %v1771
      %v1808 = vpack.c.b16 %v1774, %v1773
      %v1809 = vpack.c.b16 %v1776, %v1775
      %v1810 = vpack.c.b16 %v1778, %v1777
      %v1811 = vpack.c.b16 %v1780, %v1779
      %v1812 = vpack.c.b16 %v1782, %v1781
      %v1813 = vpack.c.b16 %v1784, %v1783
      %v1814 = vpack.c.b16 %v1786, %v1785
      %v1815 = vpack.c.b16 %v1788, %v1787
      %v1816 = vpack.c.b16 %v1790, %v1789
      %v1817 = vpack.c.b16 %v1792, %v1791
      %v1859 = vunpack.c.l.b16 %v567
      %v1860 = vunpack.c.l.b16 %v568
      %v1861 = vunpack.c.l.b16 %v569
      %v1862 = vunpack.c.l.b16 %v570
      %v1863 = vunpack.c.l.b16 %v571
      %v1864 = vunpack.c.l.b16 %v572
      %v1865 = vunpack.c.l.b16 %v573
      %v1866 = vunpack.c.l.b16 %v574
      %v1867 = vunpack.c.l.b16 %v575
      %v1868 = vunpack.c.l.b16 %v576
      %v1869 = vunpack.c.l.b16 %v577
      %v1870 = vunpack.c.l.b16 %v578
      %v1871 = vunpack.c.l.b16 %v579
      %v1872 = vunpack.c.l.b16 %v580
      %v1873 = vunpack.c.l.b16 %v581
      %v1874 = vunpack.c.l.b16 %v582
      %v1875 = vpack.c.b16 %v1860, %v1859
      %v1876 = vpack.c.b16 %v1862, %v1861
      %v1877 = vpack.c.b16 %v1864, %v1863
      %v1878 = vpack.c.b16 %v1866, %v1865
      %v1879 = vpack.c.b16 %v1868, %v1867
      %v1880 = vpack.c.b16 %v1870, %v1869
      %v1881 = vpack.c.b16 %v1872, %v1871
      %v1882 = vpack.c.b16 %v1874, %v1873
      %1891 = vmatprep.subr.bf16.mxu0 0
      %1892 = vmatpush1.bf16.msra.mxu0 %v1882
      %1893 = vmatprep.subr.bf16.mxu0 0
      %1894 = vmatpush1.bf16.msra.mxu0 %v1881
      %1895 = vmatprep.subr.bf16.mxu0 0
      %1896 = vmatpush1.bf16.msra.mxu0 %v1880
      %1897 = vmatprep.subr.bf16.mxu0 0
      %1898 = vmatpush1.bf16.msra.mxu0 %v1879
      %1899 = vmatprep.subr.bf16.mxu0 0
      %1900 = vmatpush1.bf16.msra.mxu0 %v1878
      %1901 = vmatprep.subr.bf16.mxu0 0
      %1902 = vmatpush1.bf16.msra.mxu0 %v1877
      %1903 = vmatprep.subr.bf16.mxu0 0
      %1904 = vmatpush1.bf16.msra.mxu0 %v1876
      %1905 = vmatprep.subr.bf16.mxu0 0
      %1906 = vmatpush1.bf16.msra.mxu0 %v1875
      %1907 = vmatprep.subr.bf16.mxu0 0
      %1908 = vmatpush2.bf16.msra.mxu0 0
      %1909 = vmatprep.subr.bf16.mxu0 0
      %1910 = vmatpush2.bf16.msra.mxu0 0
      %1911 = vmatprep.subr.bf16.mxu0 0
      %1912 = vmatpush2.bf16.msra.mxu0 0
      %1913 = vmatprep.subr.bf16.mxu0 0
      %1914 = vmatpush2.bf16.msra.mxu0 0
      %1915 = vmatprep.subr.bf16.mxu0 0
      %1916 = vmatpush2.bf16.msra.mxu0 0
      %1917 = vmatprep.subr.bf16.mxu0 0
      %1918 = vmatpush2.bf16.msra.mxu0 0
      %1919 = vmatprep.subr.bf16.mxu0 0
      %1920 = vmatpush2.bf16.msra.mxu0 0
      %1921 = vmatprep.subr.bf16.mxu0 0
      %1922 = vmatpush2.bf16.msra.mxu0 0
      %1923 = vmatprep.mubr.bf16.mxu0 0
      %1924 = vmatmul.mubr.bf16.gmra.mxu0 %v1793
      %v1925 = vpop.f32.mrf.mxu0
      %v1926 = vadd.f32 %v1064, %v1925
      %v1927 = vpop.f32.mrf.mxu0
      %v1928 = vpop.f32.mrf.mxu0
      %v1929 = vadd.f32 %v1067, %v1928
      %v1930 = vpop.f32.mrf.mxu0
      %1931 = vmatprep.mubr.bf16.mxu0 0
      %1932 = vmatmul.mubr.bf16.gmra.mxu0 %v1794
      %v1933 = vpop.f32.mrf.mxu0
      %v1934 = vadd.f32 %v1072, %v1933
      %v1935 = vpop.f32.mrf.mxu0
      %v1936 = vpop.f32.mrf.mxu0
      %v1937 = vadd.f32 %v1075, %v1936
      %v1938 = vpop.f32.mrf.mxu0
      %1939 = vmatprep.mubr.bf16.mxu0 0
      %1940 = vmatmul.mubr.bf16.gmra.mxu0 %v1795
      %v1941 = vpop.f32.mrf.mxu0
      %v1942 = vadd.f32 %v1080, %v1941
      %v1943 = vpop.f32.mrf.mxu0
      %v1944 = vpop.f32.mrf.mxu0
      %v1945 = vadd.f32 %v1083, %v1944
      %v1946 = vpop.f32.mrf.mxu0
      %1947 = vmatprep.mubr.bf16.mxu0 0
      %1948 = vmatmul.mubr.bf16.gmra.mxu0 %v1796
      %v1949 = vpop.f32.mrf.mxu0
      %v1950 = vadd.f32 %v1088, %v1949
      %v1951 = vpop.f32.mrf.mxu0
      %v1952 = vpop.f32.mrf.mxu0
      %v1953 = vadd.f32 %v1091, %v1952
      %v1954 = vpop.f32.mrf.mxu0
      %1955 = vmatprep.mubr.bf16.mxu0 0
      %1956 = vmatmul.mubr.bf16.gmra.mxu0 %v1797
      %v1957 = vpop.f32.mrf.mxu0
      %v1958 = vadd.f32 %v1096, %v1957
      %v1959 = vpop.f32.mrf.mxu0
      %v1960 = vpop.f32.mrf.mxu0
      %v1961 = vadd.f32 %v1099, %v1960
      %v1962 = vpop.f32.mrf.mxu0
      %1963 = vmatprep.mubr.bf16.mxu0 0
      %1964 = vmatmul.mubr.bf16.gmra.mxu0 %v1798
      %v1965 = vpop.f32.mrf.mxu0
      %v1966 = vadd.f32 %v1104, %v1965
      %v1967 = vpop.f32.mrf.mxu0
      %v1968 = vpop.f32.mrf.mxu0
      %v1969 = vadd.f32 %v1107, %v1968
      %v1970 = vpop.f32.mrf.mxu0
      %1971 = vmatprep.mubr.bf16.mxu0 0
      %1972 = vmatmul.mubr.bf16.gmra.mxu0 %v1799
      %v1973 = vpop.f32.mrf.mxu0
      %v1974 = vadd.f32 %v1112, %v1973
      %v1975 = vpop.f32.mrf.mxu0
      %v1976 = vpop.f32.mrf.mxu0
      %v1977 = vadd.f32 %v1115, %v1976
      %v1978 = vpop.f32.mrf.mxu0
      %1979 = vmatprep.mubr.bf16.mxu0 0
      %1980 = vmatmul.mubr.bf16.gmra.mxu0 %v1800
      %v1981 = vpop.f32.mrf.mxu0
      %v1982 = vadd.f32 %v1120, %v1981
      %v1983 = vpop.f32.mrf.mxu0
      %v1984 = vpop.f32.mrf.mxu0
      %v1985 = vadd.f32 %v1123, %v1984
      %v1986 = vpop.f32.mrf.mxu0
      %1987 = vmatprep.mubr.bf16.mxu0 0
      %1988 = vmatmul.mubr.bf16.gmra.mxu0 %v1801
      %v1989 = vpop.f32.mrf.mxu0
      %v1990 = vadd.f32 %v1128, %v1989
      %v1991 = vpop.f32.mrf.mxu0
      %v1992 = vpop.f32.mrf.mxu0
      %v1993 = vadd.f32 %v1131, %v1992
      %v1994 = vpop.f32.mrf.mxu0
      %1995 = vmatprep.mubr.bf16.mxu0 0
      %1996 = vmatmul.mubr.bf16.gmra.mxu0 %v1802
      %v1997 = vpop.f32.mrf.mxu0
      %v1998 = vadd.f32 %v1136, %v1997
      %v1999 = vpop.f32.mrf.mxu0
      %v2000 = vpop.f32.mrf.mxu0
      %v2001 = vadd.f32 %v1139, %v2000
      %v2002 = vpop.f32.mrf.mxu0
      %2003 = vmatprep.mubr.bf16.mxu0 0
      %2004 = vmatmul.mubr.bf16.gmra.mxu0 %v1803
      %v2005 = vpop.f32.mrf.mxu0
      %v2006 = vadd.f32 %v1144, %v2005
      %v2007 = vpop.f32.mrf.mxu0
      %v2008 = vpop.f32.mrf.mxu0
      %v2009 = vadd.f32 %v1147, %v2008
      %v2010 = vpop.f32.mrf.mxu0
      %2011 = vmatprep.mubr.bf16.mxu0 0
      %2012 = vmatmul.mubr.bf16.gmra.mxu0 %v1804
      %v2013 = vpop.f32.mrf.mxu0
      %v2014 = vadd.f32 %v1152, %v2013
      %v2015 = vpop.f32.mrf.mxu0
      %v2016 = vpop.f32.mrf.mxu0
      %v2017 = vadd.f32 %v1155, %v2016
      %v2018 = vpop.f32.mrf.mxu0
      %2019 = vmatprep.mubr.bf16.mxu0 0
      %2020 = vmatmul.mubr.bf16.gmra.mxu0 %v1805
      %v2021 = vpop.f32.mrf.mxu0
      %v2022 = vadd.f32 %v1160, %v2021
      %v2023 = vpop.f32.mrf.mxu0
      %v2024 = vpop.f32.mrf.mxu0
      %v2025 = vadd.f32 %v1163, %v2024
      %v2026 = vpop.f32.mrf.mxu0
      %2027 = vmatprep.mubr.bf16.mxu0 0
      %2028 = vmatmul.mubr.bf16.gmra.mxu0 %v1806
      %v2029 = vpop.f32.mrf.mxu0
      %v2030 = vadd.f32 %v1168, %v2029
      %v2031 = vpop.f32.mrf.mxu0
      %v2032 = vpop.f32.mrf.mxu0
      %v2033 = vadd.f32 %v1171, %v2032
      %v2034 = vpop.f32.mrf.mxu0
      %2035 = vmatprep.mubr.bf16.mxu0 0
      %2036 = vmatmul.mubr.bf16.gmra.mxu0 %v1807
      %v2037 = vpop.f32.mrf.mxu0
      %v2038 = vadd.f32 %v1176, %v2037
      %v2039 = vpop.f32.mrf.mxu0
      %v2040 = vpop.f32.mrf.mxu0
      %v2041 = vadd.f32 %v1179, %v2040
      %v2042 = vpop.f32.mrf.mxu0
      %2043 = vmatprep.mubr.bf16.mxu0 0
      %2044 = vmatmul.mubr.bf16.gmra.mxu0 %v1808
      %v2045 = vpop.f32.mrf.mxu0
      %v2046 = vadd.f32 %v1184, %v2045
      %v2047 = vpop.f32.mrf.mxu0
      %v2048 = vpop.f32.mrf.mxu0
      %v2049 = vadd.f32 %v1187, %v2048
      %v2050 = vpop.f32.mrf.mxu0
      %2051 = vmatprep.mubr.bf16.mxu0 0
      %2052 = vmatmul.mubr.bf16.gmra.mxu0 %v1809
      %v2053 = vpop.f32.mrf.mxu0
      %v2054 = vadd.f32 %v1192, %v2053
      %v2055 = vpop.f32.mrf.mxu0
      %v2056 = vpop.f32.mrf.mxu0
      %v2057 = vadd.f32 %v1195, %v2056
      %v2058 = vpop.f32.mrf.mxu0
      %2059 = vmatprep.mubr.bf16.mxu0 0
      %2060 = vmatmul.mubr.bf16.gmra.mxu0 %v1810
      %v2061 = vpop.f32.mrf.mxu0
      %v2062 = vadd.f32 %v1200, %v2061
      %v2063 = vpop.f32.mrf.mxu0
      %v2064 = vpop.f32.mrf.mxu0
      %v2065 = vadd.f32 %v1203, %v2064
      %v2066 = vpop.f32.mrf.mxu0
      %2067 = vmatprep.mubr.bf16.mxu0 0
      %2068 = vmatmul.mubr.bf16.gmra.mxu0 %v1811
      %v2069 = vpop.f32.mrf.mxu0
      %v2070 = vadd.f32 %v1208, %v2069
      %v2071 = vpop.f32.mrf.mxu0
      %v2072 = vpop.f32.mrf.mxu0
      %v2073 = vadd.f32 %v1211, %v2072
      %v2074 = vpop.f32.mrf.mxu0
      %2075 = vmatprep.mubr.bf16.mxu0 0
      %2076 = vmatmul.mubr.bf16.gmra.mxu0 %v1812
      %v2077 = vpop.f32.mrf.mxu0
      %v2078 = vadd.f32 %v1216, %v2077
      %v2079 = vpop.f32.mrf.mxu0
      %v2080 = vpop.f32.mrf.mxu0
      %v2081 = vadd.f32 %v1219, %v2080
      %v2082 = vpop.f32.mrf.mxu0
      %2083 = vmatprep.mubr.bf16.mxu0 0
      %2084 = vmatmul.mubr.bf16.gmra.mxu0 %v1813
      %v2085 = vpop.f32.mrf.mxu0
      %v2086 = vadd.f32 %v1224, %v2085
      %v2087 = vpop.f32.mrf.mxu0
      %v2088 = vpop.f32.mrf.mxu0
      %v2089 = vadd.f32 %v1227, %v2088
      %v2090 = vpop.f32.mrf.mxu0
      %2091 = vmatprep.mubr.bf16.mxu0 0
      %2092 = vmatmul.mubr.bf16.gmra.mxu0 %v1814
      %v2093 = vpop.f32.mrf.mxu0
      %v2094 = vadd.f32 %v1232, %v2093
      %v2095 = vpop.f32.mrf.mxu0
      %v2096 = vpop.f32.mrf.mxu0
      %v2097 = vadd.f32 %v1235, %v2096
      %v2098 = vpop.f32.mrf.mxu0
      %2099 = vmatprep.mubr.bf16.mxu0 0
      %2100 = vmatmul.mubr.bf16.gmra.mxu0 %v1815
      %v2101 = vpop.f32.mrf.mxu0
      %v2102 = vadd.f32 %v1240, %v2101
      %v2103 = vpop.f32.mrf.mxu0
      %v2104 = vpop.f32.mrf.mxu0
      %v2105 = vadd.f32 %v1243, %v2104
      %v2106 = vpop.f32.mrf.mxu0
      %2107 = vmatprep.mubr.bf16.mxu0 0
      %2108 = vmatmul.mubr.bf16.gmra.mxu0 %v1816
      %v2109 = vpop.f32.mrf.mxu0
      %v2110 = vadd.f32 %v1248, %v2109
      %v2111 = vpop.f32.mrf.mxu0
      %v2112 = vpop.f32.mrf.mxu0
      %v2113 = vadd.f32 %v1251, %v2112
      %v2114 = vpop.f32.mrf.mxu0
      %2115 = vmatprep.mubr.bf16.mxu0 0
      %2116 = vmatmul.mubr.bf16.gmra.mxu0 %v1817
      %v2117 = vpop.f32.mrf.mxu0
      %v2118 = vadd.f32 %v1256, %v2117
      %v2119 = vpop.f32.mrf.mxu0
      %v2120 = vpop.f32.mrf.mxu0
      %v2121 = vadd.f32 %v1259, %v2120
      %v2122 = vpop.f32.mrf.mxu0
      %2123 = vdwg.mxu0
      %v2174 = vunpack.c.l.b16 %v649
      %v2175 = vunpack.c.l.b16 %v650
      %v2176 = vunpack.c.l.b16 %v651
      %v2177 = vunpack.c.l.b16 %v652
      %v2178 = vunpack.c.l.b16 %v653
      %v2179 = vunpack.c.l.b16 %v654
      %v2180 = vunpack.c.l.b16 %v655
      %v2181 = vunpack.c.l.b16 %v656
      %v2182 = vunpack.c.l.b16 %v657
      %v2183 = vunpack.c.l.b16 %v658
      %v2184 = vunpack.c.l.b16 %v659
      %v2185 = vunpack.c.l.b16 %v660
      %v2186 = vunpack.c.l.b16 %v661
      %v2187 = vunpack.c.l.b16 %v662
      %v2188 = vunpack.c.l.b16 %v663
      %v2189 = vunpack.c.l.b16 %v664
      %v2190 = vunpack.c.l.b16 %v665
      %v2191 = vunpack.c.l.b16 %v666
      %v2192 = vunpack.c.l.b16 %v667
      %v2193 = vunpack.c.l.b16 %v668
      %v2194 = vunpack.c.l.b16 %v669
      %v2195 = vunpack.c.l.b16 %v670
      %v2196 = vunpack.c.l.b16 %v671
      %v2197 = vunpack.c.l.b16 %v672
      %v2198 = vunpack.c.l.b16 %v673
      %v2199 = vunpack.c.l.b16 %v674
      %v2200 = vunpack.c.l.b16 %v675
      %v2201 = vunpack.c.l.b16 %v676
      %v2202 = vunpack.c.l.b16 %v677
      %v2203 = vunpack.c.l.b16 %v678
      %v2204 = vunpack.c.l.b16 %v679
      %v2205 = vunpack.c.l.b16 %v680
      %v2206 = vunpack.c.l.b16 %v681
      %v2207 = vunpack.c.l.b16 %v682
      %v2208 = vunpack.c.l.b16 %v683
      %v2209 = vunpack.c.l.b16 %v684
      %v2210 = vunpack.c.l.b16 %v685
      %v2211 = vunpack.c.l.b16 %v686
      %v2212 = vunpack.c.l.b16 %v687
      %v2213 = vunpack.c.l.b16 %v688
      %v2214 = vunpack.c.l.b16 %v689
      %v2215 = vunpack.c.l.b16 %v690
      %v2216 = vunpack.c.l.b16 %v691
      %v2217 = vunpack.c.l.b16 %v692
      %v2218 = vunpack.c.l.b16 %v693
      %v2219 = vunpack.c.l.b16 %v694
      %v2220 = vunpack.c.l.b16 %v695
      %v2221 = vunpack.c.l.b16 %v696
      %v2222 = vunpack.c.l.b16 %v697
      %v2223 = vunpack.c.l.b16 %v698
      %v2224 = vpack.c.b16 %v2175, %v2174
      %v2225 = vpack.c.b16 %v2177, %v2176
      %v2226 = vpack.c.b16 %v2179, %v2178
      %v2227 = vpack.c.b16 %v2181, %v2180
      %v2228 = vpack.c.b16 %v2183, %v2182
      %v2229 = vpack.c.b16 %v2185, %v2184
      %v2230 = vpack.c.b16 %v2187, %v2186
      %v2231 = vpack.c.b16 %v2189, %v2188
      %v2232 = vpack.c.b16 %v2191, %v2190
      %v2233 = vpack.c.b16 %v2193, %v2192
      %v2234 = vpack.c.b16 %v2195, %v2194
      %v2235 = vpack.c.b16 %v2197, %v2196
      %v2236 = vpack.c.b16 %v2199, %v2198
      %v2237 = vpack.c.b16 %v2201, %v2200
      %v2238 = vpack.c.b16 %v2203, %v2202
      %v2239 = vpack.c.b16 %v2205, %v2204
      %v2240 = vpack.c.b16 %v2207, %v2206
      %v2241 = vpack.c.b16 %v2209, %v2208
      %v2242 = vpack.c.b16 %v2211, %v2210
      %v2243 = vpack.c.b16 %v2213, %v2212
      %v2244 = vpack.c.b16 %v2215, %v2214
      %v2245 = vpack.c.b16 %v2217, %v2216
      %v2246 = vpack.c.b16 %v2219, %v2218
      %v2247 = vpack.c.b16 %v2221, %v2220
      %v2248 = vpack.c.b16 %v2223, %v2222
      %v2290 = vunpack.c.l.b16 %v583
      %v2291 = vunpack.c.l.b16 %v584
      %v2292 = vunpack.c.l.b16 %v585
      %v2293 = vunpack.c.l.b16 %v586
      %v2294 = vunpack.c.l.b16 %v587
      %v2295 = vunpack.c.l.b16 %v588
      %v2296 = vunpack.c.l.b16 %v589
      %v2297 = vunpack.c.l.b16 %v590
      %v2298 = vunpack.c.l.b16 %v591
      %v2299 = vunpack.c.l.b16 %v592
      %v2300 = vunpack.c.l.b16 %v593
      %v2301 = vunpack.c.l.b16 %v594
      %v2302 = vunpack.c.l.b16 %v595
      %v2303 = vunpack.c.l.b16 %v596
      %v2304 = vunpack.c.l.b16 %v597
      %v2305 = vunpack.c.l.b16 %v598
      %v2306 = vpack.c.b16 %v2291, %v2290
      %v2307 = vpack.c.b16 %v2293, %v2292
      %v2308 = vpack.c.b16 %v2295, %v2294
      %v2309 = vpack.c.b16 %v2297, %v2296
      %v2310 = vpack.c.b16 %v2299, %v2298
      %v2311 = vpack.c.b16 %v2301, %v2300
      %v2312 = vpack.c.b16 %v2303, %v2302
      %v2313 = vpack.c.b16 %v2305, %v2304
      %2322 = vmatprep.subr.bf16.mxu0 0
      %2323 = vmatpush1.bf16.msra.mxu0 %v2313
      %2324 = vmatprep.subr.bf16.mxu0 0
      %2325 = vmatpush1.bf16.msra.mxu0 %v2312
      %2326 = vmatprep.subr.bf16.mxu0 0
      %2327 = vmatpush1.bf16.msra.mxu0 %v2311
      %2328 = vmatprep.subr.bf16.mxu0 0
      %2329 = vmatpush1.bf16.msra.mxu0 %v2310
      %2330 = vmatprep.subr.bf16.mxu0 0
      %2331 = vmatpush1.bf16.msra.mxu0 %v2309
      %2332 = vmatprep.subr.bf16.mxu0 0
      %2333 = vmatpush1.bf16.msra.mxu0 %v2308
      %2334 = vmatprep.subr.bf16.mxu0 0
      %2335 = vmatpush1.bf16.msra.mxu0 %v2307
      %2336 = vmatprep.subr.bf16.mxu0 0
      %2337 = vmatpush1.bf16.msra.mxu0 %v2306
      %2338 = vmatprep.subr.bf16.mxu0 0
      %2339 = vmatpush2.bf16.msra.mxu0 0
      %2340 = vmatprep.subr.bf16.mxu0 0
      %2341 = vmatpush2.bf16.msra.mxu0 0
      %2342 = vmatprep.subr.bf16.mxu0 0
      %2343 = vmatpush2.bf16.msra.mxu0 0
      %2344 = vmatprep.subr.bf16.mxu0 0
      %2345 = vmatpush2.bf16.msra.mxu0 0
      %2346 = vmatprep.subr.bf16.mxu0 0
      %2347 = vmatpush2.bf16.msra.mxu0 0
      %2348 = vmatprep.subr.bf16.mxu0 0
      %2349 = vmatpush2.bf16.msra.mxu0 0
      %2350 = vmatprep.subr.bf16.mxu0 0
      %2351 = vmatpush2.bf16.msra.mxu0 0
      %2352 = vmatprep.subr.bf16.mxu0 0
      %2353 = vmatpush2.bf16.msra.mxu0 0
      %2354 = vmatprep.mubr.bf16.mxu0 0
      %2355 = vmatmul.mubr.bf16.gmra.mxu0 %v2224
      %v2356 = vpop.f32.mrf.mxu0
      %v2357 = vadd.f32 %v1495, %v2356
      %v2358 = vpop.f32.mrf.mxu0
      %v2359 = vpop.f32.mrf.mxu0
      %v2360 = vadd.f32 %v1498, %v2359
      %v2361 = vpop.f32.mrf.mxu0
      %2362 = vmatprep.mubr.bf16.mxu0 0
      %2363 = vmatmul.mubr.bf16.gmra.mxu0 %v2225
      %v2364 = vpop.f32.mrf.mxu0
      %v2365 = vadd.f32 %v1503, %v2364
      %v2366 = vpop.f32.mrf.mxu0
      %v2367 = vpop.f32.mrf.mxu0
      %v2368 = vadd.f32 %v1506, %v2367
      %v2369 = vpop.f32.mrf.mxu0
      %2370 = vmatprep.mubr.bf16.mxu0 0
      %2371 = vmatmul.mubr.bf16.gmra.mxu0 %v2226
      %v2372 = vpop.f32.mrf.mxu0
      %v2373 = vadd.f32 %v1511, %v2372
      %v2374 = vpop.f32.mrf.mxu0
      %v2375 = vpop.f32.mrf.mxu0
      %v2376 = vadd.f32 %v1514, %v2375
      %v2377 = vpop.f32.mrf.mxu0
      %2378 = vmatprep.mubr.bf16.mxu0 0
      %2379 = vmatmul.mubr.bf16.gmra.mxu0 %v2227
      %v2380 = vpop.f32.mrf.mxu0
      %v2381 = vadd.f32 %v1519, %v2380
      %v2382 = vpop.f32.mrf.mxu0
      %v2383 = vpop.f32.mrf.mxu0
      %v2384 = vadd.f32 %v1522, %v2383
      %v2385 = vpop.f32.mrf.mxu0
      %2386 = vmatprep.mubr.bf16.mxu0 0
      %2387 = vmatmul.mubr.bf16.gmra.mxu0 %v2228
      %v2388 = vpop.f32.mrf.mxu0
      %v2389 = vadd.f32 %v1527, %v2388
      %v2390 = vpop.f32.mrf.mxu0
      %v2391 = vpop.f32.mrf.mxu0
      %v2392 = vadd.f32 %v1530, %v2391
      %v2393 = vpop.f32.mrf.mxu0
      %2394 = vmatprep.mubr.bf16.mxu0 0
      %2395 = vmatmul.mubr.bf16.gmra.mxu0 %v2229
      %v2396 = vpop.f32.mrf.mxu0
      %v2397 = vadd.f32 %v1535, %v2396
      %v2398 = vpop.f32.mrf.mxu0
      %v2399 = vpop.f32.mrf.mxu0
      %v2400 = vadd.f32 %v1538, %v2399
      %v2401 = vpop.f32.mrf.mxu0
      %2402 = vmatprep.mubr.bf16.mxu0 0
      %2403 = vmatmul.mubr.bf16.gmra.mxu0 %v2230
      %v2404 = vpop.f32.mrf.mxu0
      %v2405 = vadd.f32 %v1543, %v2404
      %v2406 = vpop.f32.mrf.mxu0
      %v2407 = vpop.f32.mrf.mxu0
      %v2408 = vadd.f32 %v1546, %v2407
      %v2409 = vpop.f32.mrf.mxu0
      %2410 = vmatprep.mubr.bf16.mxu0 0
      %2411 = vmatmul.mubr.bf16.gmra.mxu0 %v2231
      %v2412 = vpop.f32.mrf.mxu0
      %v2413 = vadd.f32 %v1551, %v2412
      %v2414 = vpop.f32.mrf.mxu0
      %v2415 = vpop.f32.mrf.mxu0
      %v2416 = vadd.f32 %v1554, %v2415
      %v2417 = vpop.f32.mrf.mxu0
      %2418 = vmatprep.mubr.bf16.mxu0 0
      %2419 = vmatmul.mubr.bf16.gmra.mxu0 %v2232
      %v2420 = vpop.f32.mrf.mxu0
      %v2421 = vadd.f32 %v1559, %v2420
      %v2422 = vpop.f32.mrf.mxu0
      %v2423 = vpop.f32.mrf.mxu0
      %v2424 = vadd.f32 %v1562, %v2423
      %v2425 = vpop.f32.mrf.mxu0
      %2426 = vmatprep.mubr.bf16.mxu0 0
      %2427 = vmatmul.mubr.bf16.gmra.mxu0 %v2233
      %v2428 = vpop.f32.mrf.mxu0
      %v2429 = vadd.f32 %v1567, %v2428
      %v2430 = vpop.f32.mrf.mxu0
      %v2431 = vpop.f32.mrf.mxu0
      %v2432 = vadd.f32 %v1570, %v2431
      %v2433 = vpop.f32.mrf.mxu0
      %2434 = vmatprep.mubr.bf16.mxu0 0
      %2435 = vmatmul.mubr.bf16.gmra.mxu0 %v2234
      %v2436 = vpop.f32.mrf.mxu0
      %v2437 = vadd.f32 %v1575, %v2436
      %v2438 = vpop.f32.mrf.mxu0
      %v2439 = vpop.f32.mrf.mxu0
      %v2440 = vadd.f32 %v1578, %v2439
      %v2441 = vpop.f32.mrf.mxu0
      %2442 = vmatprep.mubr.bf16.mxu0 0
      %2443 = vmatmul.mubr.bf16.gmra.mxu0 %v2235
      %v2444 = vpop.f32.mrf.mxu0
      %v2445 = vadd.f32 %v1583, %v2444
      %v2446 = vpop.f32.mrf.mxu0
      %v2447 = vpop.f32.mrf.mxu0
      %v2448 = vadd.f32 %v1586, %v2447
      %v2449 = vpop.f32.mrf.mxu0
      %2450 = vmatprep.mubr.bf16.mxu0 0
      %2451 = vmatmul.mubr.bf16.gmra.mxu0 %v2236
      %v2452 = vpop.f32.mrf.mxu0
      %v2453 = vadd.f32 %v1591, %v2452
      %v2454 = vpop.f32.mrf.mxu0
      %v2455 = vpop.f32.mrf.mxu0
      %v2456 = vadd.f32 %v1594, %v2455
      %v2457 = vpop.f32.mrf.mxu0
      %2458 = vmatprep.mubr.bf16.mxu0 0
      %2459 = vmatmul.mubr.bf16.gmra.mxu0 %v2237
      %v2460 = vpop.f32.mrf.mxu0
      %v2461 = vadd.f32 %v1599, %v2460
      %v2462 = vpop.f32.mrf.mxu0
      %v2463 = vpop.f32.mrf.mxu0
      %v2464 = vadd.f32 %v1602, %v2463
      %v2465 = vpop.f32.mrf.mxu0
      %2466 = vmatprep.mubr.bf16.mxu0 0
      %2467 = vmatmul.mubr.bf16.gmra.mxu0 %v2238
      %v2468 = vpop.f32.mrf.mxu0
      %v2469 = vadd.f32 %v1607, %v2468
      %v2470 = vpop.f32.mrf.mxu0
      %v2471 = vpop.f32.mrf.mxu0
      %v2472 = vadd.f32 %v1610, %v2471
      %v2473 = vpop.f32.mrf.mxu0
      %2474 = vmatprep.mubr.bf16.mxu0 0
      %2475 = vmatmul.mubr.bf16.gmra.mxu0 %v2239
      %v2476 = vpop.f32.mrf.mxu0
      %v2477 = vadd.f32 %v1615, %v2476
      %v2478 = vpop.f32.mrf.mxu0
      %v2479 = vpop.f32.mrf.mxu0
      %v2480 = vadd.f32 %v1618, %v2479
      %v2481 = vpop.f32.mrf.mxu0
      %2482 = vmatprep.mubr.bf16.mxu0 0
      %2483 = vmatmul.mubr.bf16.gmra.mxu0 %v2240
      %v2484 = vpop.f32.mrf.mxu0
      %v2485 = vadd.f32 %v1623, %v2484
      %v2486 = vpop.f32.mrf.mxu0
      %v2487 = vpop.f32.mrf.mxu0
      %v2488 = vadd.f32 %v1626, %v2487
      %v2489 = vpop.f32.mrf.mxu0
      %2490 = vmatprep.mubr.bf16.mxu0 0
      %2491 = vmatmul.mubr.bf16.gmra.mxu0 %v2241
      %v2492 = vpop.f32.mrf.mxu0
      %v2493 = vadd.f32 %v1631, %v2492
      %v2494 = vpop.f32.mrf.mxu0
      %v2495 = vpop.f32.mrf.mxu0
      %v2496 = vadd.f32 %v1634, %v2495
      %v2497 = vpop.f32.mrf.mxu0
      %2498 = vmatprep.mubr.bf16.mxu0 0
      %2499 = vmatmul.mubr.bf16.gmra.mxu0 %v2242
      %v2500 = vpop.f32.mrf.mxu0
      %v2501 = vadd.f32 %v1639, %v2500
      %v2502 = vpop.f32.mrf.mxu0
      %v2503 = vpop.f32.mrf.mxu0
      %v2504 = vadd.f32 %v1642, %v2503
      %v2505 = vpop.f32.mrf.mxu0
      %2506 = vmatprep.mubr.bf16.mxu0 0
      %2507 = vmatmul.mubr.bf16.gmra.mxu0 %v2243
      %v2508 = vpop.f32.mrf.mxu0
      %v2509 = vadd.f32 %v1647, %v2508
      %v2510 = vpop.f32.mrf.mxu0
      %v2511 = vpop.f32.mrf.mxu0
      %v2512 = vadd.f32 %v1650, %v2511
      %v2513 = vpop.f32.mrf.mxu0
      %2514 = vmatprep.mubr.bf16.mxu0 0
      %2515 = vmatmul.mubr.bf16.gmra.mxu0 %v2244
      %v2516 = vpop.f32.mrf.mxu0
      %v2517 = vadd.f32 %v1655, %v2516
      %v2518 = vpop.f32.mrf.mxu0
      %v2519 = vpop.f32.mrf.mxu0
      %v2520 = vadd.f32 %v1658, %v2519
      %v2521 = vpop.f32.mrf.mxu0
      %2522 = vmatprep.mubr.bf16.mxu0 0
      %2523 = vmatmul.mubr.bf16.gmra.mxu0 %v2245
      %v2524 = vpop.f32.mrf.mxu0
      %v2525 = vadd.f32 %v1663, %v2524
      %v2526 = vpop.f32.mrf.mxu0
      %v2527 = vpop.f32.mrf.mxu0
      %v2528 = vadd.f32 %v1666, %v2527
      %v2529 = vpop.f32.mrf.mxu0
      %2530 = vmatprep.mubr.bf16.mxu0 0
      %2531 = vmatmul.mubr.bf16.gmra.mxu0 %v2246
      %v2532 = vpop.f32.mrf.mxu0
      %v2533 = vadd.f32 %v1671, %v2532
      %v2534 = vpop.f32.mrf.mxu0
      %v2535 = vpop.f32.mrf.mxu0
      %v2536 = vadd.f32 %v1674, %v2535
      %v2537 = vpop.f32.mrf.mxu0
      %2538 = vmatprep.mubr.bf16.mxu0 0
      %2539 = vmatmul.mubr.bf16.gmra.mxu0 %v2247
      %v2540 = vpop.f32.mrf.mxu0
      %v2541 = vadd.f32 %v1679, %v2540
      %v2542 = vpop.f32.mrf.mxu0
      %v2543 = vpop.f32.mrf.mxu0
      %v2544 = vadd.f32 %v1682, %v2543
      %v2545 = vpop.f32.mrf.mxu0
      %2546 = vmatprep.mubr.bf16.mxu0 0
      %2547 = vmatmul.mubr.bf16.gmra.mxu0 %v2248
      %v2548 = vpop.f32.mrf.mxu0
      %v2549 = vadd.f32 %v1687, %v2548
      %v2550 = vpop.f32.mrf.mxu0
      %v2551 = vpop.f32.mrf.mxu0
      %v2552 = vadd.f32 %v1690, %v2551
      %v2553 = vpop.f32.mrf.mxu0
      %2554 = vdwg.mxu0
      %v2555 = vld [vmem:[%s8] sm:$0x1]
      %v2557 = vlaneseq
      %v2558 = vshrl.u32 %v2557, 7
      %v2559 = vsub.s32 0, %v2558
      %v2560 = vrot.slane %v2555, %v2559
      %v2562 = vadd.f32 %v1926, %v2560
      %v2563 = vadd.f32 %v1929, %v2560
      %v2564 = vadd.f32 %v1934, %v2560
      %v2565 = vadd.f32 %v1937, %v2560
      %v2566 = vadd.f32 %v1942, %v2560
      %v2567 = vadd.f32 %v1945, %v2560
      %v2568 = vadd.f32 %v1950, %v2560
      %v2569 = vadd.f32 %v1953, %v2560
      %v2570 = vadd.f32 %v1958, %v2560
      %v2571 = vadd.f32 %v1961, %v2560
      %v2572 = vadd.f32 %v1966, %v2560
      %v2573 = vadd.f32 %v1969, %v2560
      %v2574 = vadd.f32 %v1974, %v2560
      %v2575 = vadd.f32 %v1977, %v2560
      %v2576 = vadd.f32 %v1982, %v2560
      %v2577 = vadd.f32 %v1985, %v2560
      %v2578 = vadd.f32 %v1990, %v2560
      %v2579 = vadd.f32 %v1993, %v2560
      %v2580 = vadd.f32 %v1998, %v2560
      %v2581 = vadd.f32 %v2001, %v2560
      %v2582 = vadd.f32 %v2006, %v2560
      %v2583 = vadd.f32 %v2009, %v2560
      %v2584 = vadd.f32 %v2014, %v2560
      %v2585 = vadd.f32 %v2017, %v2560
      %v2586 = vadd.f32 %v2022, %v2560
      %v2587 = vadd.f32 %v2025, %v2560
      %v2588 = vadd.f32 %v2030, %v2560
      %v2589 = vadd.f32 %v2033, %v2560
      %v2590 = vadd.f32 %v2038, %v2560
      %v2591 = vadd.f32 %v2041, %v2560
      %v2592 = vadd.f32 %v2046, %v2560
      %v2593 = vadd.f32 %v2049, %v2560
      %v2594 = vadd.f32 %v2054, %v2560
      %v2595 = vadd.f32 %v2057, %v2560
      %v2596 = vadd.f32 %v2062, %v2560
      %v2597 = vadd.f32 %v2065, %v2560
      %v2598 = vadd.f32 %v2070, %v2560
      %v2599 = vadd.f32 %v2073, %v2560
      %v2600 = vadd.f32 %v2078, %v2560
      %v2601 = vadd.f32 %v2081, %v2560
      %v2602 = vadd.f32 %v2086, %v2560
      %v2603 = vadd.f32 %v2089, %v2560
      %v2604 = vadd.f32 %v2094, %v2560
      %v2605 = vadd.f32 %v2097, %v2560
      %v2606 = vadd.f32 %v2102, %v2560
      %v2607 = vadd.f32 %v2105, %v2560
      %v2608 = vadd.f32 %v2110, %v2560
      %v2609 = vadd.f32 %v2113, %v2560
      %v2610 = vadd.f32 %v2118, %v2560
      %v2611 = vadd.f32 %v2121, %v2560
      %v2612 = vld [vmem:[%s9] sm:$0x1]
      %v2614 = vlaneseq
      %v2615 = vshrl.u32 %v2614, 7
      %v2616 = vsub.s32 0, %v2615
      %v2617 = vrot.slane %v2612, %v2616
      %v2619 = vadd.f32 %v2357, %v2617
      %v2620 = vadd.f32 %v2360, %v2617
      %v2621 = vadd.f32 %v2365, %v2617
      %v2622 = vadd.f32 %v2368, %v2617
      %v2623 = vadd.f32 %v2373, %v2617
      %v2624 = vadd.f32 %v2376, %v2617
      %v2625 = vadd.f32 %v2381, %v2617
      %v2626 = vadd.f32 %v2384, %v2617
      %v2627 = vadd.f32 %v2389, %v2617
      %v2628 = vadd.f32 %v2392, %v2617
      %v2629 = vadd.f32 %v2397, %v2617
      %v2630 = vadd.f32 %v2400, %v2617
      %v2631 = vadd.f32 %v2405, %v2617
      %v2632 = vadd.f32 %v2408, %v2617
      %v2633 = vadd.f32 %v2413, %v2617
      %v2634 = vadd.f32 %v2416, %v2617
      %v2635 = vadd.f32 %v2421, %v2617
      %v2636 = vadd.f32 %v2424, %v2617
      %v2637 = vadd.f32 %v2429, %v2617
      %v2638 = vadd.f32 %v2432, %v2617
      %v2639 = vadd.f32 %v2437, %v2617
      %v2640 = vadd.f32 %v2440, %v2617
      %v2641 = vadd.f32 %v2445, %v2617
      %v2642 = vadd.f32 %v2448, %v2617
      %v2643 = vadd.f32 %v2453, %v2617
      %v2644 = vadd.f32 %v2456, %v2617
      %v2645 = vadd.f32 %v2461, %v2617
      %v2646 = vadd.f32 %v2464, %v2617
      %v2647 = vadd.f32 %v2469, %v2617
      %v2648 = vadd.f32 %v2472, %v2617
      %v2649 = vadd.f32 %v2477, %v2617
      %v2650 = vadd.f32 %v2480, %v2617
      %v2651 = vadd.f32 %v2485, %v2617
      %v2652 = vadd.f32 %v2488, %v2617
      %v2653 = vadd.f32 %v2493, %v2617
      %v2654 = vadd.f32 %v2496, %v2617
      %v2655 = vadd.f32 %v2501, %v2617
      %v2656 = vadd.f32 %v2504, %v2617
      %v2657 = vadd.f32 %v2509, %v2617
      %v2658 = vadd.f32 %v2512, %v2617
      %v2659 = vadd.f32 %v2517, %v2617
      %v2660 = vadd.f32 %v2520, %v2617
      %v2661 = vadd.f32 %v2525, %v2617
      %v2662 = vadd.f32 %v2528, %v2617
      %v2663 = vadd.f32 %v2533, %v2617
      %v2664 = vadd.f32 %v2536, %v2617
      %v2665 = vadd.f32 %v2541, %v2617
      %v2666 = vadd.f32 %v2544, %v2617
      %v2667 = vadd.f32 %v2549, %v2617
      %v2668 = vadd.f32 %v2552, %v2617
      %v2669 = vld [vmem:[%s10] sm:$0x1]
      %v2670 = vld [vmem:[%s11] sm:$0x1]
      %v2671 = vld [vmem:[#allocation2] sm:$0xff]
      %v2672 = vld [vmem:[#allocation2 + $0x8] sm:$0xff]
      %v2673 = vld [vmem:[#allocation3] sm:$0xff]
      %v2674 = vld [vmem:[#allocation3 + $0x8] sm:$0xff]
      %v2676 = vlaneseq
      %v2677 = vshrl.u32 %v2676, 7
      %v2678 = vsub.s32 0, %v2677
      %v2679 = vrot.slane %v2669, %v2678
      %v2681 = vmul.f32 %v2679, %v2671
      %v2682 = vmul.f32 %v2679, %v2672
      %v2683 = vadd.f32 %v2562, %v2681
      %v2684 = vadd.f32 %v2563, %v2682
      %v2685 = vmax.f32 %v2683, 0.0
      %v2686 = vmax.f32 %v2684, 0.0
      %v2688 = vlaneseq
      %v2689 = vshrl.u32 %v2688, 7
      %v2690 = vsub.s32 0, %v2689
      %v2691 = vrot.slane %v2670, %v2690
      %v2693 = vmul.f32 %v2691, %v2673
      %v2694 = vmul.f32 %v2691, %v2674
      %v2695 = vadd.f32 %v2667, %v2693
      %v2696 = vadd.f32 %v2668, %v2694
      %v2697 = vmax.f32 %v2695, 0.0
      %v2698 = vmax.f32 %v2696, 0.0
      %v2699 = vpack.c.bf16 %v2686, %v2685
      %v2701 = vunpack.c.l.b16 %v2699
      %v2702 = vunpack.c.h.b16 %v2699
      %v2703 = vpack.c.b16 %v2701, %v2701
      %v2704 = vpack.c.b16 %v2702, %v2702
      %2707 = vst [vmem:[%s549] sm:$0xf] %v2703
      %2708 = vst [vmem:[%s549 + $0x4] sm:$0xf] %v2704
      %v2709 = vpack.c.bf16 %v2698, %v2697
      %v2711 = vunpack.c.l.b16 %v2709
      %v2712 = vunpack.c.h.b16 %v2709
      %v2713 = vpack.c.b16 %v2711, %v2711
      %v2714 = vpack.c.b16 %v2712, %v2712
      %2717 = vst [vmem:[%s555 + $0xc0] sm:$0xf] %v2713
      %2718 = vst [vmem:[%s555 + $0xc4] sm:$0xf] %v2714
      %v2719 = vadd.f32 %v2685, 0.0
      %v2720 = vadd.f32 %v2686, 0.0
      %v2721 = vadd.f32 %v2697, 0.0
      %v2722 = vadd.f32 %v2698, 0.0
      %v2723 = vmul.f32 %v2685, %v2685
      %v2724 = vmul.f32 %v2686, %v2686
      %v2725 = vadd.f32 %v2723, 0.0
      %v2726 = vadd.f32 %v2724, 0.0
      %v2727 = vmul.f32 %v2697, %v2697
      %v2728 = vmul.f32 %v2698, %v2698
      %v2729 = vadd.f32 %v2727, 0.0
      %v2730 = vadd.f32 %v2728, 0.0
      %v2731 = vmul.f32 %v2679, %v2685
      %v2732 = vmul.f32 %v2679, %v2686
      %v2733 = vadd.f32 %v2564, %v2731
      %v2734 = vadd.f32 %v2565, %v2732
      %v2735 = vmax.f32 %v2733, 0.0
      %v2736 = vmax.f32 %v2734, 0.0
      %v2737 = vmul.f32 %v2691, %v2697
      %v2738 = vmul.f32 %v2691, %v2698
      %v2739 = vadd.f32 %v2665, %v2737
      %v2740 = vadd.f32 %v2666, %v2738
      %v2741 = vmax.f32 %v2739, 0.0
      %v2742 = vmax.f32 %v2740, 0.0
      %v2743 = vpack.c.bf16 %v2736, %v2735
      %v2745 = vunpack.c.l.b16 %v2743
      %v2746 = vunpack.c.h.b16 %v2743
      %v2747 = vpack.c.b16 %v2745, %v2745
      %v2748 = vpack.c.b16 %v2746, %v2746
      %2751 = vst [vmem:[%s549 + $0x8] sm:$0xf] %v2747
      %2752 = vst [vmem:[%s549 + $0xc] sm:$0xf] %v2748
      %v2753 = vpack.c.bf16 %v2742, %v2741
      %v2755 = vunpack.c.l.b16 %v2753
      %v2756 = vunpack.c.h.b16 %v2753
      %v2757 = vpack.c.b16 %v2755, %v2755
      %v2758 = vpack.c.b16 %v2756, %v2756
      %2761 = vst [vmem:[%s555 + $0xb8] sm:$0xf] %v2757
      %2762 = vst [vmem:[%s555 + $0xbc] sm:$0xf] %v2758
      %v2763 = vadd.f32 %v2719, %v2735
      %v2764 = vadd.f32 %v2720, %v2736
      %v2765 = vadd.f32 %v2721, %v2741
      %v2766 = vadd.f32 %v2722, %v2742
      %v2767 = vmul.f32 %v2735, %v2735
      %v2768 = vmul.f32 %v2736, %v2736
      %v2769 = vadd.f32 %v2725, %v2767
      %v2770 = vadd.f32 %v2726, %v2768
      %v2771 = vmul.f32 %v2741, %v2741
      %v2772 = vmul.f32 %v2742, %v2742
      %v2773 = vadd.f32 %v2729, %v2771
      %v2774 = vadd.f32 %v2730, %v2772
      %v2775 = vmul.f32 %v2679, %v2735
      %v2776 = vmul.f32 %v2679, %v2736
      %v2777 = vadd.f32 %v2566, %v2775
      %v2778 = vadd.f32 %v2567, %v2776
      %v2779 = vmax.f32 %v2777, 0.0
      %v2780 = vmax.f32 %v2778, 0.0
      %v2781 = vmul.f32 %v2691, %v2741
      %v2782 = vmul.f32 %v2691, %v2742
      %v2783 = vadd.f32 %v2663, %v2781
      %v2784 = vadd.f32 %v2664, %v2782
      %v2785 = vmax.f32 %v2783, 0.0
      %v2786 = vmax.f32 %v2784, 0.0
      %v2787 = vpack.c.bf16 %v2780, %v2779
      %v2789 = vunpack.c.l.b16 %v2787
      %v2790 = vunpack.c.h.b16 %v2787
      %v2791 = vpack.c.b16 %v2789, %v2789
      %v2792 = vpack.c.b16 %v2790, %v2790
      %2795 = vst [vmem:[%s549 + $0x10] sm:$0xf] %v2791
      %2796 = vst [vmem:[%s549 + $0x14] sm:$0xf] %v2792
      %v2797 = vpack.c.bf16 %v2786, %v2785
      %v2799 = vunpack.c.l.b16 %v2797
      %v2800 = vunpack.c.h.b16 %v2797
      %v2801 = vpack.c.b16 %v2799, %v2799
      %v2802 = vpack.c.b16 %v2800, %v2800
      %2805 = vst [vmem:[%s555 + $0xb0] sm:$0xf] %v2801
      %2806 = vst [vmem:[%s555 + $0xb4] sm:$0xf] %v2802
      %v2807 = vadd.f32 %v2763, %v2779
      %v2808 = vadd.f32 %v2764, %v2780
      %v2809 = vadd.f32 %v2765, %v2785
      %v2810 = vadd.f32 %v2766, %v2786
      %v2811 = vmul.f32 %v2779, %v2779
      %v2812 = vmul.f32 %v2780, %v2780
      %v2813 = vadd.f32 %v2769, %v2811
      %v2814 = vadd.f32 %v2770, %v2812
      %v2815 = vmul.f32 %v2785, %v2785
      %v2816 = vmul.f32 %v2786, %v2786
      %v2817 = vadd.f32 %v2773, %v2815
      %v2818 = vadd.f32 %v2774, %v2816
      %v2819 = vmul.f32 %v2679, %v2779
      %v2820 = vmul.f32 %v2679, %v2780
      %v2821 = vadd.f32 %v2568, %v2819
      %v2822 = vadd.f32 %v2569, %v2820
      %v2823 = vmax.f32 %v2821, 0.0
      %v2824 = vmax.f32 %v2822, 0.0
      %v2825 = vmul.f32 %v2691, %v2785
      %v2826 = vmul.f32 %v2691, %v2786
      %v2827 = vadd.f32 %v2661, %v2825
      %v2828 = vadd.f32 %v2662, %v2826
      %v2829 = vmax.f32 %v2827, 0.0
      %v2830 = vmax.f32 %v2828, 0.0
      %v2831 = vpack.c.bf16 %v2824, %v2823
      %v2833 = vunpack.c.l.b16 %v2831
      %v2834 = vunpack.c.h.b16 %v2831
      %v2835 = vpack.c.b16 %v2833, %v2833
      %v2836 = vpack.c.b16 %v2834, %v2834
      %2839 = vst [vmem:[%s549 + $0x18] sm:$0xf] %v2835
      %2840 = vst [vmem:[%s549 + $0x1c] sm:$0xf] %v2836
      %v2841 = vpack.c.bf16 %v2830, %v2829
      %v2843 = vunpack.c.l.b16 %v2841
      %v2844 = vunpack.c.h.b16 %v2841
      %v2845 = vpack.c.b16 %v2843, %v2843
      %v2846 = vpack.c.b16 %v2844, %v2844
      %2849 = vst [vmem:[%s555 + $0xa8] sm:$0xf] %v2845
      %2850 = vst [vmem:[%s555 + $0xac] sm:$0xf] %v2846
      %v2851 = vadd.f32 %v2807, %v2823
      %v2852 = vadd.f32 %v2808, %v2824
      %v2853 = vadd.f32 %v2809, %v2829
      %v2854 = vadd.f32 %v2810, %v2830
      %v2855 = vmul.f32 %v2823, %v2823
      %v2856 = vmul.f32 %v2824, %v2824
      %v2857 = vadd.f32 %v2813, %v2855
      %v2858 = vadd.f32 %v2814, %v2856
      %v2859 = vmul.f32 %v2829, %v2829
      %v2860 = vmul.f32 %v2830, %v2830
      %v2861 = vadd.f32 %v2817, %v2859
      %v2862 = vadd.f32 %v2818, %v2860
      %v2863 = vmul.f32 %v2679, %v2823
      %v2864 = vmul.f32 %v2679, %v2824
      %v2865 = vadd.f32 %v2570, %v2863
      %v2866 = vadd.f32 %v2571, %v2864
      %v2867 = vmax.f32 %v2865, 0.0
      %v2868 = vmax.f32 %v2866, 0.0
      %v2869 = vmul.f32 %v2691, %v2829
      %v2870 = vmul.f32 %v2691, %v2830
      %v2871 = vadd.f32 %v2659, %v2869
      %v2872 = vadd.f32 %v2660, %v2870
      %v2873 = vmax.f32 %v2871, 0.0
      %v2874 = vmax.f32 %v2872, 0.0
      %v2875 = vpack.c.bf16 %v2868, %v2867
      %v2877 = vunpack.c.l.b16 %v2875
      %v2878 = vunpack.c.h.b16 %v2875
      %v2879 = vpack.c.b16 %v2877, %v2877
      %v2880 = vpack.c.b16 %v2878, %v2878
      %2883 = vst [vmem:[%s549 + $0x20] sm:$0xf] %v2879
      %2884 = vst [vmem:[%s549 + $0x24] sm:$0xf] %v2880
      %v2885 = vpack.c.bf16 %v2874, %v2873
      %v2887 = vunpack.c.l.b16 %v2885
      %v2888 = vunpack.c.h.b16 %v2885
      %v2889 = vpack.c.b16 %v2887, %v2887
      %v2890 = vpack.c.b16 %v2888, %v2888
      %2893 = vst [vmem:[%s555 + $0xa0] sm:$0xf] %v2889
      %2894 = vst [vmem:[%s555 + $0xa4] sm:$0xf] %v2890
      %v2895 = vadd.f32 %v2851, %v2867
      %v2896 = vadd.f32 %v2852, %v2868
      %v2897 = vadd.f32 %v2853, %v2873
      %v2898 = vadd.f32 %v2854, %v2874
      %v2899 = vmul.f32 %v2867, %v2867
      %v2900 = vmul.f32 %v2868, %v2868
      %v2901 = vadd.f32 %v2857, %v2899
      %v2902 = vadd.f32 %v2858, %v2900
      %v2903 = vmul.f32 %v2873, %v2873
      %v2904 = vmul.f32 %v2874, %v2874
      %v2905 = vadd.f32 %v2861, %v2903
      %v2906 = vadd.f32 %v2862, %v2904
      %v2907 = vmul.f32 %v2679, %v2867
      %v2908 = vmul.f32 %v2679, %v2868
      %v2909 = vadd.f32 %v2572, %v2907
      %v2910 = vadd.f32 %v2573, %v2908
      %v2911 = vmax.f32 %v2909, 0.0
      %v2912 = vmax.f32 %v2910, 0.0
      %v2913 = vmul.f32 %v2691, %v2873
      %v2914 = vmul.f32 %v2691, %v2874
      %v2915 = vadd.f32 %v2657, %v2913
      %v2916 = vadd.f32 %v2658, %v2914
      %v2917 = vmax.f32 %v2915, 0.0
      %v2918 = vmax.f32 %v2916, 0.0
      %v2919 = vpack.c.bf16 %v2912, %v2911
      %v2921 = vunpack.c.l.b16 %v2919
      %v2922 = vunpack.c.h.b16 %v2919
      %v2923 = vpack.c.b16 %v2921, %v2921
      %v2924 = vpack.c.b16 %v2922, %v2922
      %2927 = vst [vmem:[%s549 + $0x28] sm:$0xf] %v2923
      %2928 = vst [vmem:[%s549 + $0x2c] sm:$0xf] %v2924
      %v2929 = vpack.c.bf16 %v2918, %v2917
      %v2931 = vunpack.c.l.b16 %v2929
      %v2932 = vunpack.c.h.b16 %v2929
      %v2933 = vpack.c.b16 %v2931, %v2931
      %v2934 = vpack.c.b16 %v2932, %v2932
      %2937 = vst [vmem:[%s555 + $0x98] sm:$0xf] %v2933
      %2938 = vst [vmem:[%s555 + $0x9c] sm:$0xf] %v2934
      %v2939 = vadd.f32 %v2895, %v2911
      %v2940 = vadd.f32 %v2896, %v2912
      %v2941 = vadd.f32 %v2897, %v2917
      %v2942 = vadd.f32 %v2898, %v2918
      %v2943 = vmul.f32 %v2911, %v2911
      %v2944 = vmul.f32 %v2912, %v2912
      %v2945 = vadd.f32 %v2901, %v2943
      %v2946 = vadd.f32 %v2902, %v2944
      %v2947 = vmul.f32 %v2917, %v2917
      %v2948 = vmul.f32 %v2918, %v2918
      %v2949 = vadd.f32 %v2905, %v2947
      %v2950 = vadd.f32 %v2906, %v2948
      %v2951 = vmul.f32 %v2679, %v2911
      %v2952 = vmul.f32 %v2679, %v2912
      %v2953 = vadd.f32 %v2574, %v2951
      %v2954 = vadd.f32 %v2575, %v2952
      %v2955 = vmax.f32 %v2953, 0.0
      %v2956 = vmax.f32 %v2954, 0.0
      %v2957 = vmul.f32 %v2691, %v2917
      %v2958 = vmul.f32 %v2691, %v2918
      %v2959 = vadd.f32 %v2655, %v2957
      %v2960 = vadd.f32 %v2656, %v2958
      %v2961 = vmax.f32 %v2959, 0.0
      %v2962 = vmax.f32 %v2960, 0.0
      %v2963 = vpack.c.bf16 %v2956, %v2955
      %v2965 = vunpack.c.l.b16 %v2963
      %v2966 = vunpack.c.h.b16 %v2963
      %v2967 = vpack.c.b16 %v2965, %v2965
      %v2968 = vpack.c.b16 %v2966, %v2966
      %2971 = vst [vmem:[%s549 + $0x30] sm:$0xf] %v2967
      %2972 = vst [vmem:[%s549 + $0x34] sm:$0xf] %v2968
      %v2973 = vpack.c.bf16 %v2962, %v2961
      %v2975 = vunpack.c.l.b16 %v2973
      %v2976 = vunpack.c.h.b16 %v2973
      %v2977 = vpack.c.b16 %v2975, %v2975
      %v2978 = vpack.c.b16 %v2976, %v2976
      %2981 = vst [vmem:[%s555 + $0x90] sm:$0xf] %v2977
      %2982 = vst [vmem:[%s555 + $0x94] sm:$0xf] %v2978
      %v2983 = vadd.f32 %v2939, %v2955
      %v2984 = vadd.f32 %v2940, %v2956
      %v2985 = vadd.f32 %v2941, %v2961
      %v2986 = vadd.f32 %v2942, %v2962
      %v2987 = vmul.f32 %v2955, %v2955
      %v2988 = vmul.f32 %v2956, %v2956
      %v2989 = vadd.f32 %v2945, %v2987
      %v2990 = vadd.f32 %v2946, %v2988
      %v2991 = vmul.f32 %v2961, %v2961
      %v2992 = vmul.f32 %v2962, %v2962
      %v2993 = vadd.f32 %v2949, %v2991
      %v2994 = vadd.f32 %v2950, %v2992
      %v2995 = vmul.f32 %v2679, %v2955
      %v2996 = vmul.f32 %v2679, %v2956
      %v2997 = vadd.f32 %v2576, %v2995
      %v2998 = vadd.f32 %v2577, %v2996
      %v2999 = vmax.f32 %v2997, 0.0
      %v3000 = vmax.f32 %v2998, 0.0
      %v3001 = vmul.f32 %v2691, %v2961
      %v3002 = vmul.f32 %v2691, %v2962
      %v3003 = vadd.f32 %v2653, %v3001
      %v3004 = vadd.f32 %v2654, %v3002
      %v3005 = vmax.f32 %v3003, 0.0
      %v3006 = vmax.f32 %v3004, 0.0
      %v3007 = vpack.c.bf16 %v3000, %v2999
      %v3009 = vunpack.c.l.b16 %v3007
      %v3010 = vunpack.c.h.b16 %v3007
      %v3011 = vpack.c.b16 %v3009, %v3009
      %v3012 = vpack.c.b16 %v3010, %v3010
      %3015 = vst [vmem:[%s549 + $0x38] sm:$0xf] %v3011
      %3016 = vst [vmem:[%s549 + $0x3c] sm:$0xf] %v3012
      %v3017 = vpack.c.bf16 %v3006, %v3005
      %v3019 = vunpack.c.l.b16 %v3017
      %v3020 = vunpack.c.h.b16 %v3017
      %v3021 = vpack.c.b16 %v3019, %v3019
      %v3022 = vpack.c.b16 %v3020, %v3020
      %3025 = vst [vmem:[%s555 + $0x88] sm:$0xf] %v3021
      %3026 = vst [vmem:[%s555 + $0x8c] sm:$0xf] %v3022
      %v3027 = vadd.f32 %v2983, %v2999
      %v3028 = vadd.f32 %v2984, %v3000
      %v3029 = vadd.f32 %v2985, %v3005
      %v3030 = vadd.f32 %v2986, %v3006
      %v3031 = vmul.f32 %v2999, %v2999
      %v3032 = vmul.f32 %v3000, %v3000
      %v3033 = vadd.f32 %v2989, %v3031
      %v3034 = vadd.f32 %v2990, %v3032
      %v3035 = vmul.f32 %v3005, %v3005
      %v3036 = vmul.f32 %v3006, %v3006
      %v3037 = vadd.f32 %v2993, %v3035
      %v3038 = vadd.f32 %v2994, %v3036
      %v3039 = vmul.f32 %v2679, %v2999
      %v3040 = vmul.f32 %v2679, %v3000
      %v3041 = vadd.f32 %v2578, %v3039
      %v3042 = vadd.f32 %v2579, %v3040
      %v3043 = vmax.f32 %v3041, 0.0
      %v3044 = vmax.f32 %v3042, 0.0
      %v3045 = vmul.f32 %v2691, %v3005
      %v3046 = vmul.f32 %v2691, %v3006
      %v3047 = vadd.f32 %v2651, %v3045
      %v3048 = vadd.f32 %v2652, %v3046
      %v3049 = vmax.f32 %v3047, 0.0
      %v3050 = vmax.f32 %v3048, 0.0
      %v3051 = vpack.c.bf16 %v3044, %v3043
      %v3053 = vunpack.c.l.b16 %v3051
      %v3054 = vunpack.c.h.b16 %v3051
      %v3055 = vpack.c.b16 %v3053, %v3053
      %v3056 = vpack.c.b16 %v3054, %v3054
      %3059 = vst [vmem:[%s549 + $0x40] sm:$0xf] %v3055
      %3060 = vst [vmem:[%s549 + $0x44] sm:$0xf] %v3056
      %v3061 = vpack.c.bf16 %v3050, %v3049
      %v3063 = vunpack.c.l.b16 %v3061
      %v3064 = vunpack.c.h.b16 %v3061
      %v3065 = vpack.c.b16 %v3063, %v3063
      %v3066 = vpack.c.b16 %v3064, %v3064
      %3069 = vst [vmem:[%s555 + $0x80] sm:$0xf] %v3065
      %3070 = vst [vmem:[%s555 + $0x84] sm:$0xf] %v3066
      %v3071 = vadd.f32 %v3027, %v3043
      %v3072 = vadd.f32 %v3028, %v3044
      %v3073 = vadd.f32 %v3029, %v3049
      %v3074 = vadd.f32 %v3030, %v3050
      %v3075 = vmul.f32 %v3043, %v3043
      %v3076 = vmul.f32 %v3044, %v3044
      %v3077 = vadd.f32 %v3033, %v3075
      %v3078 = vadd.f32 %v3034, %v3076
      %v3079 = vmul.f32 %v3049, %v3049
      %v3080 = vmul.f32 %v3050, %v3050
      %v3081 = vadd.f32 %v3037, %v3079
      %v3082 = vadd.f32 %v3038, %v3080
      %v3083 = vmul.f32 %v2679, %v3043
      %v3084 = vmul.f32 %v2679, %v3044
      %v3085 = vadd.f32 %v2580, %v3083
      %v3086 = vadd.f32 %v2581, %v3084
      %v3087 = vmax.f32 %v3085, 0.0
      %v3088 = vmax.f32 %v3086, 0.0
      %v3089 = vmul.f32 %v2691, %v3049
      %v3090 = vmul.f32 %v2691, %v3050
      %v3091 = vadd.f32 %v2649, %v3089
      %v3092 = vadd.f32 %v2650, %v3090
      %v3093 = vmax.f32 %v3091, 0.0
      %v3094 = vmax.f32 %v3092, 0.0
      %v3095 = vpack.c.bf16 %v3088, %v3087
      %v3097 = vunpack.c.l.b16 %v3095
      %v3098 = vunpack.c.h.b16 %v3095
      %v3099 = vpack.c.b16 %v3097, %v3097
      %v3100 = vpack.c.b16 %v3098, %v3098
      %3103 = vst [vmem:[%s549 + $0x48] sm:$0xf] %v3099
      %3104 = vst [vmem:[%s549 + $0x4c] sm:$0xf] %v3100
      %v3105 = vpack.c.bf16 %v3094, %v3093
      %v3107 = vunpack.c.l.b16 %v3105
      %v3108 = vunpack.c.h.b16 %v3105
      %v3109 = vpack.c.b16 %v3107, %v3107
      %v3110 = vpack.c.b16 %v3108, %v3108
      %3113 = vst [vmem:[%s555 + $0x78] sm:$0xf] %v3109
      %3114 = vst [vmem:[%s555 + $0x7c] sm:$0xf] %v3110
      %v3115 = vadd.f32 %v3071, %v3087
      %v3116 = vadd.f32 %v3072, %v3088
      %v3117 = vadd.f32 %v3073, %v3093
      %v3118 = vadd.f32 %v3074, %v3094
      %v3119 = vmul.f32 %v3087, %v3087
      %v3120 = vmul.f32 %v3088, %v3088
      %v3121 = vadd.f32 %v3077, %v3119
      %v3122 = vadd.f32 %v3078, %v3120
      %v3123 = vmul.f32 %v3093, %v3093
      %v3124 = vmul.f32 %v3094, %v3094
      %v3125 = vadd.f32 %v3081, %v3123
      %v3126 = vadd.f32 %v3082, %v3124
      %v3127 = vmul.f32 %v2679, %v3087
      %v3128 = vmul.f32 %v2679, %v3088
      %v3129 = vadd.f32 %v2582, %v3127
      %v3130 = vadd.f32 %v2583, %v3128
      %v3131 = vmax.f32 %v3129, 0.0
      %v3132 = vmax.f32 %v3130, 0.0
      %v3133 = vmul.f32 %v2691, %v3093
      %v3134 = vmul.f32 %v2691, %v3094
      %v3135 = vadd.f32 %v2647, %v3133
      %v3136 = vadd.f32 %v2648, %v3134
      %v3137 = vmax.f32 %v3135, 0.0
      %v3138 = vmax.f32 %v3136, 0.0
      %v3139 = vpack.c.bf16 %v3132, %v3131
      %v3141 = vunpack.c.l.b16 %v3139
      %v3142 = vunpack.c.h.b16 %v3139
      %v3143 = vpack.c.b16 %v3141, %v3141
      %v3144 = vpack.c.b16 %v3142, %v3142
      %3147 = vst [vmem:[%s549 + $0x50] sm:$0xf] %v3143
      %3148 = vst [vmem:[%s549 + $0x54] sm:$0xf] %v3144
      %v3149 = vpack.c.bf16 %v3138, %v3137
      %v3151 = vunpack.c.l.b16 %v3149
      %v3152 = vunpack.c.h.b16 %v3149
      %v3153 = vpack.c.b16 %v3151, %v3151
      %v3154 = vpack.c.b16 %v3152, %v3152
      %3157 = vst [vmem:[%s555 + $0x70] sm:$0xf] %v3153
      %3158 = vst [vmem:[%s555 + $0x74] sm:$0xf] %v3154
      %v3159 = vadd.f32 %v3115, %v3131
      %v3160 = vadd.f32 %v3116, %v3132
      %v3161 = vadd.f32 %v3117, %v3137
      %v3162 = vadd.f32 %v3118, %v3138
      %v3163 = vmul.f32 %v3131, %v3131
      %v3164 = vmul.f32 %v3132, %v3132
      %v3165 = vadd.f32 %v3121, %v3163
      %v3166 = vadd.f32 %v3122, %v3164
      %v3167 = vmul.f32 %v3137, %v3137
      %v3168 = vmul.f32 %v3138, %v3138
      %v3169 = vadd.f32 %v3125, %v3167
      %v3170 = vadd.f32 %v3126, %v3168
      %v3171 = vmul.f32 %v2679, %v3131
      %v3172 = vmul.f32 %v2679, %v3132
      %v3173 = vadd.f32 %v2584, %v3171
      %v3174 = vadd.f32 %v2585, %v3172
      %v3175 = vmax.f32 %v3173, 0.0
      %v3176 = vmax.f32 %v3174, 0.0
      %v3177 = vmul.f32 %v2691, %v3137
      %v3178 = vmul.f32 %v2691, %v3138
      %v3179 = vadd.f32 %v2645, %v3177
      %v3180 = vadd.f32 %v2646, %v3178
      %v3181 = vmax.f32 %v3179, 0.0
      %v3182 = vmax.f32 %v3180, 0.0
      %v3183 = vpack.c.bf16 %v3176, %v3175
      %v3185 = vunpack.c.l.b16 %v3183
      %v3186 = vunpack.c.h.b16 %v3183
      %v3187 = vpack.c.b16 %v3185, %v3185
      %v3188 = vpack.c.b16 %v3186, %v3186
      %3191 = vst [vmem:[%s549 + $0x58] sm:$0xf] %v3187
      %3192 = vst [vmem:[%s549 + $0x5c] sm:$0xf] %v3188
      %v3193 = vpack.c.bf16 %v3182, %v3181
      %v3195 = vunpack.c.l.b16 %v3193
      %v3196 = vunpack.c.h.b16 %v3193
      %v3197 = vpack.c.b16 %v3195, %v3195
      %v3198 = vpack.c.b16 %v3196, %v3196
      %3201 = vst [vmem:[%s555 + $0x68] sm:$0xf] %v3197
      %3202 = vst [vmem:[%s555 + $0x6c] sm:$0xf] %v3198
      %v3203 = vadd.f32 %v3159, %v3175
      %v3204 = vadd.f32 %v3160, %v3176
      %v3205 = vadd.f32 %v3161, %v3181
      %v3206 = vadd.f32 %v3162, %v3182
      %v3207 = vmul.f32 %v3175, %v3175
      %v3208 = vmul.f32 %v3176, %v3176
      %v3209 = vadd.f32 %v3165, %v3207
      %v3210 = vadd.f32 %v3166, %v3208
      %v3211 = vmul.f32 %v3181, %v3181
      %v3212 = vmul.f32 %v3182, %v3182
      %v3213 = vadd.f32 %v3169, %v3211
      %v3214 = vadd.f32 %v3170, %v3212
      %v3215 = vmul.f32 %v2679, %v3175
      %v3216 = vmul.f32 %v2679, %v3176
      %v3217 = vadd.f32 %v2586, %v3215
      %v3218 = vadd.f32 %v2587, %v3216
      %v3219 = vmax.f32 %v3217, 0.0
      %v3220 = vmax.f32 %v3218, 0.0
      %v3221 = vmul.f32 %v2691, %v3181
      %v3222 = vmul.f32 %v2691, %v3182
      %v3223 = vadd.f32 %v2643, %v3221
      %v3224 = vadd.f32 %v2644, %v3222
      %v3225 = vmax.f32 %v3223, 0.0
      %v3226 = vmax.f32 %v3224, 0.0
      %v3227 = vpack.c.bf16 %v3220, %v3219
      %v3229 = vunpack.c.l.b16 %v3227
      %v3230 = vunpack.c.h.b16 %v3227
      %v3231 = vpack.c.b16 %v3229, %v3229
      %v3232 = vpack.c.b16 %v3230, %v3230
      %3235 = vst [vmem:[%s549 + $0x60] sm:$0xf] %v3231
      %3236 = vst [vmem:[%s549 + $0x64] sm:$0xf] %v3232
      %v3237 = vpack.c.bf16 %v3226, %v3225
      %v3239 = vunpack.c.l.b16 %v3237
      %v3240 = vunpack.c.h.b16 %v3237
      %v3241 = vpack.c.b16 %v3239, %v3239
      %v3242 = vpack.c.b16 %v3240, %v3240
      %3245 = vst [vmem:[%s555 + $0x60] sm:$0xf] %v3241
      %3246 = vst [vmem:[%s555 + $0x64] sm:$0xf] %v3242
      %v3247 = vadd.f32 %v3203, %v3219
      %v3248 = vadd.f32 %v3204, %v3220
      %v3249 = vadd.f32 %v3205, %v3225
      %v3250 = vadd.f32 %v3206, %v3226
      %v3251 = vmul.f32 %v3219, %v3219
      %v3252 = vmul.f32 %v3220, %v3220
      %v3253 = vadd.f32 %v3209, %v3251
      %v3254 = vadd.f32 %v3210, %v3252
      %v3255 = vmul.f32 %v3225, %v3225
      %v3256 = vmul.f32 %v3226, %v3226
      %v3257 = vadd.f32 %v3213, %v3255
      %v3258 = vadd.f32 %v3214, %v3256
      %v3259 = vmul.f32 %v2679, %v3219
      %v3260 = vmul.f32 %v2679, %v3220
      %v3261 = vadd.f32 %v2588, %v3259
      %v3262 = vadd.f32 %v2589, %v3260
      %v3263 = vmax.f32 %v3261, 0.0
      %v3264 = vmax.f32 %v3262, 0.0
      %v3265 = vmul.f32 %v2691, %v3225
      %v3266 = vmul.f32 %v2691, %v3226
      %v3267 = vadd.f32 %v2641, %v3265
      %v3268 = vadd.f32 %v2642, %v3266
      %v3269 = vmax.f32 %v3267, 0.0
      %v3270 = vmax.f32 %v3268, 0.0
      %v3271 = vpack.c.bf16 %v3264, %v3263
      %v3273 = vunpack.c.l.b16 %v3271
      %v3274 = vunpack.c.h.b16 %v3271
      %v3275 = vpack.c.b16 %v3273, %v3273
      %v3276 = vpack.c.b16 %v3274, %v3274
      %3279 = vst [vmem:[%s549 + $0x68] sm:$0xf] %v3275
      %3280 = vst [vmem:[%s549 + $0x6c] sm:$0xf] %v3276
      %v3281 = vpack.c.bf16 %v3270, %v3269
      %v3283 = vunpack.c.l.b16 %v3281
      %v3284 = vunpack.c.h.b16 %v3281
      %v3285 = vpack.c.b16 %v3283, %v3283
      %v3286 = vpack.c.b16 %v3284, %v3284
      %3289 = vst [vmem:[%s555 + $0x58] sm:$0xf] %v3285
      %3290 = vst [vmem:[%s555 + $0x5c] sm:$0xf] %v3286
      %v3291 = vadd.f32 %v3247, %v3263
      %v3292 = vadd.f32 %v3248, %v3264
      %v3293 = vadd.f32 %v3249, %v3269
      %v3294 = vadd.f32 %v3250, %v3270
      %v3295 = vmul.f32 %v3263, %v3263
      %v3296 = vmul.f32 %v3264, %v3264
      %v3297 = vadd.f32 %v3253, %v3295
      %v3298 = vadd.f32 %v3254, %v3296
      %v3299 = vmul.f32 %v3269, %v3269
      %v3300 = vmul.f32 %v3270, %v3270
      %v3301 = vadd.f32 %v3257, %v3299
      %v3302 = vadd.f32 %v3258, %v3300
      %v3303 = vmul.f32 %v2679, %v3263
      %v3304 = vmul.f32 %v2679, %v3264
      %v3305 = vadd.f32 %v2590, %v3303
      %v3306 = vadd.f32 %v2591, %v3304
      %v3307 = vmax.f32 %v3305, 0.0
      %v3308 = vmax.f32 %v3306, 0.0
      %v3309 = vmul.f32 %v2691, %v3269
      %v3310 = vmul.f32 %v2691, %v3270
      %v3311 = vadd.f32 %v2639, %v3309
      %v3312 = vadd.f32 %v2640, %v3310
      %v3313 = vmax.f32 %v3311, 0.0
      %v3314 = vmax.f32 %v3312, 0.0
      %v3315 = vpack.c.bf16 %v3308, %v3307
      %v3317 = vunpack.c.l.b16 %v3315
      %v3318 = vunpack.c.h.b16 %v3315
      %v3319 = vpack.c.b16 %v3317, %v3317
      %v3320 = vpack.c.b16 %v3318, %v3318
      %3323 = vst [vmem:[%s549 + $0x70] sm:$0xf] %v3319
      %3324 = vst [vmem:[%s549 + $0x74] sm:$0xf] %v3320
      %v3325 = vpack.c.bf16 %v3314, %v3313
      %v3327 = vunpack.c.l.b16 %v3325
      %v3328 = vunpack.c.h.b16 %v3325
      %v3329 = vpack.c.b16 %v3327, %v3327
      %v3330 = vpack.c.b16 %v3328, %v3328
      %3333 = vst [vmem:[%s555 + $0x50] sm:$0xf] %v3329
      %3334 = vst [vmem:[%s555 + $0x54] sm:$0xf] %v3330
      %v3335 = vadd.f32 %v3291, %v3307
      %v3336 = vadd.f32 %v3292, %v3308
      %v3337 = vadd.f32 %v3293, %v3313
      %v3338 = vadd.f32 %v3294, %v3314
      %v3339 = vmul.f32 %v3307, %v3307
      %v3340 = vmul.f32 %v3308, %v3308
      %v3341 = vadd.f32 %v3297, %v3339
      %v3342 = vadd.f32 %v3298, %v3340
      %v3343 = vmul.f32 %v3313, %v3313
      %v3344 = vmul.f32 %v3314, %v3314
      %v3345 = vadd.f32 %v3301, %v3343
      %v3346 = vadd.f32 %v3302, %v3344
      %v3347 = vmul.f32 %v2679, %v3307
      %v3348 = vmul.f32 %v2679, %v3308
      %v3349 = vadd.f32 %v2592, %v3347
      %v3350 = vadd.f32 %v2593, %v3348
      %v3351 = vmax.f32 %v3349, 0.0
      %v3352 = vmax.f32 %v3350, 0.0
      %v3353 = vmul.f32 %v2691, %v3313
      %v3354 = vmul.f32 %v2691, %v3314
      %v3355 = vadd.f32 %v2637, %v3353
      %v3356 = vadd.f32 %v2638, %v3354
      %v3357 = vmax.f32 %v3355, 0.0
      %v3358 = vmax.f32 %v3356, 0.0
      %v3359 = vpack.c.bf16 %v3352, %v3351
      %v3361 = vunpack.c.l.b16 %v3359
      %v3362 = vunpack.c.h.b16 %v3359
      %v3363 = vpack.c.b16 %v3361, %v3361
      %v3364 = vpack.c.b16 %v3362, %v3362
      %3367 = vst [vmem:[%s549 + $0x78] sm:$0xf] %v3363
      %3368 = vst [vmem:[%s549 + $0x7c] sm:$0xf] %v3364
      %v3369 = vpack.c.bf16 %v3358, %v3357
      %v3371 = vunpack.c.l.b16 %v3369
      %v3372 = vunpack.c.h.b16 %v3369
      %v3373 = vpack.c.b16 %v3371, %v3371
      %v3374 = vpack.c.b16 %v3372, %v3372
      %3377 = vst [vmem:[%s555 + $0x48] sm:$0xf] %v3373
      %3378 = vst [vmem:[%s555 + $0x4c] sm:$0xf] %v3374
      %v3379 = vadd.f32 %v3335, %v3351
      %v3380 = vadd.f32 %v3336, %v3352
      %v3381 = vadd.f32 %v3337, %v3357
      %v3382 = vadd.f32 %v3338, %v3358
      %v3383 = vmul.f32 %v3351, %v3351
      %v3384 = vmul.f32 %v3352, %v3352
      %v3385 = vadd.f32 %v3341, %v3383
      %v3386 = vadd.f32 %v3342, %v3384
      %v3387 = vmul.f32 %v3357, %v3357
      %v3388 = vmul.f32 %v3358, %v3358
      %v3389 = vadd.f32 %v3345, %v3387
      %v3390 = vadd.f32 %v3346, %v3388
      %v3391 = vmul.f32 %v2679, %v3351
      %v3392 = vmul.f32 %v2679, %v3352
      %v3393 = vadd.f32 %v2594, %v3391
      %v3394 = vadd.f32 %v2595, %v3392
      %v3395 = vmax.f32 %v3393, 0.0
      %v3396 = vmax.f32 %v3394, 0.0
      %v3397 = vmul.f32 %v2691, %v3357
      %v3398 = vmul.f32 %v2691, %v3358
      %v3399 = vadd.f32 %v2635, %v3397
      %v3400 = vadd.f32 %v2636, %v3398
      %v3401 = vmax.f32 %v3399, 0.0
      %v3402 = vmax.f32 %v3400, 0.0
      %v3403 = vpack.c.bf16 %v3396, %v3395
      %v3405 = vunpack.c.l.b16 %v3403
      %v3406 = vunpack.c.h.b16 %v3403
      %v3407 = vpack.c.b16 %v3405, %v3405
      %v3408 = vpack.c.b16 %v3406, %v3406
      %3411 = vst [vmem:[%s549 + $0x80] sm:$0xf] %v3407
      %3412 = vst [vmem:[%s549 + $0x84] sm:$0xf] %v3408
      %v3413 = vpack.c.bf16 %v3402, %v3401
      %v3415 = vunpack.c.l.b16 %v3413
      %v3416 = vunpack.c.h.b16 %v3413
      %v3417 = vpack.c.b16 %v3415, %v3415
      %v3418 = vpack.c.b16 %v3416, %v3416
      %3421 = vst [vmem:[%s555 + $0x40] sm:$0xf] %v3417
      %3422 = vst [vmem:[%s555 + $0x44] sm:$0xf] %v3418
      %v3423 = vadd.f32 %v3379, %v3395
      %v3424 = vadd.f32 %v3380, %v3396
      %v3425 = vadd.f32 %v3381, %v3401
      %v3426 = vadd.f32 %v3382, %v3402
      %v3427 = vmul.f32 %v3395, %v3395
      %v3428 = vmul.f32 %v3396, %v3396
      %v3429 = vadd.f32 %v3385, %v3427
      %v3430 = vadd.f32 %v3386, %v3428
      %v3431 = vmul.f32 %v3401, %v3401
      %v3432 = vmul.f32 %v3402, %v3402
      %v3433 = vadd.f32 %v3389, %v3431
      %v3434 = vadd.f32 %v3390, %v3432
      %v3435 = vmul.f32 %v2679, %v3395
      %v3436 = vmul.f32 %v2679, %v3396
      %v3437 = vadd.f32 %v2596, %v3435
      %v3438 = vadd.f32 %v2597, %v3436
      %v3439 = vmax.f32 %v3437, 0.0
      %v3440 = vmax.f32 %v3438, 0.0
      %v3441 = vmul.f32 %v2691, %v3401
      %v3442 = vmul.f32 %v2691, %v3402
      %v3443 = vadd.f32 %v2633, %v3441
      %v3444 = vadd.f32 %v2634, %v3442
      %v3445 = vmax.f32 %v3443, 0.0
      %v3446 = vmax.f32 %v3444, 0.0
      %v3447 = vpack.c.bf16 %v3440, %v3439
      %v3449 = vunpack.c.l.b16 %v3447
      %v3450 = vunpack.c.h.b16 %v3447
      %v3451 = vpack.c.b16 %v3449, %v3449
      %v3452 = vpack.c.b16 %v3450, %v3450
      %3455 = vst [vmem:[%s549 + $0x88] sm:$0xf] %v3451
      %3456 = vst [vmem:[%s549 + $0x8c] sm:$0xf] %v3452
      %v3457 = vpack.c.bf16 %v3446, %v3445
      %v3459 = vunpack.c.l.b16 %v3457
      %v3460 = vunpack.c.h.b16 %v3457
      %v3461 = vpack.c.b16 %v3459, %v3459
      %v3462 = vpack.c.b16 %v3460, %v3460
      %3465 = vst [vmem:[%s555 + $0x38] sm:$0xf] %v3461
      %3466 = vst [vmem:[%s555 + $0x3c] sm:$0xf] %v3462
      %v3467 = vadd.f32 %v3423, %v3439
      %v3468 = vadd.f32 %v3424, %v3440
      %v3469 = vadd.f32 %v3425, %v3445
      %v3470 = vadd.f32 %v3426, %v3446
      %v3471 = vmul.f32 %v3439, %v3439
      %v3472 = vmul.f32 %v3440, %v3440
      %v3473 = vadd.f32 %v3429, %v3471
      %v3474 = vadd.f32 %v3430, %v3472
      %v3475 = vmul.f32 %v3445, %v3445
      %v3476 = vmul.f32 %v3446, %v3446
      %v3477 = vadd.f32 %v3433, %v3475
      %v3478 = vadd.f32 %v3434, %v3476
      %v3479 = vmul.f32 %v2679, %v3439
      %v3480 = vmul.f32 %v2679, %v3440
      %v3481 = vadd.f32 %v2598, %v3479
      %v3482 = vadd.f32 %v2599, %v3480
      %v3483 = vmax.f32 %v3481, 0.0
      %v3484 = vmax.f32 %v3482, 0.0
      %v3485 = vmul.f32 %v2691, %v3445
      %v3486 = vmul.f32 %v2691, %v3446
      %v3487 = vadd.f32 %v2631, %v3485
      %v3488 = vadd.f32 %v2632, %v3486
      %v3489 = vmax.f32 %v3487, 0.0
      %v3490 = vmax.f32 %v3488, 0.0
      %v3491 = vpack.c.bf16 %v3484, %v3483
      %v3493 = vunpack.c.l.b16 %v3491
      %v3494 = vunpack.c.h.b16 %v3491
      %v3495 = vpack.c.b16 %v3493, %v3493
      %v3496 = vpack.c.b16 %v3494, %v3494
      %3499 = vst [vmem:[%s549 + $0x90] sm:$0xf] %v3495
      %3500 = vst [vmem:[%s549 + $0x94] sm:$0xf] %v3496
      %v3501 = vpack.c.bf16 %v3490, %v3489
      %v3503 = vunpack.c.l.b16 %v3501
      %v3504 = vunpack.c.h.b16 %v3501
      %v3505 = vpack.c.b16 %v3503, %v3503
      %v3506 = vpack.c.b16 %v3504, %v3504
      %3509 = vst [vmem:[%s555 + $0x30] sm:$0xf] %v3505
      %3510 = vst [vmem:[%s555 + $0x34] sm:$0xf] %v3506
      %v3511 = vadd.f32 %v3467, %v3483
      %v3512 = vadd.f32 %v3468, %v3484
      %v3513 = vadd.f32 %v3469, %v3489
      %v3514 = vadd.f32 %v3470, %v3490
      %v3515 = vmul.f32 %v3483, %v3483
      %v3516 = vmul.f32 %v3484, %v3484
      %v3517 = vadd.f32 %v3473, %v3515
      %v3518 = vadd.f32 %v3474, %v3516
      %v3519 = vmul.f32 %v3489, %v3489
      %v3520 = vmul.f32 %v3490, %v3490
      %v3521 = vadd.f32 %v3477, %v3519
      %v3522 = vadd.f32 %v3478, %v3520
      %v3523 = vmul.f32 %v2679, %v3483
      %v3524 = vmul.f32 %v2679, %v3484
      %v3525 = vadd.f32 %v2600, %v3523
      %v3526 = vadd.f32 %v2601, %v3524
      %v3527 = vmax.f32 %v3525, 0.0
      %v3528 = vmax.f32 %v3526, 0.0
      %v3529 = vmul.f32 %v2691, %v3489
      %v3530 = vmul.f32 %v2691, %v3490
      %v3531 = vadd.f32 %v2629, %v3529
      %v3532 = vadd.f32 %v2630, %v3530
      %v3533 = vmax.f32 %v3531, 0.0
      %v3534 = vmax.f32 %v3532, 0.0
      %v3535 = vpack.c.bf16 %v3528, %v3527
      %v3537 = vunpack.c.l.b16 %v3535
      %v3538 = vunpack.c.h.b16 %v3535
      %v3539 = vpack.c.b16 %v3537, %v3537
      %v3540 = vpack.c.b16 %v3538, %v3538
      %3543 = vst [vmem:[%s549 + $0x98] sm:$0xf] %v3539
      %3544 = vst [vmem:[%s549 + $0x9c] sm:$0xf] %v3540
      %v3545 = vpack.c.bf16 %v3534, %v3533
      %v3547 = vunpack.c.l.b16 %v3545
      %v3548 = vunpack.c.h.b16 %v3545
      %v3549 = vpack.c.b16 %v3547, %v3547
      %v3550 = vpack.c.b16 %v3548, %v3548
      %3553 = vst [vmem:[%s555 + $0x28] sm:$0xf] %v3549
      %3554 = vst [vmem:[%s555 + $0x2c] sm:$0xf] %v3550
      %v3555 = vadd.f32 %v3511, %v3527
      %v3556 = vadd.f32 %v3512, %v3528
      %v3557 = vadd.f32 %v3513, %v3533
      %v3558 = vadd.f32 %v3514, %v3534
      %v3559 = vmul.f32 %v3527, %v3527
      %v3560 = vmul.f32 %v3528, %v3528
      %v3561 = vadd.f32 %v3517, %v3559
      %v3562 = vadd.f32 %v3518, %v3560
      %v3563 = vmul.f32 %v3533, %v3533
      %v3564 = vmul.f32 %v3534, %v3534
      %v3565 = vadd.f32 %v3521, %v3563
      %v3566 = vadd.f32 %v3522, %v3564
      %v3567 = vmul.f32 %v2679, %v3527
      %v3568 = vmul.f32 %v2679, %v3528
      %v3569 = vadd.f32 %v2602, %v3567
      %v3570 = vadd.f32 %v2603, %v3568
      %v3571 = vmax.f32 %v3569, 0.0
      %v3572 = vmax.f32 %v3570, 0.0
      %v3573 = vmul.f32 %v2691, %v3533
      %v3574 = vmul.f32 %v2691, %v3534
      %v3575 = vadd.f32 %v2627, %v3573
      %v3576 = vadd.f32 %v2628, %v3574
      %v3577 = vmax.f32 %v3575, 0.0
      %v3578 = vmax.f32 %v3576, 0.0
      %v3579 = vpack.c.bf16 %v3572, %v3571
      %v3581 = vunpack.c.l.b16 %v3579
      %v3582 = vunpack.c.h.b16 %v3579
      %v3583 = vpack.c.b16 %v3581, %v3581
      %v3584 = vpack.c.b16 %v3582, %v3582
      %3587 = vst [vmem:[%s549 + $0xa0] sm:$0xf] %v3583
      %3588 = vst [vmem:[%s549 + $0xa4] sm:$0xf] %v3584
      %v3589 = vpack.c.bf16 %v3578, %v3577
      %v3591 = vunpack.c.l.b16 %v3589
      %v3592 = vunpack.c.h.b16 %v3589
      %v3593 = vpack.c.b16 %v3591, %v3591
      %v3594 = vpack.c.b16 %v3592, %v3592
      %3597 = vst [vmem:[%s555 + $0x20] sm:$0xf] %v3593
      %3598 = vst [vmem:[%s555 + $0x24] sm:$0xf] %v3594
      %v3599 = vadd.f32 %v3555, %v3571
      %v3600 = vadd.f32 %v3556, %v3572
      %v3601 = vadd.f32 %v3557, %v3577
      %v3602 = vadd.f32 %v3558, %v3578
      %v3603 = vmul.f32 %v3571, %v3571
      %v3604 = vmul.f32 %v3572, %v3572
      %v3605 = vadd.f32 %v3561, %v3603
      %v3606 = vadd.f32 %v3562, %v3604
      %v3607 = vmul.f32 %v3577, %v3577
      %v3608 = vmul.f32 %v3578, %v3578
      %v3609 = vadd.f32 %v3565, %v3607
      %v3610 = vadd.f32 %v3566, %v3608
      %v3611 = vmul.f32 %v2679, %v3571
      %v3612 = vmul.f32 %v2679, %v3572
      %v3613 = vadd.f32 %v2604, %v3611
      %v3614 = vadd.f32 %v2605, %v3612
      %v3615 = vmax.f32 %v3613, 0.0
      %v3616 = vmax.f32 %v3614, 0.0
      %v3617 = vmul.f32 %v2691, %v3577
      %v3618 = vmul.f32 %v2691, %v3578
      %v3619 = vadd.f32 %v2625, %v3617
      %v3620 = vadd.f32 %v2626, %v3618
      %v3621 = vmax.f32 %v3619, 0.0
      %v3622 = vmax.f32 %v3620, 0.0
      %v3623 = vpack.c.bf16 %v3616, %v3615
      %v3625 = vunpack.c.l.b16 %v3623
      %v3626 = vunpack.c.h.b16 %v3623
      %v3627 = vpack.c.b16 %v3625, %v3625
      %v3628 = vpack.c.b16 %v3626, %v3626
      %3631 = vst [vmem:[%s549 + $0xa8] sm:$0xf] %v3627
      %3632 = vst [vmem:[%s549 + $0xac] sm:$0xf] %v3628
      %v3633 = vpack.c.bf16 %v3622, %v3621
      %v3635 = vunpack.c.l.b16 %v3633
      %v3636 = vunpack.c.h.b16 %v3633
      %v3637 = vpack.c.b16 %v3635, %v3635
      %v3638 = vpack.c.b16 %v3636, %v3636
      %3641 = vst [vmem:[%s555 + $0x18] sm:$0xf] %v3637
      %3642 = vst [vmem:[%s555 + $0x1c] sm:$0xf] %v3638
      %v3643 = vadd.f32 %v3599, %v3615
      %v3644 = vadd.f32 %v3600, %v3616
      %v3645 = vadd.f32 %v3601, %v3621
      %v3646 = vadd.f32 %v3602, %v3622
      %v3647 = vmul.f32 %v3615, %v3615
      %v3648 = vmul.f32 %v3616, %v3616
      %v3649 = vadd.f32 %v3605, %v3647
      %v3650 = vadd.f32 %v3606, %v3648
      %v3651 = vmul.f32 %v3621, %v3621
      %v3652 = vmul.f32 %v3622, %v3622
      %v3653 = vadd.f32 %v3609, %v3651
      %v3654 = vadd.f32 %v3610, %v3652
      %v3655 = vmul.f32 %v2679, %v3615
      %v3656 = vmul.f32 %v2679, %v3616
      %v3657 = vadd.f32 %v2606, %v3655
      %v3658 = vadd.f32 %v2607, %v3656
      %v3659 = vmax.f32 %v3657, 0.0
      %v3660 = vmax.f32 %v3658, 0.0
      %v3661 = vmul.f32 %v2691, %v3621
      %v3662 = vmul.f32 %v2691, %v3622
      %v3663 = vadd.f32 %v2623, %v3661
      %v3664 = vadd.f32 %v2624, %v3662
      %v3665 = vmax.f32 %v3663, 0.0
      %v3666 = vmax.f32 %v3664, 0.0
      %v3667 = vpack.c.bf16 %v3660, %v3659
      %v3669 = vunpack.c.l.b16 %v3667
      %v3670 = vunpack.c.h.b16 %v3667
      %v3671 = vpack.c.b16 %v3669, %v3669
      %v3672 = vpack.c.b16 %v3670, %v3670
      %3675 = vst [vmem:[%s549 + $0xb0] sm:$0xf] %v3671
      %3676 = vst [vmem:[%s549 + $0xb4] sm:$0xf] %v3672
      %v3677 = vpack.c.bf16 %v3666, %v3665
      %v3679 = vunpack.c.l.b16 %v3677
      %v3680 = vunpack.c.h.b16 %v3677
      %v3681 = vpack.c.b16 %v3679, %v3679
      %v3682 = vpack.c.b16 %v3680, %v3680
      %3685 = vst [vmem:[%s555 + $0x10] sm:$0xf] %v3681
      %3686 = vst [vmem:[%s555 + $0x14] sm:$0xf] %v3682
      %v3687 = vadd.f32 %v3643, %v3659
      %v3688 = vadd.f32 %v3644, %v3660
      %v3689 = vadd.f32 %v3645, %v3665
      %v3690 = vadd.f32 %v3646, %v3666
      %v3691 = vmul.f32 %v3659, %v3659
      %v3692 = vmul.f32 %v3660, %v3660
      %v3693 = vadd.f32 %v3649, %v3691
      %v3694 = vadd.f32 %v3650, %v3692
      %v3695 = vmul.f32 %v3665, %v3665
      %v3696 = vmul.f32 %v3666, %v3666
      %v3697 = vadd.f32 %v3653, %v3695
      %v3698 = vadd.f32 %v3654, %v3696
      %v3699 = vmul.f32 %v2679, %v3659
      %v3700 = vmul.f32 %v2679, %v3660
      %v3701 = vadd.f32 %v2608, %v3699
      %v3702 = vadd.f32 %v2609, %v3700
      %v3703 = vmax.f32 %v3701, 0.0
      %v3704 = vmax.f32 %v3702, 0.0
      %v3705 = vmul.f32 %v2691, %v3665
      %v3706 = vmul.f32 %v2691, %v3666
      %v3707 = vadd.f32 %v2621, %v3705
      %v3708 = vadd.f32 %v2622, %v3706
      %v3709 = vmax.f32 %v3707, 0.0
      %v3710 = vmax.f32 %v3708, 0.0
      %v3711 = vpack.c.bf16 %v3704, %v3703
      %v3713 = vunpack.c.l.b16 %v3711
      %v3714 = vunpack.c.h.b16 %v3711
      %v3715 = vpack.c.b16 %v3713, %v3713
      %v3716 = vpack.c.b16 %v3714, %v3714
      %3719 = vst [vmem:[%s549 + $0xb8] sm:$0xf] %v3715
      %3720 = vst [vmem:[%s549 + $0xbc] sm:$0xf] %v3716
      %v3721 = vpack.c.bf16 %v3710, %v3709
      %v3723 = vunpack.c.l.b16 %v3721
      %v3724 = vunpack.c.h.b16 %v3721
      %v3725 = vpack.c.b16 %v3723, %v3723
      %v3726 = vpack.c.b16 %v3724, %v3724
      %3729 = vst [vmem:[%s555 + $0x8] sm:$0xf] %v3725
      %3730 = vst [vmem:[%s555 + $0xc] sm:$0xf] %v3726
      %v3731 = vadd.f32 %v3687, %v3703
      %v3732 = vadd.f32 %v3688, %v3704
      %v3733 = vadd.f32 %v3689, %v3709
      %v3734 = vadd.f32 %v3690, %v3710
      %v3735 = vmul.f32 %v3703, %v3703
      %v3736 = vmul.f32 %v3704, %v3704
      %v3737 = vadd.f32 %v3693, %v3735
      %v3738 = vadd.f32 %v3694, %v3736
      %v3739 = vmul.f32 %v3709, %v3709
      %v3740 = vmul.f32 %v3710, %v3710
      %v3741 = vadd.f32 %v3697, %v3739
      %v3742 = vadd.f32 %v3698, %v3740
      %v3743 = vmul.f32 %v2679, %v3703
      %v3744 = vmul.f32 %v2679, %v3704
      %v3745 = vadd.f32 %v2610, %v3743
      %v3746 = vadd.f32 %v2611, %v3744
      %v3747 = vmax.f32 %v3745, 0.0
      %v3748 = vmax.f32 %v3746, 0.0
      %v3749 = vmul.f32 %v2691, %v3709
      %v3750 = vmul.f32 %v2691, %v3710
      %v3751 = vadd.f32 %v2619, %v3749
      %v3752 = vadd.f32 %v2620, %v3750
      %v3753 = vmax.f32 %v3751, 0.0
      %v3754 = vmax.f32 %v3752, 0.0
      %v3755 = vpack.c.bf16 %v3748, %v3747
      %v3757 = vunpack.c.l.b16 %v3755
      %v3758 = vunpack.c.h.b16 %v3755
      %v3759 = vpack.c.b16 %v3757, %v3757
      %v3760 = vpack.c.b16 %v3758, %v3758
      %3763 = vst [vmem:[%s549 + $0xc0] sm:$0xf] %v3759
      %3764 = vst [vmem:[%s549 + $0xc4] sm:$0xf] %v3760
      %v3765 = vpack.c.bf16 %v3754, %v3753
      %v3767 = vunpack.c.l.b16 %v3765
      %v3768 = vunpack.c.h.b16 %v3765
      %v3769 = vpack.c.b16 %v3767, %v3767
      %v3770 = vpack.c.b16 %v3768, %v3768
      %3773 = vst [vmem:[%s555] sm:$0xf] %v3769
      %3774 = vst [vmem:[%s555 + $0x4] sm:$0xf] %v3770
      %v3775 = vadd.f32 %v3731, %v3747
      %v3776 = vadd.f32 %v3732, %v3748
      %v3777 = vadd.f32 %v3733, %v3753
      %v3778 = vadd.f32 %v3734, %v3754
      %v3779 = vmul.f32 %v3747, %v3747
      %v3780 = vmul.f32 %v3748, %v3748
      %v3781 = vadd.f32 %v3737, %v3779
      %v3782 = vadd.f32 %v3738, %v3780
      %v3783 = vmul.f32 %v3753, %v3753
      %v3784 = vmul.f32 %v3754, %v3754
      %v3785 = vadd.f32 %v3741, %v3783
      %v3786 = vadd.f32 %v3742, %v3784
      %3787 = vst [vmem:[#allocation2] sm:$0xff] %v3747
      %3788 = vst [vmem:[#allocation2 + $0x8] sm:$0xff] %v3748
      %3789 = vst [vmem:[#allocation3] sm:$0xff] %v3753
      %3790 = vst [vmem:[#allocation3 + $0x8] sm:$0xff] %v3754
      %v3791 = vld [vmem:[%s14] sm:$0xf]
      %v3792 = vadd.f32 %v3775, %v3776
      %v3793 = vrot.slane %v3792, 4
      %v3794 = vadd.f32 %v3792, %v3793
      %v3795 = vrot.slane %v3794, 2
      %v3796 = vadd.f32 %v3794, %v3795
      %v3797 = vrot.slane %v3796, 1
      %v3798 = vadd.f32 %v3796, %v3797
      %v3799 = vadd.f32 %v3777, %v3778
      %v3800 = vrot.slane %v3799, 4
      %v3801 = vadd.f32 %v3799, %v3800
      %v3802 = vrot.slane %v3801, 2
      %v3803 = vadd.f32 %v3801, %v3802
      %v3804 = vrot.slane %v3803, 1
      %v3805 = vadd.f32 %v3803, %v3804
      %v3806 = vadd.f32 %v3781, %v3782
      %v3807 = vrot.slane %v3806, 4
      %v3808 = vadd.f32 %v3806, %v3807
      %v3809 = vrot.slane %v3808, 2
      %v3810 = vadd.f32 %v3808, %v3809
      %v3811 = vrot.slane %v3810, 1
      %v3812 = vadd.f32 %v3810, %v3811
      %v3813 = vadd.f32 %v3785, %v3786
      %v3814 = vrot.slane %v3813, 4
      %v3815 = vadd.f32 %v3813, %v3814
      %v3816 = vrot.slane %v3815, 2
      %v3817 = vadd.f32 %v3815, %v3816
      %v3818 = vrot.slane %v3817, 1
      %v3819 = vadd.f32 %v3817, %v3818
      %vm3820 = vcmask 1040384
      %v3821 = vsel %vm3820, %v3798, %v3805
      %vm3822 = vcmask 1041408
      %v3823 = vsel %vm3822, %v3821, %v3812
      %vm3824 = vcmask 1042432
      %v3825 = vsel %vm3824, %v3823, %v3819
      %v3826 = vadd.f32 %v3791, %v3825
      %3827 = vst [vmem:[%s14] sm:$0xf] %v3826
      %p3828 = scmp.lt.s32.totalorder %s26, 3
      %s3829 = scalar_select %p3828, %s26, 3
      %s3830 = smul.addr %s3829, 50
      %s3831 = smul.addr %s3830, 4
      %s3832 = scalar_lea.vmem %s12, %s3831
      %s3833 = ssub.s32 3, %s26
      %p3834 = scmp.lt.s32.totalorder %s3833, 3
      %s3835 = scalar_select %p3834, %s3833, 3
      %s3836 = smul.addr %s3835, 50
      %s3837 = smul.addr %s3836, 4
      %s3838 = scalar_lea.vmem %s13, %s3837
      // Predicated region
      $region73: #{net_forward.3} parent=67 // pred_check
        %p3839 = pneg %p320
      $region74: #{net_forward.3} parent=67 // pred_check_branch
        %3841 = sbr.rel (%p3839) target = $region76
      $region75: #{net_forward.3} parent=67 // pred_region
        _
      $region76: #{net_forward.3} parent=67 // pred_fallthru
        _
      // Predicated region
      $region77: #{net_forward.3} parent=67 // pred_check
        %p3842 = pneg %p348
      $region78: #{net_forward.3} parent=67 // pred_check_branch
        %3844 = sbr.rel (%p3842) target = $region80
      $region79: #{net_forward.3} parent=67 // pred_region
        %s3845 = ssub.s32 3, %s26
      $region80: #{net_forward.3} parent=67 // pred_fallthru
        _
      // Predicated region
      $region81: #{net_forward.3} parent=67 // pred_check
        %p3846 = pneg %p369
      $region82: #{net_forward.3} parent=67 // pred_check_branch
        %3848 = sbr.rel (%p3846) target = $region84
      $region83: #{net_forward.3} parent=67 // pred_region
        _
      $region84: #{net_forward.3} parent=67 // pred_fallthru
        _
      // Predicated region
      $region85: #{net_forward.3} parent=67 // pred_check
        %p3849 = pneg %p369
      $region86: #{net_forward.3} parent=67 // pred_check_branch
        %3851 = sbr.rel (%p3849) target = $region88
      $region87: #{net_forward.3} parent=67 // pred_region
        _
      $region88: #{net_forward.3} parent=67 // pred_fallthru
        _
    $region68: #{net_forward.3} parent=5 // pred_fallthru
      _
    %p3852 = scmp.le.s32.totalorder 2, %s21
    // Predicated region
    $region89: #{net_forward.3} parent=5 // pred_check
      %p3853 = pneg %p3852
    $region90: #{net_forward.3} parent=5 // pred_check_branch
      %3855 = sbr.rel (%p3853) target = $region92
    $region91: #{net_forward.3} parent=5 // pred_region
      %s3856 = ssub.s32 %s21, 2
      // Predicated region
      $region93: #{net_forward.3} parent=91 // pred_check
        %p3857 = pneg %p326
      $region94: #{net_forward.3} parent=91 // pred_check_branch
        %3859 = sbr.rel (%p3857) target = $region96
      $region95: #{net_forward.3} parent=91 // pred_region
        %p3860 = scmp.lt.s32.totalorder %s27, 3
        %s3861 = scalar_select %p3860, %s27, 3
        %s3862 = smul.addr %s3861, 50
        %s3863 = smul.addr %s3862, 4
        %s3864 = scalar_lea.vmem %s12, %s3863
      $region96: #{net_forward.3} parent=91 // pred_fallthru
        _
      // Predicated region
      $region97: #{net_forward.3} parent=91 // pred_check
        %p3865 = pneg %p354
      $region98: #{net_forward.3} parent=91 // pred_check_branch
        %3867 = sbr.rel (%p3865) target = $region100
      $region99: #{net_forward.3} parent=91 // pred_region
        %s3868 = ssub.s32 3, %s27
        %p3869 = scmp.lt.s32.totalorder %s3868, 3
        %s3870 = scalar_select %p3869, %s3868, 3
        %s3871 = smul.addr %s3870, 50
        %s3872 = smul.addr %s3871, 4
        %s3873 = scalar_lea.vmem %s13, %s3872
      $region100: #{net_forward.3} parent=91 // pred_fallthru
        _
    $region92: #{net_forward.3} parent=5 // pred_fallthru
      _
  $region6: #{net_forward.3} parent=0 // loop_footer
    %s25 = sadd.s32 1, %s21
  $region7: #{net_forward.3} parent=0 // loop_footer_branch
    %20 = sbr.rel target = $region3
  $region8: #{net_forward.3} parent=0 // loop_exit
    _

</llo_original>
